<compile_context>
chip_gen: v5e
topology: v5e:2x2
jax: 0.10.0
libtpu: 0.0.40
codegen_flags: <defaults>
</compile_context>

<pallas_src>
import math

import jax
import jax.numpy as jnp
from jax import lax
from jax.experimental import pallas as pl
from jax.experimental.pallas import tpu as pltpu

EPS = 1e-5          # InstanceNorm3d default eps
NEG_SLOPE = 0.01    # LeakyReLU negative_slope
LANE = 128
SUBLANE = 8


def _round_up(x, m):
    return (x + m - 1) // m * m


def _shift_lanes(x, off):
    """Return s with s[:, q] = x[:, q + off] wherever q + off is in range.

    Out-of-range lanes are filled with zeros; they can only land on halo / tail
    positions of the padded grid, which are masked out downstream.
    """
    c, n = x.shape
    if off == 0:
        return x
    if off > 0:
        return jnp.concatenate([x[:, off:], jnp.zeros((c, off), x.dtype)], axis=1)
    return jnp.concatenate([jnp.zeros((c, -off), x.dtype), x[:, : n + off]], axis=1)


def _make_fused_kernel(num_blocks, tap_offsets, n_real_voxels):
    """Builds the per-sample kernel: num_blocks x (conv -> InstanceNorm -> LeakyReLU)."""
    inv_cnt = 1.0 / float(n_real_voxels)
    multi = num_blocks > 1

    def kernel(*refs):
        if multi:
            x_ref, w0_ref, wr_ref, aff_ref, mask_ref, o_ref = refs
        else:
            x_ref, w0_ref, aff_ref, mask_ref, o_ref = refs
            wr_ref = None

        mask = mask_ref[...]                        # (1, Pp) f32: 1 on real voxels, 0 on halo/tail
        aff = aff_ref[...]                          # (B, 2, Cout_pad, 1) f32 (gamma, beta)
        w_first = w0_ref[...]                       # (27, Cout_pad, Cin_pad) bf16
        w_rest = wr_ref[...] if multi else None     # (B-1, 27, Cout_pad, Cout_pad) bf16
        act = x_ref[0].astype(jnp.float32)          # (Cin_pad, Pp) f32, zero halo

        for blk in range(num_blocks):
            w = w_first if blk == 0 else w_rest[blk - 1]
            n_out = w.shape[1]

            # --- Conv3d as 27 lane-shifted matmuls, f32 accumulation, lane-dense output.
            acc = jnp.zeros((n_out, act.shape[1]), jnp.float32)
            for t, off in enumerate(tap_offsets):
                shifted = _shift_lanes(act, off).astype(jnp.bfloat16)
                acc = acc + jnp.dot(w[t], shifted,
                                    preferred_element_type=jnp.float32)
            # (Conv bias omitted: a per-channel constant is cancelled exactly by the
            #  InstanceNorm mean subtraction below.)

            # --- InstanceNorm3d over the real (unpadded) voxels only, biased variance.
            mean = jnp.sum(acc * mask, axis=1, keepdims=True) * inv_cnt
            cent = acc - mean
            var = jnp.sum(cent * cent * mask, axis=1, keepdims=True) * inv_cnt
            y = cent * lax.rsqrt(var + EPS) * aff[blk, 0] + aff[blk, 1]

            # --- LeakyReLU(0.01); re-zero halo/tail lanes so they act as the zero
            #     padding for the next block's conv.
            y = jnp.where(y > 0.0, y, NEG_SLOPE * y) * mask

            if blk + 1 < num_blocks:
                act = y                             # stays in VMEM / registers
            else:
                o_ref[0] = y

    return kernel


def conv_blocks(x_ncdhw, params):
    """ConvBlocks.forward.  x_ncdhw: (N, Cin, D, H, W) f32 -> (N, Cout, D, H, W) f32."""
    N, Cin, D, H, W = x_ncdhw.shape
    num_blocks = len(params)
    Cout = params[0]["w"].shape[0]

    Dp, Hp, Wp = D + 2, H + 2, W + 2
    Pp_real = Dp * Hp * Wp                 # flattened padded volume
    Pp = _round_up(Pp_real, LANE)          # lane-dense length
    Cin_pad = _round_up(Cin, SUBLANE)
    Cout_pad = _round_up(Cout, SUBLANE)

    # Flat lane offset of each of the 27 taps on the padded grid.
    tap_offsets = [(kd - 1) * Hp * Wp + (kh - 1) * Wp + (kw - 1)
                   for kd in range(3) for kh in range(3) for kw in range(3)]

    # --- wrapper glue (small): channel pad, spatial zero-pad by 1, flatten the padded
    #     volume onto the lane axis, bf16 for HBM/DMA.
    xp = jnp.pad(x_ncdhw.astype(jnp.float32),
                 ((0, 0), (0, Cin_pad - Cin), (1, 1), (1, 1), (1, 1)))
    x_flat = xp.reshape(N, Cin_pad, Pp_real)
    x_flat = jnp.pad(x_flat, ((0, 0), (0, 0), (0, Pp - Pp_real))).astype(jnp.bfloat16)

    # Mask of real voxels on the padded grid (1 interior / 0 halo+lane-tail).
    mask = jnp.pad(jnp.ones((D, H, W), jnp.float32), ((1, 1), (1, 1), (1, 1)))
    mask = jnp.pad(mask.reshape(1, Pp_real), ((0, 0), (0, Pp - Pp_real)))

    # Weights: (Cout, Cin, 3, 3, 3) -> (27, Cout_pad, Cin_pad) bf16, tap order matching
    # tap_offsets (kd, kh, kw).  Conv bias is intentionally not packed (see kernel).
    def pack_w(w, cin_pad):
        co, ci = w.shape[0], w.shape[1]
        wt = jnp.transpose(w.astype(jnp.float32), (2, 3, 4, 0, 1)).reshape(27, co, ci)
        wt = jnp.pad(wt, ((0, 0), (0, Cout_pad - co), (0, cin_pad - ci)))
        return wt.astype(jnp.bfloat16)

    w0 = pack_w(params[0]["w"], Cin_pad)

    # Affine params, padded channels get gamma = beta = 0 so they stay zero.
    aff = []
    for p in params:
        g = jnp.pad(p["gamma"].astype(jnp.float32), (0, Cout_pad - Cout))
        b = jnp.pad(p["beta"].astype(jnp.float32), (0, Cout_pad - Cout))
        aff.append(jnp.stack([g, b], axis=0))
    aff = jnp.stack(aff, axis=0).reshape(num_blocks, 2, Cout_pad, 1)

    inputs = [x_flat, w0]
    in_specs = [
        pl.BlockSpec((1, Cin_pad, Pp), lambda n: (n, 0, 0)),
        pl.BlockSpec((27, Cout_pad, Cin_pad), lambda n: (0, 0, 0)),
    ]
    if num_blocks > 1:
        wr = jnp.stack([pack_w(p["w"], Cout_pad) for p in params[1:]], axis=0)
        inputs.append(wr)
        in_specs.append(pl.BlockSpec((num_blocks - 1, 27, Cout_pad, Cout_pad),
                                     lambda n: (0, 0, 0, 0)))
    inputs += [aff, mask]
    in_specs += [
        pl.BlockSpec((num_blocks, 2, Cout_pad, 1), lambda n: (0, 0, 0, 0)),
        pl.BlockSpec((1, Pp), lambda n: (0, 0)),
    ]

    kernel = _make_fused_kernel(num_blocks, tap_offsets, D * H * W)

    out = pl.pallas_call(
        kernel,
        out_shape=jax.ShapeDtypeStruct((N, Cout_pad, Pp), jnp.float32),
        grid_spec=pltpu.PrefetchScalarGridSpec(
            num_scalar_prefetch=0,
            grid=(N,),
            in_specs=in_specs,
            out_specs=pl.BlockSpec((1, Cout_pad, Pp), lambda n: (n, 0, 0)),
        ),
        compiler_params=pltpu.CompilerParams(
            dimension_semantics=("parallel",),      # shard samples across TCs (v7x)
            vmem_limit_bytes=48 * 1024 * 1024,      # fits the v7x 64 MiB physical VMEM
        ),
    )(*inputs)

    # Drop padded channels, halo and lane tail -> NCDHW, matching the PyTorch module.
    out = out[:, :Cout, :Pp_real].reshape(N, Cout, Dp, Hp, Wp)
    return out[:, :, 1:-1, 1:-1, 1:-1]


def init_params(key, in_channels=4, out_channels=5, num_blocks=2):
    params = []
    cin = in_channels
    for _ in range(num_blocks):
        key, kw, kb = jax.random.split(key, 3)
        fan_in = cin * 27
        bound = 1.0 / math.sqrt(fan_in)
        w = jax.random.uniform(kw, (out_channels, cin, 3, 3, 3),
                               jnp.float32, -bound, bound)
        # Conv bias exists in the PyTorch module but is mathematically cancelled by the
        # following InstanceNorm mean subtraction, so the kernel does not consume it.
        b = jax.random.uniform(kb, (out_channels,), jnp.float32, -bound, bound)
        gamma = jnp.ones((out_channels,), jnp.float32)   # InstanceNorm3d affine init
        beta = jnp.zeros((out_channels,), jnp.float32)
        params.append({"w": w, "b": b, "gamma": gamma, "beta": beta})
        cin = out_channels
    return params


if __name__ == "__main__":
    key = jax.random.PRNGKey(0)
    k_x, k_p = jax.random.split(key)

    N, Cin, D, H, W = 2, 4, 8, 8, 8
    Cout, num_blocks = 5, 2

    x = jax.random.normal(k_x, (N, Cin, D, H, W), jnp.float32)
    params = init_params(k_p, Cin, Cout, num_blocks)

    out = jax.jit(conv_blocks)(x, params)
    out = jax.block_until_ready(out)
    assert out.shape == (N, Cout, D, H, W)
    print("KERNEL_OK")
</pallas_src>

<mosaic_0001>
module attributes {stable_mosaic.version = 11 : i64} {
  func.func @kernel(%arg0: i32, %arg1: memref<1x8x1024xbf16, #tpu.memory_space<vmem>>, %arg2: memref<27x8x8xbf16, #tpu.memory_space<vmem>>, %arg3: memref<1x27x8x8xbf16, #tpu.memory_space<vmem>>, %arg4: memref<2x2x8x1xf32, #tpu.memory_space<vmem>>, %arg5: memref<1x1024xf32, #tpu.memory_space<vmem>>, %arg6: memref<1x8x1024xf32, #tpu.memory_space<vmem>>) attributes {dimension_semantics = [#tpu.dimension_semantics<parallel>], iteration_bounds = array<i64: 2>, scalar_prefetch = 0 : i64, scratch_operands = 0 : i64, tpu.core_type = #tpu.core_type<tc>, window_params = [{transform_indices = @transform_0, window_bounds = array<i64: 1, 8, 1024>}, {pipeline_mode = #tpu.pipeline_mode<synchronous>, transform_indices = @transform_1, window_bounds = array<i64: 27, 8, 8>}, {pipeline_mode = #tpu.pipeline_mode<synchronous>, transform_indices = @transform_2, window_bounds = array<i64: 1, 27, 8, 8>}, {pipeline_mode = #tpu.pipeline_mode<synchronous>, transform_indices = @transform_3, window_bounds = array<i64: 2, 2, 8, 1>}, {pipeline_mode = #tpu.pipeline_mode<synchronous>, transform_indices = @transform_4, window_bounds = array<i64: 1, 1024>}, {transform_indices = @transform_5, window_bounds = array<i64: 1, 8, 1024>}]} {
    %c0 = arith.constant 0 : index
    %c0_0 = arith.constant 0 : index
    %0 = vector.load %arg5[%c0, %c0_0] : memref<1x1024xf32, #tpu.memory_space<vmem>>, vector<1x1024xf32>
    %c0_1 = arith.constant 0 : index
    %c0_2 = arith.constant 0 : index
    %c0_3 = arith.constant 0 : index
    %c0_4 = arith.constant 0 : index
    %1 = vector.load %arg4[%c0_1, %c0_2, %c0_3, %c0_4] : memref<2x2x8x1xf32, #tpu.memory_space<vmem>>, vector<2x2x8x1xf32>
    %c0_5 = arith.constant 0 : index
    %c0_6 = arith.constant 0 : index
    %c0_7 = arith.constant 0 : index
    %2 = vector.load %arg2[%c0_5, %c0_6, %c0_7] : memref<27x8x8xbf16, #tpu.memory_space<vmem>>, vector<27x8x8xbf16>
    %c0_8 = arith.constant 0 : index
    %c0_9 = arith.constant 0 : index
    %c0_10 = arith.constant 0 : index
    %c0_11 = arith.constant 0 : index
    %3 = vector.load %arg3[%c0_8, %c0_9, %c0_10, %c0_11] : memref<1x27x8x8xbf16, #tpu.memory_space<vmem>>, vector<1x27x8x8xbf16>
    %c0_12 = arith.constant 0 : index
    %c0_13 = arith.constant 0 : index
    %c0_14 = arith.constant 0 : index
    %4 = vector.load %arg1[%c0_12, %c0_13, %c0_14] : memref<1x8x1024xbf16, #tpu.memory_space<vmem>>, vector<1x8x1024xbf16>
    %5 = vector.shape_cast %4 : vector<1x8x1024xbf16> to vector<8x1024xbf16>
    %6 = arith.extf %5 : vector<8x1024xbf16> to vector<8x1024xf32>
    %cst = arith.constant 0.000000e+00 : f32
    %7 = vector.broadcast %cst : f32 to vector<8x1024xf32>
    %cst_15 = arith.constant 0.000000e+00 : f32
    %8 = vector.broadcast %cst_15 : f32 to vector<8x111xf32>
    %9 = vector.extract_strided_slice %6 {offsets = [0, 0], sizes = [8, 913], strides = [1, 1]} : vector<8x1024xf32> to vector<8x913xf32>
    %10 = tpu.concatenate %8, %9 in 1 : vector<8x111xf32>, vector<8x913xf32> -> vector<8x1024xf32>
    %11 = arith.truncf %10 : vector<8x1024xf32> to vector<8x1024xbf16>
    %12 = vector.extract_strided_slice %2 {offsets = [0, 0, 0], sizes = [1, 8, 8], strides = [1, 1, 1]} : vector<27x8x8xbf16> to vector<1x8x8xbf16>
    %13 = vector.shape_cast %12 : vector<1x8x8xbf16> to vector<8x8xbf16>
    %cst_16 = arith.constant dense<0.000000e+00> : vector<8x1024xf32>
    %14 = tpu.matmul %13, %11, %cst_16 {dimension_numbers = #tpu.dot_dimension_numbers<[1], [0], [0], [1], [0, 0, 1, 1], [], []>} : vector<8x8xbf16>, vector<8x1024xbf16>, vector<8x1024xf32> -> vector<8x1024xf32>
    %15 = arith.addf %7, %14 : vector<8x1024xf32>
    %cst_17 = arith.constant 0.000000e+00 : f32
    %16 = vector.broadcast %cst_17 : f32 to vector<8x110xf32>
    %17 = vector.extract_strided_slice %6 {offsets = [0, 0], sizes = [8, 914], strides = [1, 1]} : vector<8x1024xf32> to vector<8x914xf32>
    %18 = tpu.concatenate %16, %17 in 1 : vector<8x110xf32>, vector<8x914xf32> -> vector<8x1024xf32>
    %19 = arith.truncf %18 : vector<8x1024xf32> to vector<8x1024xbf16>
    %20 = vector.extract_strided_slice %2 {offsets = [1, 0, 0], sizes = [1, 8, 8], strides = [1, 1, 1]} : vector<27x8x8xbf16> to vector<1x8x8xbf16>
    %21 = vector.shape_cast %20 : vector<1x8x8xbf16> to vector<8x8xbf16>
    %cst_18 = arith.constant dense<0.000000e+00> : vector<8x1024xf32>
    %22 = tpu.matmul %21, %19, %cst_18 {dimension_numbers = #tpu.dot_dimension_numbers<[1], [0], [0], [1], [0, 0, 1, 1], [], []>} : vector<8x8xbf16>, vector<8x1024xbf16>, vector<8x1024xf32> -> vector<8x1024xf32>
    %23 = arith.addf %15, %22 : vector<8x1024xf32>
    %cst_19 = arith.constant 0.000000e+00 : f32
    %24 = vector.broadcast %cst_19 : f32 to vector<8x109xf32>
    %25 = vector.extract_strided_slice %6 {offsets = [0, 0], sizes = [8, 915], strides = [1, 1]} : vector<8x1024xf32> to vector<8x915xf32>
    %26 = tpu.concatenate %24, %25 in 1 : vector<8x109xf32>, vector<8x915xf32> -> vector<8x1024xf32>
    %27 = arith.truncf %26 : vector<8x1024xf32> to vector<8x1024xbf16>
    %28 = vector.extract_strided_slice %2 {offsets = [2, 0, 0], sizes = [1, 8, 8], strides = [1, 1, 1]} : vector<27x8x8xbf16> to vector<1x8x8xbf16>
    %29 = vector.shape_cast %28 : vector<1x8x8xbf16> to vector<8x8xbf16>
    %cst_20 = arith.constant dense<0.000000e+00> : vector<8x1024xf32>
    %30 = tpu.matmul %29, %27, %cst_20 {dimension_numbers = #tpu.dot_dimension_numbers<[1], [0], [0], [1], [0, 0, 1, 1], [], []>} : vector<8x8xbf16>, vector<8x1024xbf16>, vector<8x1024xf32> -> vector<8x1024xf32>
    %31 = arith.addf %23, %30 : vector<8x1024xf32>
    %cst_21 = arith.constant 0.000000e+00 : f32
    %32 = vector.broadcast %cst_21 : f32 to vector<8x101xf32>
    %33 = vector.extract_strided_slice %6 {offsets = [0, 0], sizes = [8, 923], strides = [1, 1]} : vector<8x1024xf32> to vector<8x923xf32>
    %34 = tpu.concatenate %32, %33 in 1 : vector<8x101xf32>, vector<8x923xf32> -> vector<8x1024xf32>
    %35 = arith.truncf %34 : vector<8x1024xf32> to vector<8x1024xbf16>
    %36 = vector.extract_strided_slice %2 {offsets = [3, 0, 0], sizes = [1, 8, 8], strides = [1, 1, 1]} : vector<27x8x8xbf16> to vector<1x8x8xbf16>
    %37 = vector.shape_cast %36 : vector<1x8x8xbf16> to vector<8x8xbf16>
    %cst_22 = arith.constant dense<0.000000e+00> : vector<8x1024xf32>
    %38 = tpu.matmul %37, %35, %cst_22 {dimension_numbers = #tpu.dot_dimension_numbers<[1], [0], [0], [1], [0, 0, 1, 1], [], []>} : vector<8x8xbf16>, vector<8x1024xbf16>, vector<8x1024xf32> -> vector<8x1024xf32>
    %39 = arith.addf %31, %38 : vector<8x1024xf32>
    %cst_23 = arith.constant 0.000000e+00 : f32
    %40 = vector.broadcast %cst_23 : f32 to vector<8x100xf32>
    %41 = vector.extract_strided_slice %6 {offsets = [0, 0], sizes = [8, 924], strides = [1, 1]} : vector<8x1024xf32> to vector<8x924xf32>
    %42 = tpu.concatenate %40, %41 in 1 : vector<8x100xf32>, vector<8x924xf32> -> vector<8x1024xf32>
    %43 = arith.truncf %42 : vector<8x1024xf32> to vector<8x1024xbf16>
    %44 = vector.extract_strided_slice %2 {offsets = [4, 0, 0], sizes = [1, 8, 8], strides = [1, 1, 1]} : vector<27x8x8xbf16> to vector<1x8x8xbf16>
    %45 = vector.shape_cast %44 : vector<1x8x8xbf16> to vector<8x8xbf16>
    %cst_24 = arith.constant dense<0.000000e+00> : vector<8x1024xf32>
    %46 = tpu.matmul %45, %43, %cst_24 {dimension_numbers = #tpu.dot_dimension_numbers<[1], [0], [0], [1], [0, 0, 1, 1], [], []>} : vector<8x8xbf16>, vector<8x1024xbf16>, vector<8x1024xf32> -> vector<8x1024xf32>
    %47 = arith.addf %39, %46 : vector<8x1024xf32>
    %cst_25 = arith.constant 0.000000e+00 : f32
    %48 = vector.broadcast %cst_25 : f32 to vector<8x99xf32>
    %49 = vector.extract_strided_slice %6 {offsets = [0, 0], sizes = [8, 925], strides = [1, 1]} : vector<8x1024xf32> to vector<8x925xf32>
    %50 = tpu.concatenate %48, %49 in 1 : vector<8x99xf32>, vector<8x925xf32> -> vector<8x1024xf32>
    %51 = arith.truncf %50 : vector<8x1024xf32> to vector<8x1024xbf16>
    %52 = vector.extract_strided_slice %2 {offsets = [5, 0, 0], sizes = [1, 8, 8], strides = [1, 1, 1]} : vector<27x8x8xbf16> to vector<1x8x8xbf16>
    %53 = vector.shape_cast %52 : vector<1x8x8xbf16> to vector<8x8xbf16>
    %cst_26 = arith.constant dense<0.000000e+00> : vector<8x1024xf32>
    %54 = tpu.matmul %53, %51, %cst_26 {dimension_numbers = #tpu.dot_dimension_numbers<[1], [0], [0], [1], [0, 0, 1, 1], [], []>} : vector<8x8xbf16>, vector<8x1024xbf16>, vector<8x1024xf32> -> vector<8x1024xf32>
    %55 = arith.addf %47, %54 : vector<8x1024xf32>
    %cst_27 = arith.constant 0.000000e+00 : f32
    %56 = vector.broadcast %cst_27 : f32 to vector<8x91xf32>
    %57 = vector.extract_strided_slice %6 {offsets = [0, 0], sizes = [8, 933], strides = [1, 1]} : vector<8x1024xf32> to vector<8x933xf32>
    %58 = tpu.concatenate %56, %57 in 1 : vector<8x91xf32>, vector<8x933xf32> -> vector<8x1024xf32>
    %59 = arith.truncf %58 : vector<8x1024xf32> to vector<8x1024xbf16>
    %60 = vector.extract_strided_slice %2 {offsets = [6, 0, 0], sizes = [1, 8, 8], strides = [1, 1, 1]} : vector<27x8x8xbf16> to vector<1x8x8xbf16>
    %61 = vector.shape_cast %60 : vector<1x8x8xbf16> to vector<8x8xbf16>
    %cst_28 = arith.constant dense<0.000000e+00> : vector<8x1024xf32>
    %62 = tpu.matmul %61, %59, %cst_28 {dimension_numbers = #tpu.dot_dimension_numbers<[1], [0], [0], [1], [0, 0, 1, 1], [], []>} : vector<8x8xbf16>, vector<8x1024xbf16>, vector<8x1024xf32> -> vector<8x1024xf32>
    %63 = arith.addf %55, %62 : vector<8x1024xf32>
    %cst_29 = arith.constant 0.000000e+00 : f32
    %64 = vector.broadcast %cst_29 : f32 to vector<8x90xf32>
    %65 = vector.extract_strided_slice %6 {offsets = [0, 0], sizes = [8, 934], strides = [1, 1]} : vector<8x1024xf32> to vector<8x934xf32>
    %66 = tpu.concatenate %64, %65 in 1 : vector<8x90xf32>, vector<8x934xf32> -> vector<8x1024xf32>
    %67 = arith.truncf %66 : vector<8x1024xf32> to vector<8x1024xbf16>
    %68 = vector.extract_strided_slice %2 {offsets = [7, 0, 0], sizes = [1, 8, 8], strides = [1, 1, 1]} : vector<27x8x8xbf16> to vector<1x8x8xbf16>
    %69 = vector.shape_cast %68 : vector<1x8x8xbf16> to vector<8x8xbf16>
    %cst_30 = arith.constant dense<0.000000e+00> : vector<8x1024xf32>
    %70 = tpu.matmul %69, %67, %cst_30 {dimension_numbers = #tpu.dot_dimension_numbers<[1], [0], [0], [1], [0, 0, 1, 1], [], []>} : vector<8x8xbf16>, vector<8x1024xbf16>, vector<8x1024xf32> -> vector<8x1024xf32>
    %71 = arith.addf %63, %70 : vector<8x1024xf32>
    %cst_31 = arith.constant 0.000000e+00 : f32
    %72 = vector.broadcast %cst_31 : f32 to vector<8x89xf32>
    %73 = vector.extract_strided_slice %6 {offsets = [0, 0], sizes = [8, 935], strides = [1, 1]} : vector<8x1024xf32> to vector<8x935xf32>
    %74 = tpu.concatenate %72, %73 in 1 : vector<8x89xf32>, vector<8x935xf32> -> vector<8x1024xf32>
    %75 = arith.truncf %74 : vector<8x1024xf32> to vector<8x1024xbf16>
    %76 = vector.extract_strided_slice %2 {offsets = [8, 0, 0], sizes = [1, 8, 8], strides = [1, 1, 1]} : vector<27x8x8xbf16> to vector<1x8x8xbf16>
    %77 = vector.shape_cast %76 : vector<1x8x8xbf16> to vector<8x8xbf16>
    %cst_32 = arith.constant dense<0.000000e+00> : vector<8x1024xf32>
    %78 = tpu.matmul %77, %75, %cst_32 {dimension_numbers = #tpu.dot_dimension_numbers<[1], [0], [0], [1], [0, 0, 1, 1], [], []>} : vector<8x8xbf16>, vector<8x1024xbf16>, vector<8x1024xf32> -> vector<8x1024xf32>
    %79 = arith.addf %71, %78 : vector<8x1024xf32>
    %cst_33 = arith.constant 0.000000e+00 : f32
    %80 = vector.broadcast %cst_33 : f32 to vector<8x11xf32>
    %81 = vector.extract_strided_slice %6 {offsets = [0, 0], sizes = [8, 1013], strides = [1, 1]} : vector<8x1024xf32> to vector<8x1013xf32>
    %82 = tpu.concatenate %80, %81 in 1 : vector<8x11xf32>, vector<8x1013xf32> -> vector<8x1024xf32>
    %83 = arith.truncf %82 : vector<8x1024xf32> to vector<8x1024xbf16>
    %84 = vector.extract_strided_slice %2 {offsets = [9, 0, 0], sizes = [1, 8, 8], strides = [1, 1, 1]} : vector<27x8x8xbf16> to vector<1x8x8xbf16>
    %85 = vector.shape_cast %84 : vector<1x8x8xbf16> to vector<8x8xbf16>
    %cst_34 = arith.constant dense<0.000000e+00> : vector<8x1024xf32>
    %86 = tpu.matmul %85, %83, %cst_34 {dimension_numbers = #tpu.dot_dimension_numbers<[1], [0], [0], [1], [0, 0, 1, 1], [], []>} : vector<8x8xbf16>, vector<8x1024xbf16>, vector<8x1024xf32> -> vector<8x1024xf32>
    %87 = arith.addf %79, %86 : vector<8x1024xf32>
    %cst_35 = arith.constant 0.000000e+00 : f32
    %88 = vector.broadcast %cst_35 : f32 to vector<8x10xf32>
    %89 = vector.extract_strided_slice %6 {offsets = [0, 0], sizes = [8, 1014], strides = [1, 1]} : vector<8x1024xf32> to vector<8x1014xf32>
    %90 = tpu.concatenate %88, %89 in 1 : vector<8x10xf32>, vector<8x1014xf32> -> vector<8x1024xf32>
    %91 = arith.truncf %90 : vector<8x1024xf32> to vector<8x1024xbf16>
    %92 = vector.extract_strided_slice %2 {offsets = [10, 0, 0], sizes = [1, 8, 8], strides = [1, 1, 1]} : vector<27x8x8xbf16> to vector<1x8x8xbf16>
    %93 = vector.shape_cast %92 : vector<1x8x8xbf16> to vector<8x8xbf16>
    %cst_36 = arith.constant dense<0.000000e+00> : vector<8x1024xf32>
    %94 = tpu.matmul %93, %91, %cst_36 {dimension_numbers = #tpu.dot_dimension_numbers<[1], [0], [0], [1], [0, 0, 1, 1], [], []>} : vector<8x8xbf16>, vector<8x1024xbf16>, vector<8x1024xf32> -> vector<8x1024xf32>
    %95 = arith.addf %87, %94 : vector<8x1024xf32>
    %cst_37 = arith.constant 0.000000e+00 : f32
    %96 = vector.broadcast %cst_37 : f32 to vector<8x9xf32>
    %97 = vector.extract_strided_slice %6 {offsets = [0, 0], sizes = [8, 1015], strides = [1, 1]} : vector<8x1024xf32> to vector<8x1015xf32>
    %98 = tpu.concatenate %96, %97 in 1 : vector<8x9xf32>, vector<8x1015xf32> -> vector<8x1024xf32>
    %99 = arith.truncf %98 : vector<8x1024xf32> to vector<8x1024xbf16>
    %100 = vector.extract_strided_slice %2 {offsets = [11, 0, 0], sizes = [1, 8, 8], strides = [1, 1, 1]} : vector<27x8x8xbf16> to vector<1x8x8xbf16>
    %101 = vector.shape_cast %100 : vector<1x8x8xbf16> to vector<8x8xbf16>
    %cst_38 = arith.constant dense<0.000000e+00> : vector<8x1024xf32>
    %102 = tpu.matmul %101, %99, %cst_38 {dimension_numbers = #tpu.dot_dimension_numbers<[1], [0], [0], [1], [0, 0, 1, 1], [], []>} : vector<8x8xbf16>, vector<8x1024xbf16>, vector<8x1024xf32> -> vector<8x1024xf32>
    %103 = arith.addf %95, %102 : vector<8x1024xf32>
    %cst_39 = arith.constant 0.000000e+00 : f32
    %104 = vector.broadcast %cst_39 : f32 to vector<8x1xf32>
    %105 = vector.extract_strided_slice %6 {offsets = [0, 0], sizes = [8, 1023], strides = [1, 1]} : vector<8x1024xf32> to vector<8x1023xf32>
    %106 = tpu.concatenate %104, %105 in 1 : vector<8x1xf32>, vector<8x1023xf32> -> vector<8x1024xf32>
    %107 = arith.truncf %106 : vector<8x1024xf32> to vector<8x1024xbf16>
    %108 = vector.extract_strided_slice %2 {offsets = [12, 0, 0], sizes = [1, 8, 8], strides = [1, 1, 1]} : vector<27x8x8xbf16> to vector<1x8x8xbf16>
    %109 = vector.shape_cast %108 : vector<1x8x8xbf16> to vector<8x8xbf16>
    %cst_40 = arith.constant dense<0.000000e+00> : vector<8x1024xf32>
    %110 = tpu.matmul %109, %107, %cst_40 {dimension_numbers = #tpu.dot_dimension_numbers<[1], [0], [0], [1], [0, 0, 1, 1], [], []>} : vector<8x8xbf16>, vector<8x1024xbf16>, vector<8x1024xf32> -> vector<8x1024xf32>
    %111 = arith.addf %103, %110 : vector<8x1024xf32>
    %112 = arith.truncf %6 : vector<8x1024xf32> to vector<8x1024xbf16>
    %113 = vector.extract_strided_slice %2 {offsets = [13, 0, 0], sizes = [1, 8, 8], strides = [1, 1, 1]} : vector<27x8x8xbf16> to vector<1x8x8xbf16>
    %114 = vector.shape_cast %113 : vector<1x8x8xbf16> to vector<8x8xbf16>
    %cst_41 = arith.constant dense<0.000000e+00> : vector<8x1024xf32>
    %115 = tpu.matmul %114, %112, %cst_41 {dimension_numbers = #tpu.dot_dimension_numbers<[1], [0], [0], [1], [0, 0, 1, 1], [], []>} : vector<8x8xbf16>, vector<8x1024xbf16>, vector<8x1024xf32> -> vector<8x1024xf32>
    %116 = arith.addf %111, %115 : vector<8x1024xf32>
    %117 = vector.extract_strided_slice %6 {offsets = [0, 1], sizes = [8, 1023], strides = [1, 1]} : vector<8x1024xf32> to vector<8x1023xf32>
    %cst_42 = arith.constant 0.000000e+00 : f32
    %118 = vector.broadcast %cst_42 : f32 to vector<8x1xf32>
    %119 = tpu.concatenate %117, %118 in 1 : vector<8x1023xf32>, vector<8x1xf32> -> vector<8x1024xf32>
    %120 = arith.truncf %119 : vector<8x1024xf32> to vector<8x1024xbf16>
    %121 = vector.extract_strided_slice %2 {offsets = [14, 0, 0], sizes = [1, 8, 8], strides = [1, 1, 1]} : vector<27x8x8xbf16> to vector<1x8x8xbf16>
    %122 = vector.shape_cast %121 : vector<1x8x8xbf16> to vector<8x8xbf16>
    %cst_43 = arith.constant dense<0.000000e+00> : vector<8x1024xf32>
    %123 = tpu.matmul %122, %120, %cst_43 {dimension_numbers = #tpu.dot_dimension_numbers<[1], [0], [0], [1], [0, 0, 1, 1], [], []>} : vector<8x8xbf16>, vector<8x1024xbf16>, vector<8x1024xf32> -> vector<8x1024xf32>
    %124 = arith.addf %116, %123 : vector<8x1024xf32>
    %125 = vector.extract_strided_slice %6 {offsets = [0, 9], sizes = [8, 1015], strides = [1, 1]} : vector<8x1024xf32> to vector<8x1015xf32>
    %cst_44 = arith.constant 0.000000e+00 : f32
    %126 = vector.broadcast %cst_44 : f32 to vector<8x9xf32>
    %127 = tpu.concatenate %125, %126 in 1 : vector<8x1015xf32>, vector<8x9xf32> -> vector<8x1024xf32>
    %128 = arith.truncf %127 : vector<8x1024xf32> to vector<8x1024xbf16>
    %129 = vector.extract_strided_slice %2 {offsets = [15, 0, 0], sizes = [1, 8, 8], strides = [1, 1, 1]} : vector<27x8x8xbf16> to vector<1x8x8xbf16>
    %130 = vector.shape_cast %129 : vector<1x8x8xbf16> to vector<8x8xbf16>
    %cst_45 = arith.constant dense<0.000000e+00> : vector<8x1024xf32>
    %131 = tpu.matmul %130, %128, %cst_45 {dimension_numbers = #tpu.dot_dimension_numbers<[1], [0], [0], [1], [0, 0, 1, 1], [], []>} : vector<8x8xbf16>, vector<8x1024xbf16>, vector<8x1024xf32> -> vector<8x1024xf32>
    %132 = arith.addf %124, %131 : vector<8x1024xf32>
    %133 = vector.extract_strided_slice %6 {offsets = [0, 10], sizes = [8, 1014], strides = [1, 1]} : vector<8x1024xf32> to vector<8x1014xf32>
    %cst_46 = arith.constant 0.000000e+00 : f32
    %134 = vector.broadcast %cst_46 : f32 to vector<8x10xf32>
    %135 = tpu.concatenate %133, %134 in 1 : vector<8x1014xf32>, vector<8x10xf32> -> vector<8x1024xf32>
    %136 = arith.truncf %135 : vector<8x1024xf32> to vector<8x1024xbf16>
    %137 = vector.extract_strided_slice %2 {offsets = [16, 0, 0], sizes = [1, 8, 8], strides = [1, 1, 1]} : vector<27x8x8xbf16> to vector<1x8x8xbf16>
    %138 = vector.shape_cast %137 : vector<1x8x8xbf16> to vector<8x8xbf16>
    %cst_47 = arith.constant dense<0.000000e+00> : vector<8x1024xf32>
    %139 = tpu.matmul %138, %136, %cst_47 {dimension_numbers = #tpu.dot_dimension_numbers<[1], [0], [0], [1], [0, 0, 1, 1], [], []>} : vector<8x8xbf16>, vector<8x1024xbf16>, vector<8x1024xf32> -> vector<8x1024xf32>
    %140 = arith.addf %132, %139 : vector<8x1024xf32>
    %141 = vector.extract_strided_slice %6 {offsets = [0, 11], sizes = [8, 1013], strides = [1, 1]} : vector<8x1024xf32> to vector<8x1013xf32>
    %cst_48 = arith.constant 0.000000e+00 : f32
    %142 = vector.broadcast %cst_48 : f32 to vector<8x11xf32>
    %143 = tpu.concatenate %141, %142 in 1 : vector<8x1013xf32>, vector<8x11xf32> -> vector<8x1024xf32>
    %144 = arith.truncf %143 : vector<8x1024xf32> to vector<8x1024xbf16>
    %145 = vector.extract_strided_slice %2 {offsets = [17, 0, 0], sizes = [1, 8, 8], strides = [1, 1, 1]} : vector<27x8x8xbf16> to vector<1x8x8xbf16>
    %146 = vector.shape_cast %145 : vector<1x8x8xbf16> to vector<8x8xbf16>
    %cst_49 = arith.constant dense<0.000000e+00> : vector<8x1024xf32>
    %147 = tpu.matmul %146, %144, %cst_49 {dimension_numbers = #tpu.dot_dimension_numbers<[1], [0], [0], [1], [0, 0, 1, 1], [], []>} : vector<8x8xbf16>, vector<8x1024xbf16>, vector<8x1024xf32> -> vector<8x1024xf32>
    %148 = arith.addf %140, %147 : vector<8x1024xf32>
    %149 = vector.extract_strided_slice %6 {offsets = [0, 89], sizes = [8, 935], strides = [1, 1]} : vector<8x1024xf32> to vector<8x935xf32>
    %cst_50 = arith.constant 0.000000e+00 : f32
    %150 = vector.broadcast %cst_50 : f32 to vector<8x89xf32>
    %151 = tpu.concatenate %149, %150 in 1 : vector<8x935xf32>, vector<8x89xf32> -> vector<8x1024xf32>
    %152 = arith.truncf %151 : vector<8x1024xf32> to vector<8x1024xbf16>
    %153 = vector.extract_strided_slice %2 {offsets = [18, 0, 0], sizes = [1, 8, 8], strides = [1, 1, 1]} : vector<27x8x8xbf16> to vector<1x8x8xbf16>
    %154 = vector.shape_cast %153 : vector<1x8x8xbf16> to vector<8x8xbf16>
    %cst_51 = arith.constant dense<0.000000e+00> : vector<8x1024xf32>
    %155 = tpu.matmul %154, %152, %cst_51 {dimension_numbers = #tpu.dot_dimension_numbers<[1], [0], [0], [1], [0, 0, 1, 1], [], []>} : vector<8x8xbf16>, vector<8x1024xbf16>, vector<8x1024xf32> -> vector<8x1024xf32>
    %156 = arith.addf %148, %155 : vector<8x1024xf32>
    %157 = vector.extract_strided_slice %6 {offsets = [0, 90], sizes = [8, 934], strides = [1, 1]} : vector<8x1024xf32> to vector<8x934xf32>
    %cst_52 = arith.constant 0.000000e+00 : f32
    %158 = vector.broadcast %cst_52 : f32 to vector<8x90xf32>
    %159 = tpu.concatenate %157, %158 in 1 : vector<8x934xf32>, vector<8x90xf32> -> vector<8x1024xf32>
    %160 = arith.truncf %159 : vector<8x1024xf32> to vector<8x1024xbf16>
    %161 = vector.extract_strided_slice %2 {offsets = [19, 0, 0], sizes = [1, 8, 8], strides = [1, 1, 1]} : vector<27x8x8xbf16> to vector<1x8x8xbf16>
    %162 = vector.shape_cast %161 : vector<1x8x8xbf16> to vector<8x8xbf16>
    %cst_53 = arith.constant dense<0.000000e+00> : vector<8x1024xf32>
    %163 = tpu.matmul %162, %160, %cst_53 {dimension_numbers = #tpu.dot_dimension_numbers<[1], [0], [0], [1], [0, 0, 1, 1], [], []>} : vector<8x8xbf16>, vector<8x1024xbf16>, vector<8x1024xf32> -> vector<8x1024xf32>
    %164 = arith.addf %156, %163 : vector<8x1024xf32>
    %165 = vector.extract_strided_slice %6 {offsets = [0, 91], sizes = [8, 933], strides = [1, 1]} : vector<8x1024xf32> to vector<8x933xf32>
    %cst_54 = arith.constant 0.000000e+00 : f32
    %166 = vector.broadcast %cst_54 : f32 to vector<8x91xf32>
    %167 = tpu.concatenate %165, %166 in 1 : vector<8x933xf32>, vector<8x91xf32> -> vector<8x1024xf32>
    %168 = arith.truncf %167 : vector<8x1024xf32> to vector<8x1024xbf16>
    %169 = vector.extract_strided_slice %2 {offsets = [20, 0, 0], sizes = [1, 8, 8], strides = [1, 1, 1]} : vector<27x8x8xbf16> to vector<1x8x8xbf16>
    %170 = vector.shape_cast %169 : vector<1x8x8xbf16> to vector<8x8xbf16>
    %cst_55 = arith.constant dense<0.000000e+00> : vector<8x1024xf32>
    %171 = tpu.matmul %170, %168, %cst_55 {dimension_numbers = #tpu.dot_dimension_numbers<[1], [0], [0], [1], [0, 0, 1, 1], [], []>} : vector<8x8xbf16>, vector<8x1024xbf16>, vector<8x1024xf32> -> vector<8x1024xf32>
    %172 = arith.addf %164, %171 : vector<8x1024xf32>
    %173 = vector.extract_strided_slice %6 {offsets = [0, 99], sizes = [8, 925], strides = [1, 1]} : vector<8x1024xf32> to vector<8x925xf32>
    %cst_56 = arith.constant 0.000000e+00 : f32
    %174 = vector.broadcast %cst_56 : f32 to vector<8x99xf32>
    %175 = tpu.concatenate %173, %174 in 1 : vector<8x925xf32>, vector<8x99xf32> -> vector<8x1024xf32>
    %176 = arith.truncf %175 : vector<8x1024xf32> to vector<8x1024xbf16>
    %177 = vector.extract_strided_slice %2 {offsets = [21, 0, 0], sizes = [1, 8, 8], strides = [1, 1, 1]} : vector<27x8x8xbf16> to vector<1x8x8xbf16>
    %178 = vector.shape_cast %177 : vector<1x8x8xbf16> to vector<8x8xbf16>
    %cst_57 = arith.constant dense<0.000000e+00> : vector<8x1024xf32>
    %179 = tpu.matmul %178, %176, %cst_57 {dimension_numbers = #tpu.dot_dimension_numbers<[1], [0], [0], [1], [0, 0, 1, 1], [], []>} : vector<8x8xbf16>, vector<8x1024xbf16>, vector<8x1024xf32> -> vector<8x1024xf32>
    %180 = arith.addf %172, %179 : vector<8x1024xf32>
    %181 = vector.extract_strided_slice %6 {offsets = [0, 100], sizes = [8, 924], strides = [1, 1]} : vector<8x1024xf32> to vector<8x924xf32>
    %cst_58 = arith.constant 0.000000e+00 : f32
    %182 = vector.broadcast %cst_58 : f32 to vector<8x100xf32>
    %183 = tpu.concatenate %181, %182 in 1 : vector<8x924xf32>, vector<8x100xf32> -> vector<8x1024xf32>
    %184 = arith.truncf %183 : vector<8x1024xf32> to vector<8x1024xbf16>
    %185 = vector.extract_strided_slice %2 {offsets = [22, 0, 0], sizes = [1, 8, 8], strides = [1, 1, 1]} : vector<27x8x8xbf16> to vector<1x8x8xbf16>
    %186 = vector.shape_cast %185 : vector<1x8x8xbf16> to vector<8x8xbf16>
    %cst_59 = arith.constant dense<0.000000e+00> : vector<8x1024xf32>
    %187 = tpu.matmul %186, %184, %cst_59 {dimension_numbers = #tpu.dot_dimension_numbers<[1], [0], [0], [1], [0, 0, 1, 1], [], []>} : vector<8x8xbf16>, vector<8x1024xbf16>, vector<8x1024xf32> -> vector<8x1024xf32>
    %188 = arith.addf %180, %187 : vector<8x1024xf32>
    %189 = vector.extract_strided_slice %6 {offsets = [0, 101], sizes = [8, 923], strides = [1, 1]} : vector<8x1024xf32> to vector<8x923xf32>
    %cst_60 = arith.constant 0.000000e+00 : f32
    %190 = vector.broadcast %cst_60 : f32 to vector<8x101xf32>
    %191 = tpu.concatenate %189, %190 in 1 : vector<8x923xf32>, vector<8x101xf32> -> vector<8x1024xf32>
    %192 = arith.truncf %191 : vector<8x1024xf32> to vector<8x1024xbf16>
    %193 = vector.extract_strided_slice %2 {offsets = [23, 0, 0], sizes = [1, 8, 8], strides = [1, 1, 1]} : vector<27x8x8xbf16> to vector<1x8x8xbf16>
    %194 = vector.shape_cast %193 : vector<1x8x8xbf16> to vector<8x8xbf16>
    %cst_61 = arith.constant dense<0.000000e+00> : vector<8x1024xf32>
    %195 = tpu.matmul %194, %192, %cst_61 {dimension_numbers = #tpu.dot_dimension_numbers<[1], [0], [0], [1], [0, 0, 1, 1], [], []>} : vector<8x8xbf16>, vector<8x1024xbf16>, vector<8x1024xf32> -> vector<8x1024xf32>
    %196 = arith.addf %188, %195 : vector<8x1024xf32>
    %197 = vector.extract_strided_slice %6 {offsets = [0, 109], sizes = [8, 915], strides = [1, 1]} : vector<8x1024xf32> to vector<8x915xf32>
    %cst_62 = arith.constant 0.000000e+00 : f32
    %198 = vector.broadcast %cst_62 : f32 to vector<8x109xf32>
    %199 = tpu.concatenate %197, %198 in 1 : vector<8x915xf32>, vector<8x109xf32> -> vector<8x1024xf32>
    %200 = arith.truncf %199 : vector<8x1024xf32> to vector<8x1024xbf16>
    %201 = vector.extract_strided_slice %2 {offsets = [24, 0, 0], sizes = [1, 8, 8], strides = [1, 1, 1]} : vector<27x8x8xbf16> to vector<1x8x8xbf16>
    %202 = vector.shape_cast %201 : vector<1x8x8xbf16> to vector<8x8xbf16>
    %cst_63 = arith.constant dense<0.000000e+00> : vector<8x1024xf32>
    %203 = tpu.matmul %202, %200, %cst_63 {dimension_numbers = #tpu.dot_dimension_numbers<[1], [0], [0], [1], [0, 0, 1, 1], [], []>} : vector<8x8xbf16>, vector<8x1024xbf16>, vector<8x1024xf32> -> vector<8x1024xf32>
    %204 = arith.addf %196, %203 : vector<8x1024xf32>
    %205 = vector.extract_strided_slice %6 {offsets = [0, 110], sizes = [8, 914], strides = [1, 1]} : vector<8x1024xf32> to vector<8x914xf32>
    %cst_64 = arith.constant 0.000000e+00 : f32
    %206 = vector.broadcast %cst_64 : f32 to vector<8x110xf32>
    %207 = tpu.concatenate %205, %206 in 1 : vector<8x914xf32>, vector<8x110xf32> -> vector<8x1024xf32>
    %208 = arith.truncf %207 : vector<8x1024xf32> to vector<8x1024xbf16>
    %209 = vector.extract_strided_slice %2 {offsets = [25, 0, 0], sizes = [1, 8, 8], strides = [1, 1, 1]} : vector<27x8x8xbf16> to vector<1x8x8xbf16>
    %210 = vector.shape_cast %209 : vector<1x8x8xbf16> to vector<8x8xbf16>
    %cst_65 = arith.constant dense<0.000000e+00> : vector<8x1024xf32>
    %211 = tpu.matmul %210, %208, %cst_65 {dimension_numbers = #tpu.dot_dimension_numbers<[1], [0], [0], [1], [0, 0, 1, 1], [], []>} : vector<8x8xbf16>, vector<8x1024xbf16>, vector<8x1024xf32> -> vector<8x1024xf32>
    %212 = arith.addf %204, %211 : vector<8x1024xf32>
    %213 = vector.extract_strided_slice %6 {offsets = [0, 111], sizes = [8, 913], strides = [1, 1]} : vector<8x1024xf32> to vector<8x913xf32>
    %cst_66 = arith.constant 0.000000e+00 : f32
    %214 = vector.broadcast %cst_66 : f32 to vector<8x111xf32>
    %215 = tpu.concatenate %213, %214 in 1 : vector<8x913xf32>, vector<8x111xf32> -> vector<8x1024xf32>
    %216 = arith.truncf %215 : vector<8x1024xf32> to vector<8x1024xbf16>
    %217 = vector.extract_strided_slice %2 {offsets = [26, 0, 0], sizes = [1, 8, 8], strides = [1, 1, 1]} : vector<27x8x8xbf16> to vector<1x8x8xbf16>
    %218 = vector.shape_cast %217 : vector<1x8x8xbf16> to vector<8x8xbf16>
    %cst_67 = arith.constant dense<0.000000e+00> : vector<8x1024xf32>
    %219 = tpu.matmul %218, %216, %cst_67 {dimension_numbers = #tpu.dot_dimension_numbers<[1], [0], [0], [1], [0, 0, 1, 1], [], []>} : vector<8x8xbf16>, vector<8x1024xbf16>, vector<8x1024xf32> -> vector<8x1024xf32>
    %220 = arith.addf %212, %219 : vector<8x1024xf32>
    %221 = vector.broadcast %0 : vector<1x1024xf32> to vector<8x1024xf32>
    %222 = arith.mulf %220, %221 : vector<8x1024xf32>
    %cst_68 = arith.constant dense<0.000000e+00> : vector<8xf32>
    %223 = vector.multi_reduction <add>, %222, %cst_68 [1] : vector<8x1024xf32> to vector<8xf32>
    %224 = vector.shape_cast %223 : vector<8xf32> to vector<8x1xf32>
    %cst_69 = arith.constant 0.001953125 : f32
    %225 = vector.broadcast %cst_69 : f32 to vector<8x1xf32>
    %226 = arith.mulf %224, %225 : vector<8x1xf32>
    %227 = vector.broadcast %226 : vector<8x1xf32> to vector<8x1024xf32>
    %228 = arith.subf %220, %227 : vector<8x1024xf32>
    %229 = arith.mulf %228, %228 : vector<8x1024xf32>
    %230 = vector.broadcast %0 : vector<1x1024xf32> to vector<8x1024xf32>
    %231 = arith.mulf %229, %230 : vector<8x1024xf32>
    %cst_70 = arith.constant dense<0.000000e+00> : vector<8xf32>
    %232 = vector.multi_reduction <add>, %231, %cst_70 [1] : vector<8x1024xf32> to vector<8xf32>
    %233 = vector.shape_cast %232 : vector<8xf32> to vector<8x1xf32>
    %cst_71 = arith.constant 0.001953125 : f32
    %234 = vector.broadcast %cst_71 : f32 to vector<8x1xf32>
    %235 = arith.mulf %233, %234 : vector<8x1xf32>
    %cst_72 = arith.constant 9.99999974E-6 : f32
    %236 = vector.broadcast %cst_72 : f32 to vector<8x1xf32>
    %237 = arith.addf %235, %236 : vector<8x1xf32>
    %238 = math.rsqrt %237 : vector<8x1xf32>
    %239 = vector.broadcast %238 : vector<8x1xf32> to vector<8x1024xf32>
    %240 = arith.mulf %228, %239 : vector<8x1024xf32>
    %241 = vector.extract_strided_slice %1 {offsets = [0, 0, 0, 0], sizes = [1, 1, 8, 1], strides = [1, 1, 1, 1]} : vector<2x2x8x1xf32> to vector<1x1x8x1xf32>
    %242 = vector.shape_cast %241 : vector<1x1x8x1xf32> to vector<8x1xf32>
    %243 = vector.broadcast %242 : vector<8x1xf32> to vector<8x1024xf32>
    %244 = arith.mulf %240, %243 : vector<8x1024xf32>
    %245 = vector.extract_strided_slice %1 {offsets = [0, 1, 0, 0], sizes = [1, 1, 8, 1], strides = [1, 1, 1, 1]} : vector<2x2x8x1xf32> to vector<1x1x8x1xf32>
    %246 = vector.shape_cast %245 : vector<1x1x8x1xf32> to vector<8x1xf32>
    %247 = vector.broadcast %246 : vector<8x1xf32> to vector<8x1024xf32>
    %248 = arith.addf %244, %247 : vector<8x1024xf32>
    %cst_73 = arith.constant 0.000000e+00 : f32
    %249 = vector.broadcast %cst_73 : f32 to vector<8x1024xf32>
    %250 = arith.cmpf ogt, %248, %249 : vector<8x1024xf32>
    %cst_74 = arith.constant 0.00999999977 : f32
    %251 = vector.broadcast %cst_74 : f32 to vector<8x1024xf32>
    %252 = arith.mulf %251, %248 : vector<8x1024xf32>
    %253 = arith.select %250, %248, %252 : vector<8x1024xi1>, vector<8x1024xf32>
    %254 = vector.broadcast %0 : vector<1x1024xf32> to vector<8x1024xf32>
    %255 = arith.mulf %253, %254 : vector<8x1024xf32>
    %256 = vector.shape_cast %3 : vector<1x27x8x8xbf16> to vector<27x8x8xbf16>
    %cst_75 = arith.constant 0.000000e+00 : f32
    %257 = vector.broadcast %cst_75 : f32 to vector<8x1024xf32>
    %cst_76 = arith.constant 0.000000e+00 : f32
    %258 = vector.broadcast %cst_76 : f32 to vector<8x111xf32>
    %259 = vector.extract_strided_slice %255 {offsets = [0, 0], sizes = [8, 913], strides = [1, 1]} : vector<8x1024xf32> to vector<8x913xf32>
    %260 = tpu.concatenate %258, %259 in 1 : vector<8x111xf32>, vector<8x913xf32> -> vector<8x1024xf32>
    %261 = arith.truncf %260 : vector<8x1024xf32> to vector<8x1024xbf16>
    %262 = vector.extract_strided_slice %256 {offsets = [0, 0, 0], sizes = [1, 8, 8], strides = [1, 1, 1]} : vector<27x8x8xbf16> to vector<1x8x8xbf16>
    %263 = vector.shape_cast %262 : vector<1x8x8xbf16> to vector<8x8xbf16>
    %cst_77 = arith.constant dense<0.000000e+00> : vector<8x1024xf32>
    %264 = tpu.matmul %263, %261, %cst_77 {dimension_numbers = #tpu.dot_dimension_numbers<[1], [0], [0], [1], [0, 0, 1, 1], [], []>} : vector<8x8xbf16>, vector<8x1024xbf16>, vector<8x1024xf32> -> vector<8x1024xf32>
    %265 = arith.addf %257, %264 : vector<8x1024xf32>
    %cst_78 = arith.constant 0.000000e+00 : f32
    %266 = vector.broadcast %cst_78 : f32 to vector<8x110xf32>
    %267 = vector.extract_strided_slice %255 {offsets = [0, 0], sizes = [8, 914], strides = [1, 1]} : vector<8x1024xf32> to vector<8x914xf32>
    %268 = tpu.concatenate %266, %267 in 1 : vector<8x110xf32>, vector<8x914xf32> -> vector<8x1024xf32>
    %269 = arith.truncf %268 : vector<8x1024xf32> to vector<8x1024xbf16>
    %270 = vector.extract_strided_slice %256 {offsets = [1, 0, 0], sizes = [1, 8, 8], strides = [1, 1, 1]} : vector<27x8x8xbf16> to vector<1x8x8xbf16>
    %271 = vector.shape_cast %270 : vector<1x8x8xbf16> to vector<8x8xbf16>
    %cst_79 = arith.constant dense<0.000000e+00> : vector<8x1024xf32>
    %272 = tpu.matmul %271, %269, %cst_79 {dimension_numbers = #tpu.dot_dimension_numbers<[1], [0], [0], [1], [0, 0, 1, 1], [], []>} : vector<8x8xbf16>, vector<8x1024xbf16>, vector<8x1024xf32> -> vector<8x1024xf32>
    %273 = arith.addf %265, %272 : vector<8x1024xf32>
    %cst_80 = arith.constant 0.000000e+00 : f32
    %274 = vector.broadcast %cst_80 : f32 to vector<8x109xf32>
    %275 = vector.extract_strided_slice %255 {offsets = [0, 0], sizes = [8, 915], strides = [1, 1]} : vector<8x1024xf32> to vector<8x915xf32>
    %276 = tpu.concatenate %274, %275 in 1 : vector<8x109xf32>, vector<8x915xf32> -> vector<8x1024xf32>
    %277 = arith.truncf %276 : vector<8x1024xf32> to vector<8x1024xbf16>
    %278 = vector.extract_strided_slice %256 {offsets = [2, 0, 0], sizes = [1, 8, 8], strides = [1, 1, 1]} : vector<27x8x8xbf16> to vector<1x8x8xbf16>
    %279 = vector.shape_cast %278 : vector<1x8x8xbf16> to vector<8x8xbf16>
    %cst_81 = arith.constant dense<0.000000e+00> : vector<8x1024xf32>
    %280 = tpu.matmul %279, %277, %cst_81 {dimension_numbers = #tpu.dot_dimension_numbers<[1], [0], [0], [1], [0, 0, 1, 1], [], []>} : vector<8x8xbf16>, vector<8x1024xbf16>, vector<8x1024xf32> -> vector<8x1024xf32>
    %281 = arith.addf %273, %280 : vector<8x1024xf32>
    %cst_82 = arith.constant 0.000000e+00 : f32
    %282 = vector.broadcast %cst_82 : f32 to vector<8x101xf32>
    %283 = vector.extract_strided_slice %255 {offsets = [0, 0], sizes = [8, 923], strides = [1, 1]} : vector<8x1024xf32> to vector<8x923xf32>
    %284 = tpu.concatenate %282, %283 in 1 : vector<8x101xf32>, vector<8x923xf32> -> vector<8x1024xf32>
    %285 = arith.truncf %284 : vector<8x1024xf32> to vector<8x1024xbf16>
    %286 = vector.extract_strided_slice %256 {offsets = [3, 0, 0], sizes = [1, 8, 8], strides = [1, 1, 1]} : vector<27x8x8xbf16> to vector<1x8x8xbf16>
    %287 = vector.shape_cast %286 : vector<1x8x8xbf16> to vector<8x8xbf16>
    %cst_83 = arith.constant dense<0.000000e+00> : vector<8x1024xf32>
    %288 = tpu.matmul %287, %285, %cst_83 {dimension_numbers = #tpu.dot_dimension_numbers<[1], [0], [0], [1], [0, 0, 1, 1], [], []>} : vector<8x8xbf16>, vector<8x1024xbf16>, vector<8x1024xf32> -> vector<8x1024xf32>
    %289 = arith.addf %281, %288 : vector<8x1024xf32>
    %cst_84 = arith.constant 0.000000e+00 : f32
    %290 = vector.broadcast %cst_84 : f32 to vector<8x100xf32>
    %291 = vector.extract_strided_slice %255 {offsets = [0, 0], sizes = [8, 924], strides = [1, 1]} : vector<8x1024xf32> to vector<8x924xf32>
    %292 = tpu.concatenate %290, %291 in 1 : vector<8x100xf32>, vector<8x924xf32> -> vector<8x1024xf32>
    %293 = arith.truncf %292 : vector<8x1024xf32> to vector<8x1024xbf16>
    %294 = vector.extract_strided_slice %256 {offsets = [4, 0, 0], sizes = [1, 8, 8], strides = [1, 1, 1]} : vector<27x8x8xbf16> to vector<1x8x8xbf16>
    %295 = vector.shape_cast %294 : vector<1x8x8xbf16> to vector<8x8xbf16>
    %cst_85 = arith.constant dense<0.000000e+00> : vector<8x1024xf32>
    %296 = tpu.matmul %295, %293, %cst_85 {dimension_numbers = #tpu.dot_dimension_numbers<[1], [0], [0], [1], [0, 0, 1, 1], [], []>} : vector<8x8xbf16>, vector<8x1024xbf16>, vector<8x1024xf32> -> vector<8x1024xf32>
    %297 = arith.addf %289, %296 : vector<8x1024xf32>
    %cst_86 = arith.constant 0.000000e+00 : f32
    %298 = vector.broadcast %cst_86 : f32 to vector<8x99xf32>
    %299 = vector.extract_strided_slice %255 {offsets = [0, 0], sizes = [8, 925], strides = [1, 1]} : vector<8x1024xf32> to vector<8x925xf32>
    %300 = tpu.concatenate %298, %299 in 1 : vector<8x99xf32>, vector<8x925xf32> -> vector<8x1024xf32>
    %301 = arith.truncf %300 : vector<8x1024xf32> to vector<8x1024xbf16>
    %302 = vector.extract_strided_slice %256 {offsets = [5, 0, 0], sizes = [1, 8, 8], strides = [1, 1, 1]} : vector<27x8x8xbf16> to vector<1x8x8xbf16>
    %303 = vector.shape_cast %302 : vector<1x8x8xbf16> to vector<8x8xbf16>
    %cst_87 = arith.constant dense<0.000000e+00> : vector<8x1024xf32>
    %304 = tpu.matmul %303, %301, %cst_87 {dimension_numbers = #tpu.dot_dimension_numbers<[1], [0], [0], [1], [0, 0, 1, 1], [], []>} : vector<8x8xbf16>, vector<8x1024xbf16>, vector<8x1024xf32> -> vector<8x1024xf32>
    %305 = arith.addf %297, %304 : vector<8x1024xf32>
    %cst_88 = arith.constant 0.000000e+00 : f32
    %306 = vector.broadcast %cst_88 : f32 to vector<8x91xf32>
    %307 = vector.extract_strided_slice %255 {offsets = [0, 0], sizes = [8, 933], strides = [1, 1]} : vector<8x1024xf32> to vector<8x933xf32>
    %308 = tpu.concatenate %306, %307 in 1 : vector<8x91xf32>, vector<8x933xf32> -> vector<8x1024xf32>
    %309 = arith.truncf %308 : vector<8x1024xf32> to vector<8x1024xbf16>
    %310 = vector.extract_strided_slice %256 {offsets = [6, 0, 0], sizes = [1, 8, 8], strides = [1, 1, 1]} : vector<27x8x8xbf16> to vector<1x8x8xbf16>
    %311 = vector.shape_cast %310 : vector<1x8x8xbf16> to vector<8x8xbf16>
    %cst_89 = arith.constant dense<0.000000e+00> : vector<8x1024xf32>
    %312 = tpu.matmul %311, %309, %cst_89 {dimension_numbers = #tpu.dot_dimension_numbers<[1], [0], [0], [1], [0, 0, 1, 1], [], []>} : vector<8x8xbf16>, vector<8x1024xbf16>, vector<8x1024xf32> -> vector<8x1024xf32>
    %313 = arith.addf %305, %312 : vector<8x1024xf32>
    %cst_90 = arith.constant 0.000000e+00 : f32
    %314 = vector.broadcast %cst_90 : f32 to vector<8x90xf32>
    %315 = vector.extract_strided_slice %255 {offsets = [0, 0], sizes = [8, 934], strides = [1, 1]} : vector<8x1024xf32> to vector<8x934xf32>
    %316 = tpu.concatenate %314, %315 in 1 : vector<8x90xf32>, vector<8x934xf32> -> vector<8x1024xf32>
    %317 = arith.truncf %316 : vector<8x1024xf32> to vector<8x1024xbf16>
    %318 = vector.extract_strided_slice %256 {offsets = [7, 0, 0], sizes = [1, 8, 8], strides = [1, 1, 1]} : vector<27x8x8xbf16> to vector<1x8x8xbf16>
    %319 = vector.shape_cast %318 : vector<1x8x8xbf16> to vector<8x8xbf16>
    %cst_91 = arith.constant dense<0.000000e+00> : vector<8x1024xf32>
    %320 = tpu.matmul %319, %317, %cst_91 {dimension_numbers = #tpu.dot_dimension_numbers<[1], [0], [0], [1], [0, 0, 1, 1], [], []>} : vector<8x8xbf16>, vector<8x1024xbf16>, vector<8x1024xf32> -> vector<8x1024xf32>
    %321 = arith.addf %313, %320 : vector<8x1024xf32>
    %cst_92 = arith.constant 0.000000e+00 : f32
    %322 = vector.broadcast %cst_92 : f32 to vector<8x89xf32>
    %323 = vector.extract_strided_slice %255 {offsets = [0, 0], sizes = [8, 935], strides = [1, 1]} : vector<8x1024xf32> to vector<8x935xf32>
    %324 = tpu.concatenate %322, %323 in 1 : vector<8x89xf32>, vector<8x935xf32> -> vector<8x1024xf32>
    %325 = arith.truncf %324 : vector<8x1024xf32> to vector<8x1024xbf16>
    %326 = vector.extract_strided_slice %256 {offsets = [8, 0, 0], sizes = [1, 8, 8], strides = [1, 1, 1]} : vector<27x8x8xbf16> to vector<1x8x8xbf16>
    %327 = vector.shape_cast %326 : vector<1x8x8xbf16> to vector<8x8xbf16>
    %cst_93 = arith.constant dense<0.000000e+00> : vector<8x1024xf32>
    %328 = tpu.matmul %327, %325, %cst_93 {dimension_numbers = #tpu.dot_dimension_numbers<[1], [0], [0], [1], [0, 0, 1, 1], [], []>} : vector<8x8xbf16>, vector<8x1024xbf16>, vector<8x1024xf32> -> vector<8x1024xf32>
    %329 = arith.addf %321, %328 : vector<8x1024xf32>
    %cst_94 = arith.constant 0.000000e+00 : f32
    %330 = vector.broadcast %cst_94 : f32 to vector<8x11xf32>
    %331 = vector.extract_strided_slice %255 {offsets = [0, 0], sizes = [8, 1013], strides = [1, 1]} : vector<8x1024xf32> to vector<8x1013xf32>
    %332 = tpu.concatenate %330, %331 in 1 : vector<8x11xf32>, vector<8x1013xf32> -> vector<8x1024xf32>
    %333 = arith.truncf %332 : vector<8x1024xf32> to vector<8x1024xbf16>
    %334 = vector.extract_strided_slice %256 {offsets = [9, 0, 0], sizes = [1, 8, 8], strides = [1, 1, 1]} : vector<27x8x8xbf16> to vector<1x8x8xbf16>
    %335 = vector.shape_cast %334 : vector<1x8x8xbf16> to vector<8x8xbf16>
    %cst_95 = arith.constant dense<0.000000e+00> : vector<8x1024xf32>
    %336 = tpu.matmul %335, %333, %cst_95 {dimension_numbers = #tpu.dot_dimension_numbers<[1], [0], [0], [1], [0, 0, 1, 1], [], []>} : vector<8x8xbf16>, vector<8x1024xbf16>, vector<8x1024xf32> -> vector<8x1024xf32>
    %337 = arith.addf %329, %336 : vector<8x1024xf32>
    %cst_96 = arith.constant 0.000000e+00 : f32
    %338 = vector.broadcast %cst_96 : f32 to vector<8x10xf32>
    %339 = vector.extract_strided_slice %255 {offsets = [0, 0], sizes = [8, 1014], strides = [1, 1]} : vector<8x1024xf32> to vector<8x1014xf32>
    %340 = tpu.concatenate %338, %339 in 1 : vector<8x10xf32>, vector<8x1014xf32> -> vector<8x1024xf32>
    %341 = arith.truncf %340 : vector<8x1024xf32> to vector<8x1024xbf16>
    %342 = vector.extract_strided_slice %256 {offsets = [10, 0, 0], sizes = [1, 8, 8], strides = [1, 1, 1]} : vector<27x8x8xbf16> to vector<1x8x8xbf16>
    %343 = vector.shape_cast %342 : vector<1x8x8xbf16> to vector<8x8xbf16>
    %cst_97 = arith.constant dense<0.000000e+00> : vector<8x1024xf32>
    %344 = tpu.matmul %343, %341, %cst_97 {dimension_numbers = #tpu.dot_dimension_numbers<[1], [0], [0], [1], [0, 0, 1, 1], [], []>} : vector<8x8xbf16>, vector<8x1024xbf16>, vector<8x1024xf32> -> vector<8x1024xf32>
    %345 = arith.addf %337, %344 : vector<8x1024xf32>
    %cst_98 = arith.constant 0.000000e+00 : f32
    %346 = vector.broadcast %cst_98 : f32 to vector<8x9xf32>
    %347 = vector.extract_strided_slice %255 {offsets = [0, 0], sizes = [8, 1015], strides = [1, 1]} : vector<8x1024xf32> to vector<8x1015xf32>
    %348 = tpu.concatenate %346, %347 in 1 : vector<8x9xf32>, vector<8x1015xf32> -> vector<8x1024xf32>
    %349 = arith.truncf %348 : vector<8x1024xf32> to vector<8x1024xbf16>
    %350 = vector.extract_strided_slice %256 {offsets = [11, 0, 0], sizes = [1, 8, 8], strides = [1, 1, 1]} : vector<27x8x8xbf16> to vector<1x8x8xbf16>
    %351 = vector.shape_cast %350 : vector<1x8x8xbf16> to vector<8x8xbf16>
    %cst_99 = arith.constant dense<0.000000e+00> : vector<8x1024xf32>
    %352 = tpu.matmul %351, %349, %cst_99 {dimension_numbers = #tpu.dot_dimension_numbers<[1], [0], [0], [1], [0, 0, 1, 1], [], []>} : vector<8x8xbf16>, vector<8x1024xbf16>, vector<8x1024xf32> -> vector<8x1024xf32>
    %353 = arith.addf %345, %352 : vector<8x1024xf32>
    %cst_100 = arith.constant 0.000000e+00 : f32
    %354 = vector.broadcast %cst_100 : f32 to vector<8x1xf32>
    %355 = vector.extract_strided_slice %255 {offsets = [0, 0], sizes = [8, 1023], strides = [1, 1]} : vector<8x1024xf32> to vector<8x1023xf32>
    %356 = tpu.concatenate %354, %355 in 1 : vector<8x1xf32>, vector<8x1023xf32> -> vector<8x1024xf32>
    %357 = arith.truncf %356 : vector<8x1024xf32> to vector<8x1024xbf16>
    %358 = vector.extract_strided_slice %256 {offsets = [12, 0, 0], sizes = [1, 8, 8], strides = [1, 1, 1]} : vector<27x8x8xbf16> to vector<1x8x8xbf16>
    %359 = vector.shape_cast %358 : vector<1x8x8xbf16> to vector<8x8xbf16>
    %cst_101 = arith.constant dense<0.000000e+00> : vector<8x1024xf32>
    %360 = tpu.matmul %359, %357, %cst_101 {dimension_numbers = #tpu.dot_dimension_numbers<[1], [0], [0], [1], [0, 0, 1, 1], [], []>} : vector<8x8xbf16>, vector<8x1024xbf16>, vector<8x1024xf32> -> vector<8x1024xf32>
    %361 = arith.addf %353, %360 : vector<8x1024xf32>
    %362 = arith.truncf %255 : vector<8x1024xf32> to vector<8x1024xbf16>
    %363 = vector.extract_strided_slice %256 {offsets = [13, 0, 0], sizes = [1, 8, 8], strides = [1, 1, 1]} : vector<27x8x8xbf16> to vector<1x8x8xbf16>
    %364 = vector.shape_cast %363 : vector<1x8x8xbf16> to vector<8x8xbf16>
    %cst_102 = arith.constant dense<0.000000e+00> : vector<8x1024xf32>
    %365 = tpu.matmul %364, %362, %cst_102 {dimension_numbers = #tpu.dot_dimension_numbers<[1], [0], [0], [1], [0, 0, 1, 1], [], []>} : vector<8x8xbf16>, vector<8x1024xbf16>, vector<8x1024xf32> -> vector<8x1024xf32>
    %366 = arith.addf %361, %365 : vector<8x1024xf32>
    %367 = vector.extract_strided_slice %255 {offsets = [0, 1], sizes = [8, 1023], strides = [1, 1]} : vector<8x1024xf32> to vector<8x1023xf32>
    %cst_103 = arith.constant 0.000000e+00 : f32
    %368 = vector.broadcast %cst_103 : f32 to vector<8x1xf32>
    %369 = tpu.concatenate %367, %368 in 1 : vector<8x1023xf32>, vector<8x1xf32> -> vector<8x1024xf32>
    %370 = arith.truncf %369 : vector<8x1024xf32> to vector<8x1024xbf16>
    %371 = vector.extract_strided_slice %256 {offsets = [14, 0, 0], sizes = [1, 8, 8], strides = [1, 1, 1]} : vector<27x8x8xbf16> to vector<1x8x8xbf16>
    %372 = vector.shape_cast %371 : vector<1x8x8xbf16> to vector<8x8xbf16>
    %cst_104 = arith.constant dense<0.000000e+00> : vector<8x1024xf32>
    %373 = tpu.matmul %372, %370, %cst_104 {dimension_numbers = #tpu.dot_dimension_numbers<[1], [0], [0], [1], [0, 0, 1, 1], [], []>} : vector<8x8xbf16>, vector<8x1024xbf16>, vector<8x1024xf32> -> vector<8x1024xf32>
    %374 = arith.addf %366, %373 : vector<8x1024xf32>
    %375 = vector.extract_strided_slice %255 {offsets = [0, 9], sizes = [8, 1015], strides = [1, 1]} : vector<8x1024xf32> to vector<8x1015xf32>
    %cst_105 = arith.constant 0.000000e+00 : f32
    %376 = vector.broadcast %cst_105 : f32 to vector<8x9xf32>
    %377 = tpu.concatenate %375, %376 in 1 : vector<8x1015xf32>, vector<8x9xf32> -> vector<8x1024xf32>
    %378 = arith.truncf %377 : vector<8x1024xf32> to vector<8x1024xbf16>
    %379 = vector.extract_strided_slice %256 {offsets = [15, 0, 0], sizes = [1, 8, 8], strides = [1, 1, 1]} : vector<27x8x8xbf16> to vector<1x8x8xbf16>
    %380 = vector.shape_cast %379 : vector<1x8x8xbf16> to vector<8x8xbf16>
    %cst_106 = arith.constant dense<0.000000e+00> : vector<8x1024xf32>
    %381 = tpu.matmul %380, %378, %cst_106 {dimension_numbers = #tpu.dot_dimension_numbers<[1], [0], [0], [1], [0, 0, 1, 1], [], []>} : vector<8x8xbf16>, vector<8x1024xbf16>, vector<8x1024xf32> -> vector<8x1024xf32>
    %382 = arith.addf %374, %381 : vector<8x1024xf32>
    %383 = vector.extract_strided_slice %255 {offsets = [0, 10], sizes = [8, 1014], strides = [1, 1]} : vector<8x1024xf32> to vector<8x1014xf32>
    %cst_107 = arith.constant 0.000000e+00 : f32
    %384 = vector.broadcast %cst_107 : f32 to vector<8x10xf32>
    %385 = tpu.concatenate %383, %384 in 1 : vector<8x1014xf32>, vector<8x10xf32> -> vector<8x1024xf32>
    %386 = arith.truncf %385 : vector<8x1024xf32> to vector<8x1024xbf16>
    %387 = vector.extract_strided_slice %256 {offsets = [16, 0, 0], sizes = [1, 8, 8], strides = [1, 1, 1]} : vector<27x8x8xbf16> to vector<1x8x8xbf16>
    %388 = vector.shape_cast %387 : vector<1x8x8xbf16> to vector<8x8xbf16>
    %cst_108 = arith.constant dense<0.000000e+00> : vector<8x1024xf32>
    %389 = tpu.matmul %388, %386, %cst_108 {dimension_numbers = #tpu.dot_dimension_numbers<[1], [0], [0], [1], [0, 0, 1, 1], [], []>} : vector<8x8xbf16>, vector<8x1024xbf16>, vector<8x1024xf32> -> vector<8x1024xf32>
    %390 = arith.addf %382, %389 : vector<8x1024xf32>
    %391 = vector.extract_strided_slice %255 {offsets = [0, 11], sizes = [8, 1013], strides = [1, 1]} : vector<8x1024xf32> to vector<8x1013xf32>
    %cst_109 = arith.constant 0.000000e+00 : f32
    %392 = vector.broadcast %cst_109 : f32 to vector<8x11xf32>
    %393 = tpu.concatenate %391, %392 in 1 : vector<8x1013xf32>, vector<8x11xf32> -> vector<8x1024xf32>
    %394 = arith.truncf %393 : vector<8x1024xf32> to vector<8x1024xbf16>
    %395 = vector.extract_strided_slice %256 {offsets = [17, 0, 0], sizes = [1, 8, 8], strides = [1, 1, 1]} : vector<27x8x8xbf16> to vector<1x8x8xbf16>
    %396 = vector.shape_cast %395 : vector<1x8x8xbf16> to vector<8x8xbf16>
    %cst_110 = arith.constant dense<0.000000e+00> : vector<8x1024xf32>
    %397 = tpu.matmul %396, %394, %cst_110 {dimension_numbers = #tpu.dot_dimension_numbers<[1], [0], [0], [1], [0, 0, 1, 1], [], []>} : vector<8x8xbf16>, vector<8x1024xbf16>, vector<8x1024xf32> -> vector<8x1024xf32>
    %398 = arith.addf %390, %397 : vector<8x1024xf32>
    %399 = vector.extract_strided_slice %255 {offsets = [0, 89], sizes = [8, 935], strides = [1, 1]} : vector<8x1024xf32> to vector<8x935xf32>
    %cst_111 = arith.constant 0.000000e+00 : f32
    %400 = vector.broadcast %cst_111 : f32 to vector<8x89xf32>
    %401 = tpu.concatenate %399, %400 in 1 : vector<8x935xf32>, vector<8x89xf32> -> vector<8x1024xf32>
    %402 = arith.truncf %401 : vector<8x1024xf32> to vector<8x1024xbf16>
    %403 = vector.extract_strided_slice %256 {offsets = [18, 0, 0], sizes = [1, 8, 8], strides = [1, 1, 1]} : vector<27x8x8xbf16> to vector<1x8x8xbf16>
    %404 = vector.shape_cast %403 : vector<1x8x8xbf16> to vector<8x8xbf16>
    %cst_112 = arith.constant dense<0.000000e+00> : vector<8x1024xf32>
    %405 = tpu.matmul %404, %402, %cst_112 {dimension_numbers = #tpu.dot_dimension_numbers<[1], [0], [0], [1], [0, 0, 1, 1], [], []>} : vector<8x8xbf16>, vector<8x1024xbf16>, vector<8x1024xf32> -> vector<8x1024xf32>
    %406 = arith.addf %398, %405 : vector<8x1024xf32>
    %407 = vector.extract_strided_slice %255 {offsets = [0, 90], sizes = [8, 934], strides = [1, 1]} : vector<8x1024xf32> to vector<8x934xf32>
    %cst_113 = arith.constant 0.000000e+00 : f32
    %408 = vector.broadcast %cst_113 : f32 to vector<8x90xf32>
    %409 = tpu.concatenate %407, %408 in 1 : vector<8x934xf32>, vector<8x90xf32> -> vector<8x1024xf32>
    %410 = arith.truncf %409 : vector<8x1024xf32> to vector<8x1024xbf16>
    %411 = vector.extract_strided_slice %256 {offsets = [19, 0, 0], sizes = [1, 8, 8], strides = [1, 1, 1]} : vector<27x8x8xbf16> to vector<1x8x8xbf16>
    %412 = vector.shape_cast %411 : vector<1x8x8xbf16> to vector<8x8xbf16>
    %cst_114 = arith.constant dense<0.000000e+00> : vector<8x1024xf32>
    %413 = tpu.matmul %412, %410, %cst_114 {dimension_numbers = #tpu.dot_dimension_numbers<[1], [0], [0], [1], [0, 0, 1, 1], [], []>} : vector<8x8xbf16>, vector<8x1024xbf16>, vector<8x1024xf32> -> vector<8x1024xf32>
    %414 = arith.addf %406, %413 : vector<8x1024xf32>
    %415 = vector.extract_strided_slice %255 {offsets = [0, 91], sizes = [8, 933], strides = [1, 1]} : vector<8x1024xf32> to vector<8x933xf32>
    %cst_115 = arith.constant 0.000000e+00 : f32
    %416 = vector.broadcast %cst_115 : f32 to vector<8x91xf32>
    %417 = tpu.concatenate %415, %416 in 1 : vector<8x933xf32>, vector<8x91xf32> -> vector<8x1024xf32>
    %418 = arith.truncf %417 : vector<8x1024xf32> to vector<8x1024xbf16>
    %419 = vector.extract_strided_slice %256 {offsets = [20, 0, 0], sizes = [1, 8, 8], strides = [1, 1, 1]} : vector<27x8x8xbf16> to vector<1x8x8xbf16>
    %420 = vector.shape_cast %419 : vector<1x8x8xbf16> to vector<8x8xbf16>
    %cst_116 = arith.constant dense<0.000000e+00> : vector<8x1024xf32>
    %421 = tpu.matmul %420, %418, %cst_116 {dimension_numbers = #tpu.dot_dimension_numbers<[1], [0], [0], [1], [0, 0, 1, 1], [], []>} : vector<8x8xbf16>, vector<8x1024xbf16>, vector<8x1024xf32> -> vector<8x1024xf32>
    %422 = arith.addf %414, %421 : vector<8x1024xf32>
    %423 = vector.extract_strided_slice %255 {offsets = [0, 99], sizes = [8, 925], strides = [1, 1]} : vector<8x1024xf32> to vector<8x925xf32>
    %cst_117 = arith.constant 0.000000e+00 : f32
    %424 = vector.broadcast %cst_117 : f32 to vector<8x99xf32>
    %425 = tpu.concatenate %423, %424 in 1 : vector<8x925xf32>, vector<8x99xf32> -> vector<8x1024xf32>
    %426 = arith.truncf %425 : vector<8x1024xf32> to vector<8x1024xbf16>
    %427 = vector.extract_strided_slice %256 {offsets = [21, 0, 0], sizes = [1, 8, 8], strides = [1, 1, 1]} : vector<27x8x8xbf16> to vector<1x8x8xbf16>
    %428 = vector.shape_cast %427 : vector<1x8x8xbf16> to vector<8x8xbf16>
    %cst_118 = arith.constant dense<0.000000e+00> : vector<8x1024xf32>
    %429 = tpu.matmul %428, %426, %cst_118 {dimension_numbers = #tpu.dot_dimension_numbers<[1], [0], [0], [1], [0, 0, 1, 1], [], []>} : vector<8x8xbf16>, vector<8x1024xbf16>, vector<8x1024xf32> -> vector<8x1024xf32>
    %430 = arith.addf %422, %429 : vector<8x1024xf32>
    %431 = vector.extract_strided_slice %255 {offsets = [0, 100], sizes = [8, 924], strides = [1, 1]} : vector<8x1024xf32> to vector<8x924xf32>
    %cst_119 = arith.constant 0.000000e+00 : f32
    %432 = vector.broadcast %cst_119 : f32 to vector<8x100xf32>
    %433 = tpu.concatenate %431, %432 in 1 : vector<8x924xf32>, vector<8x100xf32> -> vector<8x1024xf32>
    %434 = arith.truncf %433 : vector<8x1024xf32> to vector<8x1024xbf16>
    %435 = vector.extract_strided_slice %256 {offsets = [22, 0, 0], sizes = [1, 8, 8], strides = [1, 1, 1]} : vector<27x8x8xbf16> to vector<1x8x8xbf16>
    %436 = vector.shape_cast %435 : vector<1x8x8xbf16> to vector<8x8xbf16>
    %cst_120 = arith.constant dense<0.000000e+00> : vector<8x1024xf32>
    %437 = tpu.matmul %436, %434, %cst_120 {dimension_numbers = #tpu.dot_dimension_numbers<[1], [0], [0], [1], [0, 0, 1, 1], [], []>} : vector<8x8xbf16>, vector<8x1024xbf16>, vector<8x1024xf32> -> vector<8x1024xf32>
    %438 = arith.addf %430, %437 : vector<8x1024xf32>
    %439 = vector.extract_strided_slice %255 {offsets = [0, 101], sizes = [8, 923], strides = [1, 1]} : vector<8x1024xf32> to vector<8x923xf32>
    %cst_121 = arith.constant 0.000000e+00 : f32
    %440 = vector.broadcast %cst_121 : f32 to vector<8x101xf32>
    %441 = tpu.concatenate %439, %440 in 1 : vector<8x923xf32>, vector<8x101xf32> -> vector<8x1024xf32>
    %442 = arith.truncf %441 : vector<8x1024xf32> to vector<8x1024xbf16>
    %443 = vector.extract_strided_slice %256 {offsets = [23, 0, 0], sizes = [1, 8, 8], strides = [1, 1, 1]} : vector<27x8x8xbf16> to vector<1x8x8xbf16>
    %444 = vector.shape_cast %443 : vector<1x8x8xbf16> to vector<8x8xbf16>
    %cst_122 = arith.constant dense<0.000000e+00> : vector<8x1024xf32>
    %445 = tpu.matmul %444, %442, %cst_122 {dimension_numbers = #tpu.dot_dimension_numbers<[1], [0], [0], [1], [0, 0, 1, 1], [], []>} : vector<8x8xbf16>, vector<8x1024xbf16>, vector<8x1024xf32> -> vector<8x1024xf32>
    %446 = arith.addf %438, %445 : vector<8x1024xf32>
    %447 = vector.extract_strided_slice %255 {offsets = [0, 109], sizes = [8, 915], strides = [1, 1]} : vector<8x1024xf32> to vector<8x915xf32>
    %cst_123 = arith.constant 0.000000e+00 : f32
    %448 = vector.broadcast %cst_123 : f32 to vector<8x109xf32>
    %449 = tpu.concatenate %447, %448 in 1 : vector<8x915xf32>, vector<8x109xf32> -> vector<8x1024xf32>
    %450 = arith.truncf %449 : vector<8x1024xf32> to vector<8x1024xbf16>
    %451 = vector.extract_strided_slice %256 {offsets = [24, 0, 0], sizes = [1, 8, 8], strides = [1, 1, 1]} : vector<27x8x8xbf16> to vector<1x8x8xbf16>
    %452 = vector.shape_cast %451 : vector<1x8x8xbf16> to vector<8x8xbf16>
    %cst_124 = arith.constant dense<0.000000e+00> : vector<8x1024xf32>
    %453 = tpu.matmul %452, %450, %cst_124 {dimension_numbers = #tpu.dot_dimension_numbers<[1], [0], [0], [1], [0, 0, 1, 1], [], []>} : vector<8x8xbf16>, vector<8x1024xbf16>, vector<8x1024xf32> -> vector<8x1024xf32>
    %454 = arith.addf %446, %453 : vector<8x1024xf32>
    %455 = vector.extract_strided_slice %255 {offsets = [0, 110], sizes = [8, 914], strides = [1, 1]} : vector<8x1024xf32> to vector<8x914xf32>
    %cst_125 = arith.constant 0.000000e+00 : f32
    %456 = vector.broadcast %cst_125 : f32 to vector<8x110xf32>
    %457 = tpu.concatenate %455, %456 in 1 : vector<8x914xf32>, vector<8x110xf32> -> vector<8x1024xf32>
    %458 = arith.truncf %457 : vector<8x1024xf32> to vector<8x1024xbf16>
    %459 = vector.extract_strided_slice %256 {offsets = [25, 0, 0], sizes = [1, 8, 8], strides = [1, 1, 1]} : vector<27x8x8xbf16> to vector<1x8x8xbf16>
    %460 = vector.shape_cast %459 : vector<1x8x8xbf16> to vector<8x8xbf16>
    %cst_126 = arith.constant dense<0.000000e+00> : vector<8x1024xf32>
    %461 = tpu.matmul %460, %458, %cst_126 {dimension_numbers = #tpu.dot_dimension_numbers<[1], [0], [0], [1], [0, 0, 1, 1], [], []>} : vector<8x8xbf16>, vector<8x1024xbf16>, vector<8x1024xf32> -> vector<8x1024xf32>
    %462 = arith.addf %454, %461 : vector<8x1024xf32>
    %463 = vector.extract_strided_slice %255 {offsets = [0, 111], sizes = [8, 913], strides = [1, 1]} : vector<8x1024xf32> to vector<8x913xf32>
    %cst_127 = arith.constant 0.000000e+00 : f32
    %464 = vector.broadcast %cst_127 : f32 to vector<8x111xf32>
    %465 = tpu.concatenate %463, %464 in 1 : vector<8x913xf32>, vector<8x111xf32> -> vector<8x1024xf32>
    %466 = arith.truncf %465 : vector<8x1024xf32> to vector<8x1024xbf16>
    %467 = vector.extract_strided_slice %256 {offsets = [26, 0, 0], sizes = [1, 8, 8], strides = [1, 1, 1]} : vector<27x8x8xbf16> to vector<1x8x8xbf16>
    %468 = vector.shape_cast %467 : vector<1x8x8xbf16> to vector<8x8xbf16>
    %cst_128 = arith.constant dense<0.000000e+00> : vector<8x1024xf32>
    %469 = tpu.matmul %468, %466, %cst_128 {dimension_numbers = #tpu.dot_dimension_numbers<[1], [0], [0], [1], [0, 0, 1, 1], [], []>} : vector<8x8xbf16>, vector<8x1024xbf16>, vector<8x1024xf32> -> vector<8x1024xf32>
    %470 = arith.addf %462, %469 : vector<8x1024xf32>
    %471 = vector.broadcast %0 : vector<1x1024xf32> to vector<8x1024xf32>
    %472 = arith.mulf %470, %471 : vector<8x1024xf32>
    %cst_129 = arith.constant dense<0.000000e+00> : vector<8xf32>
    %473 = vector.multi_reduction <add>, %472, %cst_129 [1] : vector<8x1024xf32> to vector<8xf32>
    %474 = vector.shape_cast %473 : vector<8xf32> to vector<8x1xf32>
    %cst_130 = arith.constant 0.001953125 : f32
    %475 = vector.broadcast %cst_130 : f32 to vector<8x1xf32>
    %476 = arith.mulf %474, %475 : vector<8x1xf32>
    %477 = vector.broadcast %476 : vector<8x1xf32> to vector<8x1024xf32>
    %478 = arith.subf %470, %477 : vector<8x1024xf32>
    %479 = arith.mulf %478, %478 : vector<8x1024xf32>
    %480 = vector.broadcast %0 : vector<1x1024xf32> to vector<8x1024xf32>
    %481 = arith.mulf %479, %480 : vector<8x1024xf32>
    %cst_131 = arith.constant dense<0.000000e+00> : vector<8xf32>
    %482 = vector.multi_reduction <add>, %481, %cst_131 [1] : vector<8x1024xf32> to vector<8xf32>
    %483 = vector.shape_cast %482 : vector<8xf32> to vector<8x1xf32>
    %cst_132 = arith.constant 0.001953125 : f32
    %484 = vector.broadcast %cst_132 : f32 to vector<8x1xf32>
    %485 = arith.mulf %483, %484 : vector<8x1xf32>
    %cst_133 = arith.constant 9.99999974E-6 : f32
    %486 = vector.broadcast %cst_133 : f32 to vector<8x1xf32>
    %487 = arith.addf %485, %486 : vector<8x1xf32>
    %488 = math.rsqrt %487 : vector<8x1xf32>
    %489 = vector.broadcast %488 : vector<8x1xf32> to vector<8x1024xf32>
    %490 = arith.mulf %478, %489 : vector<8x1024xf32>
    %491 = vector.extract_strided_slice %1 {offsets = [1, 0, 0, 0], sizes = [1, 1, 8, 1], strides = [1, 1, 1, 1]} : vector<2x2x8x1xf32> to vector<1x1x8x1xf32>
    %492 = vector.shape_cast %491 : vector<1x1x8x1xf32> to vector<8x1xf32>
    %493 = vector.broadcast %492 : vector<8x1xf32> to vector<8x1024xf32>
    %494 = arith.mulf %490, %493 : vector<8x1024xf32>
    %495 = vector.extract_strided_slice %1 {offsets = [1, 1, 0, 0], sizes = [1, 1, 8, 1], strides = [1, 1, 1, 1]} : vector<2x2x8x1xf32> to vector<1x1x8x1xf32>
    %496 = vector.shape_cast %495 : vector<1x1x8x1xf32> to vector<8x1xf32>
    %497 = vector.broadcast %496 : vector<8x1xf32> to vector<8x1024xf32>
    %498 = arith.addf %494, %497 : vector<8x1024xf32>
    %cst_134 = arith.constant 0.000000e+00 : f32
    %499 = vector.broadcast %cst_134 : f32 to vector<8x1024xf32>
    %500 = arith.cmpf ogt, %498, %499 : vector<8x1024xf32>
    %cst_135 = arith.constant 0.00999999977 : f32
    %501 = vector.broadcast %cst_135 : f32 to vector<8x1024xf32>
    %502 = arith.mulf %501, %498 : vector<8x1024xf32>
    %503 = arith.select %500, %498, %502 : vector<8x1024xi1>, vector<8x1024xf32>
    %504 = vector.broadcast %0 : vector<1x1024xf32> to vector<8x1024xf32>
    %505 = arith.mulf %503, %504 : vector<8x1024xf32>
    %c0_136 = arith.constant 0 : index
    %c0_137 = arith.constant 0 : index
    %c0_138 = arith.constant 0 : index
    %506 = vector.load %arg6[%c0_136, %c0_137, %c0_138] : memref<1x8x1024xf32, #tpu.memory_space<vmem>>, vector<1x8x1024xf32>
    %507 = vector.shape_cast %506 : vector<1x8x1024xf32> to vector<8x1024xf32>
    %508 = vector.shape_cast %505 : vector<8x1024xf32> to vector<1x8x1024xf32>
    tpu.vector_store %arg6[%c0_136, %c0_137, %c0_138], %508 {strides = array<i32>} : memref<1x8x1024xf32, #tpu.memory_space<vmem>>, vector<1x8x1024xf32>,
    return
  }
  func.func @transform_0(%arg0: i32) -> (i32, i32, i32) {
    %c0_i32 = arith.constant 0 : i32
    %c0_i32_0 = arith.constant 0 : i32
    %c0_i32_1 = arith.constant 0 : i32
    return %arg0, %c0_i32, %c0_i32_0 : i32, i32, i32
  }
  func.func @transform_1(%arg0: i32) -> (i32, i32, i32) {
    %c0_i32 = arith.constant 0 : i32
    %c0_i32_0 = arith.constant 0 : i32
    %c0_i32_1 = arith.constant 0 : i32
    %c0_i32_2 = arith.constant 0 : i32
    return %c0_i32, %c0_i32_0, %c0_i32_1 : i32, i32, i32
  }
  func.func @transform_2(%arg0: i32) -> (i32, i32, i32, i32) {
    %c0_i32 = arith.constant 0 : i32
    %c0_i32_0 = arith.constant 0 : i32
    %c0_i32_1 = arith.constant 0 : i32
    %c0_i32_2 = arith.constant 0 : i32
    %c0_i32_3 = arith.constant 0 : i32
    return %c0_i32, %c0_i32_0, %c0_i32_1, %c0_i32_2 : i32, i32, i32, i32
  }
  func.func @transform_3(%arg0: i32) -> (i32, i32, i32, i32) {
    %c0_i32 = arith.constant 0 : i32
    %c0_i32_0 = arith.constant 0 : i32
    %c0_i32_1 = arith.constant 0 : i32
    %c0_i32_2 = arith.constant 0 : i32
    %c0_i32_3 = arith.constant 0 : i32
    return %c0_i32, %c0_i32_0, %c0_i32_1, %c0_i32_2 : i32, i32, i32, i32
  }
  func.func @transform_4(%arg0: i32) -> (i32, i32) {
    %c0_i32 = arith.constant 0 : i32
    %c0_i32_0 = arith.constant 0 : i32
    %c0_i32_1 = arith.constant 0 : i32
    return %c0_i32, %c0_i32_0 : i32, i32
  }
  func.func @transform_5(%arg0: i32) -> (i32, i32, i32) {
    %c0_i32 = arith.constant 0 : i32
    %c0_i32_0 = arith.constant 0 : i32
    %c0_i32_1 = arith.constant 0 : i32
    return %arg0, %c0_i32, %c0_i32_0 : i32, i32, i32
  }
}

</mosaic_0001>

<llo_original>
// kernel: conv_blocks.1
$region0: #{conv_blocks.1}
  #allocation0 [shape = 'u32[]', space=smem, size = 0x4, offset = 0x4, fixed_abs, tag = 'smem constant byte address 0x4 - core index']
  #allocation1 [shape = 'u32[72,128]{1,0:T(1,128)}', space=vmem, size = 0x9000, scoped, tag = 'internal scratch']
  %s0 = inlined_call_operand.vmem [shape: bf16[2,8,1024], index: 0, kind: input, shape index: {}]
  %s1 = inlined_call_operand.vmem [shape: bf16[27,8,8], index: 1, kind: input, shape index: {}]
  %s2 = inlined_call_operand.vmem [shape: bf16[1,27,8,8], index: 2, kind: input, shape index: {}]
  %s3 = inlined_call_operand.vmem [shape: f32[2,2,8,1], index: 3, kind: input, shape index: {}]
  %s4 = inlined_call_operand.vmem [shape: f32[1,1024], index: 4, kind: input, shape index: {}]
  %s5 = inlined_call_operand.vmem [shape: f32[2,8,1024], index: 5, kind: output, shape index: {}]
  %s6 = sld [smem:[#allocation0]]
  $region53: #{conv_blocks.1} parent=0
    _
  %s8 = ssub.s32 1, %s6
  %s9 = scalar_select 0, %s8, %s6
  loop: start=0, step=1, limit=4
  $region2: #{conv_blocks.1} parent=0 // loop_pre_header
    _
  $region3: #{conv_blocks.1} parent=0 // loop_header
    %s11 = sphi 0, %s15
    %p12 = scmp.ge.s32.totalorder %s11, 4
    %s21 = sphi 0, %s23
    %s24 = sphi 0, %s21
    %s25 = sphi 0, %s24
    %s41 = sphi 0, %s25
    %s45 = sphi 0, %s45
    %s47 = sphi 0, %s45
    %s48 = sphi 0, %s47
    %s62 = sphi 0, %s48
    %s66 = sphi 0, %s66
    %s68 = sphi 0, %s66
    %s69 = sphi 0, %s68
    %s83 = sphi 0, %s69
    %s87 = sphi 0, %s87
    %s89 = sphi 0, %s87
    %s90 = sphi 0, %s89
    %s104 = sphi 0, %s90
    %s108 = sphi 0, %s108
    %s110 = sphi 0, %s108
    %s111 = sphi 0, %s110
    %s125 = sphi 0, %s111
    %s131 = sphi 0, %s133
    %s134 = sphi 0, %s131
    %s135 = sphi 0, %s134
    %s151 = sphi 0, %s135
  $region4: #{conv_blocks.1} parent=0 // loop_header_branch
    %14 = sbr.rel (%p12) target = $region8
  $region5: #{conv_blocks.1} parent=0 // loop_body
    %s16 = ssub.s32 %s11, 1
    %s17 = ssub.s32 %s11, 2
    %s18 = sadd.s32 %s11, 1
    %s19 = ssub.s32 %s11, %s18
    %p20 = scmp.eq.s32.totalorder %s19, 0
    %s22 = sadd.s32 %s21, 1
    %s23 = scalar_select %p20, %s21, %s22
    %p26 = pneg %p20
    %p27 = scmp.eq.s32.totalorder %s11, 1
    %p28 = por %p26, %p27
    %p29 = scmp.ne.s32.totalorder %s21, %s24
    %p30 = scmp.eq.s32.totalorder %s11, 0
    %p31 = por %p29, %p30
    %p32 = scmp.ne.s32.totalorder %s21, %s24
    %p33 = scmp.eq.s32.totalorder %s16, 1
    %p34 = por %p32, %p33
    %p35 = scmp.ne.s32.totalorder %s24, %s25
    %p36 = scmp.eq.s32.totalorder %s16, 0
    %p37 = por %p35, %p36
    %p38 = scmp.ne.s32.totalorder %s24, %s25
    %p39 = scmp.eq.s32.totalorder %s17, 1
    %p40 = por %p38, %p39
    %p42 = scmp.ne.s32.totalorder %s25, %s41
    %p43 = scmp.eq.s32.totalorder %s17, 0
    %p44 = por %p42, %p43
    %s46 = sadd.s32 %s45, 1
    %p49 = scmp.eq.s32.totalorder %s11, 1
    %p50 = scmp.ne.s32.totalorder %s45, %s47
    %p51 = scmp.eq.s32.totalorder %s11, 0
    %p52 = por %p50, %p51
    %p53 = scmp.ne.s32.totalorder %s45, %s47
    %p54 = scmp.eq.s32.totalorder %s16, 1
    %p55 = por %p53, %p54
    %p56 = scmp.ne.s32.totalorder %s47, %s48
    %p57 = scmp.eq.s32.totalorder %s16, 0
    %p58 = por %p56, %p57
    %p59 = scmp.ne.s32.totalorder %s47, %s48
    %p60 = scmp.eq.s32.totalorder %s17, 1
    %p61 = por %p59, %p60
    %p63 = scmp.ne.s32.totalorder %s48, %s62
    %p64 = scmp.eq.s32.totalorder %s17, 0
    %p65 = por %p63, %p64
    %s67 = sadd.s32 %s66, 1
    %p70 = scmp.eq.s32.totalorder %s11, 1
    %p71 = scmp.ne.s32.totalorder %s66, %s68
    %p72 = scmp.eq.s32.totalorder %s11, 0
    %p73 = por %p71, %p72
    %p74 = scmp.ne.s32.totalorder %s66, %s68
    %p75 = scmp.eq.s32.totalorder %s16, 1
    %p76 = por %p74, %p75
    %p77 = scmp.ne.s32.totalorder %s68, %s69
    %p78 = scmp.eq.s32.totalorder %s16, 0
    %p79 = por %p77, %p78
    %p80 = scmp.ne.s32.totalorder %s68, %s69
    %p81 = scmp.eq.s32.totalorder %s17, 1
    %p82 = por %p80, %p81
    %p84 = scmp.ne.s32.totalorder %s69, %s83
    %p85 = scmp.eq.s32.totalorder %s17, 0
    %p86 = por %p84, %p85
    %s88 = sadd.s32 %s87, 1
    %p91 = scmp.eq.s32.totalorder %s11, 1
    %p92 = scmp.ne.s32.totalorder %s87, %s89
    %p93 = scmp.eq.s32.totalorder %s11, 0
    %p94 = por %p92, %p93
    %p95 = scmp.ne.s32.totalorder %s87, %s89
    %p96 = scmp.eq.s32.totalorder %s16, 1
    %p97 = por %p95, %p96
    %p98 = scmp.ne.s32.totalorder %s89, %s90
    %p99 = scmp.eq.s32.totalorder %s16, 0
    %p100 = por %p98, %p99
    %p101 = scmp.ne.s32.totalorder %s89, %s90
    %p102 = scmp.eq.s32.totalorder %s17, 1
    %p103 = por %p101, %p102
    %p105 = scmp.ne.s32.totalorder %s90, %s104
    %p106 = scmp.eq.s32.totalorder %s17, 0
    %p107 = por %p105, %p106
    %s109 = sadd.s32 %s108, 1
    %p112 = scmp.eq.s32.totalorder %s11, 1
    %p113 = scmp.ne.s32.totalorder %s108, %s110
    %p114 = scmp.eq.s32.totalorder %s11, 0
    %p115 = por %p113, %p114
    %p116 = scmp.ne.s32.totalorder %s108, %s110
    %p117 = scmp.eq.s32.totalorder %s16, 1
    %p118 = por %p116, %p117
    %p119 = scmp.ne.s32.totalorder %s110, %s111
    %p120 = scmp.eq.s32.totalorder %s16, 0
    %p121 = por %p119, %p120
    %p122 = scmp.ne.s32.totalorder %s110, %s111
    %p123 = scmp.eq.s32.totalorder %s17, 1
    %p124 = por %p122, %p123
    %p126 = scmp.ne.s32.totalorder %s111, %s125
    %p127 = scmp.eq.s32.totalorder %s17, 0
    %p128 = por %p126, %p127
    %s129 = ssub.s32 %s11, %s18
    %p130 = scmp.eq.s32.totalorder %s129, 0
    %s132 = sadd.s32 %s131, 1
    %s133 = scalar_select %p130, %s131, %s132
    %p136 = pneg %p130
    %p137 = scmp.eq.s32.totalorder %s11, 1
    %p138 = por %p136, %p137
    %p139 = scmp.ne.s32.totalorder %s131, %s134
    %p140 = scmp.eq.s32.totalorder %s11, 0
    %p141 = por %p139, %p140
    %p142 = scmp.ne.s32.totalorder %s131, %s134
    %p143 = scmp.eq.s32.totalorder %s16, 1
    %p144 = por %p142, %p143
    %p145 = scmp.ne.s32.totalorder %s134, %s135
    %p146 = scmp.eq.s32.totalorder %s16, 0
    %p147 = por %p145, %p146
    %p148 = scmp.ne.s32.totalorder %s134, %s135
    %p149 = scmp.eq.s32.totalorder %s17, 1
    %p150 = por %p148, %p149
    %p152 = scmp.ne.s32.totalorder %s135, %s151
    %p153 = scmp.eq.s32.totalorder %s17, 0
    %p154 = por %p152, %p153
    %p155 = scmp.le.s32.totalorder 1, %s11
    %p156 = scmp.lt.s32.totalorder %s11, 3
    %p157 = pnand %p155, %p156
    %p158 = pneg %p157
    // Predicated region
    $region9: #{conv_blocks.1} parent=5 // pred_check
      _
    $region10: #{conv_blocks.1} parent=5 // pred_check_branch
      %160 = sbr.rel (%p157) target = $region12
    $region11: #{conv_blocks.1} parent=5 // pred_region
      %s161 = ssub.s32 %s11, 1
      // Predicated region
      $region13: #{conv_blocks.1} parent=11 // pred_check
        %p162 = pneg %p58
      $region14: #{conv_blocks.1} parent=11 // pred_check_branch
        %164 = sbr.rel (%p162) target = $region16
      $region15: #{conv_blocks.1} parent=11 // pred_region
        _
      $region16: #{conv_blocks.1} parent=11 // pred_fallthru
        _
      // Predicated region
      $region17: #{conv_blocks.1} parent=11 // pred_check
        %p165 = pneg %p79
      $region18: #{conv_blocks.1} parent=11 // pred_check_branch
        %167 = sbr.rel (%p165) target = $region20
      $region19: #{conv_blocks.1} parent=11 // pred_region
        _
      $region20: #{conv_blocks.1} parent=11 // pred_fallthru
        _
      // Predicated region
      $region21: #{conv_blocks.1} parent=11 // pred_check
        %p168 = pneg %p100
      $region22: #{conv_blocks.1} parent=11 // pred_check_branch
        %170 = sbr.rel (%p168) target = $region24
      $region23: #{conv_blocks.1} parent=11 // pred_region
        _
      $region24: #{conv_blocks.1} parent=11 // pred_fallthru
        _
      // Predicated region
      $region25: #{conv_blocks.1} parent=11 // pred_check
        %p171 = pneg %p121
      $region26: #{conv_blocks.1} parent=11 // pred_check_branch
        %173 = sbr.rel (%p171) target = $region28
      $region27: #{conv_blocks.1} parent=11 // pred_region
        _
      $region28: #{conv_blocks.1} parent=11 // pred_fallthru
        _
    $region12: #{conv_blocks.1} parent=5 // pred_fallthru
      _
    %p174 = scmp.lt.s32.totalorder %s11, 2
    // Predicated region
    $region29: #{conv_blocks.1} parent=5 // pred_check
      %p175 = pneg %p174
    $region30: #{conv_blocks.1} parent=5 // pred_check_branch
      %177 = sbr.rel (%p175) target = $region32
    $region31: #{conv_blocks.1} parent=5 // pred_region
      // Predicated region
      $region33: #{conv_blocks.1} parent=31 // pred_check
        %p178 = pneg %p31
      $region34: #{conv_blocks.1} parent=31 // pred_check_branch
        %180 = sbr.rel (%p178) target = $region36
      $region35: #{conv_blocks.1} parent=31 // pred_region
        %p181 = scmp.lt.s32.totalorder %s11, 1
        %s182 = scalar_select %p181, %s11, 1
        %s183 = smul.addr %s182, 8
        %s184 = smul.addr %s183, 4
        %s185 = scalar_lea.vmem %s0, %s184
      $region36: #{conv_blocks.1} parent=31 // pred_fallthru
        _
    $region32: #{conv_blocks.1} parent=5 // pred_fallthru
      _
    %p186 = scmp.le.s32.totalorder 1, %s11
    %p187 = scmp.lt.s32.totalorder %s11, 3
    %p188 = pnand %p186, %p187
    %p189 = pneg %p188
    // Predicated region
    $region37: #{conv_blocks.1} parent=5 // pred_check
      _
    $region38: #{conv_blocks.1} parent=5 // pred_check_branch
      %191 = sbr.rel (%p188) target = $region40
    $region39: #{conv_blocks.1} parent=5 // pred_region
      %s192 = ssub.s32 %s11, 1
      %p193 = scmp.lt.s32.totalorder %s16, 1
      %s194 = scalar_select %p193, %s16, 1
      %s195 = smul.addr %s194, 8
      %s196 = smul.addr %s195, 4
      %s197 = scalar_lea.vmem %s0, %s196
      %p198 = pneg %p37
      %p199 = pneg %p34
      %p200 = pneg %p58
      %p201 = pneg %p55
      %p202 = pneg %p79
      %p203 = pneg %p76
      %p204 = pneg %p100
      %p205 = pneg %p97
      %p206 = pneg %p121
      %p207 = pneg %p118
      %p208 = pneg %p147
      %p209 = pneg %p144
      %p210 = scmp.lt.s32.totalorder %s16, 1
      %s211 = scalar_select %p210, %s16, 1
      %s212 = smul.addr %s211, 8
      %s213 = smul.addr %s212, 8
      %s214 = scalar_lea.vmem %s5, %s213
      %p215 = scmp.lt.s32.totalorder %s16, 1
      %s216 = scalar_select %p215, %s16, 1
      %s217 = smul.addr %s216, 8
      %s218 = smul.addr %s217, 4
      %s219 = scalar_lea.vmem %s0, %s218
      %p220 = scmp.lt.s32.totalorder %s16, 1
      %s221 = scalar_select %p220, %s16, 1
      %s222 = smul.addr %s221, 8
      %s223 = smul.addr %s222, 8
      %s224 = scalar_lea.vmem %s5, %s223
      %v226 = vld [vmem:[%s4] sm:$0xff]
      %v227 = vld [vmem:[%s3] sm:$0xff]
      %v228 = vld [vmem:[%s3 + $0x8] sm:$0xff]
      %v229 = vld [vmem:[%s3 + $0x10] sm:$0xff]
      %v230 = vld [vmem:[%s3 + $0x18] sm:$0xff]
      %v231 = vld [vmem:[%s1] sm:$0xf]
      %v232 = vld [vmem:[%s1 + $0x4] sm:$0xf]
      %v233 = vld [vmem:[%s1 + $0x8] sm:$0xf]
      %v234 = vld [vmem:[%s1 + $0xc] sm:$0xf]
      %v235 = vld [vmem:[%s1 + $0x10] sm:$0xf]
      %v236 = vld [vmem:[%s1 + $0x14] sm:$0xf]
      %v237 = vld [vmem:[%s1 + $0x18] sm:$0xf]
      %v238 = vld [vmem:[%s1 + $0x1c] sm:$0xf]
      %v239 = vld [vmem:[%s1 + $0x20] sm:$0xf]
      %v240 = vld [vmem:[%s1 + $0x24] sm:$0xf]
      %v241 = vld [vmem:[%s1 + $0x28] sm:$0xf]
      %v242 = vld [vmem:[%s1 + $0x2c] sm:$0xf]
      %v243 = vld [vmem:[%s1 + $0x30] sm:$0xf]
      %v244 = vld [vmem:[%s1 + $0x34] sm:$0xf]
      %v245 = vld [vmem:[%s1 + $0x38] sm:$0xf]
      %v246 = vld [vmem:[%s1 + $0x3c] sm:$0xf]
      %v247 = vld [vmem:[%s1 + $0x40] sm:$0xf]
      %v248 = vld [vmem:[%s1 + $0x44] sm:$0xf]
      %v249 = vld [vmem:[%s1 + $0x48] sm:$0xf]
      %v250 = vld [vmem:[%s1 + $0x4c] sm:$0xf]
      %v251 = vld [vmem:[%s1 + $0x50] sm:$0xf]
      %v252 = vld [vmem:[%s1 + $0x54] sm:$0xf]
      %v253 = vld [vmem:[%s1 + $0x58] sm:$0xf]
      %v254 = vld [vmem:[%s1 + $0x5c] sm:$0xf]
      %v255 = vld [vmem:[%s1 + $0x60] sm:$0xf]
      %v256 = vld [vmem:[%s1 + $0x64] sm:$0xf]
      %v257 = vld [vmem:[%s1 + $0x68] sm:$0xf]
      %v258 = vld [vmem:[%s2] sm:$0xf]
      %v259 = vld [vmem:[%s2 + $0x4] sm:$0xf]
      %v260 = vld [vmem:[%s2 + $0x8] sm:$0xf]
      %v261 = vld [vmem:[%s2 + $0xc] sm:$0xf]
      %v262 = vld [vmem:[%s2 + $0x10] sm:$0xf]
      %v263 = vld [vmem:[%s2 + $0x14] sm:$0xf]
      %v264 = vld [vmem:[%s2 + $0x18] sm:$0xf]
      %v265 = vld [vmem:[%s2 + $0x1c] sm:$0xf]
      %v266 = vld [vmem:[%s2 + $0x20] sm:$0xf]
      %v267 = vld [vmem:[%s2 + $0x24] sm:$0xf]
      %v268 = vld [vmem:[%s2 + $0x28] sm:$0xf]
      %v269 = vld [vmem:[%s2 + $0x2c] sm:$0xf]
      %v270 = vld [vmem:[%s2 + $0x30] sm:$0xf]
      %v271 = vld [vmem:[%s2 + $0x34] sm:$0xf]
      %v272 = vld [vmem:[%s2 + $0x38] sm:$0xf]
      %v273 = vld [vmem:[%s2 + $0x3c] sm:$0xf]
      %v274 = vld [vmem:[%s2 + $0x40] sm:$0xf]
      %v275 = vld [vmem:[%s2 + $0x44] sm:$0xf]
      %v276 = vld [vmem:[%s2 + $0x48] sm:$0xf]
      %v277 = vld [vmem:[%s2 + $0x4c] sm:$0xf]
      %v278 = vld [vmem:[%s2 + $0x50] sm:$0xf]
      %v279 = vld [vmem:[%s2 + $0x54] sm:$0xf]
      %v280 = vld [vmem:[%s2 + $0x58] sm:$0xf]
      %v281 = vld [vmem:[%s2 + $0x5c] sm:$0xf]
      %v282 = vld [vmem:[%s2 + $0x60] sm:$0xf]
      %v283 = vld [vmem:[%s2 + $0x64] sm:$0xf]
      %v284 = vld [vmem:[%s2 + $0x68] sm:$0xf]
      %v285 = vld [vmem:[%s219] sm:$0xff]
      %v286 = vld [vmem:[%s219 + $0x8] sm:$0xff]
      %v287 = vld [vmem:[%s219 + $0x10] sm:$0xff]
      %v288 = vld [vmem:[%s219 + $0x18] sm:$0xff]
      %v289 = vunpack.c.l.bf16 %v285
      %v290 = vunpack.c.h.bf16 %v285
      %v291 = vunpack.c.l.bf16 %v286
      %v292 = vunpack.c.h.bf16 %v286
      %v293 = vunpack.c.l.bf16 %v287
      %v294 = vunpack.c.h.bf16 %v287
      %v295 = vunpack.c.l.bf16 %v288
      %v296 = vunpack.c.h.bf16 %v288
      %305 = vrot.lane.b32.xlu0 %v289, 111
      %v306 = vpop.permute.xlu0 %305
      %307 = vrot.lane.b32.xlu0 %v290, 111
      %v308 = vpop.permute.xlu0 %307
      %309 = vrot.lane.b32.xlu0 %v291, 111
      %v310 = vpop.permute.xlu0 %309
      %311 = vrot.lane.b32.xlu0 %v292, 111
      %v312 = vpop.permute.xlu0 %311
      %313 = vrot.lane.b32.xlu0 %v293, 111
      %v314 = vpop.permute.xlu0 %313
      %315 = vrot.lane.b32.xlu0 %v294, 111
      %v316 = vpop.permute.xlu0 %315
      %317 = vrot.lane.b32.xlu0 %v295, 111
      %v318 = vpop.permute.xlu0 %317
      %319 = vrot.lane.b32.xlu0 %v296, 111
      %v320 = vpop.permute.xlu0 %319
      %vm321 = vcmask 908288
      %v322 = vsel %vm321, %v306, %v308
      %v323 = vsel %vm321, %v308, %v310
      %v324 = vsel %vm321, %v310, %v312
      %v325 = vsel %vm321, %v312, %v314
      %v326 = vsel %vm321, %v314, %v316
      %v327 = vsel %vm321, %v316, %v318
      %v328 = vsel %vm321, %v318, %v320
      %v337 = vsel %vm321, 0.0, %v306
      %v338 = vpack.c.bf16 %v337, %v337
      %v339 = vpack.c.bf16 %v322, %v322
      %v340 = vpack.c.bf16 %v323, %v323
      %v341 = vpack.c.bf16 %v324, %v324
      %v342 = vpack.c.bf16 %v325, %v325
      %v343 = vpack.c.bf16 %v326, %v326
      %v344 = vpack.c.bf16 %v327, %v327
      %v345 = vpack.c.bf16 %v328, %v328
      %346 = vrot.lane.b32.xlu0 %v289, 110
      %v347 = vpop.permute.xlu0 %346
      %348 = vrot.lane.b32.xlu0 %v290, 110
      %v349 = vpop.permute.xlu0 %348
      %350 = vrot.lane.b32.xlu0 %v291, 110
      %v351 = vpop.permute.xlu0 %350
      %352 = vrot.lane.b32.xlu0 %v292, 110
      %v353 = vpop.permute.xlu0 %352
      %354 = vrot.lane.b32.xlu0 %v293, 110
      %v355 = vpop.permute.xlu0 %354
      %356 = vrot.lane.b32.xlu0 %v294, 110
      %v357 = vpop.permute.xlu0 %356
      %358 = vrot.lane.b32.xlu0 %v295, 110
      %v359 = vpop.permute.xlu0 %358
      %360 = vrot.lane.b32.xlu0 %v296, 110
      %v361 = vpop.permute.xlu0 %360
      %vm362 = vcmask 900096
      %v363 = vsel %vm362, %v347, %v349
      %v364 = vsel %vm362, %v349, %v351
      %v365 = vsel %vm362, %v351, %v353
      %v366 = vsel %vm362, %v353, %v355
      %v367 = vsel %vm362, %v355, %v357
      %v368 = vsel %vm362, %v357, %v359
      %v369 = vsel %vm362, %v359, %v361
      %v378 = vsel %vm362, 0.0, %v347
      %v379 = vpack.c.bf16 %v378, %v378
      %v380 = vpack.c.bf16 %v363, %v363
      %v381 = vpack.c.bf16 %v364, %v364
      %v382 = vpack.c.bf16 %v365, %v365
      %v383 = vpack.c.bf16 %v366, %v366
      %v384 = vpack.c.bf16 %v367, %v367
      %v385 = vpack.c.bf16 %v368, %v368
      %v386 = vpack.c.bf16 %v369, %v369
      %vm387 = vcmask 64512
      %v389 = vsel %vm387, %v232, 0
      %vm391 = vcmask 1043456
      %v393 = vsel %vm391, %v379, 0
      %v396 = vsel %vm391, %v380, 0
      %v399 = vsel %vm391, %v381, 0
      %v402 = vsel %vm391, %v382, 0
      %v405 = vsel %vm391, %v383, 0
      %v408 = vsel %vm391, %v384, 0
      %v411 = vsel %vm391, %v385, 0
      %v414 = vsel %vm391, %v386, 0
      %416 = vmatpush.bf16.msra.mxu0 0
      %417 = vmatpush.bf16.msra.mxu0 0
      %418 = vmatpush.bf16.msra.mxu0 0
      %419 = vmatpush.bf16.msra.mxu0 0
      %420 = vmatpush.bf16.msra.mxu0 0
      %421 = vmatpush.bf16.msra.mxu0 0
      %422 = vmatpush.bf16.msra.mxu0 0
      %423 = vmatpush.bf16.msra.mxu0 %v393
      %424 = vmatmul.bf16.gmra.mxu0 %v389
      %v425 = vpop.f32.mrf.mxu0
      %v426 = vadd.f32 0.0, %v425
      %v427 = vpop.f32.mrf.mxu0
      %428 = vdwg.mxu0
      %429 = vmatpush.bf16.msra.mxu0 0
      %430 = vmatpush.bf16.msra.mxu0 0
      %431 = vmatpush.bf16.msra.mxu0 0
      %432 = vmatpush.bf16.msra.mxu0 0
      %433 = vmatpush.bf16.msra.mxu0 0
      %434 = vmatpush.bf16.msra.mxu0 0
      %435 = vmatpush.bf16.msra.mxu0 0
      %436 = vmatpush.bf16.msra.mxu0 %v396
      %437 = vmatmul.bf16.gmra.mxu0 %v389
      %v438 = vpop.f32.mrf.mxu0
      %v439 = vadd.f32 0.0, %v438
      %v440 = vpop.f32.mrf.mxu0
      %441 = vdwg.mxu0
      %442 = vmatpush.bf16.msra.mxu0 0
      %443 = vmatpush.bf16.msra.mxu0 0
      %444 = vmatpush.bf16.msra.mxu0 0
      %445 = vmatpush.bf16.msra.mxu0 0
      %446 = vmatpush.bf16.msra.mxu0 0
      %447 = vmatpush.bf16.msra.mxu0 0
      %448 = vmatpush.bf16.msra.mxu0 0
      %449 = vmatpush.bf16.msra.mxu0 %v399
      %450 = vmatmul.bf16.gmra.mxu0 %v389
      %v451 = vpop.f32.mrf.mxu0
      %v452 = vadd.f32 0.0, %v451
      %v453 = vpop.f32.mrf.mxu0
      %454 = vdwg.mxu0
      %455 = vmatpush.bf16.msra.mxu0 0
      %456 = vmatpush.bf16.msra.mxu0 0
      %457 = vmatpush.bf16.msra.mxu0 0
      %458 = vmatpush.bf16.msra.mxu0 0
      %459 = vmatpush.bf16.msra.mxu0 0
      %460 = vmatpush.bf16.msra.mxu0 0
      %461 = vmatpush.bf16.msra.mxu0 0
      %462 = vmatpush.bf16.msra.mxu0 %v402
      %463 = vmatmul.bf16.gmra.mxu0 %v389
      %v464 = vpop.f32.mrf.mxu0
      %v465 = vadd.f32 0.0, %v464
      %v466 = vpop.f32.mrf.mxu0
      %467 = vdwg.mxu0
      %468 = vmatpush.bf16.msra.mxu0 0
      %469 = vmatpush.bf16.msra.mxu0 0
      %470 = vmatpush.bf16.msra.mxu0 0
      %471 = vmatpush.bf16.msra.mxu0 0
      %472 = vmatpush.bf16.msra.mxu0 0
      %473 = vmatpush.bf16.msra.mxu0 0
      %474 = vmatpush.bf16.msra.mxu0 0
      %475 = vmatpush.bf16.msra.mxu0 %v405
      %476 = vmatmul.bf16.gmra.mxu0 %v389
      %v477 = vpop.f32.mrf.mxu0
      %v478 = vadd.f32 0.0, %v477
      %v479 = vpop.f32.mrf.mxu0
      %480 = vdwg.mxu0
      %481 = vmatpush.bf16.msra.mxu0 0
      %482 = vmatpush.bf16.msra.mxu0 0
      %483 = vmatpush.bf16.msra.mxu0 0
      %484 = vmatpush.bf16.msra.mxu0 0
      %485 = vmatpush.bf16.msra.mxu0 0
      %486 = vmatpush.bf16.msra.mxu0 0
      %487 = vmatpush.bf16.msra.mxu0 0
      %488 = vmatpush.bf16.msra.mxu0 %v408
      %489 = vmatmul.bf16.gmra.mxu0 %v389
      %v490 = vpop.f32.mrf.mxu0
      %v491 = vadd.f32 0.0, %v490
      %v492 = vpop.f32.mrf.mxu0
      %493 = vdwg.mxu0
      %494 = vmatpush.bf16.msra.mxu0 0
      %495 = vmatpush.bf16.msra.mxu0 0
      %496 = vmatpush.bf16.msra.mxu0 0
      %497 = vmatpush.bf16.msra.mxu0 0
      %498 = vmatpush.bf16.msra.mxu0 0
      %499 = vmatpush.bf16.msra.mxu0 0
      %500 = vmatpush.bf16.msra.mxu0 0
      %501 = vmatpush.bf16.msra.mxu0 %v411
      %502 = vmatmul.bf16.gmra.mxu0 %v389
      %v503 = vpop.f32.mrf.mxu0
      %v504 = vadd.f32 0.0, %v503
      %v505 = vpop.f32.mrf.mxu0
      %506 = vdwg.mxu0
      %507 = vmatpush.bf16.msra.mxu0 0
      %508 = vmatpush.bf16.msra.mxu0 0
      %509 = vmatpush.bf16.msra.mxu0 0
      %510 = vmatpush.bf16.msra.mxu0 0
      %511 = vmatpush.bf16.msra.mxu0 0
      %512 = vmatpush.bf16.msra.mxu0 0
      %513 = vmatpush.bf16.msra.mxu0 0
      %514 = vmatpush.bf16.msra.mxu0 %v414
      %515 = vmatmul.bf16.gmra.mxu0 %v389
      %v516 = vpop.f32.mrf.mxu0
      %v517 = vadd.f32 0.0, %v516
      %v518 = vpop.f32.mrf.mxu0
      %519 = vdwg.mxu0
      %v521 = vsel %vm387, %v231, 0
      %v524 = vsel %vm391, %v338, 0
      %v527 = vsel %vm391, %v339, 0
      %v530 = vsel %vm391, %v340, 0
      %v533 = vsel %vm391, %v341, 0
      %v536 = vsel %vm391, %v342, 0
      %v539 = vsel %vm391, %v343, 0
      %v542 = vsel %vm391, %v344, 0
      %v545 = vsel %vm391, %v345, 0
      %547 = vmatpush.bf16.msra.mxu0 0
      %548 = vmatpush.bf16.msra.mxu0 0
      %549 = vmatpush.bf16.msra.mxu0 0
      %550 = vmatpush.bf16.msra.mxu0 0
      %551 = vmatpush.bf16.msra.mxu0 0
      %552 = vmatpush.bf16.msra.mxu0 0
      %553 = vmatpush.bf16.msra.mxu0 0
      %554 = vmatpush.bf16.msra.mxu0 %v524
      %555 = vmatmul.bf16.gmra.mxu0 %v521
      %v556 = vpop.f32.mrf.mxu0
      %v557 = vadd.f32 %v426, %v556
      %v558 = vpop.f32.mrf.mxu0
      %559 = vdwg.mxu0
      %560 = vmatpush.bf16.msra.mxu0 0
      %561 = vmatpush.bf16.msra.mxu0 0
      %562 = vmatpush.bf16.msra.mxu0 0
      %563 = vmatpush.bf16.msra.mxu0 0
      %564 = vmatpush.bf16.msra.mxu0 0
      %565 = vmatpush.bf16.msra.mxu0 0
      %566 = vmatpush.bf16.msra.mxu0 0
      %567 = vmatpush.bf16.msra.mxu0 %v527
      %568 = vmatmul.bf16.gmra.mxu0 %v521
      %v569 = vpop.f32.mrf.mxu0
      %v570 = vadd.f32 %v439, %v569
      %v571 = vpop.f32.mrf.mxu0
      %572 = vdwg.mxu0
      %573 = vmatpush.bf16.msra.mxu0 0
      %574 = vmatpush.bf16.msra.mxu0 0
      %575 = vmatpush.bf16.msra.mxu0 0
      %576 = vmatpush.bf16.msra.mxu0 0
      %577 = vmatpush.bf16.msra.mxu0 0
      %578 = vmatpush.bf16.msra.mxu0 0
      %579 = vmatpush.bf16.msra.mxu0 0
      %580 = vmatpush.bf16.msra.mxu0 %v530
      %581 = vmatmul.bf16.gmra.mxu0 %v521
      %v582 = vpop.f32.mrf.mxu0
      %v583 = vadd.f32 %v452, %v582
      %v584 = vpop.f32.mrf.mxu0
      %585 = vdwg.mxu0
      %586 = vmatpush.bf16.msra.mxu0 0
      %587 = vmatpush.bf16.msra.mxu0 0
      %588 = vmatpush.bf16.msra.mxu0 0
      %589 = vmatpush.bf16.msra.mxu0 0
      %590 = vmatpush.bf16.msra.mxu0 0
      %591 = vmatpush.bf16.msra.mxu0 0
      %592 = vmatpush.bf16.msra.mxu0 0
      %593 = vmatpush.bf16.msra.mxu0 %v533
      %594 = vmatmul.bf16.gmra.mxu0 %v521
      %v595 = vpop.f32.mrf.mxu0
      %v596 = vadd.f32 %v465, %v595
      %v597 = vpop.f32.mrf.mxu0
      %598 = vdwg.mxu0
      %599 = vmatpush.bf16.msra.mxu0 0
      %600 = vmatpush.bf16.msra.mxu0 0
      %601 = vmatpush.bf16.msra.mxu0 0
      %602 = vmatpush.bf16.msra.mxu0 0
      %603 = vmatpush.bf16.msra.mxu0 0
      %604 = vmatpush.bf16.msra.mxu0 0
      %605 = vmatpush.bf16.msra.mxu0 0
      %606 = vmatpush.bf16.msra.mxu0 %v536
      %607 = vmatmul.bf16.gmra.mxu0 %v521
      %v608 = vpop.f32.mrf.mxu0
      %v609 = vadd.f32 %v478, %v608
      %v610 = vpop.f32.mrf.mxu0
      %611 = vdwg.mxu0
      %612 = vmatpush.bf16.msra.mxu0 0
      %613 = vmatpush.bf16.msra.mxu0 0
      %614 = vmatpush.bf16.msra.mxu0 0
      %615 = vmatpush.bf16.msra.mxu0 0
      %616 = vmatpush.bf16.msra.mxu0 0
      %617 = vmatpush.bf16.msra.mxu0 0
      %618 = vmatpush.bf16.msra.mxu0 0
      %619 = vmatpush.bf16.msra.mxu0 %v539
      %620 = vmatmul.bf16.gmra.mxu0 %v521
      %v621 = vpop.f32.mrf.mxu0
      %v622 = vadd.f32 %v491, %v621
      %v623 = vpop.f32.mrf.mxu0
      %624 = vdwg.mxu0
      %625 = vmatpush.bf16.msra.mxu0 0
      %626 = vmatpush.bf16.msra.mxu0 0
      %627 = vmatpush.bf16.msra.mxu0 0
      %628 = vmatpush.bf16.msra.mxu0 0
      %629 = vmatpush.bf16.msra.mxu0 0
      %630 = vmatpush.bf16.msra.mxu0 0
      %631 = vmatpush.bf16.msra.mxu0 0
      %632 = vmatpush.bf16.msra.mxu0 %v542
      %633 = vmatmul.bf16.gmra.mxu0 %v521
      %v634 = vpop.f32.mrf.mxu0
      %v635 = vadd.f32 %v504, %v634
      %v636 = vpop.f32.mrf.mxu0
      %637 = vdwg.mxu0
      %638 = vmatpush.bf16.msra.mxu0 0
      %639 = vmatpush.bf16.msra.mxu0 0
      %640 = vmatpush.bf16.msra.mxu0 0
      %641 = vmatpush.bf16.msra.mxu0 0
      %642 = vmatpush.bf16.msra.mxu0 0
      %643 = vmatpush.bf16.msra.mxu0 0
      %644 = vmatpush.bf16.msra.mxu0 0
      %645 = vmatpush.bf16.msra.mxu0 %v545
      %646 = vmatmul.bf16.gmra.mxu0 %v521
      %v647 = vpop.f32.mrf.mxu0
      %v648 = vadd.f32 %v517, %v647
      %v649 = vpop.f32.mrf.mxu0
      %650 = vdwg.mxu0
      %651 = vrot.lane.b32.xlu0 %v289, 109
      %v652 = vpop.permute.xlu0 %651
      %653 = vrot.lane.b32.xlu0 %v290, 109
      %v654 = vpop.permute.xlu0 %653
      %655 = vrot.lane.b32.xlu0 %v291, 109
      %v656 = vpop.permute.xlu0 %655
      %657 = vrot.lane.b32.xlu0 %v292, 109
      %v658 = vpop.permute.xlu0 %657
      %659 = vrot.lane.b32.xlu0 %v293, 109
      %v660 = vpop.permute.xlu0 %659
      %661 = vrot.lane.b32.xlu0 %v294, 109
      %v662 = vpop.permute.xlu0 %661
      %663 = vrot.lane.b32.xlu0 %v295, 109
      %v664 = vpop.permute.xlu0 %663
      %665 = vrot.lane.b32.xlu0 %v296, 109
      %v666 = vpop.permute.xlu0 %665
      %vm667 = vcmask 891904
      %v668 = vsel %vm667, %v652, %v654
      %v669 = vsel %vm667, %v654, %v656
      %v670 = vsel %vm667, %v656, %v658
      %v671 = vsel %vm667, %v658, %v660
      %v672 = vsel %vm667, %v660, %v662
      %v673 = vsel %vm667, %v662, %v664
      %v674 = vsel %vm667, %v664, %v666
      %v683 = vsel %vm667, 0.0, %v652
      %v684 = vpack.c.bf16 %v683, %v683
      %v685 = vpack.c.bf16 %v668, %v668
      %v686 = vpack.c.bf16 %v669, %v669
      %v687 = vpack.c.bf16 %v670, %v670
      %v688 = vpack.c.bf16 %v671, %v671
      %v689 = vpack.c.bf16 %v672, %v672
      %v690 = vpack.c.bf16 %v673, %v673
      %v691 = vpack.c.bf16 %v674, %v674
      %v693 = vsel %vm387, %v233, 0
      %v696 = vsel %vm391, %v684, 0
      %v699 = vsel %vm391, %v685, 0
      %v702 = vsel %vm391, %v686, 0
      %v705 = vsel %vm391, %v687, 0
      %v708 = vsel %vm391, %v688, 0
      %v711 = vsel %vm391, %v689, 0
      %v714 = vsel %vm391, %v690, 0
      %v717 = vsel %vm391, %v691, 0
      %719 = vmatpush.bf16.msra.mxu0 0
      %720 = vmatpush.bf16.msra.mxu0 0
      %721 = vmatpush.bf16.msra.mxu0 0
      %722 = vmatpush.bf16.msra.mxu0 0
      %723 = vmatpush.bf16.msra.mxu0 0
      %724 = vmatpush.bf16.msra.mxu0 0
      %725 = vmatpush.bf16.msra.mxu0 0
      %726 = vmatpush.bf16.msra.mxu0 %v696
      %727 = vmatmul.bf16.gmra.mxu0 %v693
      %v728 = vpop.f32.mrf.mxu0
      %v729 = vadd.f32 0.0, %v728
      %v730 = vpop.f32.mrf.mxu0
      %731 = vdwg.mxu0
      %732 = vmatpush.bf16.msra.mxu0 0
      %733 = vmatpush.bf16.msra.mxu0 0
      %734 = vmatpush.bf16.msra.mxu0 0
      %735 = vmatpush.bf16.msra.mxu0 0
      %736 = vmatpush.bf16.msra.mxu0 0
      %737 = vmatpush.bf16.msra.mxu0 0
      %738 = vmatpush.bf16.msra.mxu0 0
      %739 = vmatpush.bf16.msra.mxu0 %v699
      %740 = vmatmul.bf16.gmra.mxu0 %v693
      %v741 = vpop.f32.mrf.mxu0
      %v742 = vadd.f32 0.0, %v741
      %v743 = vpop.f32.mrf.mxu0
      %744 = vdwg.mxu0
      %745 = vmatpush.bf16.msra.mxu0 0
      %746 = vmatpush.bf16.msra.mxu0 0
      %747 = vmatpush.bf16.msra.mxu0 0
      %748 = vmatpush.bf16.msra.mxu0 0
      %749 = vmatpush.bf16.msra.mxu0 0
      %750 = vmatpush.bf16.msra.mxu0 0
      %751 = vmatpush.bf16.msra.mxu0 0
      %752 = vmatpush.bf16.msra.mxu0 %v702
      %753 = vmatmul.bf16.gmra.mxu0 %v693
      %v754 = vpop.f32.mrf.mxu0
      %v755 = vadd.f32 0.0, %v754
      %v756 = vpop.f32.mrf.mxu0
      %757 = vdwg.mxu0
      %758 = vmatpush.bf16.msra.mxu0 0
      %759 = vmatpush.bf16.msra.mxu0 0
      %760 = vmatpush.bf16.msra.mxu0 0
      %761 = vmatpush.bf16.msra.mxu0 0
      %762 = vmatpush.bf16.msra.mxu0 0
      %763 = vmatpush.bf16.msra.mxu0 0
      %764 = vmatpush.bf16.msra.mxu0 0
      %765 = vmatpush.bf16.msra.mxu0 %v705
      %766 = vmatmul.bf16.gmra.mxu0 %v693
      %v767 = vpop.f32.mrf.mxu0
      %v768 = vadd.f32 0.0, %v767
      %v769 = vpop.f32.mrf.mxu0
      %770 = vdwg.mxu0
      %771 = vmatpush.bf16.msra.mxu0 0
      %772 = vmatpush.bf16.msra.mxu0 0
      %773 = vmatpush.bf16.msra.mxu0 0
      %774 = vmatpush.bf16.msra.mxu0 0
      %775 = vmatpush.bf16.msra.mxu0 0
      %776 = vmatpush.bf16.msra.mxu0 0
      %777 = vmatpush.bf16.msra.mxu0 0
      %778 = vmatpush.bf16.msra.mxu0 %v708
      %779 = vmatmul.bf16.gmra.mxu0 %v693
      %v780 = vpop.f32.mrf.mxu0
      %v781 = vadd.f32 0.0, %v780
      %v782 = vpop.f32.mrf.mxu0
      %783 = vdwg.mxu0
      %784 = vmatpush.bf16.msra.mxu0 0
      %785 = vmatpush.bf16.msra.mxu0 0
      %786 = vmatpush.bf16.msra.mxu0 0
      %787 = vmatpush.bf16.msra.mxu0 0
      %788 = vmatpush.bf16.msra.mxu0 0
      %789 = vmatpush.bf16.msra.mxu0 0
      %790 = vmatpush.bf16.msra.mxu0 0
      %791 = vmatpush.bf16.msra.mxu0 %v711
      %792 = vmatmul.bf16.gmra.mxu0 %v693
      %v793 = vpop.f32.mrf.mxu0
      %v794 = vadd.f32 0.0, %v793
      %v795 = vpop.f32.mrf.mxu0
      %796 = vdwg.mxu0
      %797 = vmatpush.bf16.msra.mxu0 0
      %798 = vmatpush.bf16.msra.mxu0 0
      %799 = vmatpush.bf16.msra.mxu0 0
      %800 = vmatpush.bf16.msra.mxu0 0
      %801 = vmatpush.bf16.msra.mxu0 0
      %802 = vmatpush.bf16.msra.mxu0 0
      %803 = vmatpush.bf16.msra.mxu0 0
      %804 = vmatpush.bf16.msra.mxu0 %v714
      %805 = vmatmul.bf16.gmra.mxu0 %v693
      %v806 = vpop.f32.mrf.mxu0
      %v807 = vadd.f32 0.0, %v806
      %v808 = vpop.f32.mrf.mxu0
      %809 = vdwg.mxu0
      %810 = vmatpush.bf16.msra.mxu0 0
      %811 = vmatpush.bf16.msra.mxu0 0
      %812 = vmatpush.bf16.msra.mxu0 0
      %813 = vmatpush.bf16.msra.mxu0 0
      %814 = vmatpush.bf16.msra.mxu0 0
      %815 = vmatpush.bf16.msra.mxu0 0
      %816 = vmatpush.bf16.msra.mxu0 0
      %817 = vmatpush.bf16.msra.mxu0 %v717
      %818 = vmatmul.bf16.gmra.mxu0 %v693
      %v819 = vpop.f32.mrf.mxu0
      %v820 = vadd.f32 0.0, %v819
      %v821 = vpop.f32.mrf.mxu0
      %822 = vdwg.mxu0
      %v823 = vadd.f32 %v557, %v729
      %v824 = vadd.f32 %v570, %v742
      %v825 = vadd.f32 %v583, %v755
      %v826 = vadd.f32 %v596, %v768
      %v827 = vadd.f32 %v609, %v781
      %v828 = vadd.f32 %v622, %v794
      %v829 = vadd.f32 %v635, %v807
      %v830 = vadd.f32 %v648, %v820
      %831 = vrot.lane.b32.xlu0 %v289, 101
      %v832 = vpop.permute.xlu0 %831
      %833 = vrot.lane.b32.xlu0 %v290, 101
      %v834 = vpop.permute.xlu0 %833
      %835 = vrot.lane.b32.xlu0 %v291, 101
      %v836 = vpop.permute.xlu0 %835
      %837 = vrot.lane.b32.xlu0 %v292, 101
      %v838 = vpop.permute.xlu0 %837
      %839 = vrot.lane.b32.xlu0 %v293, 101
      %v840 = vpop.permute.xlu0 %839
      %841 = vrot.lane.b32.xlu0 %v294, 101
      %v842 = vpop.permute.xlu0 %841
      %843 = vrot.lane.b32.xlu0 %v295, 101
      %v844 = vpop.permute.xlu0 %843
      %845 = vrot.lane.b32.xlu0 %v296, 101
      %v846 = vpop.permute.xlu0 %845
      %vm847 = vcmask 826368
      %v848 = vsel %vm847, %v832, %v834
      %v849 = vsel %vm847, %v834, %v836
      %v850 = vsel %vm847, %v836, %v838
      %v851 = vsel %vm847, %v838, %v840
      %v852 = vsel %vm847, %v840, %v842
      %v853 = vsel %vm847, %v842, %v844
      %v854 = vsel %vm847, %v844, %v846
      %v863 = vsel %vm847, 0.0, %v832
      %v864 = vpack.c.bf16 %v863, %v863
      %v865 = vpack.c.bf16 %v848, %v848
      %v866 = vpack.c.bf16 %v849, %v849
      %v867 = vpack.c.bf16 %v850, %v850
      %v868 = vpack.c.bf16 %v851, %v851
      %v869 = vpack.c.bf16 %v852, %v852
      %v870 = vpack.c.bf16 %v853, %v853
      %v871 = vpack.c.bf16 %v854, %v854
      %v873 = vsel %vm387, %v234, 0
      %v876 = vsel %vm391, %v864, 0
      %v879 = vsel %vm391, %v865, 0
      %v882 = vsel %vm391, %v866, 0
      %v885 = vsel %vm391, %v867, 0
      %v888 = vsel %vm391, %v868, 0
      %v891 = vsel %vm391, %v869, 0
      %v894 = vsel %vm391, %v870, 0
      %v897 = vsel %vm391, %v871, 0
      %899 = vmatpush.bf16.msra.mxu0 0
      %900 = vmatpush.bf16.msra.mxu0 0
      %901 = vmatpush.bf16.msra.mxu0 0
      %902 = vmatpush.bf16.msra.mxu0 0
      %903 = vmatpush.bf16.msra.mxu0 0
      %904 = vmatpush.bf16.msra.mxu0 0
      %905 = vmatpush.bf16.msra.mxu0 0
      %906 = vmatpush.bf16.msra.mxu0 %v876
      %907 = vmatmul.bf16.gmra.mxu0 %v873
      %v908 = vpop.f32.mrf.mxu0
      %v909 = vadd.f32 0.0, %v908
      %v910 = vpop.f32.mrf.mxu0
      %911 = vdwg.mxu0
      %912 = vmatpush.bf16.msra.mxu0 0
      %913 = vmatpush.bf16.msra.mxu0 0
      %914 = vmatpush.bf16.msra.mxu0 0
      %915 = vmatpush.bf16.msra.mxu0 0
      %916 = vmatpush.bf16.msra.mxu0 0
      %917 = vmatpush.bf16.msra.mxu0 0
      %918 = vmatpush.bf16.msra.mxu0 0
      %919 = vmatpush.bf16.msra.mxu0 %v879
      %920 = vmatmul.bf16.gmra.mxu0 %v873
      %v921 = vpop.f32.mrf.mxu0
      %v922 = vadd.f32 0.0, %v921
      %v923 = vpop.f32.mrf.mxu0
      %924 = vdwg.mxu0
      %925 = vmatpush.bf16.msra.mxu0 0
      %926 = vmatpush.bf16.msra.mxu0 0
      %927 = vmatpush.bf16.msra.mxu0 0
      %928 = vmatpush.bf16.msra.mxu0 0
      %929 = vmatpush.bf16.msra.mxu0 0
      %930 = vmatpush.bf16.msra.mxu0 0
      %931 = vmatpush.bf16.msra.mxu0 0
      %932 = vmatpush.bf16.msra.mxu0 %v882
      %933 = vmatmul.bf16.gmra.mxu0 %v873
      %v934 = vpop.f32.mrf.mxu0
      %v935 = vadd.f32 0.0, %v934
      %v936 = vpop.f32.mrf.mxu0
      %937 = vdwg.mxu0
      %938 = vmatpush.bf16.msra.mxu0 0
      %939 = vmatpush.bf16.msra.mxu0 0
      %940 = vmatpush.bf16.msra.mxu0 0
      %941 = vmatpush.bf16.msra.mxu0 0
      %942 = vmatpush.bf16.msra.mxu0 0
      %943 = vmatpush.bf16.msra.mxu0 0
      %944 = vmatpush.bf16.msra.mxu0 0
      %945 = vmatpush.bf16.msra.mxu0 %v885
      %946 = vmatmul.bf16.gmra.mxu0 %v873
      %v947 = vpop.f32.mrf.mxu0
      %v948 = vadd.f32 0.0, %v947
      %v949 = vpop.f32.mrf.mxu0
      %950 = vdwg.mxu0
      %951 = vmatpush.bf16.msra.mxu0 0
      %952 = vmatpush.bf16.msra.mxu0 0
      %953 = vmatpush.bf16.msra.mxu0 0
      %954 = vmatpush.bf16.msra.mxu0 0
      %955 = vmatpush.bf16.msra.mxu0 0
      %956 = vmatpush.bf16.msra.mxu0 0
      %957 = vmatpush.bf16.msra.mxu0 0
      %958 = vmatpush.bf16.msra.mxu0 %v888
      %959 = vmatmul.bf16.gmra.mxu0 %v873
      %v960 = vpop.f32.mrf.mxu0
      %v961 = vadd.f32 0.0, %v960
      %v962 = vpop.f32.mrf.mxu0
      %963 = vdwg.mxu0
      %964 = vmatpush.bf16.msra.mxu0 0
      %965 = vmatpush.bf16.msra.mxu0 0
      %966 = vmatpush.bf16.msra.mxu0 0
      %967 = vmatpush.bf16.msra.mxu0 0
      %968 = vmatpush.bf16.msra.mxu0 0
      %969 = vmatpush.bf16.msra.mxu0 0
      %970 = vmatpush.bf16.msra.mxu0 0
      %971 = vmatpush.bf16.msra.mxu0 %v891
      %972 = vmatmul.bf16.gmra.mxu0 %v873
      %v973 = vpop.f32.mrf.mxu0
      %v974 = vadd.f32 0.0, %v973
      %v975 = vpop.f32.mrf.mxu0
      %976 = vdwg.mxu0
      %977 = vmatpush.bf16.msra.mxu0 0
      %978 = vmatpush.bf16.msra.mxu0 0
      %979 = vmatpush.bf16.msra.mxu0 0
      %980 = vmatpush.bf16.msra.mxu0 0
      %981 = vmatpush.bf16.msra.mxu0 0
      %982 = vmatpush.bf16.msra.mxu0 0
      %983 = vmatpush.bf16.msra.mxu0 0
      %984 = vmatpush.bf16.msra.mxu0 %v894
      %985 = vmatmul.bf16.gmra.mxu0 %v873
      %v986 = vpop.f32.mrf.mxu0
      %v987 = vadd.f32 0.0, %v986
      %v988 = vpop.f32.mrf.mxu0
      %989 = vdwg.mxu0
      %990 = vmatpush.bf16.msra.mxu0 0
      %991 = vmatpush.bf16.msra.mxu0 0
      %992 = vmatpush.bf16.msra.mxu0 0
      %993 = vmatpush.bf16.msra.mxu0 0
      %994 = vmatpush.bf16.msra.mxu0 0
      %995 = vmatpush.bf16.msra.mxu0 0
      %996 = vmatpush.bf16.msra.mxu0 0
      %997 = vmatpush.bf16.msra.mxu0 %v897
      %998 = vmatmul.bf16.gmra.mxu0 %v873
      %v999 = vpop.f32.mrf.mxu0
      %v1000 = vadd.f32 0.0, %v999
      %v1001 = vpop.f32.mrf.mxu0
      %1002 = vdwg.mxu0
      %v1003 = vadd.f32 %v823, %v909
      %v1004 = vadd.f32 %v824, %v922
      %v1005 = vadd.f32 %v825, %v935
      %v1006 = vadd.f32 %v826, %v948
      %v1007 = vadd.f32 %v827, %v961
      %v1008 = vadd.f32 %v828, %v974
      %v1009 = vadd.f32 %v829, %v987
      %v1010 = vadd.f32 %v830, %v1000
      %1011 = vrot.lane.b32.xlu0 %v289, 100
      %v1012 = vpop.permute.xlu0 %1011
      %1013 = vrot.lane.b32.xlu0 %v290, 100
      %v1014 = vpop.permute.xlu0 %1013
      %1015 = vrot.lane.b32.xlu0 %v291, 100
      %v1016 = vpop.permute.xlu0 %1015
      %1017 = vrot.lane.b32.xlu0 %v292, 100
      %v1018 = vpop.permute.xlu0 %1017
      %1019 = vrot.lane.b32.xlu0 %v293, 100
      %v1020 = vpop.permute.xlu0 %1019
      %1021 = vrot.lane.b32.xlu0 %v294, 100
      %v1022 = vpop.permute.xlu0 %1021
      %1023 = vrot.lane.b32.xlu0 %v295, 100
      %v1024 = vpop.permute.xlu0 %1023
      %1025 = vrot.lane.b32.xlu0 %v296, 100
      %v1026 = vpop.permute.xlu0 %1025
      %vm1027 = vcmask 818176
      %v1028 = vsel %vm1027, %v1012, %v1014
      %v1029 = vsel %vm1027, %v1014, %v1016
      %v1030 = vsel %vm1027, %v1016, %v1018
      %v1031 = vsel %vm1027, %v1018, %v1020
      %v1032 = vsel %vm1027, %v1020, %v1022
      %v1033 = vsel %vm1027, %v1022, %v1024
      %v1034 = vsel %vm1027, %v1024, %v1026
      %v1043 = vsel %vm1027, 0.0, %v1012
      %v1044 = vpack.c.bf16 %v1043, %v1043
      %v1045 = vpack.c.bf16 %v1028, %v1028
      %v1046 = vpack.c.bf16 %v1029, %v1029
      %v1047 = vpack.c.bf16 %v1030, %v1030
      %v1048 = vpack.c.bf16 %v1031, %v1031
      %v1049 = vpack.c.bf16 %v1032, %v1032
      %v1050 = vpack.c.bf16 %v1033, %v1033
      %v1051 = vpack.c.bf16 %v1034, %v1034
      %v1053 = vsel %vm387, %v235, 0
      %v1056 = vsel %vm391, %v1044, 0
      %v1059 = vsel %vm391, %v1045, 0
      %v1062 = vsel %vm391, %v1046, 0
      %v1065 = vsel %vm391, %v1047, 0
      %v1068 = vsel %vm391, %v1048, 0
      %v1071 = vsel %vm391, %v1049, 0
      %v1074 = vsel %vm391, %v1050, 0
      %v1077 = vsel %vm391, %v1051, 0
      %1079 = vmatpush.bf16.msra.mxu0 0
      %1080 = vmatpush.bf16.msra.mxu0 0
      %1081 = vmatpush.bf16.msra.mxu0 0
      %1082 = vmatpush.bf16.msra.mxu0 0
      %1083 = vmatpush.bf16.msra.mxu0 0
      %1084 = vmatpush.bf16.msra.mxu0 0
      %1085 = vmatpush.bf16.msra.mxu0 0
      %1086 = vmatpush.bf16.msra.mxu0 %v1056
      %1087 = vmatmul.bf16.gmra.mxu0 %v1053
      %v1088 = vpop.f32.mrf.mxu0
      %v1089 = vadd.f32 0.0, %v1088
      %v1090 = vpop.f32.mrf.mxu0
      %1091 = vdwg.mxu0
      %1092 = vmatpush.bf16.msra.mxu0 0
      %1093 = vmatpush.bf16.msra.mxu0 0
      %1094 = vmatpush.bf16.msra.mxu0 0
      %1095 = vmatpush.bf16.msra.mxu0 0
      %1096 = vmatpush.bf16.msra.mxu0 0
      %1097 = vmatpush.bf16.msra.mxu0 0
      %1098 = vmatpush.bf16.msra.mxu0 0
      %1099 = vmatpush.bf16.msra.mxu0 %v1059
      %1100 = vmatmul.bf16.gmra.mxu0 %v1053
      %v1101 = vpop.f32.mrf.mxu0
      %v1102 = vadd.f32 0.0, %v1101
      %v1103 = vpop.f32.mrf.mxu0
      %1104 = vdwg.mxu0
      %1105 = vmatpush.bf16.msra.mxu0 0
      %1106 = vmatpush.bf16.msra.mxu0 0
      %1107 = vmatpush.bf16.msra.mxu0 0
      %1108 = vmatpush.bf16.msra.mxu0 0
      %1109 = vmatpush.bf16.msra.mxu0 0
      %1110 = vmatpush.bf16.msra.mxu0 0
      %1111 = vmatpush.bf16.msra.mxu0 0
      %1112 = vmatpush.bf16.msra.mxu0 %v1062
      %1113 = vmatmul.bf16.gmra.mxu0 %v1053
      %v1114 = vpop.f32.mrf.mxu0
      %v1115 = vadd.f32 0.0, %v1114
      %v1116 = vpop.f32.mrf.mxu0
      %1117 = vdwg.mxu0
      %1118 = vmatpush.bf16.msra.mxu0 0
      %1119 = vmatpush.bf16.msra.mxu0 0
      %1120 = vmatpush.bf16.msra.mxu0 0
      %1121 = vmatpush.bf16.msra.mxu0 0
      %1122 = vmatpush.bf16.msra.mxu0 0
      %1123 = vmatpush.bf16.msra.mxu0 0
      %1124 = vmatpush.bf16.msra.mxu0 0
      %1125 = vmatpush.bf16.msra.mxu0 %v1065
      %1126 = vmatmul.bf16.gmra.mxu0 %v1053
      %v1127 = vpop.f32.mrf.mxu0
      %v1128 = vadd.f32 0.0, %v1127
      %v1129 = vpop.f32.mrf.mxu0
      %1130 = vdwg.mxu0
      %1131 = vmatpush.bf16.msra.mxu0 0
      %1132 = vmatpush.bf16.msra.mxu0 0
      %1133 = vmatpush.bf16.msra.mxu0 0
      %1134 = vmatpush.bf16.msra.mxu0 0
      %1135 = vmatpush.bf16.msra.mxu0 0
      %1136 = vmatpush.bf16.msra.mxu0 0
      %1137 = vmatpush.bf16.msra.mxu0 0
      %1138 = vmatpush.bf16.msra.mxu0 %v1068
      %1139 = vmatmul.bf16.gmra.mxu0 %v1053
      %v1140 = vpop.f32.mrf.mxu0
      %v1141 = vadd.f32 0.0, %v1140
      %v1142 = vpop.f32.mrf.mxu0
      %1143 = vdwg.mxu0
      %1144 = vmatpush.bf16.msra.mxu0 0
      %1145 = vmatpush.bf16.msra.mxu0 0
      %1146 = vmatpush.bf16.msra.mxu0 0
      %1147 = vmatpush.bf16.msra.mxu0 0
      %1148 = vmatpush.bf16.msra.mxu0 0
      %1149 = vmatpush.bf16.msra.mxu0 0
      %1150 = vmatpush.bf16.msra.mxu0 0
      %1151 = vmatpush.bf16.msra.mxu0 %v1071
      %1152 = vmatmul.bf16.gmra.mxu0 %v1053
      %v1153 = vpop.f32.mrf.mxu0
      %v1154 = vadd.f32 0.0, %v1153
      %v1155 = vpop.f32.mrf.mxu0
      %1156 = vdwg.mxu0
      %1157 = vmatpush.bf16.msra.mxu0 0
      %1158 = vmatpush.bf16.msra.mxu0 0
      %1159 = vmatpush.bf16.msra.mxu0 0
      %1160 = vmatpush.bf16.msra.mxu0 0
      %1161 = vmatpush.bf16.msra.mxu0 0
      %1162 = vmatpush.bf16.msra.mxu0 0
      %1163 = vmatpush.bf16.msra.mxu0 0
      %1164 = vmatpush.bf16.msra.mxu0 %v1074
      %1165 = vmatmul.bf16.gmra.mxu0 %v1053
      %v1166 = vpop.f32.mrf.mxu0
      %v1167 = vadd.f32 0.0, %v1166
      %v1168 = vpop.f32.mrf.mxu0
      %1169 = vdwg.mxu0
      %1170 = vmatpush.bf16.msra.mxu0 0
      %1171 = vmatpush.bf16.msra.mxu0 0
      %1172 = vmatpush.bf16.msra.mxu0 0
      %1173 = vmatpush.bf16.msra.mxu0 0
      %1174 = vmatpush.bf16.msra.mxu0 0
      %1175 = vmatpush.bf16.msra.mxu0 0
      %1176 = vmatpush.bf16.msra.mxu0 0
      %1177 = vmatpush.bf16.msra.mxu0 %v1077
      %1178 = vmatmul.bf16.gmra.mxu0 %v1053
      %v1179 = vpop.f32.mrf.mxu0
      %v1180 = vadd.f32 0.0, %v1179
      %v1181 = vpop.f32.mrf.mxu0
      %1182 = vdwg.mxu0
      %v1183 = vadd.f32 %v1003, %v1089
      %v1184 = vadd.f32 %v1004, %v1102
      %v1185 = vadd.f32 %v1005, %v1115
      %v1186 = vadd.f32 %v1006, %v1128
      %v1187 = vadd.f32 %v1007, %v1141
      %v1188 = vadd.f32 %v1008, %v1154
      %v1189 = vadd.f32 %v1009, %v1167
      %v1190 = vadd.f32 %v1010, %v1180
      %1191 = vrot.lane.b32.xlu0 %v289, 99
      %v1192 = vpop.permute.xlu0 %1191
      %1193 = vrot.lane.b32.xlu0 %v290, 99
      %v1194 = vpop.permute.xlu0 %1193
      %1195 = vrot.lane.b32.xlu0 %v291, 99
      %v1196 = vpop.permute.xlu0 %1195
      %1197 = vrot.lane.b32.xlu0 %v292, 99
      %v1198 = vpop.permute.xlu0 %1197
      %1199 = vrot.lane.b32.xlu0 %v293, 99
      %v1200 = vpop.permute.xlu0 %1199
      %1201 = vrot.lane.b32.xlu0 %v294, 99
      %v1202 = vpop.permute.xlu0 %1201
      %1203 = vrot.lane.b32.xlu0 %v295, 99
      %v1204 = vpop.permute.xlu0 %1203
      %1205 = vrot.lane.b32.xlu0 %v296, 99
      %v1206 = vpop.permute.xlu0 %1205
      %vm1207 = vcmask 809984
      %v1208 = vsel %vm1207, %v1192, %v1194
      %v1209 = vsel %vm1207, %v1194, %v1196
      %v1210 = vsel %vm1207, %v1196, %v1198
      %v1211 = vsel %vm1207, %v1198, %v1200
      %v1212 = vsel %vm1207, %v1200, %v1202
      %v1213 = vsel %vm1207, %v1202, %v1204
      %v1214 = vsel %vm1207, %v1204, %v1206
      %v1223 = vsel %vm1207, 0.0, %v1192
      %v1224 = vpack.c.bf16 %v1223, %v1223
      %v1225 = vpack.c.bf16 %v1208, %v1208
      %v1226 = vpack.c.bf16 %v1209, %v1209
      %v1227 = vpack.c.bf16 %v1210, %v1210
      %v1228 = vpack.c.bf16 %v1211, %v1211
      %v1229 = vpack.c.bf16 %v1212, %v1212
      %v1230 = vpack.c.bf16 %v1213, %v1213
      %v1231 = vpack.c.bf16 %v1214, %v1214
      %v1233 = vsel %vm387, %v236, 0
      %v1236 = vsel %vm391, %v1224, 0
      %v1239 = vsel %vm391, %v1225, 0
      %v1242 = vsel %vm391, %v1226, 0
      %v1245 = vsel %vm391, %v1227, 0
      %v1248 = vsel %vm391, %v1228, 0
      %v1251 = vsel %vm391, %v1229, 0
      %v1254 = vsel %vm391, %v1230, 0
      %v1257 = vsel %vm391, %v1231, 0
      %1259 = vmatpush.bf16.msra.mxu0 0
      %1260 = vmatpush.bf16.msra.mxu0 0
      %1261 = vmatpush.bf16.msra.mxu0 0
      %1262 = vmatpush.bf16.msra.mxu0 0
      %1263 = vmatpush.bf16.msra.mxu0 0
      %1264 = vmatpush.bf16.msra.mxu0 0
      %1265 = vmatpush.bf16.msra.mxu0 0
      %1266 = vmatpush.bf16.msra.mxu0 %v1236
      %1267 = vmatmul.bf16.gmra.mxu0 %v1233
      %v1268 = vpop.f32.mrf.mxu0
      %v1269 = vadd.f32 0.0, %v1268
      %v1270 = vpop.f32.mrf.mxu0
      %1271 = vdwg.mxu0
      %1272 = vmatpush.bf16.msra.mxu0 0
      %1273 = vmatpush.bf16.msra.mxu0 0
      %1274 = vmatpush.bf16.msra.mxu0 0
      %1275 = vmatpush.bf16.msra.mxu0 0
      %1276 = vmatpush.bf16.msra.mxu0 0
      %1277 = vmatpush.bf16.msra.mxu0 0
      %1278 = vmatpush.bf16.msra.mxu0 0
      %1279 = vmatpush.bf16.msra.mxu0 %v1239
      %1280 = vmatmul.bf16.gmra.mxu0 %v1233
      %v1281 = vpop.f32.mrf.mxu0
      %v1282 = vadd.f32 0.0, %v1281
      %v1283 = vpop.f32.mrf.mxu0
      %1284 = vdwg.mxu0
      %1285 = vmatpush.bf16.msra.mxu0 0
      %1286 = vmatpush.bf16.msra.mxu0 0
      %1287 = vmatpush.bf16.msra.mxu0 0
      %1288 = vmatpush.bf16.msra.mxu0 0
      %1289 = vmatpush.bf16.msra.mxu0 0
      %1290 = vmatpush.bf16.msra.mxu0 0
      %1291 = vmatpush.bf16.msra.mxu0 0
      %1292 = vmatpush.bf16.msra.mxu0 %v1242
      %1293 = vmatmul.bf16.gmra.mxu0 %v1233
      %v1294 = vpop.f32.mrf.mxu0
      %v1295 = vadd.f32 0.0, %v1294
      %v1296 = vpop.f32.mrf.mxu0
      %1297 = vdwg.mxu0
      %1298 = vmatpush.bf16.msra.mxu0 0
      %1299 = vmatpush.bf16.msra.mxu0 0
      %1300 = vmatpush.bf16.msra.mxu0 0
      %1301 = vmatpush.bf16.msra.mxu0 0
      %1302 = vmatpush.bf16.msra.mxu0 0
      %1303 = vmatpush.bf16.msra.mxu0 0
      %1304 = vmatpush.bf16.msra.mxu0 0
      %1305 = vmatpush.bf16.msra.mxu0 %v1245
      %1306 = vmatmul.bf16.gmra.mxu0 %v1233
      %v1307 = vpop.f32.mrf.mxu0
      %v1308 = vadd.f32 0.0, %v1307
      %v1309 = vpop.f32.mrf.mxu0
      %1310 = vdwg.mxu0
      %1311 = vmatpush.bf16.msra.mxu0 0
      %1312 = vmatpush.bf16.msra.mxu0 0
      %1313 = vmatpush.bf16.msra.mxu0 0
      %1314 = vmatpush.bf16.msra.mxu0 0
      %1315 = vmatpush.bf16.msra.mxu0 0
      %1316 = vmatpush.bf16.msra.mxu0 0
      %1317 = vmatpush.bf16.msra.mxu0 0
      %1318 = vmatpush.bf16.msra.mxu0 %v1248
      %1319 = vmatmul.bf16.gmra.mxu0 %v1233
      %v1320 = vpop.f32.mrf.mxu0
      %v1321 = vadd.f32 0.0, %v1320
      %v1322 = vpop.f32.mrf.mxu0
      %1323 = vdwg.mxu0
      %1324 = vmatpush.bf16.msra.mxu0 0
      %1325 = vmatpush.bf16.msra.mxu0 0
      %1326 = vmatpush.bf16.msra.mxu0 0
      %1327 = vmatpush.bf16.msra.mxu0 0
      %1328 = vmatpush.bf16.msra.mxu0 0
      %1329 = vmatpush.bf16.msra.mxu0 0
      %1330 = vmatpush.bf16.msra.mxu0 0
      %1331 = vmatpush.bf16.msra.mxu0 %v1251
      %1332 = vmatmul.bf16.gmra.mxu0 %v1233
      %v1333 = vpop.f32.mrf.mxu0
      %v1334 = vadd.f32 0.0, %v1333
      %v1335 = vpop.f32.mrf.mxu0
      %1336 = vdwg.mxu0
      %1337 = vmatpush.bf16.msra.mxu0 0
      %1338 = vmatpush.bf16.msra.mxu0 0
      %1339 = vmatpush.bf16.msra.mxu0 0
      %1340 = vmatpush.bf16.msra.mxu0 0
      %1341 = vmatpush.bf16.msra.mxu0 0
      %1342 = vmatpush.bf16.msra.mxu0 0
      %1343 = vmatpush.bf16.msra.mxu0 0
      %1344 = vmatpush.bf16.msra.mxu0 %v1254
      %1345 = vmatmul.bf16.gmra.mxu0 %v1233
      %v1346 = vpop.f32.mrf.mxu0
      %v1347 = vadd.f32 0.0, %v1346
      %v1348 = vpop.f32.mrf.mxu0
      %1349 = vdwg.mxu0
      %1350 = vmatpush.bf16.msra.mxu0 0
      %1351 = vmatpush.bf16.msra.mxu0 0
      %1352 = vmatpush.bf16.msra.mxu0 0
      %1353 = vmatpush.bf16.msra.mxu0 0
      %1354 = vmatpush.bf16.msra.mxu0 0
      %1355 = vmatpush.bf16.msra.mxu0 0
      %1356 = vmatpush.bf16.msra.mxu0 0
      %1357 = vmatpush.bf16.msra.mxu0 %v1257
      %1358 = vmatmul.bf16.gmra.mxu0 %v1233
      %v1359 = vpop.f32.mrf.mxu0
      %v1360 = vadd.f32 0.0, %v1359
      %v1361 = vpop.f32.mrf.mxu0
      %1362 = vdwg.mxu0
      %v1363 = vadd.f32 %v1183, %v1269
      %v1364 = vadd.f32 %v1184, %v1282
      %v1365 = vadd.f32 %v1185, %v1295
      %v1366 = vadd.f32 %v1186, %v1308
      %v1367 = vadd.f32 %v1187, %v1321
      %v1368 = vadd.f32 %v1188, %v1334
      %v1369 = vadd.f32 %v1189, %v1347
      %v1370 = vadd.f32 %v1190, %v1360
      %1371 = vrot.lane.b32.xlu0 %v289, 91
      %v1372 = vpop.permute.xlu0 %1371
      %1373 = vrot.lane.b32.xlu0 %v290, 91
      %v1374 = vpop.permute.xlu0 %1373
      %1375 = vrot.lane.b32.xlu0 %v291, 91
      %v1376 = vpop.permute.xlu0 %1375
      %1377 = vrot.lane.b32.xlu0 %v292, 91
      %v1378 = vpop.permute.xlu0 %1377
      %1379 = vrot.lane.b32.xlu0 %v293, 91
      %v1380 = vpop.permute.xlu0 %1379
      %1381 = vrot.lane.b32.xlu0 %v294, 91
      %v1382 = vpop.permute.xlu0 %1381
      %1383 = vrot.lane.b32.xlu0 %v295, 91
      %v1384 = vpop.permute.xlu0 %1383
      %1385 = vrot.lane.b32.xlu0 %v296, 91
      %v1386 = vpop.permute.xlu0 %1385
      %vm1387 = vcmask 744448
      %v1388 = vsel %vm1387, %v1372, %v1374
      %v1389 = vsel %vm1387, %v1374, %v1376
      %v1390 = vsel %vm1387, %v1376, %v1378
      %v1391 = vsel %vm1387, %v1378, %v1380
      %v1392 = vsel %vm1387, %v1380, %v1382
      %v1393 = vsel %vm1387, %v1382, %v1384
      %v1394 = vsel %vm1387, %v1384, %v1386
      %v1403 = vsel %vm1387, 0.0, %v1372
      %v1404 = vpack.c.bf16 %v1403, %v1403
      %v1405 = vpack.c.bf16 %v1388, %v1388
      %v1406 = vpack.c.bf16 %v1389, %v1389
      %v1407 = vpack.c.bf16 %v1390, %v1390
      %v1408 = vpack.c.bf16 %v1391, %v1391
      %v1409 = vpack.c.bf16 %v1392, %v1392
      %v1410 = vpack.c.bf16 %v1393, %v1393
      %v1411 = vpack.c.bf16 %v1394, %v1394
      %v1413 = vsel %vm387, %v237, 0
      %v1416 = vsel %vm391, %v1404, 0
      %v1419 = vsel %vm391, %v1405, 0
      %v1422 = vsel %vm391, %v1406, 0
      %v1425 = vsel %vm391, %v1407, 0
      %v1428 = vsel %vm391, %v1408, 0
      %v1431 = vsel %vm391, %v1409, 0
      %v1434 = vsel %vm391, %v1410, 0
      %v1437 = vsel %vm391, %v1411, 0
      %1439 = vmatpush.bf16.msra.mxu0 0
      %1440 = vmatpush.bf16.msra.mxu0 0
      %1441 = vmatpush.bf16.msra.mxu0 0
      %1442 = vmatpush.bf16.msra.mxu0 0
      %1443 = vmatpush.bf16.msra.mxu0 0
      %1444 = vmatpush.bf16.msra.mxu0 0
      %1445 = vmatpush.bf16.msra.mxu0 0
      %1446 = vmatpush.bf16.msra.mxu0 %v1416
      %1447 = vmatmul.bf16.gmra.mxu0 %v1413
      %v1448 = vpop.f32.mrf.mxu0
      %v1449 = vadd.f32 0.0, %v1448
      %v1450 = vpop.f32.mrf.mxu0
      %1451 = vdwg.mxu0
      %1452 = vmatpush.bf16.msra.mxu0 0
      %1453 = vmatpush.bf16.msra.mxu0 0
      %1454 = vmatpush.bf16.msra.mxu0 0
      %1455 = vmatpush.bf16.msra.mxu0 0
      %1456 = vmatpush.bf16.msra.mxu0 0
      %1457 = vmatpush.bf16.msra.mxu0 0
      %1458 = vmatpush.bf16.msra.mxu0 0
      %1459 = vmatpush.bf16.msra.mxu0 %v1419
      %1460 = vmatmul.bf16.gmra.mxu0 %v1413
      %v1461 = vpop.f32.mrf.mxu0
      %v1462 = vadd.f32 0.0, %v1461
      %v1463 = vpop.f32.mrf.mxu0
      %1464 = vdwg.mxu0
      %1465 = vmatpush.bf16.msra.mxu0 0
      %1466 = vmatpush.bf16.msra.mxu0 0
      %1467 = vmatpush.bf16.msra.mxu0 0
      %1468 = vmatpush.bf16.msra.mxu0 0
      %1469 = vmatpush.bf16.msra.mxu0 0
      %1470 = vmatpush.bf16.msra.mxu0 0
      %1471 = vmatpush.bf16.msra.mxu0 0
      %1472 = vmatpush.bf16.msra.mxu0 %v1422
      %1473 = vmatmul.bf16.gmra.mxu0 %v1413
      %v1474 = vpop.f32.mrf.mxu0
      %v1475 = vadd.f32 0.0, %v1474
      %v1476 = vpop.f32.mrf.mxu0
      %1477 = vdwg.mxu0
      %1478 = vmatpush.bf16.msra.mxu0 0
      %1479 = vmatpush.bf16.msra.mxu0 0
      %1480 = vmatpush.bf16.msra.mxu0 0
      %1481 = vmatpush.bf16.msra.mxu0 0
      %1482 = vmatpush.bf16.msra.mxu0 0
      %1483 = vmatpush.bf16.msra.mxu0 0
      %1484 = vmatpush.bf16.msra.mxu0 0
      %1485 = vmatpush.bf16.msra.mxu0 %v1425
      %1486 = vmatmul.bf16.gmra.mxu0 %v1413
      %v1487 = vpop.f32.mrf.mxu0
      %v1488 = vadd.f32 0.0, %v1487
      %v1489 = vpop.f32.mrf.mxu0
      %1490 = vdwg.mxu0
      %1491 = vmatpush.bf16.msra.mxu0 0
      %1492 = vmatpush.bf16.msra.mxu0 0
      %1493 = vmatpush.bf16.msra.mxu0 0
      %1494 = vmatpush.bf16.msra.mxu0 0
      %1495 = vmatpush.bf16.msra.mxu0 0
      %1496 = vmatpush.bf16.msra.mxu0 0
      %1497 = vmatpush.bf16.msra.mxu0 0
      %1498 = vmatpush.bf16.msra.mxu0 %v1428
      %1499 = vmatmul.bf16.gmra.mxu0 %v1413
      %v1500 = vpop.f32.mrf.mxu0
      %v1501 = vadd.f32 0.0, %v1500
      %v1502 = vpop.f32.mrf.mxu0
      %1503 = vdwg.mxu0
      %1504 = vmatpush.bf16.msra.mxu0 0
      %1505 = vmatpush.bf16.msra.mxu0 0
      %1506 = vmatpush.bf16.msra.mxu0 0
      %1507 = vmatpush.bf16.msra.mxu0 0
      %1508 = vmatpush.bf16.msra.mxu0 0
      %1509 = vmatpush.bf16.msra.mxu0 0
      %1510 = vmatpush.bf16.msra.mxu0 0
      %1511 = vmatpush.bf16.msra.mxu0 %v1431
      %1512 = vmatmul.bf16.gmra.mxu0 %v1413
      %v1513 = vpop.f32.mrf.mxu0
      %v1514 = vadd.f32 0.0, %v1513
      %v1515 = vpop.f32.mrf.mxu0
      %1516 = vdwg.mxu0
      %1517 = vmatpush.bf16.msra.mxu0 0
      %1518 = vmatpush.bf16.msra.mxu0 0
      %1519 = vmatpush.bf16.msra.mxu0 0
      %1520 = vmatpush.bf16.msra.mxu0 0
      %1521 = vmatpush.bf16.msra.mxu0 0
      %1522 = vmatpush.bf16.msra.mxu0 0
      %1523 = vmatpush.bf16.msra.mxu0 0
      %1524 = vmatpush.bf16.msra.mxu0 %v1434
      %1525 = vmatmul.bf16.gmra.mxu0 %v1413
      %v1526 = vpop.f32.mrf.mxu0
      %v1527 = vadd.f32 0.0, %v1526
      %v1528 = vpop.f32.mrf.mxu0
      %1529 = vdwg.mxu0
      %1530 = vmatpush.bf16.msra.mxu0 0
      %1531 = vmatpush.bf16.msra.mxu0 0
      %1532 = vmatpush.bf16.msra.mxu0 0
      %1533 = vmatpush.bf16.msra.mxu0 0
      %1534 = vmatpush.bf16.msra.mxu0 0
      %1535 = vmatpush.bf16.msra.mxu0 0
      %1536 = vmatpush.bf16.msra.mxu0 0
      %1537 = vmatpush.bf16.msra.mxu0 %v1437
      %1538 = vmatmul.bf16.gmra.mxu0 %v1413
      %v1539 = vpop.f32.mrf.mxu0
      %v1540 = vadd.f32 0.0, %v1539
      %v1541 = vpop.f32.mrf.mxu0
      %1542 = vdwg.mxu0
      %v1543 = vadd.f32 %v1363, %v1449
      %v1544 = vadd.f32 %v1364, %v1462
      %v1545 = vadd.f32 %v1365, %v1475
      %v1546 = vadd.f32 %v1366, %v1488
      %v1547 = vadd.f32 %v1367, %v1501
      %v1548 = vadd.f32 %v1368, %v1514
      %v1549 = vadd.f32 %v1369, %v1527
      %v1550 = vadd.f32 %v1370, %v1540
      %1551 = vrot.lane.b32.xlu0 %v289, 90
      %v1552 = vpop.permute.xlu0 %1551
      %1553 = vrot.lane.b32.xlu0 %v290, 90
      %v1554 = vpop.permute.xlu0 %1553
      %1555 = vrot.lane.b32.xlu0 %v291, 90
      %v1556 = vpop.permute.xlu0 %1555
      %1557 = vrot.lane.b32.xlu0 %v292, 90
      %v1558 = vpop.permute.xlu0 %1557
      %1559 = vrot.lane.b32.xlu0 %v293, 90
      %v1560 = vpop.permute.xlu0 %1559
      %1561 = vrot.lane.b32.xlu0 %v294, 90
      %v1562 = vpop.permute.xlu0 %1561
      %1563 = vrot.lane.b32.xlu0 %v295, 90
      %v1564 = vpop.permute.xlu0 %1563
      %1565 = vrot.lane.b32.xlu0 %v296, 90
      %v1566 = vpop.permute.xlu0 %1565
      %vm1567 = vcmask 736256
      %v1568 = vsel %vm1567, %v1552, %v1554
      %v1569 = vsel %vm1567, %v1554, %v1556
      %v1570 = vsel %vm1567, %v1556, %v1558
      %v1571 = vsel %vm1567, %v1558, %v1560
      %v1572 = vsel %vm1567, %v1560, %v1562
      %v1573 = vsel %vm1567, %v1562, %v1564
      %v1574 = vsel %vm1567, %v1564, %v1566
      %v1583 = vsel %vm1567, 0.0, %v1552
      %v1584 = vpack.c.bf16 %v1583, %v1583
      %v1585 = vpack.c.bf16 %v1568, %v1568
      %v1586 = vpack.c.bf16 %v1569, %v1569
      %v1587 = vpack.c.bf16 %v1570, %v1570
      %v1588 = vpack.c.bf16 %v1571, %v1571
      %v1589 = vpack.c.bf16 %v1572, %v1572
      %v1590 = vpack.c.bf16 %v1573, %v1573
      %v1591 = vpack.c.bf16 %v1574, %v1574
      %v1593 = vsel %vm387, %v238, 0
      %v1596 = vsel %vm391, %v1584, 0
      %v1599 = vsel %vm391, %v1585, 0
      %v1602 = vsel %vm391, %v1586, 0
      %v1605 = vsel %vm391, %v1587, 0
      %v1608 = vsel %vm391, %v1588, 0
      %v1611 = vsel %vm391, %v1589, 0
      %v1614 = vsel %vm391, %v1590, 0
      %v1617 = vsel %vm391, %v1591, 0
      %1619 = vmatpush.bf16.msra.mxu0 0
      %1620 = vmatpush.bf16.msra.mxu0 0
      %1621 = vmatpush.bf16.msra.mxu0 0
      %1622 = vmatpush.bf16.msra.mxu0 0
      %1623 = vmatpush.bf16.msra.mxu0 0
      %1624 = vmatpush.bf16.msra.mxu0 0
      %1625 = vmatpush.bf16.msra.mxu0 0
      %1626 = vmatpush.bf16.msra.mxu0 %v1596
      %1627 = vmatmul.bf16.gmra.mxu0 %v1593
      %v1628 = vpop.f32.mrf.mxu0
      %v1629 = vadd.f32 0.0, %v1628
      %v1630 = vpop.f32.mrf.mxu0
      %1631 = vdwg.mxu0
      %1632 = vmatpush.bf16.msra.mxu0 0
      %1633 = vmatpush.bf16.msra.mxu0 0
      %1634 = vmatpush.bf16.msra.mxu0 0
      %1635 = vmatpush.bf16.msra.mxu0 0
      %1636 = vmatpush.bf16.msra.mxu0 0
      %1637 = vmatpush.bf16.msra.mxu0 0
      %1638 = vmatpush.bf16.msra.mxu0 0
      %1639 = vmatpush.bf16.msra.mxu0 %v1599
      %1640 = vmatmul.bf16.gmra.mxu0 %v1593
      %v1641 = vpop.f32.mrf.mxu0
      %v1642 = vadd.f32 0.0, %v1641
      %v1643 = vpop.f32.mrf.mxu0
      %1644 = vdwg.mxu0
      %1645 = vmatpush.bf16.msra.mxu0 0
      %1646 = vmatpush.bf16.msra.mxu0 0
      %1647 = vmatpush.bf16.msra.mxu0 0
      %1648 = vmatpush.bf16.msra.mxu0 0
      %1649 = vmatpush.bf16.msra.mxu0 0
      %1650 = vmatpush.bf16.msra.mxu0 0
      %1651 = vmatpush.bf16.msra.mxu0 0
      %1652 = vmatpush.bf16.msra.mxu0 %v1602
      %1653 = vmatmul.bf16.gmra.mxu0 %v1593
      %v1654 = vpop.f32.mrf.mxu0
      %v1655 = vadd.f32 0.0, %v1654
      %v1656 = vpop.f32.mrf.mxu0
      %1657 = vdwg.mxu0
      %1658 = vmatpush.bf16.msra.mxu0 0
      %1659 = vmatpush.bf16.msra.mxu0 0
      %1660 = vmatpush.bf16.msra.mxu0 0
      %1661 = vmatpush.bf16.msra.mxu0 0
      %1662 = vmatpush.bf16.msra.mxu0 0
      %1663 = vmatpush.bf16.msra.mxu0 0
      %1664 = vmatpush.bf16.msra.mxu0 0
      %1665 = vmatpush.bf16.msra.mxu0 %v1605
      %1666 = vmatmul.bf16.gmra.mxu0 %v1593
      %v1667 = vpop.f32.mrf.mxu0
      %v1668 = vadd.f32 0.0, %v1667
      %v1669 = vpop.f32.mrf.mxu0
      %1670 = vdwg.mxu0
      %1671 = vmatpush.bf16.msra.mxu0 0
      %1672 = vmatpush.bf16.msra.mxu0 0
      %1673 = vmatpush.bf16.msra.mxu0 0
      %1674 = vmatpush.bf16.msra.mxu0 0
      %1675 = vmatpush.bf16.msra.mxu0 0
      %1676 = vmatpush.bf16.msra.mxu0 0
      %1677 = vmatpush.bf16.msra.mxu0 0
      %1678 = vmatpush.bf16.msra.mxu0 %v1608
      %1679 = vmatmul.bf16.gmra.mxu0 %v1593
      %v1680 = vpop.f32.mrf.mxu0
      %v1681 = vadd.f32 0.0, %v1680
      %v1682 = vpop.f32.mrf.mxu0
      %1683 = vdwg.mxu0
      %1684 = vmatpush.bf16.msra.mxu0 0
      %1685 = vmatpush.bf16.msra.mxu0 0
      %1686 = vmatpush.bf16.msra.mxu0 0
      %1687 = vmatpush.bf16.msra.mxu0 0
      %1688 = vmatpush.bf16.msra.mxu0 0
      %1689 = vmatpush.bf16.msra.mxu0 0
      %1690 = vmatpush.bf16.msra.mxu0 0
      %1691 = vmatpush.bf16.msra.mxu0 %v1611
      %1692 = vmatmul.bf16.gmra.mxu0 %v1593
      %v1693 = vpop.f32.mrf.mxu0
      %v1694 = vadd.f32 0.0, %v1693
      %v1695 = vpop.f32.mrf.mxu0
      %1696 = vdwg.mxu0
      %1697 = vmatpush.bf16.msra.mxu0 0
      %1698 = vmatpush.bf16.msra.mxu0 0
      %1699 = vmatpush.bf16.msra.mxu0 0
      %1700 = vmatpush.bf16.msra.mxu0 0
      %1701 = vmatpush.bf16.msra.mxu0 0
      %1702 = vmatpush.bf16.msra.mxu0 0
      %1703 = vmatpush.bf16.msra.mxu0 0
      %1704 = vmatpush.bf16.msra.mxu0 %v1614
      %1705 = vmatmul.bf16.gmra.mxu0 %v1593
      %v1706 = vpop.f32.mrf.mxu0
      %v1707 = vadd.f32 0.0, %v1706
      %v1708 = vpop.f32.mrf.mxu0
      %1709 = vdwg.mxu0
      %1710 = vmatpush.bf16.msra.mxu0 0
      %1711 = vmatpush.bf16.msra.mxu0 0
      %1712 = vmatpush.bf16.msra.mxu0 0
      %1713 = vmatpush.bf16.msra.mxu0 0
      %1714 = vmatpush.bf16.msra.mxu0 0
      %1715 = vmatpush.bf16.msra.mxu0 0
      %1716 = vmatpush.bf16.msra.mxu0 0
      %1717 = vmatpush.bf16.msra.mxu0 %v1617
      %1718 = vmatmul.bf16.gmra.mxu0 %v1593
      %v1719 = vpop.f32.mrf.mxu0
      %v1720 = vadd.f32 0.0, %v1719
      %v1721 = vpop.f32.mrf.mxu0
      %1722 = vdwg.mxu0
      %v1723 = vadd.f32 %v1543, %v1629
      %v1724 = vadd.f32 %v1544, %v1642
      %v1725 = vadd.f32 %v1545, %v1655
      %v1726 = vadd.f32 %v1546, %v1668
      %v1727 = vadd.f32 %v1547, %v1681
      %v1728 = vadd.f32 %v1548, %v1694
      %v1729 = vadd.f32 %v1549, %v1707
      %v1730 = vadd.f32 %v1550, %v1720
      %1731 = vrot.lane.b32.xlu0 %v289, 89
      %v1732 = vpop.permute.xlu0 %1731
      %1733 = vrot.lane.b32.xlu0 %v290, 89
      %v1734 = vpop.permute.xlu0 %1733
      %1735 = vrot.lane.b32.xlu0 %v291, 89
      %v1736 = vpop.permute.xlu0 %1735
      %1737 = vrot.lane.b32.xlu0 %v292, 89
      %v1738 = vpop.permute.xlu0 %1737
      %1739 = vrot.lane.b32.xlu0 %v293, 89
      %v1740 = vpop.permute.xlu0 %1739
      %1741 = vrot.lane.b32.xlu0 %v294, 89
      %v1742 = vpop.permute.xlu0 %1741
      %1743 = vrot.lane.b32.xlu0 %v295, 89
      %v1744 = vpop.permute.xlu0 %1743
      %1745 = vrot.lane.b32.xlu0 %v296, 89
      %v1746 = vpop.permute.xlu0 %1745
      %vm1747 = vcmask 728064
      %v1748 = vsel %vm1747, %v1732, %v1734
      %v1749 = vsel %vm1747, %v1734, %v1736
      %v1750 = vsel %vm1747, %v1736, %v1738
      %v1751 = vsel %vm1747, %v1738, %v1740
      %v1752 = vsel %vm1747, %v1740, %v1742
      %v1753 = vsel %vm1747, %v1742, %v1744
      %v1754 = vsel %vm1747, %v1744, %v1746
      %v1763 = vsel %vm1747, 0.0, %v1732
      %v1764 = vpack.c.bf16 %v1763, %v1763
      %v1765 = vpack.c.bf16 %v1748, %v1748
      %v1766 = vpack.c.bf16 %v1749, %v1749
      %v1767 = vpack.c.bf16 %v1750, %v1750
      %v1768 = vpack.c.bf16 %v1751, %v1751
      %v1769 = vpack.c.bf16 %v1752, %v1752
      %v1770 = vpack.c.bf16 %v1753, %v1753
      %v1771 = vpack.c.bf16 %v1754, %v1754
      %v1773 = vsel %vm387, %v239, 0
      %v1776 = vsel %vm391, %v1764, 0
      %v1779 = vsel %vm391, %v1765, 0
      %v1782 = vsel %vm391, %v1766, 0
      %v1785 = vsel %vm391, %v1767, 0
      %v1788 = vsel %vm391, %v1768, 0
      %v1791 = vsel %vm391, %v1769, 0
      %v1794 = vsel %vm391, %v1770, 0
      %v1797 = vsel %vm391, %v1771, 0
      %1799 = vmatpush.bf16.msra.mxu0 0
      %1800 = vmatpush.bf16.msra.mxu0 0
      %1801 = vmatpush.bf16.msra.mxu0 0
      %1802 = vmatpush.bf16.msra.mxu0 0
      %1803 = vmatpush.bf16.msra.mxu0 0
      %1804 = vmatpush.bf16.msra.mxu0 0
      %1805 = vmatpush.bf16.msra.mxu0 0
      %1806 = vmatpush.bf16.msra.mxu0 %v1776
      %1807 = vmatmul.bf16.gmra.mxu0 %v1773
      %v1808 = vpop.f32.mrf.mxu0
      %v1809 = vadd.f32 0.0, %v1808
      %v1810 = vpop.f32.mrf.mxu0
      %1811 = vdwg.mxu0
      %1812 = vmatpush.bf16.msra.mxu0 0
      %1813 = vmatpush.bf16.msra.mxu0 0
      %1814 = vmatpush.bf16.msra.mxu0 0
      %1815 = vmatpush.bf16.msra.mxu0 0
      %1816 = vmatpush.bf16.msra.mxu0 0
      %1817 = vmatpush.bf16.msra.mxu0 0
      %1818 = vmatpush.bf16.msra.mxu0 0
      %1819 = vmatpush.bf16.msra.mxu0 %v1779
      %1820 = vmatmul.bf16.gmra.mxu0 %v1773
      %v1821 = vpop.f32.mrf.mxu0
      %v1822 = vadd.f32 0.0, %v1821
      %v1823 = vpop.f32.mrf.mxu0
      %1824 = vdwg.mxu0
      %1825 = vmatpush.bf16.msra.mxu0 0
      %1826 = vmatpush.bf16.msra.mxu0 0
      %1827 = vmatpush.bf16.msra.mxu0 0
      %1828 = vmatpush.bf16.msra.mxu0 0
      %1829 = vmatpush.bf16.msra.mxu0 0
      %1830 = vmatpush.bf16.msra.mxu0 0
      %1831 = vmatpush.bf16.msra.mxu0 0
      %1832 = vmatpush.bf16.msra.mxu0 %v1782
      %1833 = vmatmul.bf16.gmra.mxu0 %v1773
      %v1834 = vpop.f32.mrf.mxu0
      %v1835 = vadd.f32 0.0, %v1834
      %v1836 = vpop.f32.mrf.mxu0
      %1837 = vdwg.mxu0
      %1838 = vmatpush.bf16.msra.mxu0 0
      %1839 = vmatpush.bf16.msra.mxu0 0
      %1840 = vmatpush.bf16.msra.mxu0 0
      %1841 = vmatpush.bf16.msra.mxu0 0
      %1842 = vmatpush.bf16.msra.mxu0 0
      %1843 = vmatpush.bf16.msra.mxu0 0
      %1844 = vmatpush.bf16.msra.mxu0 0
      %1845 = vmatpush.bf16.msra.mxu0 %v1785
      %1846 = vmatmul.bf16.gmra.mxu0 %v1773
      %v1847 = vpop.f32.mrf.mxu0
      %v1848 = vadd.f32 0.0, %v1847
      %v1849 = vpop.f32.mrf.mxu0
      %1850 = vdwg.mxu0
      %1851 = vmatpush.bf16.msra.mxu0 0
      %1852 = vmatpush.bf16.msra.mxu0 0
      %1853 = vmatpush.bf16.msra.mxu0 0
      %1854 = vmatpush.bf16.msra.mxu0 0
      %1855 = vmatpush.bf16.msra.mxu0 0
      %1856 = vmatpush.bf16.msra.mxu0 0
      %1857 = vmatpush.bf16.msra.mxu0 0
      %1858 = vmatpush.bf16.msra.mxu0 %v1788
      %1859 = vmatmul.bf16.gmra.mxu0 %v1773
      %v1860 = vpop.f32.mrf.mxu0
      %v1861 = vadd.f32 0.0, %v1860
      %v1862 = vpop.f32.mrf.mxu0
      %1863 = vdwg.mxu0
      %1864 = vmatpush.bf16.msra.mxu0 0
      %1865 = vmatpush.bf16.msra.mxu0 0
      %1866 = vmatpush.bf16.msra.mxu0 0
      %1867 = vmatpush.bf16.msra.mxu0 0
      %1868 = vmatpush.bf16.msra.mxu0 0
      %1869 = vmatpush.bf16.msra.mxu0 0
      %1870 = vmatpush.bf16.msra.mxu0 0
      %1871 = vmatpush.bf16.msra.mxu0 %v1791
      %1872 = vmatmul.bf16.gmra.mxu0 %v1773
      %v1873 = vpop.f32.mrf.mxu0
      %v1874 = vadd.f32 0.0, %v1873
      %v1875 = vpop.f32.mrf.mxu0
      %1876 = vdwg.mxu0
      %1877 = vmatpush.bf16.msra.mxu0 0
      %1878 = vmatpush.bf16.msra.mxu0 0
      %1879 = vmatpush.bf16.msra.mxu0 0
      %1880 = vmatpush.bf16.msra.mxu0 0
      %1881 = vmatpush.bf16.msra.mxu0 0
      %1882 = vmatpush.bf16.msra.mxu0 0
      %1883 = vmatpush.bf16.msra.mxu0 0
      %1884 = vmatpush.bf16.msra.mxu0 %v1794
      %1885 = vmatmul.bf16.gmra.mxu0 %v1773
      %v1886 = vpop.f32.mrf.mxu0
      %v1887 = vadd.f32 0.0, %v1886
      %v1888 = vpop.f32.mrf.mxu0
      %1889 = vdwg.mxu0
      %1890 = vmatpush.bf16.msra.mxu0 0
      %1891 = vmatpush.bf16.msra.mxu0 0
      %1892 = vmatpush.bf16.msra.mxu0 0
      %1893 = vmatpush.bf16.msra.mxu0 0
      %1894 = vmatpush.bf16.msra.mxu0 0
      %1895 = vmatpush.bf16.msra.mxu0 0
      %1896 = vmatpush.bf16.msra.mxu0 0
      %1897 = vmatpush.bf16.msra.mxu0 %v1797
      %1898 = vmatmul.bf16.gmra.mxu0 %v1773
      %v1899 = vpop.f32.mrf.mxu0
      %v1900 = vadd.f32 0.0, %v1899
      %v1901 = vpop.f32.mrf.mxu0
      %1902 = vdwg.mxu0
      %v1903 = vadd.f32 %v1723, %v1809
      %v1904 = vadd.f32 %v1724, %v1822
      %v1905 = vadd.f32 %v1725, %v1835
      %v1906 = vadd.f32 %v1726, %v1848
      %v1907 = vadd.f32 %v1727, %v1861
      %v1908 = vadd.f32 %v1728, %v1874
      %v1909 = vadd.f32 %v1729, %v1887
      %v1910 = vadd.f32 %v1730, %v1900
      %1911 = vrot.lane.b32.xlu0 %v289, 11
      %v1912 = vpop.permute.xlu0 %1911
      %1913 = vrot.lane.b32.xlu0 %v290, 11
      %v1914 = vpop.permute.xlu0 %1913
      %1915 = vrot.lane.b32.xlu0 %v291, 11
      %v1916 = vpop.permute.xlu0 %1915
      %1917 = vrot.lane.b32.xlu0 %v292, 11
      %v1918 = vpop.permute.xlu0 %1917
      %1919 = vrot.lane.b32.xlu0 %v293, 11
      %v1920 = vpop.permute.xlu0 %1919
      %1921 = vrot.lane.b32.xlu0 %v294, 11
      %v1922 = vpop.permute.xlu0 %1921
      %1923 = vrot.lane.b32.xlu0 %v295, 11
      %v1924 = vpop.permute.xlu0 %1923
      %1925 = vrot.lane.b32.xlu0 %v296, 11
      %v1926 = vpop.permute.xlu0 %1925
      %vm1927 = vcmask 89088
      %v1928 = vsel %vm1927, %v1912, %v1914
      %v1929 = vsel %vm1927, %v1914, %v1916
      %v1930 = vsel %vm1927, %v1916, %v1918
      %v1931 = vsel %vm1927, %v1918, %v1920
      %v1932 = vsel %vm1927, %v1920, %v1922
      %v1933 = vsel %vm1927, %v1922, %v1924
      %v1934 = vsel %vm1927, %v1924, %v1926
      %v1943 = vsel %vm1927, 0.0, %v1912
      %v1944 = vpack.c.bf16 %v1943, %v1943
      %v1945 = vpack.c.bf16 %v1928, %v1928
      %v1946 = vpack.c.bf16 %v1929, %v1929
      %v1947 = vpack.c.bf16 %v1930, %v1930
      %v1948 = vpack.c.bf16 %v1931, %v1931
      %v1949 = vpack.c.bf16 %v1932, %v1932
      %v1950 = vpack.c.bf16 %v1933, %v1933
      %v1951 = vpack.c.bf16 %v1934, %v1934
      %v1953 = vsel %vm387, %v240, 0
      %v1956 = vsel %vm391, %v1944, 0
      %v1959 = vsel %vm391, %v1945, 0
      %v1962 = vsel %vm391, %v1946, 0
      %v1965 = vsel %vm391, %v1947, 0
      %v1968 = vsel %vm391, %v1948, 0
      %v1971 = vsel %vm391, %v1949, 0
      %v1974 = vsel %vm391, %v1950, 0
      %v1977 = vsel %vm391, %v1951, 0
      %1979 = vmatpush.bf16.msra.mxu0 0
      %1980 = vmatpush.bf16.msra.mxu0 0
      %1981 = vmatpush.bf16.msra.mxu0 0
      %1982 = vmatpush.bf16.msra.mxu0 0
      %1983 = vmatpush.bf16.msra.mxu0 0
      %1984 = vmatpush.bf16.msra.mxu0 0
      %1985 = vmatpush.bf16.msra.mxu0 0
      %1986 = vmatpush.bf16.msra.mxu0 %v1956
      %1987 = vmatmul.bf16.gmra.mxu0 %v1953
      %v1988 = vpop.f32.mrf.mxu0
      %v1989 = vadd.f32 0.0, %v1988
      %v1990 = vpop.f32.mrf.mxu0
      %1991 = vdwg.mxu0
      %1992 = vmatpush.bf16.msra.mxu0 0
      %1993 = vmatpush.bf16.msra.mxu0 0
      %1994 = vmatpush.bf16.msra.mxu0 0
      %1995 = vmatpush.bf16.msra.mxu0 0
      %1996 = vmatpush.bf16.msra.mxu0 0
      %1997 = vmatpush.bf16.msra.mxu0 0
      %1998 = vmatpush.bf16.msra.mxu0 0
      %1999 = vmatpush.bf16.msra.mxu0 %v1959
      %2000 = vmatmul.bf16.gmra.mxu0 %v1953
      %v2001 = vpop.f32.mrf.mxu0
      %v2002 = vadd.f32 0.0, %v2001
      %v2003 = vpop.f32.mrf.mxu0
      %2004 = vdwg.mxu0
      %2005 = vmatpush.bf16.msra.mxu0 0
      %2006 = vmatpush.bf16.msra.mxu0 0
      %2007 = vmatpush.bf16.msra.mxu0 0
      %2008 = vmatpush.bf16.msra.mxu0 0
      %2009 = vmatpush.bf16.msra.mxu0 0
      %2010 = vmatpush.bf16.msra.mxu0 0
      %2011 = vmatpush.bf16.msra.mxu0 0
      %2012 = vmatpush.bf16.msra.mxu0 %v1962
      %2013 = vmatmul.bf16.gmra.mxu0 %v1953
      %v2014 = vpop.f32.mrf.mxu0
      %v2015 = vadd.f32 0.0, %v2014
      %v2016 = vpop.f32.mrf.mxu0
      %2017 = vdwg.mxu0
      %2018 = vmatpush.bf16.msra.mxu0 0
      %2019 = vmatpush.bf16.msra.mxu0 0
      %2020 = vmatpush.bf16.msra.mxu0 0
      %2021 = vmatpush.bf16.msra.mxu0 0
      %2022 = vmatpush.bf16.msra.mxu0 0
      %2023 = vmatpush.bf16.msra.mxu0 0
      %2024 = vmatpush.bf16.msra.mxu0 0
      %2025 = vmatpush.bf16.msra.mxu0 %v1965
      %2026 = vmatmul.bf16.gmra.mxu0 %v1953
      %v2027 = vpop.f32.mrf.mxu0
      %v2028 = vadd.f32 0.0, %v2027
      %v2029 = vpop.f32.mrf.mxu0
      %2030 = vdwg.mxu0
      %2031 = vmatpush.bf16.msra.mxu0 0
      %2032 = vmatpush.bf16.msra.mxu0 0
      %2033 = vmatpush.bf16.msra.mxu0 0
      %2034 = vmatpush.bf16.msra.mxu0 0
      %2035 = vmatpush.bf16.msra.mxu0 0
      %2036 = vmatpush.bf16.msra.mxu0 0
      %2037 = vmatpush.bf16.msra.mxu0 0
      %2038 = vmatpush.bf16.msra.mxu0 %v1968
      %2039 = vmatmul.bf16.gmra.mxu0 %v1953
      %v2040 = vpop.f32.mrf.mxu0
      %v2041 = vadd.f32 0.0, %v2040
      %v2042 = vpop.f32.mrf.mxu0
      %2043 = vdwg.mxu0
      %2044 = vmatpush.bf16.msra.mxu0 0
      %2045 = vmatpush.bf16.msra.mxu0 0
      %2046 = vmatpush.bf16.msra.mxu0 0
      %2047 = vmatpush.bf16.msra.mxu0 0
      %2048 = vmatpush.bf16.msra.mxu0 0
      %2049 = vmatpush.bf16.msra.mxu0 0
      %2050 = vmatpush.bf16.msra.mxu0 0
      %2051 = vmatpush.bf16.msra.mxu0 %v1971
      %2052 = vmatmul.bf16.gmra.mxu0 %v1953
      %v2053 = vpop.f32.mrf.mxu0
      %v2054 = vadd.f32 0.0, %v2053
      %v2055 = vpop.f32.mrf.mxu0
      %2056 = vdwg.mxu0
      %2057 = vmatpush.bf16.msra.mxu0 0
      %2058 = vmatpush.bf16.msra.mxu0 0
      %2059 = vmatpush.bf16.msra.mxu0 0
      %2060 = vmatpush.bf16.msra.mxu0 0
      %2061 = vmatpush.bf16.msra.mxu0 0
      %2062 = vmatpush.bf16.msra.mxu0 0
      %2063 = vmatpush.bf16.msra.mxu0 0
      %2064 = vmatpush.bf16.msra.mxu0 %v1974
      %2065 = vmatmul.bf16.gmra.mxu0 %v1953
      %v2066 = vpop.f32.mrf.mxu0
      %v2067 = vadd.f32 0.0, %v2066
      %v2068 = vpop.f32.mrf.mxu0
      %2069 = vdwg.mxu0
      %2070 = vmatpush.bf16.msra.mxu0 0
      %2071 = vmatpush.bf16.msra.mxu0 0
      %2072 = vmatpush.bf16.msra.mxu0 0
      %2073 = vmatpush.bf16.msra.mxu0 0
      %2074 = vmatpush.bf16.msra.mxu0 0
      %2075 = vmatpush.bf16.msra.mxu0 0
      %2076 = vmatpush.bf16.msra.mxu0 0
      %2077 = vmatpush.bf16.msra.mxu0 %v1977
      %2078 = vmatmul.bf16.gmra.mxu0 %v1953
      %v2079 = vpop.f32.mrf.mxu0
      %v2080 = vadd.f32 0.0, %v2079
      %v2081 = vpop.f32.mrf.mxu0
      %2082 = vdwg.mxu0
      %v2083 = vadd.f32 %v1903, %v1989
      %v2084 = vadd.f32 %v1904, %v2002
      %v2085 = vadd.f32 %v1905, %v2015
      %v2086 = vadd.f32 %v1906, %v2028
      %v2087 = vadd.f32 %v1907, %v2041
      %v2088 = vadd.f32 %v1908, %v2054
      %v2089 = vadd.f32 %v1909, %v2067
      %v2090 = vadd.f32 %v1910, %v2080
      %2091 = vrot.lane.b32.xlu0 %v289, 10
      %v2092 = vpop.permute.xlu0 %2091
      %2093 = vrot.lane.b32.xlu0 %v290, 10
      %v2094 = vpop.permute.xlu0 %2093
      %2095 = vrot.lane.b32.xlu0 %v291, 10
      %v2096 = vpop.permute.xlu0 %2095
      %2097 = vrot.lane.b32.xlu0 %v292, 10
      %v2098 = vpop.permute.xlu0 %2097
      %2099 = vrot.lane.b32.xlu0 %v293, 10
      %v2100 = vpop.permute.xlu0 %2099
      %2101 = vrot.lane.b32.xlu0 %v294, 10
      %v2102 = vpop.permute.xlu0 %2101
      %2103 = vrot.lane.b32.xlu0 %v295, 10
      %v2104 = vpop.permute.xlu0 %2103
      %2105 = vrot.lane.b32.xlu0 %v296, 10
      %v2106 = vpop.permute.xlu0 %2105
      %vm2107 = vcmask 80896
      %v2108 = vsel %vm2107, %v2092, %v2094
      %v2109 = vsel %vm2107, %v2094, %v2096
      %v2110 = vsel %vm2107, %v2096, %v2098
      %v2111 = vsel %vm2107, %v2098, %v2100
      %v2112 = vsel %vm2107, %v2100, %v2102
      %v2113 = vsel %vm2107, %v2102, %v2104
      %v2114 = vsel %vm2107, %v2104, %v2106
      %v2123 = vsel %vm2107, 0.0, %v2092
      %v2124 = vpack.c.bf16 %v2123, %v2123
      %v2125 = vpack.c.bf16 %v2108, %v2108
      %v2126 = vpack.c.bf16 %v2109, %v2109
      %v2127 = vpack.c.bf16 %v2110, %v2110
      %v2128 = vpack.c.bf16 %v2111, %v2111
      %v2129 = vpack.c.bf16 %v2112, %v2112
      %v2130 = vpack.c.bf16 %v2113, %v2113
      %v2131 = vpack.c.bf16 %v2114, %v2114
      %v2133 = vsel %vm387, %v241, 0
      %v2136 = vsel %vm391, %v2124, 0
      %v2139 = vsel %vm391, %v2125, 0
      %v2142 = vsel %vm391, %v2126, 0
      %v2145 = vsel %vm391, %v2127, 0
      %v2148 = vsel %vm391, %v2128, 0
      %v2151 = vsel %vm391, %v2129, 0
      %v2154 = vsel %vm391, %v2130, 0
      %v2157 = vsel %vm391, %v2131, 0
      %2159 = vmatpush.bf16.msra.mxu0 0
      %2160 = vmatpush.bf16.msra.mxu0 0
      %2161 = vmatpush.bf16.msra.mxu0 0
      %2162 = vmatpush.bf16.msra.mxu0 0
      %2163 = vmatpush.bf16.msra.mxu0 0
      %2164 = vmatpush.bf16.msra.mxu0 0
      %2165 = vmatpush.bf16.msra.mxu0 0
      %2166 = vmatpush.bf16.msra.mxu0 %v2136
      %2167 = vmatmul.bf16.gmra.mxu0 %v2133
      %v2168 = vpop.f32.mrf.mxu0
      %v2169 = vadd.f32 0.0, %v2168
      %v2170 = vpop.f32.mrf.mxu0
      %2171 = vdwg.mxu0
      %2172 = vmatpush.bf16.msra.mxu0 0
      %2173 = vmatpush.bf16.msra.mxu0 0
      %2174 = vmatpush.bf16.msra.mxu0 0
      %2175 = vmatpush.bf16.msra.mxu0 0
      %2176 = vmatpush.bf16.msra.mxu0 0
      %2177 = vmatpush.bf16.msra.mxu0 0
      %2178 = vmatpush.bf16.msra.mxu0 0
      %2179 = vmatpush.bf16.msra.mxu0 %v2139
      %2180 = vmatmul.bf16.gmra.mxu0 %v2133
      %v2181 = vpop.f32.mrf.mxu0
      %v2182 = vadd.f32 0.0, %v2181
      %v2183 = vpop.f32.mrf.mxu0
      %2184 = vdwg.mxu0
      %2185 = vmatpush.bf16.msra.mxu0 0
      %2186 = vmatpush.bf16.msra.mxu0 0
      %2187 = vmatpush.bf16.msra.mxu0 0
      %2188 = vmatpush.bf16.msra.mxu0 0
      %2189 = vmatpush.bf16.msra.mxu0 0
      %2190 = vmatpush.bf16.msra.mxu0 0
      %2191 = vmatpush.bf16.msra.mxu0 0
      %2192 = vmatpush.bf16.msra.mxu0 %v2142
      %2193 = vmatmul.bf16.gmra.mxu0 %v2133
      %v2194 = vpop.f32.mrf.mxu0
      %v2195 = vadd.f32 0.0, %v2194
      %v2196 = vpop.f32.mrf.mxu0
      %2197 = vdwg.mxu0
      %2198 = vmatpush.bf16.msra.mxu0 0
      %2199 = vmatpush.bf16.msra.mxu0 0
      %2200 = vmatpush.bf16.msra.mxu0 0
      %2201 = vmatpush.bf16.msra.mxu0 0
      %2202 = vmatpush.bf16.msra.mxu0 0
      %2203 = vmatpush.bf16.msra.mxu0 0
      %2204 = vmatpush.bf16.msra.mxu0 0
      %2205 = vmatpush.bf16.msra.mxu0 %v2145
      %2206 = vmatmul.bf16.gmra.mxu0 %v2133
      %v2207 = vpop.f32.mrf.mxu0
      %v2208 = vadd.f32 0.0, %v2207
      %v2209 = vpop.f32.mrf.mxu0
      %2210 = vdwg.mxu0
      %2211 = vmatpush.bf16.msra.mxu0 0
      %2212 = vmatpush.bf16.msra.mxu0 0
      %2213 = vmatpush.bf16.msra.mxu0 0
      %2214 = vmatpush.bf16.msra.mxu0 0
      %2215 = vmatpush.bf16.msra.mxu0 0
      %2216 = vmatpush.bf16.msra.mxu0 0
      %2217 = vmatpush.bf16.msra.mxu0 0
      %2218 = vmatpush.bf16.msra.mxu0 %v2148
      %2219 = vmatmul.bf16.gmra.mxu0 %v2133
      %v2220 = vpop.f32.mrf.mxu0
      %v2221 = vadd.f32 0.0, %v2220
      %v2222 = vpop.f32.mrf.mxu0
      %2223 = vdwg.mxu0
      %2224 = vmatpush.bf16.msra.mxu0 0
      %2225 = vmatpush.bf16.msra.mxu0 0
      %2226 = vmatpush.bf16.msra.mxu0 0
      %2227 = vmatpush.bf16.msra.mxu0 0
      %2228 = vmatpush.bf16.msra.mxu0 0
      %2229 = vmatpush.bf16.msra.mxu0 0
      %2230 = vmatpush.bf16.msra.mxu0 0
      %2231 = vmatpush.bf16.msra.mxu0 %v2151
      %2232 = vmatmul.bf16.gmra.mxu0 %v2133
      %v2233 = vpop.f32.mrf.mxu0
      %v2234 = vadd.f32 0.0, %v2233
      %v2235 = vpop.f32.mrf.mxu0
      %2236 = vdwg.mxu0
      %2237 = vmatpush.bf16.msra.mxu0 0
      %2238 = vmatpush.bf16.msra.mxu0 0
      %2239 = vmatpush.bf16.msra.mxu0 0
      %2240 = vmatpush.bf16.msra.mxu0 0
      %2241 = vmatpush.bf16.msra.mxu0 0
      %2242 = vmatpush.bf16.msra.mxu0 0
      %2243 = vmatpush.bf16.msra.mxu0 0
      %2244 = vmatpush.bf16.msra.mxu0 %v2154
      %2245 = vmatmul.bf16.gmra.mxu0 %v2133
      %v2246 = vpop.f32.mrf.mxu0
      %v2247 = vadd.f32 0.0, %v2246
      %v2248 = vpop.f32.mrf.mxu0
      %2249 = vdwg.mxu0
      %2250 = vmatpush.bf16.msra.mxu0 0
      %2251 = vmatpush.bf16.msra.mxu0 0
      %2252 = vmatpush.bf16.msra.mxu0 0
      %2253 = vmatpush.bf16.msra.mxu0 0
      %2254 = vmatpush.bf16.msra.mxu0 0
      %2255 = vmatpush.bf16.msra.mxu0 0
      %2256 = vmatpush.bf16.msra.mxu0 0
      %2257 = vmatpush.bf16.msra.mxu0 %v2157
      %2258 = vmatmul.bf16.gmra.mxu0 %v2133
      %v2259 = vpop.f32.mrf.mxu0
      %v2260 = vadd.f32 0.0, %v2259
      %v2261 = vpop.f32.mrf.mxu0
      %2262 = vdwg.mxu0
      %v2263 = vadd.f32 %v2083, %v2169
      %v2264 = vadd.f32 %v2084, %v2182
      %v2265 = vadd.f32 %v2085, %v2195
      %v2266 = vadd.f32 %v2086, %v2208
      %v2267 = vadd.f32 %v2087, %v2221
      %v2268 = vadd.f32 %v2088, %v2234
      %v2269 = vadd.f32 %v2089, %v2247
      %v2270 = vadd.f32 %v2090, %v2260
      %2271 = vrot.lane.b32.xlu0 %v289, 9
      %v2272 = vpop.permute.xlu0 %2271
      %2273 = vrot.lane.b32.xlu0 %v290, 9
      %v2274 = vpop.permute.xlu0 %2273
      %2275 = vrot.lane.b32.xlu0 %v291, 9
      %v2276 = vpop.permute.xlu0 %2275
      %2277 = vrot.lane.b32.xlu0 %v292, 9
      %v2278 = vpop.permute.xlu0 %2277
      %2279 = vrot.lane.b32.xlu0 %v293, 9
      %v2280 = vpop.permute.xlu0 %2279
      %2281 = vrot.lane.b32.xlu0 %v294, 9
      %v2282 = vpop.permute.xlu0 %2281
      %2283 = vrot.lane.b32.xlu0 %v295, 9
      %v2284 = vpop.permute.xlu0 %2283
      %2285 = vrot.lane.b32.xlu0 %v296, 9
      %v2286 = vpop.permute.xlu0 %2285
      %vm2287 = vcmask 72704
      %v2288 = vsel %vm2287, %v2272, %v2274
      %v2289 = vsel %vm2287, %v2274, %v2276
      %v2290 = vsel %vm2287, %v2276, %v2278
      %v2291 = vsel %vm2287, %v2278, %v2280
      %v2292 = vsel %vm2287, %v2280, %v2282
      %v2293 = vsel %vm2287, %v2282, %v2284
      %v2294 = vsel %vm2287, %v2284, %v2286
      %v2303 = vsel %vm2287, 0.0, %v2272
      %v2304 = vpack.c.bf16 %v2303, %v2303
      %v2305 = vpack.c.bf16 %v2288, %v2288
      %v2306 = vpack.c.bf16 %v2289, %v2289
      %v2307 = vpack.c.bf16 %v2290, %v2290
      %v2308 = vpack.c.bf16 %v2291, %v2291
      %v2309 = vpack.c.bf16 %v2292, %v2292
      %v2310 = vpack.c.bf16 %v2293, %v2293
      %v2311 = vpack.c.bf16 %v2294, %v2294
      %v2313 = vsel %vm387, %v242, 0
      %v2316 = vsel %vm391, %v2304, 0
      %v2319 = vsel %vm391, %v2305, 0
      %v2322 = vsel %vm391, %v2306, 0
      %v2325 = vsel %vm391, %v2307, 0
      %v2328 = vsel %vm391, %v2308, 0
      %v2331 = vsel %vm391, %v2309, 0
      %v2334 = vsel %vm391, %v2310, 0
      %v2337 = vsel %vm391, %v2311, 0
      %2339 = vmatpush.bf16.msra.mxu0 0
      %2340 = vmatpush.bf16.msra.mxu0 0
      %2341 = vmatpush.bf16.msra.mxu0 0
      %2342 = vmatpush.bf16.msra.mxu0 0
      %2343 = vmatpush.bf16.msra.mxu0 0
      %2344 = vmatpush.bf16.msra.mxu0 0
      %2345 = vmatpush.bf16.msra.mxu0 0
      %2346 = vmatpush.bf16.msra.mxu0 %v2316
      %2347 = vmatmul.bf16.gmra.mxu0 %v2313
      %v2348 = vpop.f32.mrf.mxu0
      %v2349 = vadd.f32 0.0, %v2348
      %v2350 = vpop.f32.mrf.mxu0
      %2351 = vdwg.mxu0
      %2352 = vmatpush.bf16.msra.mxu0 0
      %2353 = vmatpush.bf16.msra.mxu0 0
      %2354 = vmatpush.bf16.msra.mxu0 0
      %2355 = vmatpush.bf16.msra.mxu0 0
      %2356 = vmatpush.bf16.msra.mxu0 0
      %2357 = vmatpush.bf16.msra.mxu0 0
      %2358 = vmatpush.bf16.msra.mxu0 0
      %2359 = vmatpush.bf16.msra.mxu0 %v2319
      %2360 = vmatmul.bf16.gmra.mxu0 %v2313
      %v2361 = vpop.f32.mrf.mxu0
      %v2362 = vadd.f32 0.0, %v2361
      %v2363 = vpop.f32.mrf.mxu0
      %2364 = vdwg.mxu0
      %2365 = vmatpush.bf16.msra.mxu0 0
      %2366 = vmatpush.bf16.msra.mxu0 0
      %2367 = vmatpush.bf16.msra.mxu0 0
      %2368 = vmatpush.bf16.msra.mxu0 0
      %2369 = vmatpush.bf16.msra.mxu0 0
      %2370 = vmatpush.bf16.msra.mxu0 0
      %2371 = vmatpush.bf16.msra.mxu0 0
      %2372 = vmatpush.bf16.msra.mxu0 %v2322
      %2373 = vmatmul.bf16.gmra.mxu0 %v2313
      %v2374 = vpop.f32.mrf.mxu0
      %v2375 = vadd.f32 0.0, %v2374
      %v2376 = vpop.f32.mrf.mxu0
      %2377 = vdwg.mxu0
      %2378 = vmatpush.bf16.msra.mxu0 0
      %2379 = vmatpush.bf16.msra.mxu0 0
      %2380 = vmatpush.bf16.msra.mxu0 0
      %2381 = vmatpush.bf16.msra.mxu0 0
      %2382 = vmatpush.bf16.msra.mxu0 0
      %2383 = vmatpush.bf16.msra.mxu0 0
      %2384 = vmatpush.bf16.msra.mxu0 0
      %2385 = vmatpush.bf16.msra.mxu0 %v2325
      %2386 = vmatmul.bf16.gmra.mxu0 %v2313
      %v2387 = vpop.f32.mrf.mxu0
      %v2388 = vadd.f32 0.0, %v2387
      %v2389 = vpop.f32.mrf.mxu0
      %2390 = vdwg.mxu0
      %2391 = vmatpush.bf16.msra.mxu0 0
      %2392 = vmatpush.bf16.msra.mxu0 0
      %2393 = vmatpush.bf16.msra.mxu0 0
      %2394 = vmatpush.bf16.msra.mxu0 0
      %2395 = vmatpush.bf16.msra.mxu0 0
      %2396 = vmatpush.bf16.msra.mxu0 0
      %2397 = vmatpush.bf16.msra.mxu0 0
      %2398 = vmatpush.bf16.msra.mxu0 %v2328
      %2399 = vmatmul.bf16.gmra.mxu0 %v2313
      %v2400 = vpop.f32.mrf.mxu0
      %v2401 = vadd.f32 0.0, %v2400
      %v2402 = vpop.f32.mrf.mxu0
      %2403 = vdwg.mxu0
      %2404 = vmatpush.bf16.msra.mxu0 0
      %2405 = vmatpush.bf16.msra.mxu0 0
      %2406 = vmatpush.bf16.msra.mxu0 0
      %2407 = vmatpush.bf16.msra.mxu0 0
      %2408 = vmatpush.bf16.msra.mxu0 0
      %2409 = vmatpush.bf16.msra.mxu0 0
      %2410 = vmatpush.bf16.msra.mxu0 0
      %2411 = vmatpush.bf16.msra.mxu0 %v2331
      %2412 = vmatmul.bf16.gmra.mxu0 %v2313
      %v2413 = vpop.f32.mrf.mxu0
      %v2414 = vadd.f32 0.0, %v2413
      %v2415 = vpop.f32.mrf.mxu0
      %2416 = vdwg.mxu0
      %2417 = vmatpush.bf16.msra.mxu0 0
      %2418 = vmatpush.bf16.msra.mxu0 0
      %2419 = vmatpush.bf16.msra.mxu0 0
      %2420 = vmatpush.bf16.msra.mxu0 0
      %2421 = vmatpush.bf16.msra.mxu0 0
      %2422 = vmatpush.bf16.msra.mxu0 0
      %2423 = vmatpush.bf16.msra.mxu0 0
      %2424 = vmatpush.bf16.msra.mxu0 %v2334
      %2425 = vmatmul.bf16.gmra.mxu0 %v2313
      %v2426 = vpop.f32.mrf.mxu0
      %v2427 = vadd.f32 0.0, %v2426
      %v2428 = vpop.f32.mrf.mxu0
      %2429 = vdwg.mxu0
      %2430 = vmatpush.bf16.msra.mxu0 0
      %2431 = vmatpush.bf16.msra.mxu0 0
      %2432 = vmatpush.bf16.msra.mxu0 0
      %2433 = vmatpush.bf16.msra.mxu0 0
      %2434 = vmatpush.bf16.msra.mxu0 0
      %2435 = vmatpush.bf16.msra.mxu0 0
      %2436 = vmatpush.bf16.msra.mxu0 0
      %2437 = vmatpush.bf16.msra.mxu0 %v2337
      %2438 = vmatmul.bf16.gmra.mxu0 %v2313
      %v2439 = vpop.f32.mrf.mxu0
      %v2440 = vadd.f32 0.0, %v2439
      %v2441 = vpop.f32.mrf.mxu0
      %2442 = vdwg.mxu0
      %v2443 = vadd.f32 %v2263, %v2349
      %v2444 = vadd.f32 %v2264, %v2362
      %v2445 = vadd.f32 %v2265, %v2375
      %v2446 = vadd.f32 %v2266, %v2388
      %v2447 = vadd.f32 %v2267, %v2401
      %v2448 = vadd.f32 %v2268, %v2414
      %v2449 = vadd.f32 %v2269, %v2427
      %v2450 = vadd.f32 %v2270, %v2440
      %2451 = vrot.lane.b32.xlu0 %v289, 1
      %v2452 = vpop.permute.xlu0 %2451
      %2453 = vrot.lane.b32.xlu0 %v290, 1
      %v2454 = vpop.permute.xlu0 %2453
      %2455 = vrot.lane.b32.xlu0 %v291, 1
      %v2456 = vpop.permute.xlu0 %2455
      %2457 = vrot.lane.b32.xlu0 %v292, 1
      %v2458 = vpop.permute.xlu0 %2457
      %2459 = vrot.lane.b32.xlu0 %v293, 1
      %v2460 = vpop.permute.xlu0 %2459
      %2461 = vrot.lane.b32.xlu0 %v294, 1
      %v2462 = vpop.permute.xlu0 %2461
      %2463 = vrot.lane.b32.xlu0 %v295, 1
      %v2464 = vpop.permute.xlu0 %2463
      %2465 = vrot.lane.b32.xlu0 %v296, 1
      %v2466 = vpop.permute.xlu0 %2465
      %vm2467 = vcmask 7168
      %v2468 = vsel %vm2467, %v2452, %v2454
      %v2469 = vsel %vm2467, %v2454, %v2456
      %v2470 = vsel %vm2467, %v2456, %v2458
      %v2471 = vsel %vm2467, %v2458, %v2460
      %v2472 = vsel %vm2467, %v2460, %v2462
      %v2473 = vsel %vm2467, %v2462, %v2464
      %v2474 = vsel %vm2467, %v2464, %v2466
      %v2483 = vsel %vm2467, 0.0, %v2452
      %v2484 = vpack.c.bf16 %v2483, %v2483
      %v2485 = vpack.c.bf16 %v2468, %v2468
      %v2486 = vpack.c.bf16 %v2469, %v2469
      %v2487 = vpack.c.bf16 %v2470, %v2470
      %v2488 = vpack.c.bf16 %v2471, %v2471
      %v2489 = vpack.c.bf16 %v2472, %v2472
      %v2490 = vpack.c.bf16 %v2473, %v2473
      %v2491 = vpack.c.bf16 %v2474, %v2474
      %v2493 = vsel %vm387, %v243, 0
      %v2496 = vsel %vm391, %v2484, 0
      %v2499 = vsel %vm391, %v2485, 0
      %v2502 = vsel %vm391, %v2486, 0
      %v2505 = vsel %vm391, %v2487, 0
      %v2508 = vsel %vm391, %v2488, 0
      %v2511 = vsel %vm391, %v2489, 0
      %v2514 = vsel %vm391, %v2490, 0
      %v2517 = vsel %vm391, %v2491, 0
      %2519 = vmatpush.bf16.msra.mxu0 0
      %2520 = vmatpush.bf16.msra.mxu0 0
      %2521 = vmatpush.bf16.msra.mxu0 0
      %2522 = vmatpush.bf16.msra.mxu0 0
      %2523 = vmatpush.bf16.msra.mxu0 0
      %2524 = vmatpush.bf16.msra.mxu0 0
      %2525 = vmatpush.bf16.msra.mxu0 0
      %2526 = vmatpush.bf16.msra.mxu0 %v2496
      %2527 = vmatmul.bf16.gmra.mxu0 %v2493
      %v2528 = vpop.f32.mrf.mxu0
      %v2529 = vadd.f32 0.0, %v2528
      %v2530 = vpop.f32.mrf.mxu0
      %2531 = vdwg.mxu0
      %2532 = vmatpush.bf16.msra.mxu0 0
      %2533 = vmatpush.bf16.msra.mxu0 0
      %2534 = vmatpush.bf16.msra.mxu0 0
      %2535 = vmatpush.bf16.msra.mxu0 0
      %2536 = vmatpush.bf16.msra.mxu0 0
      %2537 = vmatpush.bf16.msra.mxu0 0
      %2538 = vmatpush.bf16.msra.mxu0 0
      %2539 = vmatpush.bf16.msra.mxu0 %v2499
      %2540 = vmatmul.bf16.gmra.mxu0 %v2493
      %v2541 = vpop.f32.mrf.mxu0
      %v2542 = vadd.f32 0.0, %v2541
      %v2543 = vpop.f32.mrf.mxu0
      %2544 = vdwg.mxu0
      %2545 = vmatpush.bf16.msra.mxu0 0
      %2546 = vmatpush.bf16.msra.mxu0 0
      %2547 = vmatpush.bf16.msra.mxu0 0
      %2548 = vmatpush.bf16.msra.mxu0 0
      %2549 = vmatpush.bf16.msra.mxu0 0
      %2550 = vmatpush.bf16.msra.mxu0 0
      %2551 = vmatpush.bf16.msra.mxu0 0
      %2552 = vmatpush.bf16.msra.mxu0 %v2502
      %2553 = vmatmul.bf16.gmra.mxu0 %v2493
      %v2554 = vpop.f32.mrf.mxu0
      %v2555 = vadd.f32 0.0, %v2554
      %v2556 = vpop.f32.mrf.mxu0
      %2557 = vdwg.mxu0
      %2558 = vmatpush.bf16.msra.mxu0 0
      %2559 = vmatpush.bf16.msra.mxu0 0
      %2560 = vmatpush.bf16.msra.mxu0 0
      %2561 = vmatpush.bf16.msra.mxu0 0
      %2562 = vmatpush.bf16.msra.mxu0 0
      %2563 = vmatpush.bf16.msra.mxu0 0
      %2564 = vmatpush.bf16.msra.mxu0 0
      %2565 = vmatpush.bf16.msra.mxu0 %v2505
      %2566 = vmatmul.bf16.gmra.mxu0 %v2493
      %v2567 = vpop.f32.mrf.mxu0
      %v2568 = vadd.f32 0.0, %v2567
      %v2569 = vpop.f32.mrf.mxu0
      %2570 = vdwg.mxu0
      %2571 = vmatpush.bf16.msra.mxu0 0
      %2572 = vmatpush.bf16.msra.mxu0 0
      %2573 = vmatpush.bf16.msra.mxu0 0
      %2574 = vmatpush.bf16.msra.mxu0 0
      %2575 = vmatpush.bf16.msra.mxu0 0
      %2576 = vmatpush.bf16.msra.mxu0 0
      %2577 = vmatpush.bf16.msra.mxu0 0
      %2578 = vmatpush.bf16.msra.mxu0 %v2508
      %2579 = vmatmul.bf16.gmra.mxu0 %v2493
      %v2580 = vpop.f32.mrf.mxu0
      %v2581 = vadd.f32 0.0, %v2580
      %v2582 = vpop.f32.mrf.mxu0
      %2583 = vdwg.mxu0
      %2584 = vmatpush.bf16.msra.mxu0 0
      %2585 = vmatpush.bf16.msra.mxu0 0
      %2586 = vmatpush.bf16.msra.mxu0 0
      %2587 = vmatpush.bf16.msra.mxu0 0
      %2588 = vmatpush.bf16.msra.mxu0 0
      %2589 = vmatpush.bf16.msra.mxu0 0
      %2590 = vmatpush.bf16.msra.mxu0 0
      %2591 = vmatpush.bf16.msra.mxu0 %v2511
      %2592 = vmatmul.bf16.gmra.mxu0 %v2493
      %v2593 = vpop.f32.mrf.mxu0
      %v2594 = vadd.f32 0.0, %v2593
      %v2595 = vpop.f32.mrf.mxu0
      %2596 = vdwg.mxu0
      %2597 = vmatpush.bf16.msra.mxu0 0
      %2598 = vmatpush.bf16.msra.mxu0 0
      %2599 = vmatpush.bf16.msra.mxu0 0
      %2600 = vmatpush.bf16.msra.mxu0 0
      %2601 = vmatpush.bf16.msra.mxu0 0
      %2602 = vmatpush.bf16.msra.mxu0 0
      %2603 = vmatpush.bf16.msra.mxu0 0
      %2604 = vmatpush.bf16.msra.mxu0 %v2514
      %2605 = vmatmul.bf16.gmra.mxu0 %v2493
      %v2606 = vpop.f32.mrf.mxu0
      %v2607 = vadd.f32 0.0, %v2606
      %v2608 = vpop.f32.mrf.mxu0
      %2609 = vdwg.mxu0
      %2610 = vmatpush.bf16.msra.mxu0 0
      %2611 = vmatpush.bf16.msra.mxu0 0
      %2612 = vmatpush.bf16.msra.mxu0 0
      %2613 = vmatpush.bf16.msra.mxu0 0
      %2614 = vmatpush.bf16.msra.mxu0 0
      %2615 = vmatpush.bf16.msra.mxu0 0
      %2616 = vmatpush.bf16.msra.mxu0 0
      %2617 = vmatpush.bf16.msra.mxu0 %v2517
      %2618 = vmatmul.bf16.gmra.mxu0 %v2493
      %v2619 = vpop.f32.mrf.mxu0
      %v2620 = vadd.f32 0.0, %v2619
      %v2621 = vpop.f32.mrf.mxu0
      %2622 = vdwg.mxu0
      %v2623 = vadd.f32 %v2443, %v2529
      %v2624 = vadd.f32 %v2444, %v2542
      %v2625 = vadd.f32 %v2445, %v2555
      %v2626 = vadd.f32 %v2446, %v2568
      %v2627 = vadd.f32 %v2447, %v2581
      %v2628 = vadd.f32 %v2448, %v2594
      %v2629 = vadd.f32 %v2449, %v2607
      %v2630 = vadd.f32 %v2450, %v2620
      %v2635 = vunpack.c.l.b16 %v285
      %v2636 = vunpack.c.h.b16 %v285
      %v2637 = vunpack.c.l.b16 %v286
      %v2638 = vunpack.c.h.b16 %v286
      %v2639 = vunpack.c.l.b16 %v287
      %v2640 = vunpack.c.h.b16 %v287
      %v2641 = vunpack.c.l.b16 %v288
      %v2642 = vunpack.c.h.b16 %v288
      %v2643 = vpack.c.b16 %v2635, %v2635
      %v2644 = vpack.c.b16 %v2636, %v2636
      %v2645 = vpack.c.b16 %v2637, %v2637
      %v2646 = vpack.c.b16 %v2638, %v2638
      %v2647 = vpack.c.b16 %v2639, %v2639
      %v2648 = vpack.c.b16 %v2640, %v2640
      %v2649 = vpack.c.b16 %v2641, %v2641
      %v2650 = vpack.c.b16 %v2642, %v2642
      %v2652 = vsel %vm387, %v244, 0
      %v2655 = vsel %vm391, %v2643, 0
      %v2658 = vsel %vm391, %v2644, 0
      %v2661 = vsel %vm391, %v2645, 0
      %v2664 = vsel %vm391, %v2646, 0
      %v2667 = vsel %vm391, %v2647, 0
      %v2670 = vsel %vm391, %v2648, 0
      %v2673 = vsel %vm391, %v2649, 0
      %v2676 = vsel %vm391, %v2650, 0
      %2678 = vmatpush.bf16.msra.mxu0 0
      %2679 = vmatpush.bf16.msra.mxu0 0
      %2680 = vmatpush.bf16.msra.mxu0 0
      %2681 = vmatpush.bf16.msra.mxu0 0
      %2682 = vmatpush.bf16.msra.mxu0 0
      %2683 = vmatpush.bf16.msra.mxu0 0
      %2684 = vmatpush.bf16.msra.mxu0 0
      %2685 = vmatpush.bf16.msra.mxu0 %v2655
      %2686 = vmatmul.bf16.gmra.mxu0 %v2652
      %v2687 = vpop.f32.mrf.mxu0
      %v2688 = vadd.f32 0.0, %v2687
      %v2689 = vpop.f32.mrf.mxu0
      %2690 = vdwg.mxu0
      %2691 = vmatpush.bf16.msra.mxu0 0
      %2692 = vmatpush.bf16.msra.mxu0 0
      %2693 = vmatpush.bf16.msra.mxu0 0
      %2694 = vmatpush.bf16.msra.mxu0 0
      %2695 = vmatpush.bf16.msra.mxu0 0
      %2696 = vmatpush.bf16.msra.mxu0 0
      %2697 = vmatpush.bf16.msra.mxu0 0
      %2698 = vmatpush.bf16.msra.mxu0 %v2658
      %2699 = vmatmul.bf16.gmra.mxu0 %v2652
      %v2700 = vpop.f32.mrf.mxu0
      %v2701 = vadd.f32 0.0, %v2700
      %v2702 = vpop.f32.mrf.mxu0
      %2703 = vdwg.mxu0
      %2704 = vmatpush.bf16.msra.mxu0 0
      %2705 = vmatpush.bf16.msra.mxu0 0
      %2706 = vmatpush.bf16.msra.mxu0 0
      %2707 = vmatpush.bf16.msra.mxu0 0
      %2708 = vmatpush.bf16.msra.mxu0 0
      %2709 = vmatpush.bf16.msra.mxu0 0
      %2710 = vmatpush.bf16.msra.mxu0 0
      %2711 = vmatpush.bf16.msra.mxu0 %v2661
      %2712 = vmatmul.bf16.gmra.mxu0 %v2652
      %v2713 = vpop.f32.mrf.mxu0
      %v2714 = vadd.f32 0.0, %v2713
      %v2715 = vpop.f32.mrf.mxu0
      %2716 = vdwg.mxu0
      %2717 = vmatpush.bf16.msra.mxu0 0
      %2718 = vmatpush.bf16.msra.mxu0 0
      %2719 = vmatpush.bf16.msra.mxu0 0
      %2720 = vmatpush.bf16.msra.mxu0 0
      %2721 = vmatpush.bf16.msra.mxu0 0
      %2722 = vmatpush.bf16.msra.mxu0 0
      %2723 = vmatpush.bf16.msra.mxu0 0
      %2724 = vmatpush.bf16.msra.mxu0 %v2664
      %2725 = vmatmul.bf16.gmra.mxu0 %v2652
      %v2726 = vpop.f32.mrf.mxu0
      %v2727 = vadd.f32 0.0, %v2726
      %v2728 = vpop.f32.mrf.mxu0
      %2729 = vdwg.mxu0
      %2730 = vmatpush.bf16.msra.mxu0 0
      %2731 = vmatpush.bf16.msra.mxu0 0
      %2732 = vmatpush.bf16.msra.mxu0 0
      %2733 = vmatpush.bf16.msra.mxu0 0
      %2734 = vmatpush.bf16.msra.mxu0 0
      %2735 = vmatpush.bf16.msra.mxu0 0
      %2736 = vmatpush.bf16.msra.mxu0 0
      %2737 = vmatpush.bf16.msra.mxu0 %v2667
      %2738 = vmatmul.bf16.gmra.mxu0 %v2652
      %v2739 = vpop.f32.mrf.mxu0
      %v2740 = vadd.f32 0.0, %v2739
      %v2741 = vpop.f32.mrf.mxu0
      %2742 = vdwg.mxu0
      %2743 = vmatpush.bf16.msra.mxu0 0
      %2744 = vmatpush.bf16.msra.mxu0 0
      %2745 = vmatpush.bf16.msra.mxu0 0
      %2746 = vmatpush.bf16.msra.mxu0 0
      %2747 = vmatpush.bf16.msra.mxu0 0
      %2748 = vmatpush.bf16.msra.mxu0 0
      %2749 = vmatpush.bf16.msra.mxu0 0
      %2750 = vmatpush.bf16.msra.mxu0 %v2670
      %2751 = vmatmul.bf16.gmra.mxu0 %v2652
      %v2752 = vpop.f32.mrf.mxu0
      %v2753 = vadd.f32 0.0, %v2752
      %v2754 = vpop.f32.mrf.mxu0
      %2755 = vdwg.mxu0
      %2756 = vmatpush.bf16.msra.mxu0 0
      %2757 = vmatpush.bf16.msra.mxu0 0
      %2758 = vmatpush.bf16.msra.mxu0 0
      %2759 = vmatpush.bf16.msra.mxu0 0
      %2760 = vmatpush.bf16.msra.mxu0 0
      %2761 = vmatpush.bf16.msra.mxu0 0
      %2762 = vmatpush.bf16.msra.mxu0 0
      %2763 = vmatpush.bf16.msra.mxu0 %v2673
      %2764 = vmatmul.bf16.gmra.mxu0 %v2652
      %v2765 = vpop.f32.mrf.mxu0
      %v2766 = vadd.f32 0.0, %v2765
      %v2767 = vpop.f32.mrf.mxu0
      %2768 = vdwg.mxu0
      %2769 = vmatpush.bf16.msra.mxu0 0
      %2770 = vmatpush.bf16.msra.mxu0 0
      %2771 = vmatpush.bf16.msra.mxu0 0
      %2772 = vmatpush.bf16.msra.mxu0 0
      %2773 = vmatpush.bf16.msra.mxu0 0
      %2774 = vmatpush.bf16.msra.mxu0 0
      %2775 = vmatpush.bf16.msra.mxu0 0
      %2776 = vmatpush.bf16.msra.mxu0 %v2676
      %2777 = vmatmul.bf16.gmra.mxu0 %v2652
      %v2778 = vpop.f32.mrf.mxu0
      %v2779 = vadd.f32 0.0, %v2778
      %v2780 = vpop.f32.mrf.mxu0
      %2781 = vdwg.mxu0
      %v2782 = vadd.f32 %v2623, %v2688
      %v2783 = vadd.f32 %v2624, %v2701
      %v2784 = vadd.f32 %v2625, %v2714
      %v2785 = vadd.f32 %v2626, %v2727
      %v2786 = vadd.f32 %v2627, %v2740
      %v2787 = vadd.f32 %v2628, %v2753
      %v2788 = vadd.f32 %v2629, %v2766
      %v2789 = vadd.f32 %v2630, %v2779
      %2790 = vrot.lane.b32.xlu0 %v289, 127
      %v2791 = vpop.permute.xlu0 %2790
      %2792 = vrot.lane.b32.xlu0 %v290, 127
      %v2793 = vpop.permute.xlu0 %2792
      %2794 = vrot.lane.b32.xlu0 %v291, 127
      %v2795 = vpop.permute.xlu0 %2794
      %2796 = vrot.lane.b32.xlu0 %v292, 127
      %v2797 = vpop.permute.xlu0 %2796
      %2798 = vrot.lane.b32.xlu0 %v293, 127
      %v2799 = vpop.permute.xlu0 %2798
      %2800 = vrot.lane.b32.xlu0 %v294, 127
      %v2801 = vpop.permute.xlu0 %2800
      %2802 = vrot.lane.b32.xlu0 %v295, 127
      %v2803 = vpop.permute.xlu0 %2802
      %2804 = vrot.lane.b32.xlu0 %v296, 127
      %v2805 = vpop.permute.xlu0 %2804
      %vm2806 = vcmask 1039360
      %v2807 = vsel %vm2806, %v2791, %v2793
      %v2808 = vsel %vm2806, %v2793, %v2795
      %v2809 = vsel %vm2806, %v2795, %v2797
      %v2810 = vsel %vm2806, %v2797, %v2799
      %v2811 = vsel %vm2806, %v2799, %v2801
      %v2812 = vsel %vm2806, %v2801, %v2803
      %v2813 = vsel %vm2806, %v2803, %v2805
      %v2822 = vsel %vm2806, %v2805, 0.0
      %v2823 = vpack.c.bf16 %v2807, %v2807
      %v2824 = vpack.c.bf16 %v2808, %v2808
      %v2825 = vpack.c.bf16 %v2809, %v2809
      %v2826 = vpack.c.bf16 %v2810, %v2810
      %v2827 = vpack.c.bf16 %v2811, %v2811
      %v2828 = vpack.c.bf16 %v2812, %v2812
      %v2829 = vpack.c.bf16 %v2813, %v2813
      %v2830 = vpack.c.bf16 %v2822, %v2822
      %v2832 = vsel %vm387, %v245, 0
      %v2835 = vsel %vm391, %v2823, 0
      %v2838 = vsel %vm391, %v2824, 0
      %v2841 = vsel %vm391, %v2825, 0
      %v2844 = vsel %vm391, %v2826, 0
      %v2847 = vsel %vm391, %v2827, 0
      %v2850 = vsel %vm391, %v2828, 0
      %v2853 = vsel %vm391, %v2829, 0
      %v2856 = vsel %vm391, %v2830, 0
      %2858 = vmatpush.bf16.msra.mxu0 0
      %2859 = vmatpush.bf16.msra.mxu0 0
      %2860 = vmatpush.bf16.msra.mxu0 0
      %2861 = vmatpush.bf16.msra.mxu0 0
      %2862 = vmatpush.bf16.msra.mxu0 0
      %2863 = vmatpush.bf16.msra.mxu0 0
      %2864 = vmatpush.bf16.msra.mxu0 0
      %2865 = vmatpush.bf16.msra.mxu0 %v2835
      %2866 = vmatmul.bf16.gmra.mxu0 %v2832
      %v2867 = vpop.f32.mrf.mxu0
      %v2868 = vadd.f32 0.0, %v2867
      %v2869 = vpop.f32.mrf.mxu0
      %2870 = vdwg.mxu0
      %2871 = vmatpush.bf16.msra.mxu0 0
      %2872 = vmatpush.bf16.msra.mxu0 0
      %2873 = vmatpush.bf16.msra.mxu0 0
      %2874 = vmatpush.bf16.msra.mxu0 0
      %2875 = vmatpush.bf16.msra.mxu0 0
      %2876 = vmatpush.bf16.msra.mxu0 0
      %2877 = vmatpush.bf16.msra.mxu0 0
      %2878 = vmatpush.bf16.msra.mxu0 %v2838
      %2879 = vmatmul.bf16.gmra.mxu0 %v2832
      %v2880 = vpop.f32.mrf.mxu0
      %v2881 = vadd.f32 0.0, %v2880
      %v2882 = vpop.f32.mrf.mxu0
      %2883 = vdwg.mxu0
      %2884 = vmatpush.bf16.msra.mxu0 0
      %2885 = vmatpush.bf16.msra.mxu0 0
      %2886 = vmatpush.bf16.msra.mxu0 0
      %2887 = vmatpush.bf16.msra.mxu0 0
      %2888 = vmatpush.bf16.msra.mxu0 0
      %2889 = vmatpush.bf16.msra.mxu0 0
      %2890 = vmatpush.bf16.msra.mxu0 0
      %2891 = vmatpush.bf16.msra.mxu0 %v2841
      %2892 = vmatmul.bf16.gmra.mxu0 %v2832
      %v2893 = vpop.f32.mrf.mxu0
      %v2894 = vadd.f32 0.0, %v2893
      %v2895 = vpop.f32.mrf.mxu0
      %2896 = vdwg.mxu0
      %2897 = vmatpush.bf16.msra.mxu0 0
      %2898 = vmatpush.bf16.msra.mxu0 0
      %2899 = vmatpush.bf16.msra.mxu0 0
      %2900 = vmatpush.bf16.msra.mxu0 0
      %2901 = vmatpush.bf16.msra.mxu0 0
      %2902 = vmatpush.bf16.msra.mxu0 0
      %2903 = vmatpush.bf16.msra.mxu0 0
      %2904 = vmatpush.bf16.msra.mxu0 %v2844
      %2905 = vmatmul.bf16.gmra.mxu0 %v2832
      %v2906 = vpop.f32.mrf.mxu0
      %v2907 = vadd.f32 0.0, %v2906
      %v2908 = vpop.f32.mrf.mxu0
      %2909 = vdwg.mxu0
      %2910 = vmatpush.bf16.msra.mxu0 0
      %2911 = vmatpush.bf16.msra.mxu0 0
      %2912 = vmatpush.bf16.msra.mxu0 0
      %2913 = vmatpush.bf16.msra.mxu0 0
      %2914 = vmatpush.bf16.msra.mxu0 0
      %2915 = vmatpush.bf16.msra.mxu0 0
      %2916 = vmatpush.bf16.msra.mxu0 0
      %2917 = vmatpush.bf16.msra.mxu0 %v2847
      %2918 = vmatmul.bf16.gmra.mxu0 %v2832
      %v2919 = vpop.f32.mrf.mxu0
      %v2920 = vadd.f32 0.0, %v2919
      %v2921 = vpop.f32.mrf.mxu0
      %2922 = vdwg.mxu0
      %2923 = vmatpush.bf16.msra.mxu0 0
      %2924 = vmatpush.bf16.msra.mxu0 0
      %2925 = vmatpush.bf16.msra.mxu0 0
      %2926 = vmatpush.bf16.msra.mxu0 0
      %2927 = vmatpush.bf16.msra.mxu0 0
      %2928 = vmatpush.bf16.msra.mxu0 0
      %2929 = vmatpush.bf16.msra.mxu0 0
      %2930 = vmatpush.bf16.msra.mxu0 %v2850
      %2931 = vmatmul.bf16.gmra.mxu0 %v2832
      %v2932 = vpop.f32.mrf.mxu0
      %v2933 = vadd.f32 0.0, %v2932
      %v2934 = vpop.f32.mrf.mxu0
      %2935 = vdwg.mxu0
      %2936 = vmatpush.bf16.msra.mxu0 0
      %2937 = vmatpush.bf16.msra.mxu0 0
      %2938 = vmatpush.bf16.msra.mxu0 0
      %2939 = vmatpush.bf16.msra.mxu0 0
      %2940 = vmatpush.bf16.msra.mxu0 0
      %2941 = vmatpush.bf16.msra.mxu0 0
      %2942 = vmatpush.bf16.msra.mxu0 0
      %2943 = vmatpush.bf16.msra.mxu0 %v2853
      %2944 = vmatmul.bf16.gmra.mxu0 %v2832
      %v2945 = vpop.f32.mrf.mxu0
      %v2946 = vadd.f32 0.0, %v2945
      %v2947 = vpop.f32.mrf.mxu0
      %2948 = vdwg.mxu0
      %2949 = vmatpush.bf16.msra.mxu0 0
      %2950 = vmatpush.bf16.msra.mxu0 0
      %2951 = vmatpush.bf16.msra.mxu0 0
      %2952 = vmatpush.bf16.msra.mxu0 0
      %2953 = vmatpush.bf16.msra.mxu0 0
      %2954 = vmatpush.bf16.msra.mxu0 0
      %2955 = vmatpush.bf16.msra.mxu0 0
      %2956 = vmatpush.bf16.msra.mxu0 %v2856
      %2957 = vmatmul.bf16.gmra.mxu0 %v2832
      %v2958 = vpop.f32.mrf.mxu0
      %v2959 = vadd.f32 0.0, %v2958
      %v2960 = vpop.f32.mrf.mxu0
      %2961 = vdwg.mxu0
      %v2962 = vadd.f32 %v2782, %v2868
      %v2963 = vadd.f32 %v2783, %v2881
      %v2964 = vadd.f32 %v2784, %v2894
      %v2965 = vadd.f32 %v2785, %v2907
      %v2966 = vadd.f32 %v2786, %v2920
      %v2967 = vadd.f32 %v2787, %v2933
      %v2968 = vadd.f32 %v2788, %v2946
      %v2969 = vadd.f32 %v2789, %v2959
      %2970 = vrot.lane.b32.xlu0 %v289, 119
      %v2971 = vpop.permute.xlu0 %2970
      %2972 = vrot.lane.b32.xlu0 %v290, 119
      %v2973 = vpop.permute.xlu0 %2972
      %2974 = vrot.lane.b32.xlu0 %v291, 119
      %v2975 = vpop.permute.xlu0 %2974
      %2976 = vrot.lane.b32.xlu0 %v292, 119
      %v2977 = vpop.permute.xlu0 %2976
      %2978 = vrot.lane.b32.xlu0 %v293, 119
      %v2979 = vpop.permute.xlu0 %2978
      %2980 = vrot.lane.b32.xlu0 %v294, 119
      %v2981 = vpop.permute.xlu0 %2980
      %2982 = vrot.lane.b32.xlu0 %v295, 119
      %v2983 = vpop.permute.xlu0 %2982
      %2984 = vrot.lane.b32.xlu0 %v296, 119
      %v2985 = vpop.permute.xlu0 %2984
      %vm2986 = vcmask 973824
      %v2987 = vsel %vm2986, %v2971, %v2973
      %v2988 = vsel %vm2986, %v2973, %v2975
      %v2989 = vsel %vm2986, %v2975, %v2977
      %v2990 = vsel %vm2986, %v2977, %v2979
      %v2991 = vsel %vm2986, %v2979, %v2981
      %v2992 = vsel %vm2986, %v2981, %v2983
      %v2993 = vsel %vm2986, %v2983, %v2985
      %v3002 = vsel %vm2986, %v2985, 0.0
      %v3003 = vpack.c.bf16 %v2987, %v2987
      %v3004 = vpack.c.bf16 %v2988, %v2988
      %v3005 = vpack.c.bf16 %v2989, %v2989
      %v3006 = vpack.c.bf16 %v2990, %v2990
      %v3007 = vpack.c.bf16 %v2991, %v2991
      %v3008 = vpack.c.bf16 %v2992, %v2992
      %v3009 = vpack.c.bf16 %v2993, %v2993
      %v3010 = vpack.c.bf16 %v3002, %v3002
      %v3012 = vsel %vm387, %v246, 0
      %v3015 = vsel %vm391, %v3003, 0
      %v3018 = vsel %vm391, %v3004, 0
      %v3021 = vsel %vm391, %v3005, 0
      %v3024 = vsel %vm391, %v3006, 0
      %v3027 = vsel %vm391, %v3007, 0
      %v3030 = vsel %vm391, %v3008, 0
      %v3033 = vsel %vm391, %v3009, 0
      %v3036 = vsel %vm391, %v3010, 0
      %3038 = vmatpush.bf16.msra.mxu0 0
      %3039 = vmatpush.bf16.msra.mxu0 0
      %3040 = vmatpush.bf16.msra.mxu0 0
      %3041 = vmatpush.bf16.msra.mxu0 0
      %3042 = vmatpush.bf16.msra.mxu0 0
      %3043 = vmatpush.bf16.msra.mxu0 0
      %3044 = vmatpush.bf16.msra.mxu0 0
      %3045 = vmatpush.bf16.msra.mxu0 %v3015
      %3046 = vmatmul.bf16.gmra.mxu0 %v3012
      %v3047 = vpop.f32.mrf.mxu0
      %v3048 = vadd.f32 0.0, %v3047
      %v3049 = vpop.f32.mrf.mxu0
      %3050 = vdwg.mxu0
      %3051 = vmatpush.bf16.msra.mxu0 0
      %3052 = vmatpush.bf16.msra.mxu0 0
      %3053 = vmatpush.bf16.msra.mxu0 0
      %3054 = vmatpush.bf16.msra.mxu0 0
      %3055 = vmatpush.bf16.msra.mxu0 0
      %3056 = vmatpush.bf16.msra.mxu0 0
      %3057 = vmatpush.bf16.msra.mxu0 0
      %3058 = vmatpush.bf16.msra.mxu0 %v3018
      %3059 = vmatmul.bf16.gmra.mxu0 %v3012
      %v3060 = vpop.f32.mrf.mxu0
      %v3061 = vadd.f32 0.0, %v3060
      %v3062 = vpop.f32.mrf.mxu0
      %3063 = vdwg.mxu0
      %3064 = vmatpush.bf16.msra.mxu0 0
      %3065 = vmatpush.bf16.msra.mxu0 0
      %3066 = vmatpush.bf16.msra.mxu0 0
      %3067 = vmatpush.bf16.msra.mxu0 0
      %3068 = vmatpush.bf16.msra.mxu0 0
      %3069 = vmatpush.bf16.msra.mxu0 0
      %3070 = vmatpush.bf16.msra.mxu0 0
      %3071 = vmatpush.bf16.msra.mxu0 %v3021
      %3072 = vmatmul.bf16.gmra.mxu0 %v3012
      %v3073 = vpop.f32.mrf.mxu0
      %v3074 = vadd.f32 0.0, %v3073
      %v3075 = vpop.f32.mrf.mxu0
      %3076 = vdwg.mxu0
      %3077 = vmatpush.bf16.msra.mxu0 0
      %3078 = vmatpush.bf16.msra.mxu0 0
      %3079 = vmatpush.bf16.msra.mxu0 0
      %3080 = vmatpush.bf16.msra.mxu0 0
      %3081 = vmatpush.bf16.msra.mxu0 0
      %3082 = vmatpush.bf16.msra.mxu0 0
      %3083 = vmatpush.bf16.msra.mxu0 0
      %3084 = vmatpush.bf16.msra.mxu0 %v3024
      %3085 = vmatmul.bf16.gmra.mxu0 %v3012
      %v3086 = vpop.f32.mrf.mxu0
      %v3087 = vadd.f32 0.0, %v3086
      %v3088 = vpop.f32.mrf.mxu0
      %3089 = vdwg.mxu0
      %3090 = vmatpush.bf16.msra.mxu0 0
      %3091 = vmatpush.bf16.msra.mxu0 0
      %3092 = vmatpush.bf16.msra.mxu0 0
      %3093 = vmatpush.bf16.msra.mxu0 0
      %3094 = vmatpush.bf16.msra.mxu0 0
      %3095 = vmatpush.bf16.msra.mxu0 0
      %3096 = vmatpush.bf16.msra.mxu0 0
      %3097 = vmatpush.bf16.msra.mxu0 %v3027
      %3098 = vmatmul.bf16.gmra.mxu0 %v3012
      %v3099 = vpop.f32.mrf.mxu0
      %v3100 = vadd.f32 0.0, %v3099
      %v3101 = vpop.f32.mrf.mxu0
      %3102 = vdwg.mxu0
      %3103 = vmatpush.bf16.msra.mxu0 0
      %3104 = vmatpush.bf16.msra.mxu0 0
      %3105 = vmatpush.bf16.msra.mxu0 0
      %3106 = vmatpush.bf16.msra.mxu0 0
      %3107 = vmatpush.bf16.msra.mxu0 0
      %3108 = vmatpush.bf16.msra.mxu0 0
      %3109 = vmatpush.bf16.msra.mxu0 0
      %3110 = vmatpush.bf16.msra.mxu0 %v3030
      %3111 = vmatmul.bf16.gmra.mxu0 %v3012
      %v3112 = vpop.f32.mrf.mxu0
      %v3113 = vadd.f32 0.0, %v3112
      %v3114 = vpop.f32.mrf.mxu0
      %3115 = vdwg.mxu0
      %3116 = vmatpush.bf16.msra.mxu0 0
      %3117 = vmatpush.bf16.msra.mxu0 0
      %3118 = vmatpush.bf16.msra.mxu0 0
      %3119 = vmatpush.bf16.msra.mxu0 0
      %3120 = vmatpush.bf16.msra.mxu0 0
      %3121 = vmatpush.bf16.msra.mxu0 0
      %3122 = vmatpush.bf16.msra.mxu0 0
      %3123 = vmatpush.bf16.msra.mxu0 %v3033
      %3124 = vmatmul.bf16.gmra.mxu0 %v3012
      %v3125 = vpop.f32.mrf.mxu0
      %v3126 = vadd.f32 0.0, %v3125
      %v3127 = vpop.f32.mrf.mxu0
      %3128 = vdwg.mxu0
      %3129 = vmatpush.bf16.msra.mxu0 0
      %3130 = vmatpush.bf16.msra.mxu0 0
      %3131 = vmatpush.bf16.msra.mxu0 0
      %3132 = vmatpush.bf16.msra.mxu0 0
      %3133 = vmatpush.bf16.msra.mxu0 0
      %3134 = vmatpush.bf16.msra.mxu0 0
      %3135 = vmatpush.bf16.msra.mxu0 0
      %3136 = vmatpush.bf16.msra.mxu0 %v3036
      %3137 = vmatmul.bf16.gmra.mxu0 %v3012
      %v3138 = vpop.f32.mrf.mxu0
      %v3139 = vadd.f32 0.0, %v3138
      %v3140 = vpop.f32.mrf.mxu0
      %3141 = vdwg.mxu0
      %v3142 = vadd.f32 %v2962, %v3048
      %v3143 = vadd.f32 %v2963, %v3061
      %v3144 = vadd.f32 %v2964, %v3074
      %v3145 = vadd.f32 %v2965, %v3087
      %v3146 = vadd.f32 %v2966, %v3100
      %v3147 = vadd.f32 %v2967, %v3113
      %v3148 = vadd.f32 %v2968, %v3126
      %v3149 = vadd.f32 %v2969, %v3139
      %3150 = vrot.lane.b32.xlu0 %v289, 118
      %v3151 = vpop.permute.xlu0 %3150
      %3152 = vrot.lane.b32.xlu0 %v290, 118
      %v3153 = vpop.permute.xlu0 %3152
      %3154 = vrot.lane.b32.xlu0 %v291, 118
      %v3155 = vpop.permute.xlu0 %3154
      %3156 = vrot.lane.b32.xlu0 %v292, 118
      %v3157 = vpop.permute.xlu0 %3156
      %3158 = vrot.lane.b32.xlu0 %v293, 118
      %v3159 = vpop.permute.xlu0 %3158
      %3160 = vrot.lane.b32.xlu0 %v294, 118
      %v3161 = vpop.permute.xlu0 %3160
      %3162 = vrot.lane.b32.xlu0 %v295, 118
      %v3163 = vpop.permute.xlu0 %3162
      %3164 = vrot.lane.b32.xlu0 %v296, 118
      %v3165 = vpop.permute.xlu0 %3164
      %vm3166 = vcmask 965632
      %v3167 = vsel %vm3166, %v3151, %v3153
      %v3168 = vsel %vm3166, %v3153, %v3155
      %v3169 = vsel %vm3166, %v3155, %v3157
      %v3170 = vsel %vm3166, %v3157, %v3159
      %v3171 = vsel %vm3166, %v3159, %v3161
      %v3172 = vsel %vm3166, %v3161, %v3163
      %v3173 = vsel %vm3166, %v3163, %v3165
      %v3182 = vsel %vm3166, %v3165, 0.0
      %v3183 = vpack.c.bf16 %v3167, %v3167
      %v3184 = vpack.c.bf16 %v3168, %v3168
      %v3185 = vpack.c.bf16 %v3169, %v3169
      %v3186 = vpack.c.bf16 %v3170, %v3170
      %v3187 = vpack.c.bf16 %v3171, %v3171
      %v3188 = vpack.c.bf16 %v3172, %v3172
      %v3189 = vpack.c.bf16 %v3173, %v3173
      %v3190 = vpack.c.bf16 %v3182, %v3182
      %v3192 = vsel %vm387, %v247, 0
      %v3195 = vsel %vm391, %v3183, 0
      %v3198 = vsel %vm391, %v3184, 0
      %v3201 = vsel %vm391, %v3185, 0
      %v3204 = vsel %vm391, %v3186, 0
      %v3207 = vsel %vm391, %v3187, 0
      %v3210 = vsel %vm391, %v3188, 0
      %v3213 = vsel %vm391, %v3189, 0
      %v3216 = vsel %vm391, %v3190, 0
      %3218 = vmatpush.bf16.msra.mxu0 0
      %3219 = vmatpush.bf16.msra.mxu0 0
      %3220 = vmatpush.bf16.msra.mxu0 0
      %3221 = vmatpush.bf16.msra.mxu0 0
      %3222 = vmatpush.bf16.msra.mxu0 0
      %3223 = vmatpush.bf16.msra.mxu0 0
      %3224 = vmatpush.bf16.msra.mxu0 0
      %3225 = vmatpush.bf16.msra.mxu0 %v3195
      %3226 = vmatmul.bf16.gmra.mxu0 %v3192
      %v3227 = vpop.f32.mrf.mxu0
      %v3228 = vadd.f32 0.0, %v3227
      %v3229 = vpop.f32.mrf.mxu0
      %3230 = vdwg.mxu0
      %3231 = vmatpush.bf16.msra.mxu0 0
      %3232 = vmatpush.bf16.msra.mxu0 0
      %3233 = vmatpush.bf16.msra.mxu0 0
      %3234 = vmatpush.bf16.msra.mxu0 0
      %3235 = vmatpush.bf16.msra.mxu0 0
      %3236 = vmatpush.bf16.msra.mxu0 0
      %3237 = vmatpush.bf16.msra.mxu0 0
      %3238 = vmatpush.bf16.msra.mxu0 %v3198
      %3239 = vmatmul.bf16.gmra.mxu0 %v3192
      %v3240 = vpop.f32.mrf.mxu0
      %v3241 = vadd.f32 0.0, %v3240
      %v3242 = vpop.f32.mrf.mxu0
      %3243 = vdwg.mxu0
      %3244 = vmatpush.bf16.msra.mxu0 0
      %3245 = vmatpush.bf16.msra.mxu0 0
      %3246 = vmatpush.bf16.msra.mxu0 0
      %3247 = vmatpush.bf16.msra.mxu0 0
      %3248 = vmatpush.bf16.msra.mxu0 0
      %3249 = vmatpush.bf16.msra.mxu0 0
      %3250 = vmatpush.bf16.msra.mxu0 0
      %3251 = vmatpush.bf16.msra.mxu0 %v3201
      %3252 = vmatmul.bf16.gmra.mxu0 %v3192
      %v3253 = vpop.f32.mrf.mxu0
      %v3254 = vadd.f32 0.0, %v3253
      %v3255 = vpop.f32.mrf.mxu0
      %3256 = vdwg.mxu0
      %3257 = vmatpush.bf16.msra.mxu0 0
      %3258 = vmatpush.bf16.msra.mxu0 0
      %3259 = vmatpush.bf16.msra.mxu0 0
      %3260 = vmatpush.bf16.msra.mxu0 0
      %3261 = vmatpush.bf16.msra.mxu0 0
      %3262 = vmatpush.bf16.msra.mxu0 0
      %3263 = vmatpush.bf16.msra.mxu0 0
      %3264 = vmatpush.bf16.msra.mxu0 %v3204
      %3265 = vmatmul.bf16.gmra.mxu0 %v3192
      %v3266 = vpop.f32.mrf.mxu0
      %v3267 = vadd.f32 0.0, %v3266
      %v3268 = vpop.f32.mrf.mxu0
      %3269 = vdwg.mxu0
      %3270 = vmatpush.bf16.msra.mxu0 0
      %3271 = vmatpush.bf16.msra.mxu0 0
      %3272 = vmatpush.bf16.msra.mxu0 0
      %3273 = vmatpush.bf16.msra.mxu0 0
      %3274 = vmatpush.bf16.msra.mxu0 0
      %3275 = vmatpush.bf16.msra.mxu0 0
      %3276 = vmatpush.bf16.msra.mxu0 0
      %3277 = vmatpush.bf16.msra.mxu0 %v3207
      %3278 = vmatmul.bf16.gmra.mxu0 %v3192
      %v3279 = vpop.f32.mrf.mxu0
      %v3280 = vadd.f32 0.0, %v3279
      %v3281 = vpop.f32.mrf.mxu0
      %3282 = vdwg.mxu0
      %3283 = vmatpush.bf16.msra.mxu0 0
      %3284 = vmatpush.bf16.msra.mxu0 0
      %3285 = vmatpush.bf16.msra.mxu0 0
      %3286 = vmatpush.bf16.msra.mxu0 0
      %3287 = vmatpush.bf16.msra.mxu0 0
      %3288 = vmatpush.bf16.msra.mxu0 0
      %3289 = vmatpush.bf16.msra.mxu0 0
      %3290 = vmatpush.bf16.msra.mxu0 %v3210
      %3291 = vmatmul.bf16.gmra.mxu0 %v3192
      %v3292 = vpop.f32.mrf.mxu0
      %v3293 = vadd.f32 0.0, %v3292
      %v3294 = vpop.f32.mrf.mxu0
      %3295 = vdwg.mxu0
      %3296 = vmatpush.bf16.msra.mxu0 0
      %3297 = vmatpush.bf16.msra.mxu0 0
      %3298 = vmatpush.bf16.msra.mxu0 0
      %3299 = vmatpush.bf16.msra.mxu0 0
      %3300 = vmatpush.bf16.msra.mxu0 0
      %3301 = vmatpush.bf16.msra.mxu0 0
      %3302 = vmatpush.bf16.msra.mxu0 0
      %3303 = vmatpush.bf16.msra.mxu0 %v3213
      %3304 = vmatmul.bf16.gmra.mxu0 %v3192
      %v3305 = vpop.f32.mrf.mxu0
      %v3306 = vadd.f32 0.0, %v3305
      %v3307 = vpop.f32.mrf.mxu0
      %3308 = vdwg.mxu0
      %3309 = vmatpush.bf16.msra.mxu0 0
      %3310 = vmatpush.bf16.msra.mxu0 0
      %3311 = vmatpush.bf16.msra.mxu0 0
      %3312 = vmatpush.bf16.msra.mxu0 0
      %3313 = vmatpush.bf16.msra.mxu0 0
      %3314 = vmatpush.bf16.msra.mxu0 0
      %3315 = vmatpush.bf16.msra.mxu0 0
      %3316 = vmatpush.bf16.msra.mxu0 %v3216
      %3317 = vmatmul.bf16.gmra.mxu0 %v3192
      %v3318 = vpop.f32.mrf.mxu0
      %v3319 = vadd.f32 0.0, %v3318
      %v3320 = vpop.f32.mrf.mxu0
      %3321 = vdwg.mxu0
      %v3322 = vadd.f32 %v3142, %v3228
      %v3323 = vadd.f32 %v3143, %v3241
      %v3324 = vadd.f32 %v3144, %v3254
      %v3325 = vadd.f32 %v3145, %v3267
      %v3326 = vadd.f32 %v3146, %v3280
      %v3327 = vadd.f32 %v3147, %v3293
      %v3328 = vadd.f32 %v3148, %v3306
      %v3329 = vadd.f32 %v3149, %v3319
      %3330 = vrot.lane.b32.xlu0 %v289, 117
      %v3331 = vpop.permute.xlu0 %3330
      %3332 = vrot.lane.b32.xlu0 %v290, 117
      %v3333 = vpop.permute.xlu0 %3332
      %3334 = vrot.lane.b32.xlu0 %v291, 117
      %v3335 = vpop.permute.xlu0 %3334
      %3336 = vrot.lane.b32.xlu0 %v292, 117
      %v3337 = vpop.permute.xlu0 %3336
      %3338 = vrot.lane.b32.xlu0 %v293, 117
      %v3339 = vpop.permute.xlu0 %3338
      %3340 = vrot.lane.b32.xlu0 %v294, 117
      %v3341 = vpop.permute.xlu0 %3340
      %3342 = vrot.lane.b32.xlu0 %v295, 117
      %v3343 = vpop.permute.xlu0 %3342
      %3344 = vrot.lane.b32.xlu0 %v296, 117
      %v3345 = vpop.permute.xlu0 %3344
      %vm3346 = vcmask 957440
      %v3347 = vsel %vm3346, %v3331, %v3333
      %v3348 = vsel %vm3346, %v3333, %v3335
      %v3349 = vsel %vm3346, %v3335, %v3337
      %v3350 = vsel %vm3346, %v3337, %v3339
      %v3351 = vsel %vm3346, %v3339, %v3341
      %v3352 = vsel %vm3346, %v3341, %v3343
      %v3353 = vsel %vm3346, %v3343, %v3345
      %v3362 = vsel %vm3346, %v3345, 0.0
      %v3363 = vpack.c.bf16 %v3347, %v3347
      %v3364 = vpack.c.bf16 %v3348, %v3348
      %v3365 = vpack.c.bf16 %v3349, %v3349
      %v3366 = vpack.c.bf16 %v3350, %v3350
      %v3367 = vpack.c.bf16 %v3351, %v3351
      %v3368 = vpack.c.bf16 %v3352, %v3352
      %v3369 = vpack.c.bf16 %v3353, %v3353
      %v3370 = vpack.c.bf16 %v3362, %v3362
      %v3372 = vsel %vm387, %v248, 0
      %v3375 = vsel %vm391, %v3363, 0
      %v3378 = vsel %vm391, %v3364, 0
      %v3381 = vsel %vm391, %v3365, 0
      %v3384 = vsel %vm391, %v3366, 0
      %v3387 = vsel %vm391, %v3367, 0
      %v3390 = vsel %vm391, %v3368, 0
      %v3393 = vsel %vm391, %v3369, 0
      %v3396 = vsel %vm391, %v3370, 0
      %3398 = vmatpush.bf16.msra.mxu0 0
      %3399 = vmatpush.bf16.msra.mxu0 0
      %3400 = vmatpush.bf16.msra.mxu0 0
      %3401 = vmatpush.bf16.msra.mxu0 0
      %3402 = vmatpush.bf16.msra.mxu0 0
      %3403 = vmatpush.bf16.msra.mxu0 0
      %3404 = vmatpush.bf16.msra.mxu0 0
      %3405 = vmatpush.bf16.msra.mxu0 %v3375
      %3406 = vmatmul.bf16.gmra.mxu0 %v3372
      %v3407 = vpop.f32.mrf.mxu0
      %v3408 = vadd.f32 0.0, %v3407
      %v3409 = vpop.f32.mrf.mxu0
      %3410 = vdwg.mxu0
      %3411 = vmatpush.bf16.msra.mxu0 0
      %3412 = vmatpush.bf16.msra.mxu0 0
      %3413 = vmatpush.bf16.msra.mxu0 0
      %3414 = vmatpush.bf16.msra.mxu0 0
      %3415 = vmatpush.bf16.msra.mxu0 0
      %3416 = vmatpush.bf16.msra.mxu0 0
      %3417 = vmatpush.bf16.msra.mxu0 0
      %3418 = vmatpush.bf16.msra.mxu0 %v3378
      %3419 = vmatmul.bf16.gmra.mxu0 %v3372
      %v3420 = vpop.f32.mrf.mxu0
      %v3421 = vadd.f32 0.0, %v3420
      %v3422 = vpop.f32.mrf.mxu0
      %3423 = vdwg.mxu0
      %3424 = vmatpush.bf16.msra.mxu0 0
      %3425 = vmatpush.bf16.msra.mxu0 0
      %3426 = vmatpush.bf16.msra.mxu0 0
      %3427 = vmatpush.bf16.msra.mxu0 0
      %3428 = vmatpush.bf16.msra.mxu0 0
      %3429 = vmatpush.bf16.msra.mxu0 0
      %3430 = vmatpush.bf16.msra.mxu0 0
      %3431 = vmatpush.bf16.msra.mxu0 %v3381
      %3432 = vmatmul.bf16.gmra.mxu0 %v3372
      %v3433 = vpop.f32.mrf.mxu0
      %v3434 = vadd.f32 0.0, %v3433
      %v3435 = vpop.f32.mrf.mxu0
      %3436 = vdwg.mxu0
      %3437 = vmatpush.bf16.msra.mxu0 0
      %3438 = vmatpush.bf16.msra.mxu0 0
      %3439 = vmatpush.bf16.msra.mxu0 0
      %3440 = vmatpush.bf16.msra.mxu0 0
      %3441 = vmatpush.bf16.msra.mxu0 0
      %3442 = vmatpush.bf16.msra.mxu0 0
      %3443 = vmatpush.bf16.msra.mxu0 0
      %3444 = vmatpush.bf16.msra.mxu0 %v3384
      %3445 = vmatmul.bf16.gmra.mxu0 %v3372
      %v3446 = vpop.f32.mrf.mxu0
      %v3447 = vadd.f32 0.0, %v3446
      %v3448 = vpop.f32.mrf.mxu0
      %3449 = vdwg.mxu0
      %3450 = vmatpush.bf16.msra.mxu0 0
      %3451 = vmatpush.bf16.msra.mxu0 0
      %3452 = vmatpush.bf16.msra.mxu0 0
      %3453 = vmatpush.bf16.msra.mxu0 0
      %3454 = vmatpush.bf16.msra.mxu0 0
      %3455 = vmatpush.bf16.msra.mxu0 0
      %3456 = vmatpush.bf16.msra.mxu0 0
      %3457 = vmatpush.bf16.msra.mxu0 %v3387
      %3458 = vmatmul.bf16.gmra.mxu0 %v3372
      %v3459 = vpop.f32.mrf.mxu0
      %v3460 = vadd.f32 0.0, %v3459
      %v3461 = vpop.f32.mrf.mxu0
      %3462 = vdwg.mxu0
      %3463 = vmatpush.bf16.msra.mxu0 0
      %3464 = vmatpush.bf16.msra.mxu0 0
      %3465 = vmatpush.bf16.msra.mxu0 0
      %3466 = vmatpush.bf16.msra.mxu0 0
      %3467 = vmatpush.bf16.msra.mxu0 0
      %3468 = vmatpush.bf16.msra.mxu0 0
      %3469 = vmatpush.bf16.msra.mxu0 0
      %3470 = vmatpush.bf16.msra.mxu0 %v3390
      %3471 = vmatmul.bf16.gmra.mxu0 %v3372
      %v3472 = vpop.f32.mrf.mxu0
      %v3473 = vadd.f32 0.0, %v3472
      %v3474 = vpop.f32.mrf.mxu0
      %3475 = vdwg.mxu0
      %3476 = vmatpush.bf16.msra.mxu0 0
      %3477 = vmatpush.bf16.msra.mxu0 0
      %3478 = vmatpush.bf16.msra.mxu0 0
      %3479 = vmatpush.bf16.msra.mxu0 0
      %3480 = vmatpush.bf16.msra.mxu0 0
      %3481 = vmatpush.bf16.msra.mxu0 0
      %3482 = vmatpush.bf16.msra.mxu0 0
      %3483 = vmatpush.bf16.msra.mxu0 %v3393
      %3484 = vmatmul.bf16.gmra.mxu0 %v3372
      %v3485 = vpop.f32.mrf.mxu0
      %v3486 = vadd.f32 0.0, %v3485
      %v3487 = vpop.f32.mrf.mxu0
      %3488 = vdwg.mxu0
      %3489 = vmatpush.bf16.msra.mxu0 0
      %3490 = vmatpush.bf16.msra.mxu0 0
      %3491 = vmatpush.bf16.msra.mxu0 0
      %3492 = vmatpush.bf16.msra.mxu0 0
      %3493 = vmatpush.bf16.msra.mxu0 0
      %3494 = vmatpush.bf16.msra.mxu0 0
      %3495 = vmatpush.bf16.msra.mxu0 0
      %3496 = vmatpush.bf16.msra.mxu0 %v3396
      %3497 = vmatmul.bf16.gmra.mxu0 %v3372
      %v3498 = vpop.f32.mrf.mxu0
      %v3499 = vadd.f32 0.0, %v3498
      %v3500 = vpop.f32.mrf.mxu0
      %3501 = vdwg.mxu0
      %v3502 = vadd.f32 %v3322, %v3408
      %v3503 = vadd.f32 %v3323, %v3421
      %v3504 = vadd.f32 %v3324, %v3434
      %v3505 = vadd.f32 %v3325, %v3447
      %v3506 = vadd.f32 %v3326, %v3460
      %v3507 = vadd.f32 %v3327, %v3473
      %v3508 = vadd.f32 %v3328, %v3486
      %v3509 = vadd.f32 %v3329, %v3499
      %3510 = vrot.lane.b32.xlu0 %v289, 39
      %v3511 = vpop.permute.xlu0 %3510
      %3512 = vrot.lane.b32.xlu0 %v290, 39
      %v3513 = vpop.permute.xlu0 %3512
      %3514 = vrot.lane.b32.xlu0 %v291, 39
      %v3515 = vpop.permute.xlu0 %3514
      %3516 = vrot.lane.b32.xlu0 %v292, 39
      %v3517 = vpop.permute.xlu0 %3516
      %3518 = vrot.lane.b32.xlu0 %v293, 39
      %v3519 = vpop.permute.xlu0 %3518
      %3520 = vrot.lane.b32.xlu0 %v294, 39
      %v3521 = vpop.permute.xlu0 %3520
      %3522 = vrot.lane.b32.xlu0 %v295, 39
      %v3523 = vpop.permute.xlu0 %3522
      %3524 = vrot.lane.b32.xlu0 %v296, 39
      %v3525 = vpop.permute.xlu0 %3524
      %vm3526 = vcmask 318464
      %v3527 = vsel %vm3526, %v3511, %v3513
      %v3528 = vsel %vm3526, %v3513, %v3515
      %v3529 = vsel %vm3526, %v3515, %v3517
      %v3530 = vsel %vm3526, %v3517, %v3519
      %v3531 = vsel %vm3526, %v3519, %v3521
      %v3532 = vsel %vm3526, %v3521, %v3523
      %v3533 = vsel %vm3526, %v3523, %v3525
      %v3542 = vsel %vm3526, %v3525, 0.0
      %v3543 = vpack.c.bf16 %v3527, %v3527
      %v3544 = vpack.c.bf16 %v3528, %v3528
      %v3545 = vpack.c.bf16 %v3529, %v3529
      %v3546 = vpack.c.bf16 %v3530, %v3530
      %v3547 = vpack.c.bf16 %v3531, %v3531
      %v3548 = vpack.c.bf16 %v3532, %v3532
      %v3549 = vpack.c.bf16 %v3533, %v3533
      %v3550 = vpack.c.bf16 %v3542, %v3542
      %v3552 = vsel %vm387, %v249, 0
      %v3555 = vsel %vm391, %v3543, 0
      %v3558 = vsel %vm391, %v3544, 0
      %v3561 = vsel %vm391, %v3545, 0
      %v3564 = vsel %vm391, %v3546, 0
      %v3567 = vsel %vm391, %v3547, 0
      %v3570 = vsel %vm391, %v3548, 0
      %v3573 = vsel %vm391, %v3549, 0
      %v3576 = vsel %vm391, %v3550, 0
      %3578 = vmatpush.bf16.msra.mxu0 0
      %3579 = vmatpush.bf16.msra.mxu0 0
      %3580 = vmatpush.bf16.msra.mxu0 0
      %3581 = vmatpush.bf16.msra.mxu0 0
      %3582 = vmatpush.bf16.msra.mxu0 0
      %3583 = vmatpush.bf16.msra.mxu0 0
      %3584 = vmatpush.bf16.msra.mxu0 0
      %3585 = vmatpush.bf16.msra.mxu0 %v3555
      %3586 = vmatmul.bf16.gmra.mxu0 %v3552
      %v3587 = vpop.f32.mrf.mxu0
      %v3588 = vadd.f32 0.0, %v3587
      %v3589 = vpop.f32.mrf.mxu0
      %3590 = vdwg.mxu0
      %3591 = vmatpush.bf16.msra.mxu0 0
      %3592 = vmatpush.bf16.msra.mxu0 0
      %3593 = vmatpush.bf16.msra.mxu0 0
      %3594 = vmatpush.bf16.msra.mxu0 0
      %3595 = vmatpush.bf16.msra.mxu0 0
      %3596 = vmatpush.bf16.msra.mxu0 0
      %3597 = vmatpush.bf16.msra.mxu0 0
      %3598 = vmatpush.bf16.msra.mxu0 %v3558
      %3599 = vmatmul.bf16.gmra.mxu0 %v3552
      %v3600 = vpop.f32.mrf.mxu0
      %v3601 = vadd.f32 0.0, %v3600
      %v3602 = vpop.f32.mrf.mxu0
      %3603 = vdwg.mxu0
      %3604 = vmatpush.bf16.msra.mxu0 0
      %3605 = vmatpush.bf16.msra.mxu0 0
      %3606 = vmatpush.bf16.msra.mxu0 0
      %3607 = vmatpush.bf16.msra.mxu0 0
      %3608 = vmatpush.bf16.msra.mxu0 0
      %3609 = vmatpush.bf16.msra.mxu0 0
      %3610 = vmatpush.bf16.msra.mxu0 0
      %3611 = vmatpush.bf16.msra.mxu0 %v3561
      %3612 = vmatmul.bf16.gmra.mxu0 %v3552
      %v3613 = vpop.f32.mrf.mxu0
      %v3614 = vadd.f32 0.0, %v3613
      %v3615 = vpop.f32.mrf.mxu0
      %3616 = vdwg.mxu0
      %3617 = vmatpush.bf16.msra.mxu0 0
      %3618 = vmatpush.bf16.msra.mxu0 0
      %3619 = vmatpush.bf16.msra.mxu0 0
      %3620 = vmatpush.bf16.msra.mxu0 0
      %3621 = vmatpush.bf16.msra.mxu0 0
      %3622 = vmatpush.bf16.msra.mxu0 0
      %3623 = vmatpush.bf16.msra.mxu0 0
      %3624 = vmatpush.bf16.msra.mxu0 %v3564
      %3625 = vmatmul.bf16.gmra.mxu0 %v3552
      %v3626 = vpop.f32.mrf.mxu0
      %v3627 = vadd.f32 0.0, %v3626
      %v3628 = vpop.f32.mrf.mxu0
      %3629 = vdwg.mxu0
      %3630 = vmatpush.bf16.msra.mxu0 0
      %3631 = vmatpush.bf16.msra.mxu0 0
      %3632 = vmatpush.bf16.msra.mxu0 0
      %3633 = vmatpush.bf16.msra.mxu0 0
      %3634 = vmatpush.bf16.msra.mxu0 0
      %3635 = vmatpush.bf16.msra.mxu0 0
      %3636 = vmatpush.bf16.msra.mxu0 0
      %3637 = vmatpush.bf16.msra.mxu0 %v3567
      %3638 = vmatmul.bf16.gmra.mxu0 %v3552
      %v3639 = vpop.f32.mrf.mxu0
      %v3640 = vadd.f32 0.0, %v3639
      %v3641 = vpop.f32.mrf.mxu0
      %3642 = vdwg.mxu0
      %3643 = vmatpush.bf16.msra.mxu0 0
      %3644 = vmatpush.bf16.msra.mxu0 0
      %3645 = vmatpush.bf16.msra.mxu0 0
      %3646 = vmatpush.bf16.msra.mxu0 0
      %3647 = vmatpush.bf16.msra.mxu0 0
      %3648 = vmatpush.bf16.msra.mxu0 0
      %3649 = vmatpush.bf16.msra.mxu0 0
      %3650 = vmatpush.bf16.msra.mxu0 %v3570
      %3651 = vmatmul.bf16.gmra.mxu0 %v3552
      %v3652 = vpop.f32.mrf.mxu0
      %v3653 = vadd.f32 0.0, %v3652
      %v3654 = vpop.f32.mrf.mxu0
      %3655 = vdwg.mxu0
      %3656 = vmatpush.bf16.msra.mxu0 0
      %3657 = vmatpush.bf16.msra.mxu0 0
      %3658 = vmatpush.bf16.msra.mxu0 0
      %3659 = vmatpush.bf16.msra.mxu0 0
      %3660 = vmatpush.bf16.msra.mxu0 0
      %3661 = vmatpush.bf16.msra.mxu0 0
      %3662 = vmatpush.bf16.msra.mxu0 0
      %3663 = vmatpush.bf16.msra.mxu0 %v3573
      %3664 = vmatmul.bf16.gmra.mxu0 %v3552
      %v3665 = vpop.f32.mrf.mxu0
      %v3666 = vadd.f32 0.0, %v3665
      %v3667 = vpop.f32.mrf.mxu0
      %3668 = vdwg.mxu0
      %3669 = vmatpush.bf16.msra.mxu0 0
      %3670 = vmatpush.bf16.msra.mxu0 0
      %3671 = vmatpush.bf16.msra.mxu0 0
      %3672 = vmatpush.bf16.msra.mxu0 0
      %3673 = vmatpush.bf16.msra.mxu0 0
      %3674 = vmatpush.bf16.msra.mxu0 0
      %3675 = vmatpush.bf16.msra.mxu0 0
      %3676 = vmatpush.bf16.msra.mxu0 %v3576
      %3677 = vmatmul.bf16.gmra.mxu0 %v3552
      %v3678 = vpop.f32.mrf.mxu0
      %v3679 = vadd.f32 0.0, %v3678
      %v3680 = vpop.f32.mrf.mxu0
      %3681 = vdwg.mxu0
      %v3682 = vadd.f32 %v3502, %v3588
      %v3683 = vadd.f32 %v3503, %v3601
      %v3684 = vadd.f32 %v3504, %v3614
      %v3685 = vadd.f32 %v3505, %v3627
      %v3686 = vadd.f32 %v3506, %v3640
      %v3687 = vadd.f32 %v3507, %v3653
      %v3688 = vadd.f32 %v3508, %v3666
      %v3689 = vadd.f32 %v3509, %v3679
      %3690 = vrot.lane.b32.xlu0 %v289, 38
      %v3691 = vpop.permute.xlu0 %3690
      %3692 = vrot.lane.b32.xlu0 %v290, 38
      %v3693 = vpop.permute.xlu0 %3692
      %3694 = vrot.lane.b32.xlu0 %v291, 38
      %v3695 = vpop.permute.xlu0 %3694
      %3696 = vrot.lane.b32.xlu0 %v292, 38
      %v3697 = vpop.permute.xlu0 %3696
      %3698 = vrot.lane.b32.xlu0 %v293, 38
      %v3699 = vpop.permute.xlu0 %3698
      %3700 = vrot.lane.b32.xlu0 %v294, 38
      %v3701 = vpop.permute.xlu0 %3700
      %3702 = vrot.lane.b32.xlu0 %v295, 38
      %v3703 = vpop.permute.xlu0 %3702
      %3704 = vrot.lane.b32.xlu0 %v296, 38
      %v3705 = vpop.permute.xlu0 %3704
      %vm3706 = vcmask 310272
      %v3707 = vsel %vm3706, %v3691, %v3693
      %v3708 = vsel %vm3706, %v3693, %v3695
      %v3709 = vsel %vm3706, %v3695, %v3697
      %v3710 = vsel %vm3706, %v3697, %v3699
      %v3711 = vsel %vm3706, %v3699, %v3701
      %v3712 = vsel %vm3706, %v3701, %v3703
      %v3713 = vsel %vm3706, %v3703, %v3705
      %v3722 = vsel %vm3706, %v3705, 0.0
      %v3723 = vpack.c.bf16 %v3707, %v3707
      %v3724 = vpack.c.bf16 %v3708, %v3708
      %v3725 = vpack.c.bf16 %v3709, %v3709
      %v3726 = vpack.c.bf16 %v3710, %v3710
      %v3727 = vpack.c.bf16 %v3711, %v3711
      %v3728 = vpack.c.bf16 %v3712, %v3712
      %v3729 = vpack.c.bf16 %v3713, %v3713
      %v3730 = vpack.c.bf16 %v3722, %v3722
      %v3732 = vsel %vm387, %v250, 0
      %v3735 = vsel %vm391, %v3723, 0
      %v3738 = vsel %vm391, %v3724, 0
      %v3741 = vsel %vm391, %v3725, 0
      %v3744 = vsel %vm391, %v3726, 0
      %v3747 = vsel %vm391, %v3727, 0
      %v3750 = vsel %vm391, %v3728, 0
      %v3753 = vsel %vm391, %v3729, 0
      %v3756 = vsel %vm391, %v3730, 0
      %3758 = vmatpush.bf16.msra.mxu0 0
      %3759 = vmatpush.bf16.msra.mxu0 0
      %3760 = vmatpush.bf16.msra.mxu0 0
      %3761 = vmatpush.bf16.msra.mxu0 0
      %3762 = vmatpush.bf16.msra.mxu0 0
      %3763 = vmatpush.bf16.msra.mxu0 0
      %3764 = vmatpush.bf16.msra.mxu0 0
      %3765 = vmatpush.bf16.msra.mxu0 %v3735
      %3766 = vmatmul.bf16.gmra.mxu0 %v3732
      %v3767 = vpop.f32.mrf.mxu0
      %v3768 = vadd.f32 0.0, %v3767
      %v3769 = vpop.f32.mrf.mxu0
      %3770 = vdwg.mxu0
      %3771 = vmatpush.bf16.msra.mxu0 0
      %3772 = vmatpush.bf16.msra.mxu0 0
      %3773 = vmatpush.bf16.msra.mxu0 0
      %3774 = vmatpush.bf16.msra.mxu0 0
      %3775 = vmatpush.bf16.msra.mxu0 0
      %3776 = vmatpush.bf16.msra.mxu0 0
      %3777 = vmatpush.bf16.msra.mxu0 0
      %3778 = vmatpush.bf16.msra.mxu0 %v3738
      %3779 = vmatmul.bf16.gmra.mxu0 %v3732
      %v3780 = vpop.f32.mrf.mxu0
      %v3781 = vadd.f32 0.0, %v3780
      %v3782 = vpop.f32.mrf.mxu0
      %3783 = vdwg.mxu0
      %3784 = vmatpush.bf16.msra.mxu0 0
      %3785 = vmatpush.bf16.msra.mxu0 0
      %3786 = vmatpush.bf16.msra.mxu0 0
      %3787 = vmatpush.bf16.msra.mxu0 0
      %3788 = vmatpush.bf16.msra.mxu0 0
      %3789 = vmatpush.bf16.msra.mxu0 0
      %3790 = vmatpush.bf16.msra.mxu0 0
      %3791 = vmatpush.bf16.msra.mxu0 %v3741
      %3792 = vmatmul.bf16.gmra.mxu0 %v3732
      %v3793 = vpop.f32.mrf.mxu0
      %v3794 = vadd.f32 0.0, %v3793
      %v3795 = vpop.f32.mrf.mxu0
      %3796 = vdwg.mxu0
      %3797 = vmatpush.bf16.msra.mxu0 0
      %3798 = vmatpush.bf16.msra.mxu0 0
      %3799 = vmatpush.bf16.msra.mxu0 0
      %3800 = vmatpush.bf16.msra.mxu0 0
      %3801 = vmatpush.bf16.msra.mxu0 0
      %3802 = vmatpush.bf16.msra.mxu0 0
      %3803 = vmatpush.bf16.msra.mxu0 0
      %3804 = vmatpush.bf16.msra.mxu0 %v3744
      %3805 = vmatmul.bf16.gmra.mxu0 %v3732
      %v3806 = vpop.f32.mrf.mxu0
      %v3807 = vadd.f32 0.0, %v3806
      %v3808 = vpop.f32.mrf.mxu0
      %3809 = vdwg.mxu0
      %3810 = vmatpush.bf16.msra.mxu0 0
      %3811 = vmatpush.bf16.msra.mxu0 0
      %3812 = vmatpush.bf16.msra.mxu0 0
      %3813 = vmatpush.bf16.msra.mxu0 0
      %3814 = vmatpush.bf16.msra.mxu0 0
      %3815 = vmatpush.bf16.msra.mxu0 0
      %3816 = vmatpush.bf16.msra.mxu0 0
      %3817 = vmatpush.bf16.msra.mxu0 %v3747
      %3818 = vmatmul.bf16.gmra.mxu0 %v3732
      %v3819 = vpop.f32.mrf.mxu0
      %v3820 = vadd.f32 0.0, %v3819
      %v3821 = vpop.f32.mrf.mxu0
      %3822 = vdwg.mxu0
      %3823 = vmatpush.bf16.msra.mxu0 0
      %3824 = vmatpush.bf16.msra.mxu0 0
      %3825 = vmatpush.bf16.msra.mxu0 0
      %3826 = vmatpush.bf16.msra.mxu0 0
      %3827 = vmatpush.bf16.msra.mxu0 0
      %3828 = vmatpush.bf16.msra.mxu0 0
      %3829 = vmatpush.bf16.msra.mxu0 0
      %3830 = vmatpush.bf16.msra.mxu0 %v3750
      %3831 = vmatmul.bf16.gmra.mxu0 %v3732
      %v3832 = vpop.f32.mrf.mxu0
      %v3833 = vadd.f32 0.0, %v3832
      %v3834 = vpop.f32.mrf.mxu0
      %3835 = vdwg.mxu0
      %3836 = vmatpush.bf16.msra.mxu0 0
      %3837 = vmatpush.bf16.msra.mxu0 0
      %3838 = vmatpush.bf16.msra.mxu0 0
      %3839 = vmatpush.bf16.msra.mxu0 0
      %3840 = vmatpush.bf16.msra.mxu0 0
      %3841 = vmatpush.bf16.msra.mxu0 0
      %3842 = vmatpush.bf16.msra.mxu0 0
      %3843 = vmatpush.bf16.msra.mxu0 %v3753
      %3844 = vmatmul.bf16.gmra.mxu0 %v3732
      %v3845 = vpop.f32.mrf.mxu0
      %v3846 = vadd.f32 0.0, %v3845
      %v3847 = vpop.f32.mrf.mxu0
      %3848 = vdwg.mxu0
      %3849 = vmatpush.bf16.msra.mxu0 0
      %3850 = vmatpush.bf16.msra.mxu0 0
      %3851 = vmatpush.bf16.msra.mxu0 0
      %3852 = vmatpush.bf16.msra.mxu0 0
      %3853 = vmatpush.bf16.msra.mxu0 0
      %3854 = vmatpush.bf16.msra.mxu0 0
      %3855 = vmatpush.bf16.msra.mxu0 0
      %3856 = vmatpush.bf16.msra.mxu0 %v3756
      %3857 = vmatmul.bf16.gmra.mxu0 %v3732
      %v3858 = vpop.f32.mrf.mxu0
      %v3859 = vadd.f32 0.0, %v3858
      %v3860 = vpop.f32.mrf.mxu0
      %3861 = vdwg.mxu0
      %v3862 = vadd.f32 %v3682, %v3768
      %v3863 = vadd.f32 %v3683, %v3781
      %v3864 = vadd.f32 %v3684, %v3794
      %v3865 = vadd.f32 %v3685, %v3807
      %v3866 = vadd.f32 %v3686, %v3820
      %v3867 = vadd.f32 %v3687, %v3833
      %v3868 = vadd.f32 %v3688, %v3846
      %v3869 = vadd.f32 %v3689, %v3859
      %3870 = vrot.lane.b32.xlu0 %v289, 37
      %v3871 = vpop.permute.xlu0 %3870
      %3872 = vrot.lane.b32.xlu0 %v290, 37
      %v3873 = vpop.permute.xlu0 %3872
      %3874 = vrot.lane.b32.xlu0 %v291, 37
      %v3875 = vpop.permute.xlu0 %3874
      %3876 = vrot.lane.b32.xlu0 %v292, 37
      %v3877 = vpop.permute.xlu0 %3876
      %3878 = vrot.lane.b32.xlu0 %v293, 37
      %v3879 = vpop.permute.xlu0 %3878
      %3880 = vrot.lane.b32.xlu0 %v294, 37
      %v3881 = vpop.permute.xlu0 %3880
      %3882 = vrot.lane.b32.xlu0 %v295, 37
      %v3883 = vpop.permute.xlu0 %3882
      %3884 = vrot.lane.b32.xlu0 %v296, 37
      %v3885 = vpop.permute.xlu0 %3884
      %vm3886 = vcmask 302080
      %v3887 = vsel %vm3886, %v3871, %v3873
      %v3888 = vsel %vm3886, %v3873, %v3875
      %v3889 = vsel %vm3886, %v3875, %v3877
      %v3890 = vsel %vm3886, %v3877, %v3879
      %v3891 = vsel %vm3886, %v3879, %v3881
      %v3892 = vsel %vm3886, %v3881, %v3883
      %v3893 = vsel %vm3886, %v3883, %v3885
      %v3902 = vsel %vm3886, %v3885, 0.0
      %v3903 = vpack.c.bf16 %v3887, %v3887
      %v3904 = vpack.c.bf16 %v3888, %v3888
      %v3905 = vpack.c.bf16 %v3889, %v3889
      %v3906 = vpack.c.bf16 %v3890, %v3890
      %v3907 = vpack.c.bf16 %v3891, %v3891
      %v3908 = vpack.c.bf16 %v3892, %v3892
      %v3909 = vpack.c.bf16 %v3893, %v3893
      %v3910 = vpack.c.bf16 %v3902, %v3902
      %v3912 = vsel %vm387, %v251, 0
      %v3915 = vsel %vm391, %v3903, 0
      %v3918 = vsel %vm391, %v3904, 0
      %v3921 = vsel %vm391, %v3905, 0
      %v3924 = vsel %vm391, %v3906, 0
      %v3927 = vsel %vm391, %v3907, 0
      %v3930 = vsel %vm391, %v3908, 0
      %v3933 = vsel %vm391, %v3909, 0
      %v3936 = vsel %vm391, %v3910, 0
      %3938 = vmatpush.bf16.msra.mxu0 0
      %3939 = vmatpush.bf16.msra.mxu0 0
      %3940 = vmatpush.bf16.msra.mxu0 0
      %3941 = vmatpush.bf16.msra.mxu0 0
      %3942 = vmatpush.bf16.msra.mxu0 0
      %3943 = vmatpush.bf16.msra.mxu0 0
      %3944 = vmatpush.bf16.msra.mxu0 0
      %3945 = vmatpush.bf16.msra.mxu0 %v3915
      %3946 = vmatmul.bf16.gmra.mxu0 %v3912
      %v3947 = vpop.f32.mrf.mxu0
      %v3948 = vadd.f32 0.0, %v3947
      %v3949 = vpop.f32.mrf.mxu0
      %3950 = vdwg.mxu0
      %3951 = vmatpush.bf16.msra.mxu0 0
      %3952 = vmatpush.bf16.msra.mxu0 0
      %3953 = vmatpush.bf16.msra.mxu0 0
      %3954 = vmatpush.bf16.msra.mxu0 0
      %3955 = vmatpush.bf16.msra.mxu0 0
      %3956 = vmatpush.bf16.msra.mxu0 0
      %3957 = vmatpush.bf16.msra.mxu0 0
      %3958 = vmatpush.bf16.msra.mxu0 %v3918
      %3959 = vmatmul.bf16.gmra.mxu0 %v3912
      %v3960 = vpop.f32.mrf.mxu0
      %v3961 = vadd.f32 0.0, %v3960
      %v3962 = vpop.f32.mrf.mxu0
      %3963 = vdwg.mxu0
      %3964 = vmatpush.bf16.msra.mxu0 0
      %3965 = vmatpush.bf16.msra.mxu0 0
      %3966 = vmatpush.bf16.msra.mxu0 0
      %3967 = vmatpush.bf16.msra.mxu0 0
      %3968 = vmatpush.bf16.msra.mxu0 0
      %3969 = vmatpush.bf16.msra.mxu0 0
      %3970 = vmatpush.bf16.msra.mxu0 0
      %3971 = vmatpush.bf16.msra.mxu0 %v3921
      %3972 = vmatmul.bf16.gmra.mxu0 %v3912
      %v3973 = vpop.f32.mrf.mxu0
      %v3974 = vadd.f32 0.0, %v3973
      %v3975 = vpop.f32.mrf.mxu0
      %3976 = vdwg.mxu0
      %3977 = vmatpush.bf16.msra.mxu0 0
      %3978 = vmatpush.bf16.msra.mxu0 0
      %3979 = vmatpush.bf16.msra.mxu0 0
      %3980 = vmatpush.bf16.msra.mxu0 0
      %3981 = vmatpush.bf16.msra.mxu0 0
      %3982 = vmatpush.bf16.msra.mxu0 0
      %3983 = vmatpush.bf16.msra.mxu0 0
      %3984 = vmatpush.bf16.msra.mxu0 %v3924
      %3985 = vmatmul.bf16.gmra.mxu0 %v3912
      %v3986 = vpop.f32.mrf.mxu0
      %v3987 = vadd.f32 0.0, %v3986
      %v3988 = vpop.f32.mrf.mxu0
      %3989 = vdwg.mxu0
      %3990 = vmatpush.bf16.msra.mxu0 0
      %3991 = vmatpush.bf16.msra.mxu0 0
      %3992 = vmatpush.bf16.msra.mxu0 0
      %3993 = vmatpush.bf16.msra.mxu0 0
      %3994 = vmatpush.bf16.msra.mxu0 0
      %3995 = vmatpush.bf16.msra.mxu0 0
      %3996 = vmatpush.bf16.msra.mxu0 0
      %3997 = vmatpush.bf16.msra.mxu0 %v3927
      %3998 = vmatmul.bf16.gmra.mxu0 %v3912
      %v3999 = vpop.f32.mrf.mxu0
      %v4000 = vadd.f32 0.0, %v3999
      %v4001 = vpop.f32.mrf.mxu0
      %4002 = vdwg.mxu0
      %4003 = vmatpush.bf16.msra.mxu0 0
      %4004 = vmatpush.bf16.msra.mxu0 0
      %4005 = vmatpush.bf16.msra.mxu0 0
      %4006 = vmatpush.bf16.msra.mxu0 0
      %4007 = vmatpush.bf16.msra.mxu0 0
      %4008 = vmatpush.bf16.msra.mxu0 0
      %4009 = vmatpush.bf16.msra.mxu0 0
      %4010 = vmatpush.bf16.msra.mxu0 %v3930
      %4011 = vmatmul.bf16.gmra.mxu0 %v3912
      %v4012 = vpop.f32.mrf.mxu0
      %v4013 = vadd.f32 0.0, %v4012
      %v4014 = vpop.f32.mrf.mxu0
      %4015 = vdwg.mxu0
      %4016 = vmatpush.bf16.msra.mxu0 0
      %4017 = vmatpush.bf16.msra.mxu0 0
      %4018 = vmatpush.bf16.msra.mxu0 0
      %4019 = vmatpush.bf16.msra.mxu0 0
      %4020 = vmatpush.bf16.msra.mxu0 0
      %4021 = vmatpush.bf16.msra.mxu0 0
      %4022 = vmatpush.bf16.msra.mxu0 0
      %4023 = vmatpush.bf16.msra.mxu0 %v3933
      %4024 = vmatmul.bf16.gmra.mxu0 %v3912
      %v4025 = vpop.f32.mrf.mxu0
      %v4026 = vadd.f32 0.0, %v4025
      %v4027 = vpop.f32.mrf.mxu0
      %4028 = vdwg.mxu0
      %4029 = vmatpush.bf16.msra.mxu0 0
      %4030 = vmatpush.bf16.msra.mxu0 0
      %4031 = vmatpush.bf16.msra.mxu0 0
      %4032 = vmatpush.bf16.msra.mxu0 0
      %4033 = vmatpush.bf16.msra.mxu0 0
      %4034 = vmatpush.bf16.msra.mxu0 0
      %4035 = vmatpush.bf16.msra.mxu0 0
      %4036 = vmatpush.bf16.msra.mxu0 %v3936
      %4037 = vmatmul.bf16.gmra.mxu0 %v3912
      %v4038 = vpop.f32.mrf.mxu0
      %v4039 = vadd.f32 0.0, %v4038
      %v4040 = vpop.f32.mrf.mxu0
      %4041 = vdwg.mxu0
      %v4042 = vadd.f32 %v3862, %v3948
      %v4043 = vadd.f32 %v3863, %v3961
      %v4044 = vadd.f32 %v3864, %v3974
      %v4045 = vadd.f32 %v3865, %v3987
      %v4046 = vadd.f32 %v3866, %v4000
      %v4047 = vadd.f32 %v3867, %v4013
      %v4048 = vadd.f32 %v3868, %v4026
      %v4049 = vadd.f32 %v3869, %v4039
      %4050 = vrot.lane.b32.xlu0 %v289, 29
      %v4051 = vpop.permute.xlu0 %4050
      %4052 = vrot.lane.b32.xlu0 %v290, 29
      %v4053 = vpop.permute.xlu0 %4052
      %4054 = vrot.lane.b32.xlu0 %v291, 29
      %v4055 = vpop.permute.xlu0 %4054
      %4056 = vrot.lane.b32.xlu0 %v292, 29
      %v4057 = vpop.permute.xlu0 %4056
      %4058 = vrot.lane.b32.xlu0 %v293, 29
      %v4059 = vpop.permute.xlu0 %4058
      %4060 = vrot.lane.b32.xlu0 %v294, 29
      %v4061 = vpop.permute.xlu0 %4060
      %4062 = vrot.lane.b32.xlu0 %v295, 29
      %v4063 = vpop.permute.xlu0 %4062
      %4064 = vrot.lane.b32.xlu0 %v296, 29
      %v4065 = vpop.permute.xlu0 %4064
      %vm4066 = vcmask 236544
      %v4067 = vsel %vm4066, %v4051, %v4053
      %v4068 = vsel %vm4066, %v4053, %v4055
      %v4069 = vsel %vm4066, %v4055, %v4057
      %v4070 = vsel %vm4066, %v4057, %v4059
      %v4071 = vsel %vm4066, %v4059, %v4061
      %v4072 = vsel %vm4066, %v4061, %v4063
      %v4073 = vsel %vm4066, %v4063, %v4065
      %v4082 = vsel %vm4066, %v4065, 0.0
      %v4083 = vpack.c.bf16 %v4067, %v4067
      %v4084 = vpack.c.bf16 %v4068, %v4068
      %v4085 = vpack.c.bf16 %v4069, %v4069
      %v4086 = vpack.c.bf16 %v4070, %v4070
      %v4087 = vpack.c.bf16 %v4071, %v4071
      %v4088 = vpack.c.bf16 %v4072, %v4072
      %v4089 = vpack.c.bf16 %v4073, %v4073
      %v4090 = vpack.c.bf16 %v4082, %v4082
      %v4092 = vsel %vm387, %v252, 0
      %v4095 = vsel %vm391, %v4083, 0
      %v4098 = vsel %vm391, %v4084, 0
      %v4101 = vsel %vm391, %v4085, 0
      %v4104 = vsel %vm391, %v4086, 0
      %v4107 = vsel %vm391, %v4087, 0
      %v4110 = vsel %vm391, %v4088, 0
      %v4113 = vsel %vm391, %v4089, 0
      %v4116 = vsel %vm391, %v4090, 0
      %4118 = vmatpush.bf16.msra.mxu0 0
      %4119 = vmatpush.bf16.msra.mxu0 0
      %4120 = vmatpush.bf16.msra.mxu0 0
      %4121 = vmatpush.bf16.msra.mxu0 0
      %4122 = vmatpush.bf16.msra.mxu0 0
      %4123 = vmatpush.bf16.msra.mxu0 0
      %4124 = vmatpush.bf16.msra.mxu0 0
      %4125 = vmatpush.bf16.msra.mxu0 %v4095
      %4126 = vmatmul.bf16.gmra.mxu0 %v4092
      %v4127 = vpop.f32.mrf.mxu0
      %v4128 = vadd.f32 0.0, %v4127
      %v4129 = vpop.f32.mrf.mxu0
      %4130 = vdwg.mxu0
      %4131 = vmatpush.bf16.msra.mxu0 0
      %4132 = vmatpush.bf16.msra.mxu0 0
      %4133 = vmatpush.bf16.msra.mxu0 0
      %4134 = vmatpush.bf16.msra.mxu0 0
      %4135 = vmatpush.bf16.msra.mxu0 0
      %4136 = vmatpush.bf16.msra.mxu0 0
      %4137 = vmatpush.bf16.msra.mxu0 0
      %4138 = vmatpush.bf16.msra.mxu0 %v4098
      %4139 = vmatmul.bf16.gmra.mxu0 %v4092
      %v4140 = vpop.f32.mrf.mxu0
      %v4141 = vadd.f32 0.0, %v4140
      %v4142 = vpop.f32.mrf.mxu0
      %4143 = vdwg.mxu0
      %4144 = vmatpush.bf16.msra.mxu0 0
      %4145 = vmatpush.bf16.msra.mxu0 0
      %4146 = vmatpush.bf16.msra.mxu0 0
      %4147 = vmatpush.bf16.msra.mxu0 0
      %4148 = vmatpush.bf16.msra.mxu0 0
      %4149 = vmatpush.bf16.msra.mxu0 0
      %4150 = vmatpush.bf16.msra.mxu0 0
      %4151 = vmatpush.bf16.msra.mxu0 %v4101
      %4152 = vmatmul.bf16.gmra.mxu0 %v4092
      %v4153 = vpop.f32.mrf.mxu0
      %v4154 = vadd.f32 0.0, %v4153
      %v4155 = vpop.f32.mrf.mxu0
      %4156 = vdwg.mxu0
      %4157 = vmatpush.bf16.msra.mxu0 0
      %4158 = vmatpush.bf16.msra.mxu0 0
      %4159 = vmatpush.bf16.msra.mxu0 0
      %4160 = vmatpush.bf16.msra.mxu0 0
      %4161 = vmatpush.bf16.msra.mxu0 0
      %4162 = vmatpush.bf16.msra.mxu0 0
      %4163 = vmatpush.bf16.msra.mxu0 0
      %4164 = vmatpush.bf16.msra.mxu0 %v4104
      %4165 = vmatmul.bf16.gmra.mxu0 %v4092
      %v4166 = vpop.f32.mrf.mxu0
      %v4167 = vadd.f32 0.0, %v4166
      %v4168 = vpop.f32.mrf.mxu0
      %4169 = vdwg.mxu0
      %4170 = vmatpush.bf16.msra.mxu0 0
      %4171 = vmatpush.bf16.msra.mxu0 0
      %4172 = vmatpush.bf16.msra.mxu0 0
      %4173 = vmatpush.bf16.msra.mxu0 0
      %4174 = vmatpush.bf16.msra.mxu0 0
      %4175 = vmatpush.bf16.msra.mxu0 0
      %4176 = vmatpush.bf16.msra.mxu0 0
      %4177 = vmatpush.bf16.msra.mxu0 %v4107
      %4178 = vmatmul.bf16.gmra.mxu0 %v4092
      %v4179 = vpop.f32.mrf.mxu0
      %v4180 = vadd.f32 0.0, %v4179
      %v4181 = vpop.f32.mrf.mxu0
      %4182 = vdwg.mxu0
      %4183 = vmatpush.bf16.msra.mxu0 0
      %4184 = vmatpush.bf16.msra.mxu0 0
      %4185 = vmatpush.bf16.msra.mxu0 0
      %4186 = vmatpush.bf16.msra.mxu0 0
      %4187 = vmatpush.bf16.msra.mxu0 0
      %4188 = vmatpush.bf16.msra.mxu0 0
      %4189 = vmatpush.bf16.msra.mxu0 0
      %4190 = vmatpush.bf16.msra.mxu0 %v4110
      %4191 = vmatmul.bf16.gmra.mxu0 %v4092
      %v4192 = vpop.f32.mrf.mxu0
      %v4193 = vadd.f32 0.0, %v4192
      %v4194 = vpop.f32.mrf.mxu0
      %4195 = vdwg.mxu0
      %4196 = vmatpush.bf16.msra.mxu0 0
      %4197 = vmatpush.bf16.msra.mxu0 0
      %4198 = vmatpush.bf16.msra.mxu0 0
      %4199 = vmatpush.bf16.msra.mxu0 0
      %4200 = vmatpush.bf16.msra.mxu0 0
      %4201 = vmatpush.bf16.msra.mxu0 0
      %4202 = vmatpush.bf16.msra.mxu0 0
      %4203 = vmatpush.bf16.msra.mxu0 %v4113
      %4204 = vmatmul.bf16.gmra.mxu0 %v4092
      %v4205 = vpop.f32.mrf.mxu0
      %v4206 = vadd.f32 0.0, %v4205
      %v4207 = vpop.f32.mrf.mxu0
      %4208 = vdwg.mxu0
      %4209 = vmatpush.bf16.msra.mxu0 0
      %4210 = vmatpush.bf16.msra.mxu0 0
      %4211 = vmatpush.bf16.msra.mxu0 0
      %4212 = vmatpush.bf16.msra.mxu0 0
      %4213 = vmatpush.bf16.msra.mxu0 0
      %4214 = vmatpush.bf16.msra.mxu0 0
      %4215 = vmatpush.bf16.msra.mxu0 0
      %4216 = vmatpush.bf16.msra.mxu0 %v4116
      %4217 = vmatmul.bf16.gmra.mxu0 %v4092
      %v4218 = vpop.f32.mrf.mxu0
      %v4219 = vadd.f32 0.0, %v4218
      %v4220 = vpop.f32.mrf.mxu0
      %4221 = vdwg.mxu0
      %v4222 = vadd.f32 %v4042, %v4128
      %v4223 = vadd.f32 %v4043, %v4141
      %v4224 = vadd.f32 %v4044, %v4154
      %v4225 = vadd.f32 %v4045, %v4167
      %v4226 = vadd.f32 %v4046, %v4180
      %v4227 = vadd.f32 %v4047, %v4193
      %v4228 = vadd.f32 %v4048, %v4206
      %v4229 = vadd.f32 %v4049, %v4219
      %4230 = vrot.lane.b32.xlu0 %v289, 28
      %v4231 = vpop.permute.xlu0 %4230
      %4232 = vrot.lane.b32.xlu0 %v290, 28
      %v4233 = vpop.permute.xlu0 %4232
      %4234 = vrot.lane.b32.xlu0 %v291, 28
      %v4235 = vpop.permute.xlu0 %4234
      %4236 = vrot.lane.b32.xlu0 %v292, 28
      %v4237 = vpop.permute.xlu0 %4236
      %4238 = vrot.lane.b32.xlu0 %v293, 28
      %v4239 = vpop.permute.xlu0 %4238
      %4240 = vrot.lane.b32.xlu0 %v294, 28
      %v4241 = vpop.permute.xlu0 %4240
      %4242 = vrot.lane.b32.xlu0 %v295, 28
      %v4243 = vpop.permute.xlu0 %4242
      %4244 = vrot.lane.b32.xlu0 %v296, 28
      %v4245 = vpop.permute.xlu0 %4244
      %vm4246 = vcmask 228352
      %v4247 = vsel %vm4246, %v4231, %v4233
      %v4248 = vsel %vm4246, %v4233, %v4235
      %v4249 = vsel %vm4246, %v4235, %v4237
      %v4250 = vsel %vm4246, %v4237, %v4239
      %v4251 = vsel %vm4246, %v4239, %v4241
      %v4252 = vsel %vm4246, %v4241, %v4243
      %v4253 = vsel %vm4246, %v4243, %v4245
      %v4262 = vsel %vm4246, %v4245, 0.0
      %v4263 = vpack.c.bf16 %v4247, %v4247
      %v4264 = vpack.c.bf16 %v4248, %v4248
      %v4265 = vpack.c.bf16 %v4249, %v4249
      %v4266 = vpack.c.bf16 %v4250, %v4250
      %v4267 = vpack.c.bf16 %v4251, %v4251
      %v4268 = vpack.c.bf16 %v4252, %v4252
      %v4269 = vpack.c.bf16 %v4253, %v4253
      %v4270 = vpack.c.bf16 %v4262, %v4262
      %v4272 = vsel %vm387, %v253, 0
      %v4275 = vsel %vm391, %v4263, 0
      %v4278 = vsel %vm391, %v4264, 0
      %v4281 = vsel %vm391, %v4265, 0
      %v4284 = vsel %vm391, %v4266, 0
      %v4287 = vsel %vm391, %v4267, 0
      %v4290 = vsel %vm391, %v4268, 0
      %v4293 = vsel %vm391, %v4269, 0
      %v4296 = vsel %vm391, %v4270, 0
      %4298 = vmatpush.bf16.msra.mxu0 0
      %4299 = vmatpush.bf16.msra.mxu0 0
      %4300 = vmatpush.bf16.msra.mxu0 0
      %4301 = vmatpush.bf16.msra.mxu0 0
      %4302 = vmatpush.bf16.msra.mxu0 0
      %4303 = vmatpush.bf16.msra.mxu0 0
      %4304 = vmatpush.bf16.msra.mxu0 0
      %4305 = vmatpush.bf16.msra.mxu0 %v4275
      %4306 = vmatmul.bf16.gmra.mxu0 %v4272
      %v4307 = vpop.f32.mrf.mxu0
      %v4308 = vadd.f32 0.0, %v4307
      %v4309 = vpop.f32.mrf.mxu0
      %4310 = vdwg.mxu0
      %4311 = vmatpush.bf16.msra.mxu0 0
      %4312 = vmatpush.bf16.msra.mxu0 0
      %4313 = vmatpush.bf16.msra.mxu0 0
      %4314 = vmatpush.bf16.msra.mxu0 0
      %4315 = vmatpush.bf16.msra.mxu0 0
      %4316 = vmatpush.bf16.msra.mxu0 0
      %4317 = vmatpush.bf16.msra.mxu0 0
      %4318 = vmatpush.bf16.msra.mxu0 %v4278
      %4319 = vmatmul.bf16.gmra.mxu0 %v4272
      %v4320 = vpop.f32.mrf.mxu0
      %v4321 = vadd.f32 0.0, %v4320
      %v4322 = vpop.f32.mrf.mxu0
      %4323 = vdwg.mxu0
      %4324 = vmatpush.bf16.msra.mxu0 0
      %4325 = vmatpush.bf16.msra.mxu0 0
      %4326 = vmatpush.bf16.msra.mxu0 0
      %4327 = vmatpush.bf16.msra.mxu0 0
      %4328 = vmatpush.bf16.msra.mxu0 0
      %4329 = vmatpush.bf16.msra.mxu0 0
      %4330 = vmatpush.bf16.msra.mxu0 0
      %4331 = vmatpush.bf16.msra.mxu0 %v4281
      %4332 = vmatmul.bf16.gmra.mxu0 %v4272
      %v4333 = vpop.f32.mrf.mxu0
      %v4334 = vadd.f32 0.0, %v4333
      %v4335 = vpop.f32.mrf.mxu0
      %4336 = vdwg.mxu0
      %4337 = vmatpush.bf16.msra.mxu0 0
      %4338 = vmatpush.bf16.msra.mxu0 0
      %4339 = vmatpush.bf16.msra.mxu0 0
      %4340 = vmatpush.bf16.msra.mxu0 0
      %4341 = vmatpush.bf16.msra.mxu0 0
      %4342 = vmatpush.bf16.msra.mxu0 0
      %4343 = vmatpush.bf16.msra.mxu0 0
      %4344 = vmatpush.bf16.msra.mxu0 %v4284
      %4345 = vmatmul.bf16.gmra.mxu0 %v4272
      %v4346 = vpop.f32.mrf.mxu0
      %v4347 = vadd.f32 0.0, %v4346
      %v4348 = vpop.f32.mrf.mxu0
      %4349 = vdwg.mxu0
      %4350 = vmatpush.bf16.msra.mxu0 0
      %4351 = vmatpush.bf16.msra.mxu0 0
      %4352 = vmatpush.bf16.msra.mxu0 0
      %4353 = vmatpush.bf16.msra.mxu0 0
      %4354 = vmatpush.bf16.msra.mxu0 0
      %4355 = vmatpush.bf16.msra.mxu0 0
      %4356 = vmatpush.bf16.msra.mxu0 0
      %4357 = vmatpush.bf16.msra.mxu0 %v4287
      %4358 = vmatmul.bf16.gmra.mxu0 %v4272
      %v4359 = vpop.f32.mrf.mxu0
      %v4360 = vadd.f32 0.0, %v4359
      %v4361 = vpop.f32.mrf.mxu0
      %4362 = vdwg.mxu0
      %4363 = vmatpush.bf16.msra.mxu0 0
      %4364 = vmatpush.bf16.msra.mxu0 0
      %4365 = vmatpush.bf16.msra.mxu0 0
      %4366 = vmatpush.bf16.msra.mxu0 0
      %4367 = vmatpush.bf16.msra.mxu0 0
      %4368 = vmatpush.bf16.msra.mxu0 0
      %4369 = vmatpush.bf16.msra.mxu0 0
      %4370 = vmatpush.bf16.msra.mxu0 %v4290
      %4371 = vmatmul.bf16.gmra.mxu0 %v4272
      %v4372 = vpop.f32.mrf.mxu0
      %v4373 = vadd.f32 0.0, %v4372
      %v4374 = vpop.f32.mrf.mxu0
      %4375 = vdwg.mxu0
      %4376 = vmatpush.bf16.msra.mxu0 0
      %4377 = vmatpush.bf16.msra.mxu0 0
      %4378 = vmatpush.bf16.msra.mxu0 0
      %4379 = vmatpush.bf16.msra.mxu0 0
      %4380 = vmatpush.bf16.msra.mxu0 0
      %4381 = vmatpush.bf16.msra.mxu0 0
      %4382 = vmatpush.bf16.msra.mxu0 0
      %4383 = vmatpush.bf16.msra.mxu0 %v4293
      %4384 = vmatmul.bf16.gmra.mxu0 %v4272
      %v4385 = vpop.f32.mrf.mxu0
      %v4386 = vadd.f32 0.0, %v4385
      %v4387 = vpop.f32.mrf.mxu0
      %4388 = vdwg.mxu0
      %4389 = vmatpush.bf16.msra.mxu0 0
      %4390 = vmatpush.bf16.msra.mxu0 0
      %4391 = vmatpush.bf16.msra.mxu0 0
      %4392 = vmatpush.bf16.msra.mxu0 0
      %4393 = vmatpush.bf16.msra.mxu0 0
      %4394 = vmatpush.bf16.msra.mxu0 0
      %4395 = vmatpush.bf16.msra.mxu0 0
      %4396 = vmatpush.bf16.msra.mxu0 %v4296
      %4397 = vmatmul.bf16.gmra.mxu0 %v4272
      %v4398 = vpop.f32.mrf.mxu0
      %v4399 = vadd.f32 0.0, %v4398
      %v4400 = vpop.f32.mrf.mxu0
      %4401 = vdwg.mxu0
      %v4402 = vadd.f32 %v4222, %v4308
      %v4403 = vadd.f32 %v4223, %v4321
      %v4404 = vadd.f32 %v4224, %v4334
      %v4405 = vadd.f32 %v4225, %v4347
      %v4406 = vadd.f32 %v4226, %v4360
      %v4407 = vadd.f32 %v4227, %v4373
      %v4408 = vadd.f32 %v4228, %v4386
      %v4409 = vadd.f32 %v4229, %v4399
      %4410 = vrot.lane.b32.xlu0 %v289, 27
      %v4411 = vpop.permute.xlu0 %4410
      %4412 = vrot.lane.b32.xlu0 %v290, 27
      %v4413 = vpop.permute.xlu0 %4412
      %4414 = vrot.lane.b32.xlu0 %v291, 27
      %v4415 = vpop.permute.xlu0 %4414
      %4416 = vrot.lane.b32.xlu0 %v292, 27
      %v4417 = vpop.permute.xlu0 %4416
      %4418 = vrot.lane.b32.xlu0 %v293, 27
      %v4419 = vpop.permute.xlu0 %4418
      %4420 = vrot.lane.b32.xlu0 %v294, 27
      %v4421 = vpop.permute.xlu0 %4420
      %4422 = vrot.lane.b32.xlu0 %v295, 27
      %v4423 = vpop.permute.xlu0 %4422
      %4424 = vrot.lane.b32.xlu0 %v296, 27
      %v4425 = vpop.permute.xlu0 %4424
      %vm4426 = vcmask 220160
      %v4427 = vsel %vm4426, %v4411, %v4413
      %v4428 = vsel %vm4426, %v4413, %v4415
      %v4429 = vsel %vm4426, %v4415, %v4417
      %v4430 = vsel %vm4426, %v4417, %v4419
      %v4431 = vsel %vm4426, %v4419, %v4421
      %v4432 = vsel %vm4426, %v4421, %v4423
      %v4433 = vsel %vm4426, %v4423, %v4425
      %v4442 = vsel %vm4426, %v4425, 0.0
      %v4443 = vpack.c.bf16 %v4427, %v4427
      %v4444 = vpack.c.bf16 %v4428, %v4428
      %v4445 = vpack.c.bf16 %v4429, %v4429
      %v4446 = vpack.c.bf16 %v4430, %v4430
      %v4447 = vpack.c.bf16 %v4431, %v4431
      %v4448 = vpack.c.bf16 %v4432, %v4432
      %v4449 = vpack.c.bf16 %v4433, %v4433
      %v4450 = vpack.c.bf16 %v4442, %v4442
      %v4452 = vsel %vm387, %v254, 0
      %v4455 = vsel %vm391, %v4443, 0
      %v4458 = vsel %vm391, %v4444, 0
      %v4461 = vsel %vm391, %v4445, 0
      %v4464 = vsel %vm391, %v4446, 0
      %v4467 = vsel %vm391, %v4447, 0
      %v4470 = vsel %vm391, %v4448, 0
      %v4473 = vsel %vm391, %v4449, 0
      %v4476 = vsel %vm391, %v4450, 0
      %4478 = vmatpush.bf16.msra.mxu0 0
      %4479 = vmatpush.bf16.msra.mxu0 0
      %4480 = vmatpush.bf16.msra.mxu0 0
      %4481 = vmatpush.bf16.msra.mxu0 0
      %4482 = vmatpush.bf16.msra.mxu0 0
      %4483 = vmatpush.bf16.msra.mxu0 0
      %4484 = vmatpush.bf16.msra.mxu0 0
      %4485 = vmatpush.bf16.msra.mxu0 %v4455
      %4486 = vmatmul.bf16.gmra.mxu0 %v4452
      %v4487 = vpop.f32.mrf.mxu0
      %v4488 = vadd.f32 0.0, %v4487
      %v4489 = vpop.f32.mrf.mxu0
      %4490 = vdwg.mxu0
      %4491 = vmatpush.bf16.msra.mxu0 0
      %4492 = vmatpush.bf16.msra.mxu0 0
      %4493 = vmatpush.bf16.msra.mxu0 0
      %4494 = vmatpush.bf16.msra.mxu0 0
      %4495 = vmatpush.bf16.msra.mxu0 0
      %4496 = vmatpush.bf16.msra.mxu0 0
      %4497 = vmatpush.bf16.msra.mxu0 0
      %4498 = vmatpush.bf16.msra.mxu0 %v4458
      %4499 = vmatmul.bf16.gmra.mxu0 %v4452
      %v4500 = vpop.f32.mrf.mxu0
      %v4501 = vadd.f32 0.0, %v4500
      %v4502 = vpop.f32.mrf.mxu0
      %4503 = vdwg.mxu0
      %4504 = vmatpush.bf16.msra.mxu0 0
      %4505 = vmatpush.bf16.msra.mxu0 0
      %4506 = vmatpush.bf16.msra.mxu0 0
      %4507 = vmatpush.bf16.msra.mxu0 0
      %4508 = vmatpush.bf16.msra.mxu0 0
      %4509 = vmatpush.bf16.msra.mxu0 0
      %4510 = vmatpush.bf16.msra.mxu0 0
      %4511 = vmatpush.bf16.msra.mxu0 %v4461
      %4512 = vmatmul.bf16.gmra.mxu0 %v4452
      %v4513 = vpop.f32.mrf.mxu0
      %v4514 = vadd.f32 0.0, %v4513
      %v4515 = vpop.f32.mrf.mxu0
      %4516 = vdwg.mxu0
      %4517 = vmatpush.bf16.msra.mxu0 0
      %4518 = vmatpush.bf16.msra.mxu0 0
      %4519 = vmatpush.bf16.msra.mxu0 0
      %4520 = vmatpush.bf16.msra.mxu0 0
      %4521 = vmatpush.bf16.msra.mxu0 0
      %4522 = vmatpush.bf16.msra.mxu0 0
      %4523 = vmatpush.bf16.msra.mxu0 0
      %4524 = vmatpush.bf16.msra.mxu0 %v4464
      %4525 = vmatmul.bf16.gmra.mxu0 %v4452
      %v4526 = vpop.f32.mrf.mxu0
      %v4527 = vadd.f32 0.0, %v4526
      %v4528 = vpop.f32.mrf.mxu0
      %4529 = vdwg.mxu0
      %4530 = vmatpush.bf16.msra.mxu0 0
      %4531 = vmatpush.bf16.msra.mxu0 0
      %4532 = vmatpush.bf16.msra.mxu0 0
      %4533 = vmatpush.bf16.msra.mxu0 0
      %4534 = vmatpush.bf16.msra.mxu0 0
      %4535 = vmatpush.bf16.msra.mxu0 0
      %4536 = vmatpush.bf16.msra.mxu0 0
      %4537 = vmatpush.bf16.msra.mxu0 %v4467
      %4538 = vmatmul.bf16.gmra.mxu0 %v4452
      %v4539 = vpop.f32.mrf.mxu0
      %v4540 = vadd.f32 0.0, %v4539
      %v4541 = vpop.f32.mrf.mxu0
      %4542 = vdwg.mxu0
      %4543 = vmatpush.bf16.msra.mxu0 0
      %4544 = vmatpush.bf16.msra.mxu0 0
      %4545 = vmatpush.bf16.msra.mxu0 0
      %4546 = vmatpush.bf16.msra.mxu0 0
      %4547 = vmatpush.bf16.msra.mxu0 0
      %4548 = vmatpush.bf16.msra.mxu0 0
      %4549 = vmatpush.bf16.msra.mxu0 0
      %4550 = vmatpush.bf16.msra.mxu0 %v4470
      %4551 = vmatmul.bf16.gmra.mxu0 %v4452
      %v4552 = vpop.f32.mrf.mxu0
      %v4553 = vadd.f32 0.0, %v4552
      %v4554 = vpop.f32.mrf.mxu0
      %4555 = vdwg.mxu0
      %4556 = vmatpush.bf16.msra.mxu0 0
      %4557 = vmatpush.bf16.msra.mxu0 0
      %4558 = vmatpush.bf16.msra.mxu0 0
      %4559 = vmatpush.bf16.msra.mxu0 0
      %4560 = vmatpush.bf16.msra.mxu0 0
      %4561 = vmatpush.bf16.msra.mxu0 0
      %4562 = vmatpush.bf16.msra.mxu0 0
      %4563 = vmatpush.bf16.msra.mxu0 %v4473
      %4564 = vmatmul.bf16.gmra.mxu0 %v4452
      %v4565 = vpop.f32.mrf.mxu0
      %v4566 = vadd.f32 0.0, %v4565
      %v4567 = vpop.f32.mrf.mxu0
      %4568 = vdwg.mxu0
      %4569 = vmatpush.bf16.msra.mxu0 0
      %4570 = vmatpush.bf16.msra.mxu0 0
      %4571 = vmatpush.bf16.msra.mxu0 0
      %4572 = vmatpush.bf16.msra.mxu0 0
      %4573 = vmatpush.bf16.msra.mxu0 0
      %4574 = vmatpush.bf16.msra.mxu0 0
      %4575 = vmatpush.bf16.msra.mxu0 0
      %4576 = vmatpush.bf16.msra.mxu0 %v4476
      %4577 = vmatmul.bf16.gmra.mxu0 %v4452
      %v4578 = vpop.f32.mrf.mxu0
      %v4579 = vadd.f32 0.0, %v4578
      %v4580 = vpop.f32.mrf.mxu0
      %4581 = vdwg.mxu0
      %v4582 = vadd.f32 %v4402, %v4488
      %v4583 = vadd.f32 %v4403, %v4501
      %v4584 = vadd.f32 %v4404, %v4514
      %v4585 = vadd.f32 %v4405, %v4527
      %v4586 = vadd.f32 %v4406, %v4540
      %v4587 = vadd.f32 %v4407, %v4553
      %v4588 = vadd.f32 %v4408, %v4566
      %v4589 = vadd.f32 %v4409, %v4579
      %4590 = vrot.lane.b32.xlu0 %v289, 19
      %v4591 = vpop.permute.xlu0 %4590
      %4592 = vrot.lane.b32.xlu0 %v290, 19
      %v4593 = vpop.permute.xlu0 %4592
      %4594 = vrot.lane.b32.xlu0 %v291, 19
      %v4595 = vpop.permute.xlu0 %4594
      %4596 = vrot.lane.b32.xlu0 %v292, 19
      %v4597 = vpop.permute.xlu0 %4596
      %4598 = vrot.lane.b32.xlu0 %v293, 19
      %v4599 = vpop.permute.xlu0 %4598
      %4600 = vrot.lane.b32.xlu0 %v294, 19
      %v4601 = vpop.permute.xlu0 %4600
      %4602 = vrot.lane.b32.xlu0 %v295, 19
      %v4603 = vpop.permute.xlu0 %4602
      %4604 = vrot.lane.b32.xlu0 %v296, 19
      %v4605 = vpop.permute.xlu0 %4604
      %vm4606 = vcmask 154624
      %v4607 = vsel %vm4606, %v4591, %v4593
      %v4608 = vsel %vm4606, %v4593, %v4595
      %v4609 = vsel %vm4606, %v4595, %v4597
      %v4610 = vsel %vm4606, %v4597, %v4599
      %v4611 = vsel %vm4606, %v4599, %v4601
      %v4612 = vsel %vm4606, %v4601, %v4603
      %v4613 = vsel %vm4606, %v4603, %v4605
      %v4622 = vsel %vm4606, %v4605, 0.0
      %v4623 = vpack.c.bf16 %v4607, %v4607
      %v4624 = vpack.c.bf16 %v4608, %v4608
      %v4625 = vpack.c.bf16 %v4609, %v4609
      %v4626 = vpack.c.bf16 %v4610, %v4610
      %v4627 = vpack.c.bf16 %v4611, %v4611
      %v4628 = vpack.c.bf16 %v4612, %v4612
      %v4629 = vpack.c.bf16 %v4613, %v4613
      %v4630 = vpack.c.bf16 %v4622, %v4622
      %v4632 = vsel %vm387, %v255, 0
      %v4635 = vsel %vm391, %v4623, 0
      %v4638 = vsel %vm391, %v4624, 0
      %v4641 = vsel %vm391, %v4625, 0
      %v4644 = vsel %vm391, %v4626, 0
      %v4647 = vsel %vm391, %v4627, 0
      %v4650 = vsel %vm391, %v4628, 0
      %v4653 = vsel %vm391, %v4629, 0
      %v4656 = vsel %vm391, %v4630, 0
      %4658 = vmatpush.bf16.msra.mxu0 0
      %4659 = vmatpush.bf16.msra.mxu0 0
      %4660 = vmatpush.bf16.msra.mxu0 0
      %4661 = vmatpush.bf16.msra.mxu0 0
      %4662 = vmatpush.bf16.msra.mxu0 0
      %4663 = vmatpush.bf16.msra.mxu0 0
      %4664 = vmatpush.bf16.msra.mxu0 0
      %4665 = vmatpush.bf16.msra.mxu0 %v4635
      %4666 = vmatmul.bf16.gmra.mxu0 %v4632
      %v4667 = vpop.f32.mrf.mxu0
      %v4668 = vadd.f32 0.0, %v4667
      %v4669 = vpop.f32.mrf.mxu0
      %4670 = vdwg.mxu0
      %4671 = vmatpush.bf16.msra.mxu0 0
      %4672 = vmatpush.bf16.msra.mxu0 0
      %4673 = vmatpush.bf16.msra.mxu0 0
      %4674 = vmatpush.bf16.msra.mxu0 0
      %4675 = vmatpush.bf16.msra.mxu0 0
      %4676 = vmatpush.bf16.msra.mxu0 0
      %4677 = vmatpush.bf16.msra.mxu0 0
      %4678 = vmatpush.bf16.msra.mxu0 %v4638
      %4679 = vmatmul.bf16.gmra.mxu0 %v4632
      %v4680 = vpop.f32.mrf.mxu0
      %v4681 = vadd.f32 0.0, %v4680
      %v4682 = vpop.f32.mrf.mxu0
      %4683 = vdwg.mxu0
      %4684 = vmatpush.bf16.msra.mxu0 0
      %4685 = vmatpush.bf16.msra.mxu0 0
      %4686 = vmatpush.bf16.msra.mxu0 0
      %4687 = vmatpush.bf16.msra.mxu0 0
      %4688 = vmatpush.bf16.msra.mxu0 0
      %4689 = vmatpush.bf16.msra.mxu0 0
      %4690 = vmatpush.bf16.msra.mxu0 0
      %4691 = vmatpush.bf16.msra.mxu0 %v4641
      %4692 = vmatmul.bf16.gmra.mxu0 %v4632
      %v4693 = vpop.f32.mrf.mxu0
      %v4694 = vadd.f32 0.0, %v4693
      %v4695 = vpop.f32.mrf.mxu0
      %4696 = vdwg.mxu0
      %4697 = vmatpush.bf16.msra.mxu0 0
      %4698 = vmatpush.bf16.msra.mxu0 0
      %4699 = vmatpush.bf16.msra.mxu0 0
      %4700 = vmatpush.bf16.msra.mxu0 0
      %4701 = vmatpush.bf16.msra.mxu0 0
      %4702 = vmatpush.bf16.msra.mxu0 0
      %4703 = vmatpush.bf16.msra.mxu0 0
      %4704 = vmatpush.bf16.msra.mxu0 %v4644
      %4705 = vmatmul.bf16.gmra.mxu0 %v4632
      %v4706 = vpop.f32.mrf.mxu0
      %v4707 = vadd.f32 0.0, %v4706
      %v4708 = vpop.f32.mrf.mxu0
      %4709 = vdwg.mxu0
      %4710 = vmatpush.bf16.msra.mxu0 0
      %4711 = vmatpush.bf16.msra.mxu0 0
      %4712 = vmatpush.bf16.msra.mxu0 0
      %4713 = vmatpush.bf16.msra.mxu0 0
      %4714 = vmatpush.bf16.msra.mxu0 0
      %4715 = vmatpush.bf16.msra.mxu0 0
      %4716 = vmatpush.bf16.msra.mxu0 0
      %4717 = vmatpush.bf16.msra.mxu0 %v4647
      %4718 = vmatmul.bf16.gmra.mxu0 %v4632
      %v4719 = vpop.f32.mrf.mxu0
      %v4720 = vadd.f32 0.0, %v4719
      %v4721 = vpop.f32.mrf.mxu0
      %4722 = vdwg.mxu0
      %4723 = vmatpush.bf16.msra.mxu0 0
      %4724 = vmatpush.bf16.msra.mxu0 0
      %4725 = vmatpush.bf16.msra.mxu0 0
      %4726 = vmatpush.bf16.msra.mxu0 0
      %4727 = vmatpush.bf16.msra.mxu0 0
      %4728 = vmatpush.bf16.msra.mxu0 0
      %4729 = vmatpush.bf16.msra.mxu0 0
      %4730 = vmatpush.bf16.msra.mxu0 %v4650
      %4731 = vmatmul.bf16.gmra.mxu0 %v4632
      %v4732 = vpop.f32.mrf.mxu0
      %v4733 = vadd.f32 0.0, %v4732
      %v4734 = vpop.f32.mrf.mxu0
      %4735 = vdwg.mxu0
      %4736 = vmatpush.bf16.msra.mxu0 0
      %4737 = vmatpush.bf16.msra.mxu0 0
      %4738 = vmatpush.bf16.msra.mxu0 0
      %4739 = vmatpush.bf16.msra.mxu0 0
      %4740 = vmatpush.bf16.msra.mxu0 0
      %4741 = vmatpush.bf16.msra.mxu0 0
      %4742 = vmatpush.bf16.msra.mxu0 0
      %4743 = vmatpush.bf16.msra.mxu0 %v4653
      %4744 = vmatmul.bf16.gmra.mxu0 %v4632
      %v4745 = vpop.f32.mrf.mxu0
      %v4746 = vadd.f32 0.0, %v4745
      %v4747 = vpop.f32.mrf.mxu0
      %4748 = vdwg.mxu0
      %4749 = vmatpush.bf16.msra.mxu0 0
      %4750 = vmatpush.bf16.msra.mxu0 0
      %4751 = vmatpush.bf16.msra.mxu0 0
      %4752 = vmatpush.bf16.msra.mxu0 0
      %4753 = vmatpush.bf16.msra.mxu0 0
      %4754 = vmatpush.bf16.msra.mxu0 0
      %4755 = vmatpush.bf16.msra.mxu0 0
      %4756 = vmatpush.bf16.msra.mxu0 %v4656
      %4757 = vmatmul.bf16.gmra.mxu0 %v4632
      %v4758 = vpop.f32.mrf.mxu0
      %v4759 = vadd.f32 0.0, %v4758
      %v4760 = vpop.f32.mrf.mxu0
      %4761 = vdwg.mxu0
      %v4762 = vadd.f32 %v4582, %v4668
      %v4763 = vadd.f32 %v4583, %v4681
      %v4764 = vadd.f32 %v4584, %v4694
      %v4765 = vadd.f32 %v4585, %v4707
      %v4766 = vadd.f32 %v4586, %v4720
      %v4767 = vadd.f32 %v4587, %v4733
      %v4768 = vadd.f32 %v4588, %v4746
      %v4769 = vadd.f32 %v4589, %v4759
      %4770 = vrot.lane.b32.xlu0 %v289, 18
      %v4771 = vpop.permute.xlu0 %4770
      %4772 = vrot.lane.b32.xlu0 %v290, 18
      %v4773 = vpop.permute.xlu0 %4772
      %4774 = vrot.lane.b32.xlu0 %v291, 18
      %v4775 = vpop.permute.xlu0 %4774
      %4776 = vrot.lane.b32.xlu0 %v292, 18
      %v4777 = vpop.permute.xlu0 %4776
      %4778 = vrot.lane.b32.xlu0 %v293, 18
      %v4779 = vpop.permute.xlu0 %4778
      %4780 = vrot.lane.b32.xlu0 %v294, 18
      %v4781 = vpop.permute.xlu0 %4780
      %4782 = vrot.lane.b32.xlu0 %v295, 18
      %v4783 = vpop.permute.xlu0 %4782
      %4784 = vrot.lane.b32.xlu0 %v296, 18
      %v4785 = vpop.permute.xlu0 %4784
      %vm4786 = vcmask 146432
      %v4787 = vsel %vm4786, %v4771, %v4773
      %v4788 = vsel %vm4786, %v4773, %v4775
      %v4789 = vsel %vm4786, %v4775, %v4777
      %v4790 = vsel %vm4786, %v4777, %v4779
      %v4791 = vsel %vm4786, %v4779, %v4781
      %v4792 = vsel %vm4786, %v4781, %v4783
      %v4793 = vsel %vm4786, %v4783, %v4785
      %v4802 = vsel %vm4786, %v4785, 0.0
      %v4803 = vpack.c.bf16 %v4787, %v4787
      %v4804 = vpack.c.bf16 %v4788, %v4788
      %v4805 = vpack.c.bf16 %v4789, %v4789
      %v4806 = vpack.c.bf16 %v4790, %v4790
      %v4807 = vpack.c.bf16 %v4791, %v4791
      %v4808 = vpack.c.bf16 %v4792, %v4792
      %v4809 = vpack.c.bf16 %v4793, %v4793
      %v4810 = vpack.c.bf16 %v4802, %v4802
      %v4812 = vsel %vm387, %v256, 0
      %v4815 = vsel %vm391, %v4803, 0
      %v4818 = vsel %vm391, %v4804, 0
      %v4821 = vsel %vm391, %v4805, 0
      %v4824 = vsel %vm391, %v4806, 0
      %v4827 = vsel %vm391, %v4807, 0
      %v4830 = vsel %vm391, %v4808, 0
      %v4833 = vsel %vm391, %v4809, 0
      %v4836 = vsel %vm391, %v4810, 0
      %4838 = vmatpush.bf16.msra.mxu0 0
      %4839 = vmatpush.bf16.msra.mxu0 0
      %4840 = vmatpush.bf16.msra.mxu0 0
      %4841 = vmatpush.bf16.msra.mxu0 0
      %4842 = vmatpush.bf16.msra.mxu0 0
      %4843 = vmatpush.bf16.msra.mxu0 0
      %4844 = vmatpush.bf16.msra.mxu0 0
      %4845 = vmatpush.bf16.msra.mxu0 %v4815
      %4846 = vmatmul.bf16.gmra.mxu0 %v4812
      %v4847 = vpop.f32.mrf.mxu0
      %v4848 = vadd.f32 0.0, %v4847
      %v4849 = vpop.f32.mrf.mxu0
      %4850 = vdwg.mxu0
      %4851 = vmatpush.bf16.msra.mxu0 0
      %4852 = vmatpush.bf16.msra.mxu0 0
      %4853 = vmatpush.bf16.msra.mxu0 0
      %4854 = vmatpush.bf16.msra.mxu0 0
      %4855 = vmatpush.bf16.msra.mxu0 0
      %4856 = vmatpush.bf16.msra.mxu0 0
      %4857 = vmatpush.bf16.msra.mxu0 0
      %4858 = vmatpush.bf16.msra.mxu0 %v4818
      %4859 = vmatmul.bf16.gmra.mxu0 %v4812
      %v4860 = vpop.f32.mrf.mxu0
      %v4861 = vadd.f32 0.0, %v4860
      %v4862 = vpop.f32.mrf.mxu0
      %4863 = vdwg.mxu0
      %4864 = vmatpush.bf16.msra.mxu0 0
      %4865 = vmatpush.bf16.msra.mxu0 0
      %4866 = vmatpush.bf16.msra.mxu0 0
      %4867 = vmatpush.bf16.msra.mxu0 0
      %4868 = vmatpush.bf16.msra.mxu0 0
      %4869 = vmatpush.bf16.msra.mxu0 0
      %4870 = vmatpush.bf16.msra.mxu0 0
      %4871 = vmatpush.bf16.msra.mxu0 %v4821
      %4872 = vmatmul.bf16.gmra.mxu0 %v4812
      %v4873 = vpop.f32.mrf.mxu0
      %v4874 = vadd.f32 0.0, %v4873
      %v4875 = vpop.f32.mrf.mxu0
      %4876 = vdwg.mxu0
      %4877 = vmatpush.bf16.msra.mxu0 0
      %4878 = vmatpush.bf16.msra.mxu0 0
      %4879 = vmatpush.bf16.msra.mxu0 0
      %4880 = vmatpush.bf16.msra.mxu0 0
      %4881 = vmatpush.bf16.msra.mxu0 0
      %4882 = vmatpush.bf16.msra.mxu0 0
      %4883 = vmatpush.bf16.msra.mxu0 0
      %4884 = vmatpush.bf16.msra.mxu0 %v4824
      %4885 = vmatmul.bf16.gmra.mxu0 %v4812
      %v4886 = vpop.f32.mrf.mxu0
      %v4887 = vadd.f32 0.0, %v4886
      %v4888 = vpop.f32.mrf.mxu0
      %4889 = vdwg.mxu0
      %4890 = vmatpush.bf16.msra.mxu0 0
      %4891 = vmatpush.bf16.msra.mxu0 0
      %4892 = vmatpush.bf16.msra.mxu0 0
      %4893 = vmatpush.bf16.msra.mxu0 0
      %4894 = vmatpush.bf16.msra.mxu0 0
      %4895 = vmatpush.bf16.msra.mxu0 0
      %4896 = vmatpush.bf16.msra.mxu0 0
      %4897 = vmatpush.bf16.msra.mxu0 %v4827
      %4898 = vmatmul.bf16.gmra.mxu0 %v4812
      %v4899 = vpop.f32.mrf.mxu0
      %v4900 = vadd.f32 0.0, %v4899
      %v4901 = vpop.f32.mrf.mxu0
      %4902 = vdwg.mxu0
      %4903 = vmatpush.bf16.msra.mxu0 0
      %4904 = vmatpush.bf16.msra.mxu0 0
      %4905 = vmatpush.bf16.msra.mxu0 0
      %4906 = vmatpush.bf16.msra.mxu0 0
      %4907 = vmatpush.bf16.msra.mxu0 0
      %4908 = vmatpush.bf16.msra.mxu0 0
      %4909 = vmatpush.bf16.msra.mxu0 0
      %4910 = vmatpush.bf16.msra.mxu0 %v4830
      %4911 = vmatmul.bf16.gmra.mxu0 %v4812
      %v4912 = vpop.f32.mrf.mxu0
      %v4913 = vadd.f32 0.0, %v4912
      %v4914 = vpop.f32.mrf.mxu0
      %4915 = vdwg.mxu0
      %4916 = vmatpush.bf16.msra.mxu0 0
      %4917 = vmatpush.bf16.msra.mxu0 0
      %4918 = vmatpush.bf16.msra.mxu0 0
      %4919 = vmatpush.bf16.msra.mxu0 0
      %4920 = vmatpush.bf16.msra.mxu0 0
      %4921 = vmatpush.bf16.msra.mxu0 0
      %4922 = vmatpush.bf16.msra.mxu0 0
      %4923 = vmatpush.bf16.msra.mxu0 %v4833
      %4924 = vmatmul.bf16.gmra.mxu0 %v4812
      %v4925 = vpop.f32.mrf.mxu0
      %v4926 = vadd.f32 0.0, %v4925
      %v4927 = vpop.f32.mrf.mxu0
      %4928 = vdwg.mxu0
      %4929 = vmatpush.bf16.msra.mxu0 0
      %4930 = vmatpush.bf16.msra.mxu0 0
      %4931 = vmatpush.bf16.msra.mxu0 0
      %4932 = vmatpush.bf16.msra.mxu0 0
      %4933 = vmatpush.bf16.msra.mxu0 0
      %4934 = vmatpush.bf16.msra.mxu0 0
      %4935 = vmatpush.bf16.msra.mxu0 0
      %4936 = vmatpush.bf16.msra.mxu0 %v4836
      %4937 = vmatmul.bf16.gmra.mxu0 %v4812
      %v4938 = vpop.f32.mrf.mxu0
      %v4939 = vadd.f32 0.0, %v4938
      %v4940 = vpop.f32.mrf.mxu0
      %4941 = vdwg.mxu0
      %v4942 = vadd.f32 %v4762, %v4848
      %v4943 = vadd.f32 %v4763, %v4861
      %v4944 = vadd.f32 %v4764, %v4874
      %v4945 = vadd.f32 %v4765, %v4887
      %v4946 = vadd.f32 %v4766, %v4900
      %v4947 = vadd.f32 %v4767, %v4913
      %v4948 = vadd.f32 %v4768, %v4926
      %v4949 = vadd.f32 %v4769, %v4939
      %4950 = vrot.lane.b32.xlu0 %v289, 17
      %v4951 = vpop.permute.xlu0 %4950
      %4952 = vrot.lane.b32.xlu0 %v290, 17
      %v4953 = vpop.permute.xlu0 %4952
      %4954 = vrot.lane.b32.xlu0 %v291, 17
      %v4955 = vpop.permute.xlu0 %4954
      %4956 = vrot.lane.b32.xlu0 %v292, 17
      %v4957 = vpop.permute.xlu0 %4956
      %4958 = vrot.lane.b32.xlu0 %v293, 17
      %v4959 = vpop.permute.xlu0 %4958
      %4960 = vrot.lane.b32.xlu0 %v294, 17
      %v4961 = vpop.permute.xlu0 %4960
      %4962 = vrot.lane.b32.xlu0 %v295, 17
      %v4963 = vpop.permute.xlu0 %4962
      %4964 = vrot.lane.b32.xlu0 %v296, 17
      %v4965 = vpop.permute.xlu0 %4964
      %vm4966 = vcmask 138240
      %v4967 = vsel %vm4966, %v4951, %v4953
      %v4968 = vsel %vm4966, %v4953, %v4955
      %v4969 = vsel %vm4966, %v4955, %v4957
      %v4970 = vsel %vm4966, %v4957, %v4959
      %v4971 = vsel %vm4966, %v4959, %v4961
      %v4972 = vsel %vm4966, %v4961, %v4963
      %v4973 = vsel %vm4966, %v4963, %v4965
      %v4982 = vsel %vm4966, %v4965, 0.0
      %v4983 = vpack.c.bf16 %v4967, %v4967
      %v4984 = vpack.c.bf16 %v4968, %v4968
      %v4985 = vpack.c.bf16 %v4969, %v4969
      %v4986 = vpack.c.bf16 %v4970, %v4970
      %v4987 = vpack.c.bf16 %v4971, %v4971
      %v4988 = vpack.c.bf16 %v4972, %v4972
      %v4989 = vpack.c.bf16 %v4973, %v4973
      %v4990 = vpack.c.bf16 %v4982, %v4982
      %v4992 = vsel %vm387, %v257, 0
      %v4995 = vsel %vm391, %v4983, 0
      %v4998 = vsel %vm391, %v4984, 0
      %v5001 = vsel %vm391, %v4985, 0
      %v5004 = vsel %vm391, %v4986, 0
      %v5007 = vsel %vm391, %v4987, 0
      %v5010 = vsel %vm391, %v4988, 0
      %v5013 = vsel %vm391, %v4989, 0
      %v5016 = vsel %vm391, %v4990, 0
      %5018 = vmatpush.bf16.msra.mxu0 0
      %5019 = vmatpush.bf16.msra.mxu0 0
      %5020 = vmatpush.bf16.msra.mxu0 0
      %5021 = vmatpush.bf16.msra.mxu0 0
      %5022 = vmatpush.bf16.msra.mxu0 0
      %5023 = vmatpush.bf16.msra.mxu0 0
      %5024 = vmatpush.bf16.msra.mxu0 0
      %5025 = vmatpush.bf16.msra.mxu0 %v4995
      %5026 = vmatmul.bf16.gmra.mxu0 %v4992
      %v5027 = vpop.f32.mrf.mxu0
      %v5028 = vadd.f32 0.0, %v5027
      %v5029 = vpop.f32.mrf.mxu0
      %5030 = vdwg.mxu0
      %5031 = vmatpush.bf16.msra.mxu0 0
      %5032 = vmatpush.bf16.msra.mxu0 0
      %5033 = vmatpush.bf16.msra.mxu0 0
      %5034 = vmatpush.bf16.msra.mxu0 0
      %5035 = vmatpush.bf16.msra.mxu0 0
      %5036 = vmatpush.bf16.msra.mxu0 0
      %5037 = vmatpush.bf16.msra.mxu0 0
      %5038 = vmatpush.bf16.msra.mxu0 %v4998
      %5039 = vmatmul.bf16.gmra.mxu0 %v4992
      %v5040 = vpop.f32.mrf.mxu0
      %v5041 = vadd.f32 0.0, %v5040
      %v5042 = vpop.f32.mrf.mxu0
      %5043 = vdwg.mxu0
      %5044 = vmatpush.bf16.msra.mxu0 0
      %5045 = vmatpush.bf16.msra.mxu0 0
      %5046 = vmatpush.bf16.msra.mxu0 0
      %5047 = vmatpush.bf16.msra.mxu0 0
      %5048 = vmatpush.bf16.msra.mxu0 0
      %5049 = vmatpush.bf16.msra.mxu0 0
      %5050 = vmatpush.bf16.msra.mxu0 0
      %5051 = vmatpush.bf16.msra.mxu0 %v5001
      %5052 = vmatmul.bf16.gmra.mxu0 %v4992
      %v5053 = vpop.f32.mrf.mxu0
      %v5054 = vadd.f32 0.0, %v5053
      %v5055 = vpop.f32.mrf.mxu0
      %5056 = vdwg.mxu0
      %5057 = vmatpush.bf16.msra.mxu0 0
      %5058 = vmatpush.bf16.msra.mxu0 0
      %5059 = vmatpush.bf16.msra.mxu0 0
      %5060 = vmatpush.bf16.msra.mxu0 0
      %5061 = vmatpush.bf16.msra.mxu0 0
      %5062 = vmatpush.bf16.msra.mxu0 0
      %5063 = vmatpush.bf16.msra.mxu0 0
      %5064 = vmatpush.bf16.msra.mxu0 %v5004
      %5065 = vmatmul.bf16.gmra.mxu0 %v4992
      %v5066 = vpop.f32.mrf.mxu0
      %v5067 = vadd.f32 0.0, %v5066
      %v5068 = vpop.f32.mrf.mxu0
      %5069 = vdwg.mxu0
      %5070 = vmatpush.bf16.msra.mxu0 0
      %5071 = vmatpush.bf16.msra.mxu0 0
      %5072 = vmatpush.bf16.msra.mxu0 0
      %5073 = vmatpush.bf16.msra.mxu0 0
      %5074 = vmatpush.bf16.msra.mxu0 0
      %5075 = vmatpush.bf16.msra.mxu0 0
      %5076 = vmatpush.bf16.msra.mxu0 0
      %5077 = vmatpush.bf16.msra.mxu0 %v5007
      %5078 = vmatmul.bf16.gmra.mxu0 %v4992
      %v5079 = vpop.f32.mrf.mxu0
      %v5080 = vadd.f32 0.0, %v5079
      %v5081 = vpop.f32.mrf.mxu0
      %5082 = vdwg.mxu0
      %5083 = vmatpush.bf16.msra.mxu0 0
      %5084 = vmatpush.bf16.msra.mxu0 0
      %5085 = vmatpush.bf16.msra.mxu0 0
      %5086 = vmatpush.bf16.msra.mxu0 0
      %5087 = vmatpush.bf16.msra.mxu0 0
      %5088 = vmatpush.bf16.msra.mxu0 0
      %5089 = vmatpush.bf16.msra.mxu0 0
      %5090 = vmatpush.bf16.msra.mxu0 %v5010
      %5091 = vmatmul.bf16.gmra.mxu0 %v4992
      %v5092 = vpop.f32.mrf.mxu0
      %v5093 = vadd.f32 0.0, %v5092
      %v5094 = vpop.f32.mrf.mxu0
      %5095 = vdwg.mxu0
      %5096 = vmatpush.bf16.msra.mxu0 0
      %5097 = vmatpush.bf16.msra.mxu0 0
      %5098 = vmatpush.bf16.msra.mxu0 0
      %5099 = vmatpush.bf16.msra.mxu0 0
      %5100 = vmatpush.bf16.msra.mxu0 0
      %5101 = vmatpush.bf16.msra.mxu0 0
      %5102 = vmatpush.bf16.msra.mxu0 0
      %5103 = vmatpush.bf16.msra.mxu0 %v5013
      %5104 = vmatmul.bf16.gmra.mxu0 %v4992
      %v5105 = vpop.f32.mrf.mxu0
      %v5106 = vadd.f32 0.0, %v5105
      %v5107 = vpop.f32.mrf.mxu0
      %5108 = vdwg.mxu0
      %5109 = vmatpush.bf16.msra.mxu0 0
      %5110 = vmatpush.bf16.msra.mxu0 0
      %5111 = vmatpush.bf16.msra.mxu0 0
      %5112 = vmatpush.bf16.msra.mxu0 0
      %5113 = vmatpush.bf16.msra.mxu0 0
      %5114 = vmatpush.bf16.msra.mxu0 0
      %5115 = vmatpush.bf16.msra.mxu0 0
      %5116 = vmatpush.bf16.msra.mxu0 %v5016
      %5117 = vmatmul.bf16.gmra.mxu0 %v4992
      %v5118 = vpop.f32.mrf.mxu0
      %v5119 = vadd.f32 0.0, %v5118
      %v5120 = vpop.f32.mrf.mxu0
      %5121 = vdwg.mxu0
      %v5122 = vadd.f32 %v4942, %v5028
      %v5123 = vadd.f32 %v4943, %v5041
      %v5124 = vadd.f32 %v4944, %v5054
      %v5125 = vadd.f32 %v4945, %v5067
      %v5126 = vadd.f32 %v4946, %v5080
      %v5127 = vadd.f32 %v4947, %v5093
      %v5128 = vadd.f32 %v4948, %v5106
      %v5129 = vadd.f32 %v4949, %v5119
      %v5131 = vperm.slane %v226, 0
      %v5132 = vperm.slane %v226, 1
      %v5133 = vperm.slane %v226, 2
      %v5134 = vperm.slane %v226, 3
      %v5135 = vperm.slane %v226, 4
      %v5136 = vperm.slane %v226, 5
      %v5137 = vperm.slane %v226, 6
      %v5138 = vperm.slane %v226, 7
      %v5147 = vmul.f32 %v5122, %v5131
      %v5148 = vmul.f32 %v5123, %v5132
      %v5149 = vmul.f32 %v5124, %v5133
      %v5150 = vmul.f32 %v5125, %v5134
      %v5151 = vmul.f32 %v5126, %v5135
      %v5152 = vmul.f32 %v5127, %v5136
      %v5153 = vmul.f32 %v5128, %v5137
      %v5154 = vmul.f32 %v5129, %v5138
      %v5155 = vadd.f32 %v5147, %v5148
      %v5156 = vadd.f32 %v5155, %v5149
      %v5157 = vadd.f32 %v5156, %v5150
      %v5158 = vadd.f32 %v5157, %v5151
      %v5159 = vadd.f32 %v5158, %v5152
      %v5160 = vadd.f32 %v5159, %v5153
      %v5161 = vadd.f32 %v5160, %v5154
      %5162 = vadd.xlane.f32.xlu0 %v5161
      %v5163 = vpop.xlane.xlu0 %5162
      %v5164 = vmul.f32 %v5163, 0.001953125
      %v5165 = vsub.f32 %v5122, %v5164
      %v5166 = vsub.f32 %v5123, %v5164
      %v5167 = vsub.f32 %v5124, %v5164
      %v5168 = vsub.f32 %v5125, %v5164
      %v5169 = vsub.f32 %v5126, %v5164
      %v5170 = vsub.f32 %v5127, %v5164
      %v5171 = vsub.f32 %v5128, %v5164
      %v5172 = vsub.f32 %v5129, %v5164
      %v5173 = vmul.f32 %v5165, %v5165
      %v5174 = vmul.f32 %v5166, %v5166
      %v5175 = vmul.f32 %v5167, %v5167
      %v5176 = vmul.f32 %v5168, %v5168
      %v5177 = vmul.f32 %v5169, %v5169
      %v5178 = vmul.f32 %v5170, %v5170
      %v5179 = vmul.f32 %v5171, %v5171
      %v5180 = vmul.f32 %v5172, %v5172
      %v5181 = vmul.f32 %v5173, %v5131
      %v5182 = vmul.f32 %v5174, %v5132
      %v5183 = vmul.f32 %v5175, %v5133
      %v5184 = vmul.f32 %v5176, %v5134
      %v5185 = vmul.f32 %v5177, %v5135
      %v5186 = vmul.f32 %v5178, %v5136
      %v5187 = vmul.f32 %v5179, %v5137
      %v5188 = vmul.f32 %v5180, %v5138
      %v5189 = vadd.f32 %v5181, %v5182
      %v5190 = vadd.f32 %v5189, %v5183
      %v5191 = vadd.f32 %v5190, %v5184
      %v5192 = vadd.f32 %v5191, %v5185
      %v5193 = vadd.f32 %v5192, %v5186
      %v5194 = vadd.f32 %v5193, %v5187
      %v5195 = vadd.f32 %v5194, %v5188
      %5196 = vadd.xlane.f32.xlu0 %v5195
      %v5197 = vpop.xlane.xlu0 %5196
      %v5198 = vmul.f32 %v5197, 0.001953125
      %v5199 = vadd.f32 %v5198, 1e-05
      %v5200 = vrsqrt.pop %v5199
      %v5201 = vmul.f32 %v5200, %v5199
      %v5202 = vmul.f32 %v5201, %v5200
      %v5203 = vmul.f32 0.5, %v5202
      %v5204 = vsub.f32 1.5, %v5203
      %v5205 = vmul.f32 %v5200, %v5204
      %vm5206 = vweird.f32 %v5199
      %vm5207 = vweird.f32 %v5200
      %vm5208 = vmor %vm5206, %vm5207
      %v5209 = vsel %vm5208, %v5200, %v5205
      %v5210 = vmul.f32 %v5165, %v5209
      %v5211 = vmul.f32 %v5166, %v5209
      %v5212 = vmul.f32 %v5167, %v5209
      %v5213 = vmul.f32 %v5168, %v5209
      %v5214 = vmul.f32 %v5169, %v5209
      %v5215 = vmul.f32 %v5170, %v5209
      %v5216 = vmul.f32 %v5171, %v5209
      %v5217 = vmul.f32 %v5172, %v5209
      %5219 = vset.pattern.permute.xlu0 0
      %5220 = vperm.xlu0 %5219, %v227
      %v5221 = vpop.permute.xlu0 %5220
      %v5223 = vmul.f32 %v5210, %v5221
      %v5224 = vmul.f32 %v5211, %v5221
      %v5225 = vmul.f32 %v5212, %v5221
      %v5226 = vmul.f32 %v5213, %v5221
      %v5227 = vmul.f32 %v5214, %v5221
      %v5228 = vmul.f32 %v5215, %v5221
      %v5229 = vmul.f32 %v5216, %v5221
      %v5230 = vmul.f32 %v5217, %v5221
      %5232 = vset.pattern.permute.xlu0 0
      %5233 = vperm.xlu0 %5232, %v228
      %v5234 = vpop.permute.xlu0 %5233
      %v5236 = vadd.f32 %v5223, %v5234
      %v5237 = vadd.f32 %v5224, %v5234
      %v5238 = vadd.f32 %v5225, %v5234
      %v5239 = vadd.f32 %v5226, %v5234
      %v5240 = vadd.f32 %v5227, %v5234
      %v5241 = vadd.f32 %v5228, %v5234
      %v5242 = vadd.f32 %v5229, %v5234
      %v5243 = vadd.f32 %v5230, %v5234
      %vm5244 = vcmp.gt.f32.partialorder %v5236, 0.0
      %vm5245 = vcmp.gt.f32.partialorder %v5237, 0.0
      %vm5246 = vcmp.gt.f32.partialorder %v5238, 0.0
      %vm5247 = vcmp.gt.f32.partialorder %v5239, 0.0
      %vm5248 = vcmp.gt.f32.partialorder %v5240, 0.0
      %vm5249 = vcmp.gt.f32.partialorder %v5241, 0.0
      %vm5250 = vcmp.gt.f32.partialorder %v5242, 0.0
      %vm5251 = vcmp.gt.f32.partialorder %v5243, 0.0
      %v5252 = vmul.f32 %v5236, 0.01
      %v5253 = vmul.f32 %v5237, 0.01
      %v5254 = vmul.f32 %v5238, 0.01
      %v5255 = vmul.f32 %v5239, 0.01
      %v5256 = vmul.f32 %v5240, 0.01
      %v5257 = vmul.f32 %v5241, 0.01
      %v5258 = vmul.f32 %v5242, 0.01
      %v5259 = vmul.f32 %v5243, 0.01
      %v5260 = vsel %vm5244, %v5236, %v5252
      %v5261 = vsel %vm5245, %v5237, %v5253
      %v5262 = vsel %vm5246, %v5238, %v5254
      %v5263 = vsel %vm5247, %v5239, %v5255
      %v5264 = vsel %vm5248, %v5240, %v5256
      %v5265 = vsel %vm5249, %v5241, %v5257
      %v5266 = vsel %vm5250, %v5242, %v5258
      %v5267 = vsel %vm5251, %v5243, %v5259
      %v5268 = vmul.f32 %v5260, %v5131
      %v5269 = vmul.f32 %v5261, %v5132
      %v5270 = vmul.f32 %v5262, %v5133
      %v5271 = vmul.f32 %v5263, %v5134
      %v5272 = vmul.f32 %v5264, %v5135
      %v5273 = vmul.f32 %v5265, %v5136
      %v5274 = vmul.f32 %v5266, %v5137
      %v5275 = vmul.f32 %v5267, %v5138
      %5284 = vrot.lane.b32.xlu0 %v5268, 111
      %v5285 = vpop.permute.xlu0 %5284
      %5286 = vrot.lane.b32.xlu0 %v5269, 111
      %v5287 = vpop.permute.xlu0 %5286
      %5288 = vrot.lane.b32.xlu0 %v5270, 111
      %v5289 = vpop.permute.xlu0 %5288
      %5290 = vrot.lane.b32.xlu0 %v5271, 111
      %v5291 = vpop.permute.xlu0 %5290
      %5292 = vrot.lane.b32.xlu0 %v5272, 111
      %v5293 = vpop.permute.xlu0 %5292
      %5294 = vrot.lane.b32.xlu0 %v5273, 111
      %v5295 = vpop.permute.xlu0 %5294
      %5296 = vrot.lane.b32.xlu0 %v5274, 111
      %v5297 = vpop.permute.xlu0 %5296
      %5298 = vrot.lane.b32.xlu0 %v5275, 111
      %v5299 = vpop.permute.xlu0 %5298
      %v5300 = vsel %vm321, %v5285, %v5287
      %v5301 = vsel %vm321, %v5287, %v5289
      %v5302 = vsel %vm321, %v5289, %v5291
      %v5303 = vsel %vm321, %v5291, %v5293
      %v5304 = vsel %vm321, %v5293, %v5295
      %v5305 = vsel %vm321, %v5295, %v5297
      %v5306 = vsel %vm321, %v5297, %v5299
      %v5315 = vsel %vm321, 0.0, %v5285
      %v5316 = vpack.c.bf16 %v5315, %v5315
      %v5317 = vpack.c.bf16 %v5300, %v5300
      %v5318 = vpack.c.bf16 %v5301, %v5301
      %v5319 = vpack.c.bf16 %v5302, %v5302
      %v5320 = vpack.c.bf16 %v5303, %v5303
      %v5321 = vpack.c.bf16 %v5304, %v5304
      %v5322 = vpack.c.bf16 %v5305, %v5305
      %v5323 = vpack.c.bf16 %v5306, %v5306
      %5324 = vrot.lane.b32.xlu0 %v5268, 110
      %v5325 = vpop.permute.xlu0 %5324
      %5326 = vrot.lane.b32.xlu0 %v5269, 110
      %v5327 = vpop.permute.xlu0 %5326
      %5328 = vrot.lane.b32.xlu0 %v5270, 110
      %v5329 = vpop.permute.xlu0 %5328
      %5330 = vrot.lane.b32.xlu0 %v5271, 110
      %v5331 = vpop.permute.xlu0 %5330
      %5332 = vrot.lane.b32.xlu0 %v5272, 110
      %v5333 = vpop.permute.xlu0 %5332
      %5334 = vrot.lane.b32.xlu0 %v5273, 110
      %v5335 = vpop.permute.xlu0 %5334
      %5336 = vrot.lane.b32.xlu0 %v5274, 110
      %v5337 = vpop.permute.xlu0 %5336
      %5338 = vrot.lane.b32.xlu0 %v5275, 110
      %v5339 = vpop.permute.xlu0 %5338
      %v5340 = vsel %vm362, %v5325, %v5327
      %v5341 = vsel %vm362, %v5327, %v5329
      %v5342 = vsel %vm362, %v5329, %v5331
      %v5343 = vsel %vm362, %v5331, %v5333
      %v5344 = vsel %vm362, %v5333, %v5335
      %v5345 = vsel %vm362, %v5335, %v5337
      %v5346 = vsel %vm362, %v5337, %v5339
      %v5355 = vsel %vm362, 0.0, %v5325
      %v5356 = vpack.c.bf16 %v5355, %v5355
      %v5357 = vpack.c.bf16 %v5340, %v5340
      %v5358 = vpack.c.bf16 %v5341, %v5341
      %v5359 = vpack.c.bf16 %v5342, %v5342
      %v5360 = vpack.c.bf16 %v5343, %v5343
      %v5361 = vpack.c.bf16 %v5344, %v5344
      %v5362 = vpack.c.bf16 %v5345, %v5345
      %v5363 = vpack.c.bf16 %v5346, %v5346
      %v5365 = vsel %vm387, %v259, 0
      %v5368 = vsel %vm391, %v5356, 0
      %v5371 = vsel %vm391, %v5357, 0
      %v5374 = vsel %vm391, %v5358, 0
      %v5377 = vsel %vm391, %v5359, 0
      %v5380 = vsel %vm391, %v5360, 0
      %v5383 = vsel %vm391, %v5361, 0
      %v5386 = vsel %vm391, %v5362, 0
      %v5389 = vsel %vm391, %v5363, 0
      %5391 = vmatpush.bf16.msra.mxu0 0
      %5392 = vmatpush.bf16.msra.mxu0 0
      %5393 = vmatpush.bf16.msra.mxu0 0
      %5394 = vmatpush.bf16.msra.mxu0 0
      %5395 = vmatpush.bf16.msra.mxu0 0
      %5396 = vmatpush.bf16.msra.mxu0 0
      %5397 = vmatpush.bf16.msra.mxu0 0
      %5398 = vmatpush.bf16.msra.mxu0 %v5368
      %5399 = vmatmul.bf16.gmra.mxu0 %v5365
      %v5400 = vpop.f32.mrf.mxu0
      %v5401 = vadd.f32 0.0, %v5400
      %v5402 = vpop.f32.mrf.mxu0
      %5403 = vdwg.mxu0
      %5404 = vmatpush.bf16.msra.mxu0 0
      %5405 = vmatpush.bf16.msra.mxu0 0
      %5406 = vmatpush.bf16.msra.mxu0 0
      %5407 = vmatpush.bf16.msra.mxu0 0
      %5408 = vmatpush.bf16.msra.mxu0 0
      %5409 = vmatpush.bf16.msra.mxu0 0
      %5410 = vmatpush.bf16.msra.mxu0 0
      %5411 = vmatpush.bf16.msra.mxu0 %v5371
      %5412 = vmatmul.bf16.gmra.mxu0 %v5365
      %v5413 = vpop.f32.mrf.mxu0
      %v5414 = vadd.f32 0.0, %v5413
      %v5415 = vpop.f32.mrf.mxu0
      %5416 = vdwg.mxu0
      %5417 = vmatpush.bf16.msra.mxu0 0
      %5418 = vmatpush.bf16.msra.mxu0 0
      %5419 = vmatpush.bf16.msra.mxu0 0
      %5420 = vmatpush.bf16.msra.mxu0 0
      %5421 = vmatpush.bf16.msra.mxu0 0
      %5422 = vmatpush.bf16.msra.mxu0 0
      %5423 = vmatpush.bf16.msra.mxu0 0
      %5424 = vmatpush.bf16.msra.mxu0 %v5374
      %5425 = vmatmul.bf16.gmra.mxu0 %v5365
      %v5426 = vpop.f32.mrf.mxu0
      %v5427 = vadd.f32 0.0, %v5426
      %v5428 = vpop.f32.mrf.mxu0
      %5429 = vdwg.mxu0
      %5430 = vmatpush.bf16.msra.mxu0 0
      %5431 = vmatpush.bf16.msra.mxu0 0
      %5432 = vmatpush.bf16.msra.mxu0 0
      %5433 = vmatpush.bf16.msra.mxu0 0
      %5434 = vmatpush.bf16.msra.mxu0 0
      %5435 = vmatpush.bf16.msra.mxu0 0
      %5436 = vmatpush.bf16.msra.mxu0 0
      %5437 = vmatpush.bf16.msra.mxu0 %v5377
      %5438 = vmatmul.bf16.gmra.mxu0 %v5365
      %v5439 = vpop.f32.mrf.mxu0
      %v5440 = vadd.f32 0.0, %v5439
      %v5441 = vpop.f32.mrf.mxu0
      %5442 = vdwg.mxu0
      %5443 = vmatpush.bf16.msra.mxu0 0
      %5444 = vmatpush.bf16.msra.mxu0 0
      %5445 = vmatpush.bf16.msra.mxu0 0
      %5446 = vmatpush.bf16.msra.mxu0 0
      %5447 = vmatpush.bf16.msra.mxu0 0
      %5448 = vmatpush.bf16.msra.mxu0 0
      %5449 = vmatpush.bf16.msra.mxu0 0
      %5450 = vmatpush.bf16.msra.mxu0 %v5380
      %5451 = vmatmul.bf16.gmra.mxu0 %v5365
      %v5452 = vpop.f32.mrf.mxu0
      %v5453 = vadd.f32 0.0, %v5452
      %v5454 = vpop.f32.mrf.mxu0
      %5455 = vdwg.mxu0
      %5456 = vmatpush.bf16.msra.mxu0 0
      %5457 = vmatpush.bf16.msra.mxu0 0
      %5458 = vmatpush.bf16.msra.mxu0 0
      %5459 = vmatpush.bf16.msra.mxu0 0
      %5460 = vmatpush.bf16.msra.mxu0 0
      %5461 = vmatpush.bf16.msra.mxu0 0
      %5462 = vmatpush.bf16.msra.mxu0 0
      %5463 = vmatpush.bf16.msra.mxu0 %v5383
      %5464 = vmatmul.bf16.gmra.mxu0 %v5365
      %v5465 = vpop.f32.mrf.mxu0
      %v5466 = vadd.f32 0.0, %v5465
      %v5467 = vpop.f32.mrf.mxu0
      %5468 = vdwg.mxu0
      %5469 = vmatpush.bf16.msra.mxu0 0
      %5470 = vmatpush.bf16.msra.mxu0 0
      %5471 = vmatpush.bf16.msra.mxu0 0
      %5472 = vmatpush.bf16.msra.mxu0 0
      %5473 = vmatpush.bf16.msra.mxu0 0
      %5474 = vmatpush.bf16.msra.mxu0 0
      %5475 = vmatpush.bf16.msra.mxu0 0
      %5476 = vmatpush.bf16.msra.mxu0 %v5386
      %5477 = vmatmul.bf16.gmra.mxu0 %v5365
      %v5478 = vpop.f32.mrf.mxu0
      %v5479 = vadd.f32 0.0, %v5478
      %v5480 = vpop.f32.mrf.mxu0
      %5481 = vdwg.mxu0
      %5482 = vmatpush.bf16.msra.mxu0 0
      %5483 = vmatpush.bf16.msra.mxu0 0
      %5484 = vmatpush.bf16.msra.mxu0 0
      %5485 = vmatpush.bf16.msra.mxu0 0
      %5486 = vmatpush.bf16.msra.mxu0 0
      %5487 = vmatpush.bf16.msra.mxu0 0
      %5488 = vmatpush.bf16.msra.mxu0 0
      %5489 = vmatpush.bf16.msra.mxu0 %v5389
      %5490 = vmatmul.bf16.gmra.mxu0 %v5365
      %v5491 = vpop.f32.mrf.mxu0
      %v5492 = vadd.f32 0.0, %v5491
      %v5493 = vpop.f32.mrf.mxu0
      %5494 = vdwg.mxu0
      %v5496 = vsel %vm387, %v258, 0
      %v5499 = vsel %vm391, %v5316, 0
      %v5502 = vsel %vm391, %v5317, 0
      %v5505 = vsel %vm391, %v5318, 0
      %v5508 = vsel %vm391, %v5319, 0
      %v5511 = vsel %vm391, %v5320, 0
      %v5514 = vsel %vm391, %v5321, 0
      %v5517 = vsel %vm391, %v5322, 0
      %v5520 = vsel %vm391, %v5323, 0
      %5522 = vmatpush.bf16.msra.mxu0 0
      %5523 = vmatpush.bf16.msra.mxu0 0
      %5524 = vmatpush.bf16.msra.mxu0 0
      %5525 = vmatpush.bf16.msra.mxu0 0
      %5526 = vmatpush.bf16.msra.mxu0 0
      %5527 = vmatpush.bf16.msra.mxu0 0
      %5528 = vmatpush.bf16.msra.mxu0 0
      %5529 = vmatpush.bf16.msra.mxu0 %v5499
      %5530 = vmatmul.bf16.gmra.mxu0 %v5496
      %v5531 = vpop.f32.mrf.mxu0
      %v5532 = vadd.f32 %v5401, %v5531
      %v5533 = vpop.f32.mrf.mxu0
      %5534 = vdwg.mxu0
      %5535 = vmatpush.bf16.msra.mxu0 0
      %5536 = vmatpush.bf16.msra.mxu0 0
      %5537 = vmatpush.bf16.msra.mxu0 0
      %5538 = vmatpush.bf16.msra.mxu0 0
      %5539 = vmatpush.bf16.msra.mxu0 0
      %5540 = vmatpush.bf16.msra.mxu0 0
      %5541 = vmatpush.bf16.msra.mxu0 0
      %5542 = vmatpush.bf16.msra.mxu0 %v5502
      %5543 = vmatmul.bf16.gmra.mxu0 %v5496
      %v5544 = vpop.f32.mrf.mxu0
      %v5545 = vadd.f32 %v5414, %v5544
      %v5546 = vpop.f32.mrf.mxu0
      %5547 = vdwg.mxu0
      %5548 = vmatpush.bf16.msra.mxu0 0
      %5549 = vmatpush.bf16.msra.mxu0 0
      %5550 = vmatpush.bf16.msra.mxu0 0
      %5551 = vmatpush.bf16.msra.mxu0 0
      %5552 = vmatpush.bf16.msra.mxu0 0
      %5553 = vmatpush.bf16.msra.mxu0 0
      %5554 = vmatpush.bf16.msra.mxu0 0
      %5555 = vmatpush.bf16.msra.mxu0 %v5505
      %5556 = vmatmul.bf16.gmra.mxu0 %v5496
      %v5557 = vpop.f32.mrf.mxu0
      %v5558 = vadd.f32 %v5427, %v5557
      %v5559 = vpop.f32.mrf.mxu0
      %5560 = vdwg.mxu0
      %5561 = vmatpush.bf16.msra.mxu0 0
      %5562 = vmatpush.bf16.msra.mxu0 0
      %5563 = vmatpush.bf16.msra.mxu0 0
      %5564 = vmatpush.bf16.msra.mxu0 0
      %5565 = vmatpush.bf16.msra.mxu0 0
      %5566 = vmatpush.bf16.msra.mxu0 0
      %5567 = vmatpush.bf16.msra.mxu0 0
      %5568 = vmatpush.bf16.msra.mxu0 %v5508
      %5569 = vmatmul.bf16.gmra.mxu0 %v5496
      %v5570 = vpop.f32.mrf.mxu0
      %v5571 = vadd.f32 %v5440, %v5570
      %v5572 = vpop.f32.mrf.mxu0
      %5573 = vdwg.mxu0
      %5574 = vmatpush.bf16.msra.mxu0 0
      %5575 = vmatpush.bf16.msra.mxu0 0
      %5576 = vmatpush.bf16.msra.mxu0 0
      %5577 = vmatpush.bf16.msra.mxu0 0
      %5578 = vmatpush.bf16.msra.mxu0 0
      %5579 = vmatpush.bf16.msra.mxu0 0
      %5580 = vmatpush.bf16.msra.mxu0 0
      %5581 = vmatpush.bf16.msra.mxu0 %v5511
      %5582 = vmatmul.bf16.gmra.mxu0 %v5496
      %v5583 = vpop.f32.mrf.mxu0
      %v5584 = vadd.f32 %v5453, %v5583
      %v5585 = vpop.f32.mrf.mxu0
      %5586 = vdwg.mxu0
      %5587 = vmatpush.bf16.msra.mxu0 0
      %5588 = vmatpush.bf16.msra.mxu0 0
      %5589 = vmatpush.bf16.msra.mxu0 0
      %5590 = vmatpush.bf16.msra.mxu0 0
      %5591 = vmatpush.bf16.msra.mxu0 0
      %5592 = vmatpush.bf16.msra.mxu0 0
      %5593 = vmatpush.bf16.msra.mxu0 0
      %5594 = vmatpush.bf16.msra.mxu0 %v5514
      %5595 = vmatmul.bf16.gmra.mxu0 %v5496
      %v5596 = vpop.f32.mrf.mxu0
      %v5597 = vadd.f32 %v5466, %v5596
      %v5598 = vpop.f32.mrf.mxu0
      %5599 = vdwg.mxu0
      %5600 = vmatpush.bf16.msra.mxu0 0
      %5601 = vmatpush.bf16.msra.mxu0 0
      %5602 = vmatpush.bf16.msra.mxu0 0
      %5603 = vmatpush.bf16.msra.mxu0 0
      %5604 = vmatpush.bf16.msra.mxu0 0
      %5605 = vmatpush.bf16.msra.mxu0 0
      %5606 = vmatpush.bf16.msra.mxu0 0
      %5607 = vmatpush.bf16.msra.mxu0 %v5517
      %5608 = vmatmul.bf16.gmra.mxu0 %v5496
      %v5609 = vpop.f32.mrf.mxu0
      %v5610 = vadd.f32 %v5479, %v5609
      %v5611 = vpop.f32.mrf.mxu0
      %5612 = vdwg.mxu0
      %5613 = vmatpush.bf16.msra.mxu0 0
      %5614 = vmatpush.bf16.msra.mxu0 0
      %5615 = vmatpush.bf16.msra.mxu0 0
      %5616 = vmatpush.bf16.msra.mxu0 0
      %5617 = vmatpush.bf16.msra.mxu0 0
      %5618 = vmatpush.bf16.msra.mxu0 0
      %5619 = vmatpush.bf16.msra.mxu0 0
      %5620 = vmatpush.bf16.msra.mxu0 %v5520
      %5621 = vmatmul.bf16.gmra.mxu0 %v5496
      %v5622 = vpop.f32.mrf.mxu0
      %v5623 = vadd.f32 %v5492, %v5622
      %v5624 = vpop.f32.mrf.mxu0
      %5625 = vdwg.mxu0
      %5626 = vrot.lane.b32.xlu0 %v5268, 109
      %v5627 = vpop.permute.xlu0 %5626
      %5628 = vrot.lane.b32.xlu0 %v5269, 109
      %v5629 = vpop.permute.xlu0 %5628
      %5630 = vrot.lane.b32.xlu0 %v5270, 109
      %v5631 = vpop.permute.xlu0 %5630
      %5632 = vrot.lane.b32.xlu0 %v5271, 109
      %v5633 = vpop.permute.xlu0 %5632
      %5634 = vrot.lane.b32.xlu0 %v5272, 109
      %v5635 = vpop.permute.xlu0 %5634
      %5636 = vrot.lane.b32.xlu0 %v5273, 109
      %v5637 = vpop.permute.xlu0 %5636
      %5638 = vrot.lane.b32.xlu0 %v5274, 109
      %v5639 = vpop.permute.xlu0 %5638
      %5640 = vrot.lane.b32.xlu0 %v5275, 109
      %v5641 = vpop.permute.xlu0 %5640
      %v5642 = vsel %vm667, %v5627, %v5629
      %v5643 = vsel %vm667, %v5629, %v5631
      %v5644 = vsel %vm667, %v5631, %v5633
      %v5645 = vsel %vm667, %v5633, %v5635
      %v5646 = vsel %vm667, %v5635, %v5637
      %v5647 = vsel %vm667, %v5637, %v5639
      %v5648 = vsel %vm667, %v5639, %v5641
      %v5657 = vsel %vm667, 0.0, %v5627
      %v5658 = vpack.c.bf16 %v5657, %v5657
      %v5659 = vpack.c.bf16 %v5642, %v5642
      %v5660 = vpack.c.bf16 %v5643, %v5643
      %v5661 = vpack.c.bf16 %v5644, %v5644
      %v5662 = vpack.c.bf16 %v5645, %v5645
      %v5663 = vpack.c.bf16 %v5646, %v5646
      %v5664 = vpack.c.bf16 %v5647, %v5647
      %v5665 = vpack.c.bf16 %v5648, %v5648
      %v5667 = vsel %vm387, %v260, 0
      %v5670 = vsel %vm391, %v5658, 0
      %v5673 = vsel %vm391, %v5659, 0
      %v5676 = vsel %vm391, %v5660, 0
      %v5679 = vsel %vm391, %v5661, 0
      %v5682 = vsel %vm391, %v5662, 0
      %v5685 = vsel %vm391, %v5663, 0
      %v5688 = vsel %vm391, %v5664, 0
      %v5691 = vsel %vm391, %v5665, 0
      %5693 = vmatpush.bf16.msra.mxu0 0
      %5694 = vmatpush.bf16.msra.mxu0 0
      %5695 = vmatpush.bf16.msra.mxu0 0
      %5696 = vmatpush.bf16.msra.mxu0 0
      %5697 = vmatpush.bf16.msra.mxu0 0
      %5698 = vmatpush.bf16.msra.mxu0 0
      %5699 = vmatpush.bf16.msra.mxu0 0
      %5700 = vmatpush.bf16.msra.mxu0 %v5670
      %5701 = vmatmul.bf16.gmra.mxu0 %v5667
      %v5702 = vpop.f32.mrf.mxu0
      %v5703 = vadd.f32 0.0, %v5702
      %v5704 = vpop.f32.mrf.mxu0
      %5705 = vdwg.mxu0
      %5706 = vmatpush.bf16.msra.mxu0 0
      %5707 = vmatpush.bf16.msra.mxu0 0
      %5708 = vmatpush.bf16.msra.mxu0 0
      %5709 = vmatpush.bf16.msra.mxu0 0
      %5710 = vmatpush.bf16.msra.mxu0 0
      %5711 = vmatpush.bf16.msra.mxu0 0
      %5712 = vmatpush.bf16.msra.mxu0 0
      %5713 = vmatpush.bf16.msra.mxu0 %v5673
      %5714 = vmatmul.bf16.gmra.mxu0 %v5667
      %v5715 = vpop.f32.mrf.mxu0
      %v5716 = vadd.f32 0.0, %v5715
      %v5717 = vpop.f32.mrf.mxu0
      %5718 = vdwg.mxu0
      %5719 = vmatpush.bf16.msra.mxu0 0
      %5720 = vmatpush.bf16.msra.mxu0 0
      %5721 = vmatpush.bf16.msra.mxu0 0
      %5722 = vmatpush.bf16.msra.mxu0 0
      %5723 = vmatpush.bf16.msra.mxu0 0
      %5724 = vmatpush.bf16.msra.mxu0 0
      %5725 = vmatpush.bf16.msra.mxu0 0
      %5726 = vmatpush.bf16.msra.mxu0 %v5676
      %5727 = vmatmul.bf16.gmra.mxu0 %v5667
      %v5728 = vpop.f32.mrf.mxu0
      %v5729 = vadd.f32 0.0, %v5728
      %v5730 = vpop.f32.mrf.mxu0
      %5731 = vdwg.mxu0
      %5732 = vmatpush.bf16.msra.mxu0 0
      %5733 = vmatpush.bf16.msra.mxu0 0
      %5734 = vmatpush.bf16.msra.mxu0 0
      %5735 = vmatpush.bf16.msra.mxu0 0
      %5736 = vmatpush.bf16.msra.mxu0 0
      %5737 = vmatpush.bf16.msra.mxu0 0
      %5738 = vmatpush.bf16.msra.mxu0 0
      %5739 = vmatpush.bf16.msra.mxu0 %v5679
      %5740 = vmatmul.bf16.gmra.mxu0 %v5667
      %v5741 = vpop.f32.mrf.mxu0
      %v5742 = vadd.f32 0.0, %v5741
      %v5743 = vpop.f32.mrf.mxu0
      %5744 = vdwg.mxu0
      %5745 = vmatpush.bf16.msra.mxu0 0
      %5746 = vmatpush.bf16.msra.mxu0 0
      %5747 = vmatpush.bf16.msra.mxu0 0
      %5748 = vmatpush.bf16.msra.mxu0 0
      %5749 = vmatpush.bf16.msra.mxu0 0
      %5750 = vmatpush.bf16.msra.mxu0 0
      %5751 = vmatpush.bf16.msra.mxu0 0
      %5752 = vmatpush.bf16.msra.mxu0 %v5682
      %5753 = vmatmul.bf16.gmra.mxu0 %v5667
      %v5754 = vpop.f32.mrf.mxu0
      %v5755 = vadd.f32 0.0, %v5754
      %v5756 = vpop.f32.mrf.mxu0
      %5757 = vdwg.mxu0
      %5758 = vmatpush.bf16.msra.mxu0 0
      %5759 = vmatpush.bf16.msra.mxu0 0
      %5760 = vmatpush.bf16.msra.mxu0 0
      %5761 = vmatpush.bf16.msra.mxu0 0
      %5762 = vmatpush.bf16.msra.mxu0 0
      %5763 = vmatpush.bf16.msra.mxu0 0
      %5764 = vmatpush.bf16.msra.mxu0 0
      %5765 = vmatpush.bf16.msra.mxu0 %v5685
      %5766 = vmatmul.bf16.gmra.mxu0 %v5667
      %v5767 = vpop.f32.mrf.mxu0
      %v5768 = vadd.f32 0.0, %v5767
      %v5769 = vpop.f32.mrf.mxu0
      %5770 = vdwg.mxu0
      %5771 = vmatpush.bf16.msra.mxu0 0
      %5772 = vmatpush.bf16.msra.mxu0 0
      %5773 = vmatpush.bf16.msra.mxu0 0
      %5774 = vmatpush.bf16.msra.mxu0 0
      %5775 = vmatpush.bf16.msra.mxu0 0
      %5776 = vmatpush.bf16.msra.mxu0 0
      %5777 = vmatpush.bf16.msra.mxu0 0
      %5778 = vmatpush.bf16.msra.mxu0 %v5688
      %5779 = vmatmul.bf16.gmra.mxu0 %v5667
      %v5780 = vpop.f32.mrf.mxu0
      %v5781 = vadd.f32 0.0, %v5780
      %v5782 = vpop.f32.mrf.mxu0
      %5783 = vdwg.mxu0
      %5784 = vmatpush.bf16.msra.mxu0 0
      %5785 = vmatpush.bf16.msra.mxu0 0
      %5786 = vmatpush.bf16.msra.mxu0 0
      %5787 = vmatpush.bf16.msra.mxu0 0
      %5788 = vmatpush.bf16.msra.mxu0 0
      %5789 = vmatpush.bf16.msra.mxu0 0
      %5790 = vmatpush.bf16.msra.mxu0 0
      %5791 = vmatpush.bf16.msra.mxu0 %v5691
      %5792 = vmatmul.bf16.gmra.mxu0 %v5667
      %v5793 = vpop.f32.mrf.mxu0
      %v5794 = vadd.f32 0.0, %v5793
      %v5795 = vpop.f32.mrf.mxu0
      %5796 = vdwg.mxu0
      %v5797 = vadd.f32 %v5532, %v5703
      %v5798 = vadd.f32 %v5545, %v5716
      %v5799 = vadd.f32 %v5558, %v5729
      %v5800 = vadd.f32 %v5571, %v5742
      %v5801 = vadd.f32 %v5584, %v5755
      %v5802 = vadd.f32 %v5597, %v5768
      %v5803 = vadd.f32 %v5610, %v5781
      %v5804 = vadd.f32 %v5623, %v5794
      %5805 = vrot.lane.b32.xlu0 %v5268, 101
      %v5806 = vpop.permute.xlu0 %5805
      %5807 = vrot.lane.b32.xlu0 %v5269, 101
      %v5808 = vpop.permute.xlu0 %5807
      %5809 = vrot.lane.b32.xlu0 %v5270, 101
      %v5810 = vpop.permute.xlu0 %5809
      %5811 = vrot.lane.b32.xlu0 %v5271, 101
      %v5812 = vpop.permute.xlu0 %5811
      %5813 = vrot.lane.b32.xlu0 %v5272, 101
      %v5814 = vpop.permute.xlu0 %5813
      %5815 = vrot.lane.b32.xlu0 %v5273, 101
      %v5816 = vpop.permute.xlu0 %5815
      %5817 = vrot.lane.b32.xlu0 %v5274, 101
      %v5818 = vpop.permute.xlu0 %5817
      %5819 = vrot.lane.b32.xlu0 %v5275, 101
      %v5820 = vpop.permute.xlu0 %5819
      %v5821 = vsel %vm847, %v5806, %v5808
      %v5822 = vsel %vm847, %v5808, %v5810
      %v5823 = vsel %vm847, %v5810, %v5812
      %v5824 = vsel %vm847, %v5812, %v5814
      %v5825 = vsel %vm847, %v5814, %v5816
      %v5826 = vsel %vm847, %v5816, %v5818
      %v5827 = vsel %vm847, %v5818, %v5820
      %v5836 = vsel %vm847, 0.0, %v5806
      %v5837 = vpack.c.bf16 %v5836, %v5836
      %v5838 = vpack.c.bf16 %v5821, %v5821
      %v5839 = vpack.c.bf16 %v5822, %v5822
      %v5840 = vpack.c.bf16 %v5823, %v5823
      %v5841 = vpack.c.bf16 %v5824, %v5824
      %v5842 = vpack.c.bf16 %v5825, %v5825
      %v5843 = vpack.c.bf16 %v5826, %v5826
      %v5844 = vpack.c.bf16 %v5827, %v5827
      %v5846 = vsel %vm387, %v261, 0
      %v5849 = vsel %vm391, %v5837, 0
      %v5852 = vsel %vm391, %v5838, 0
      %v5855 = vsel %vm391, %v5839, 0
      %v5858 = vsel %vm391, %v5840, 0
      %v5861 = vsel %vm391, %v5841, 0
      %v5864 = vsel %vm391, %v5842, 0
      %v5867 = vsel %vm391, %v5843, 0
      %v5870 = vsel %vm391, %v5844, 0
      %5872 = vmatpush.bf16.msra.mxu0 0
      %5873 = vmatpush.bf16.msra.mxu0 0
      %5874 = vmatpush.bf16.msra.mxu0 0
      %5875 = vmatpush.bf16.msra.mxu0 0
      %5876 = vmatpush.bf16.msra.mxu0 0
      %5877 = vmatpush.bf16.msra.mxu0 0
      %5878 = vmatpush.bf16.msra.mxu0 0
      %5879 = vmatpush.bf16.msra.mxu0 %v5849
      %5880 = vmatmul.bf16.gmra.mxu0 %v5846
      %v5881 = vpop.f32.mrf.mxu0
      %v5882 = vadd.f32 0.0, %v5881
      %v5883 = vpop.f32.mrf.mxu0
      %5884 = vdwg.mxu0
      %5885 = vmatpush.bf16.msra.mxu0 0
      %5886 = vmatpush.bf16.msra.mxu0 0
      %5887 = vmatpush.bf16.msra.mxu0 0
      %5888 = vmatpush.bf16.msra.mxu0 0
      %5889 = vmatpush.bf16.msra.mxu0 0
      %5890 = vmatpush.bf16.msra.mxu0 0
      %5891 = vmatpush.bf16.msra.mxu0 0
      %5892 = vmatpush.bf16.msra.mxu0 %v5852
      %5893 = vmatmul.bf16.gmra.mxu0 %v5846
      %v5894 = vpop.f32.mrf.mxu0
      %v5895 = vadd.f32 0.0, %v5894
      %v5896 = vpop.f32.mrf.mxu0
      %5897 = vdwg.mxu0
      %5898 = vmatpush.bf16.msra.mxu0 0
      %5899 = vmatpush.bf16.msra.mxu0 0
      %5900 = vmatpush.bf16.msra.mxu0 0
      %5901 = vmatpush.bf16.msra.mxu0 0
      %5902 = vmatpush.bf16.msra.mxu0 0
      %5903 = vmatpush.bf16.msra.mxu0 0
      %5904 = vmatpush.bf16.msra.mxu0 0
      %5905 = vmatpush.bf16.msra.mxu0 %v5855
      %5906 = vmatmul.bf16.gmra.mxu0 %v5846
      %v5907 = vpop.f32.mrf.mxu0
      %v5908 = vadd.f32 0.0, %v5907
      %v5909 = vpop.f32.mrf.mxu0
      %5910 = vdwg.mxu0
      %5911 = vmatpush.bf16.msra.mxu0 0
      %5912 = vmatpush.bf16.msra.mxu0 0
      %5913 = vmatpush.bf16.msra.mxu0 0
      %5914 = vmatpush.bf16.msra.mxu0 0
      %5915 = vmatpush.bf16.msra.mxu0 0
      %5916 = vmatpush.bf16.msra.mxu0 0
      %5917 = vmatpush.bf16.msra.mxu0 0
      %5918 = vmatpush.bf16.msra.mxu0 %v5858
      %5919 = vmatmul.bf16.gmra.mxu0 %v5846
      %v5920 = vpop.f32.mrf.mxu0
      %v5921 = vadd.f32 0.0, %v5920
      %v5922 = vpop.f32.mrf.mxu0
      %5923 = vdwg.mxu0
      %5924 = vmatpush.bf16.msra.mxu0 0
      %5925 = vmatpush.bf16.msra.mxu0 0
      %5926 = vmatpush.bf16.msra.mxu0 0
      %5927 = vmatpush.bf16.msra.mxu0 0
      %5928 = vmatpush.bf16.msra.mxu0 0
      %5929 = vmatpush.bf16.msra.mxu0 0
      %5930 = vmatpush.bf16.msra.mxu0 0
      %5931 = vmatpush.bf16.msra.mxu0 %v5861
      %5932 = vmatmul.bf16.gmra.mxu0 %v5846
      %v5933 = vpop.f32.mrf.mxu0
      %v5934 = vadd.f32 0.0, %v5933
      %v5935 = vpop.f32.mrf.mxu0
      %5936 = vdwg.mxu0
      %5937 = vmatpush.bf16.msra.mxu0 0
      %5938 = vmatpush.bf16.msra.mxu0 0
      %5939 = vmatpush.bf16.msra.mxu0 0
      %5940 = vmatpush.bf16.msra.mxu0 0
      %5941 = vmatpush.bf16.msra.mxu0 0
      %5942 = vmatpush.bf16.msra.mxu0 0
      %5943 = vmatpush.bf16.msra.mxu0 0
      %5944 = vmatpush.bf16.msra.mxu0 %v5864
      %5945 = vmatmul.bf16.gmra.mxu0 %v5846
      %v5946 = vpop.f32.mrf.mxu0
      %v5947 = vadd.f32 0.0, %v5946
      %v5948 = vpop.f32.mrf.mxu0
      %5949 = vdwg.mxu0
      %5950 = vmatpush.bf16.msra.mxu0 0
      %5951 = vmatpush.bf16.msra.mxu0 0
      %5952 = vmatpush.bf16.msra.mxu0 0
      %5953 = vmatpush.bf16.msra.mxu0 0
      %5954 = vmatpush.bf16.msra.mxu0 0
      %5955 = vmatpush.bf16.msra.mxu0 0
      %5956 = vmatpush.bf16.msra.mxu0 0
      %5957 = vmatpush.bf16.msra.mxu0 %v5867
      %5958 = vmatmul.bf16.gmra.mxu0 %v5846
      %v5959 = vpop.f32.mrf.mxu0
      %v5960 = vadd.f32 0.0, %v5959
      %v5961 = vpop.f32.mrf.mxu0
      %5962 = vdwg.mxu0
      %5963 = vmatpush.bf16.msra.mxu0 0
      %5964 = vmatpush.bf16.msra.mxu0 0
      %5965 = vmatpush.bf16.msra.mxu0 0
      %5966 = vmatpush.bf16.msra.mxu0 0
      %5967 = vmatpush.bf16.msra.mxu0 0
      %5968 = vmatpush.bf16.msra.mxu0 0
      %5969 = vmatpush.bf16.msra.mxu0 0
      %5970 = vmatpush.bf16.msra.mxu0 %v5870
      %5971 = vmatmul.bf16.gmra.mxu0 %v5846
      %v5972 = vpop.f32.mrf.mxu0
      %v5973 = vadd.f32 0.0, %v5972
      %v5974 = vpop.f32.mrf.mxu0
      %5975 = vdwg.mxu0
      %v5976 = vadd.f32 %v5797, %v5882
      %v5977 = vadd.f32 %v5798, %v5895
      %v5978 = vadd.f32 %v5799, %v5908
      %v5979 = vadd.f32 %v5800, %v5921
      %v5980 = vadd.f32 %v5801, %v5934
      %v5981 = vadd.f32 %v5802, %v5947
      %v5982 = vadd.f32 %v5803, %v5960
      %v5983 = vadd.f32 %v5804, %v5973
      %5984 = vrot.lane.b32.xlu0 %v5268, 100
      %v5985 = vpop.permute.xlu0 %5984
      %5986 = vrot.lane.b32.xlu0 %v5269, 100
      %v5987 = vpop.permute.xlu0 %5986
      %5988 = vrot.lane.b32.xlu0 %v5270, 100
      %v5989 = vpop.permute.xlu0 %5988
      %5990 = vrot.lane.b32.xlu0 %v5271, 100
      %v5991 = vpop.permute.xlu0 %5990
      %5992 = vrot.lane.b32.xlu0 %v5272, 100
      %v5993 = vpop.permute.xlu0 %5992
      %5994 = vrot.lane.b32.xlu0 %v5273, 100
      %v5995 = vpop.permute.xlu0 %5994
      %5996 = vrot.lane.b32.xlu0 %v5274, 100
      %v5997 = vpop.permute.xlu0 %5996
      %5998 = vrot.lane.b32.xlu0 %v5275, 100
      %v5999 = vpop.permute.xlu0 %5998
      %v6000 = vsel %vm1027, %v5985, %v5987
      %v6001 = vsel %vm1027, %v5987, %v5989
      %v6002 = vsel %vm1027, %v5989, %v5991
      %v6003 = vsel %vm1027, %v5991, %v5993
      %v6004 = vsel %vm1027, %v5993, %v5995
      %v6005 = vsel %vm1027, %v5995, %v5997
      %v6006 = vsel %vm1027, %v5997, %v5999
      %v6015 = vsel %vm1027, 0.0, %v5985
      %v6016 = vpack.c.bf16 %v6015, %v6015
      %v6017 = vpack.c.bf16 %v6000, %v6000
      %v6018 = vpack.c.bf16 %v6001, %v6001
      %v6019 = vpack.c.bf16 %v6002, %v6002
      %v6020 = vpack.c.bf16 %v6003, %v6003
      %v6021 = vpack.c.bf16 %v6004, %v6004
      %v6022 = vpack.c.bf16 %v6005, %v6005
      %v6023 = vpack.c.bf16 %v6006, %v6006
      %v6025 = vsel %vm387, %v262, 0
      %v6028 = vsel %vm391, %v6016, 0
      %v6031 = vsel %vm391, %v6017, 0
      %v6034 = vsel %vm391, %v6018, 0
      %v6037 = vsel %vm391, %v6019, 0
      %v6040 = vsel %vm391, %v6020, 0
      %v6043 = vsel %vm391, %v6021, 0
      %v6046 = vsel %vm391, %v6022, 0
      %v6049 = vsel %vm391, %v6023, 0
      %6051 = vmatpush.bf16.msra.mxu0 0
      %6052 = vmatpush.bf16.msra.mxu0 0
      %6053 = vmatpush.bf16.msra.mxu0 0
      %6054 = vmatpush.bf16.msra.mxu0 0
      %6055 = vmatpush.bf16.msra.mxu0 0
      %6056 = vmatpush.bf16.msra.mxu0 0
      %6057 = vmatpush.bf16.msra.mxu0 0
      %6058 = vmatpush.bf16.msra.mxu0 %v6028
      %6059 = vmatmul.bf16.gmra.mxu0 %v6025
      %v6060 = vpop.f32.mrf.mxu0
      %v6061 = vadd.f32 0.0, %v6060
      %v6062 = vpop.f32.mrf.mxu0
      %6063 = vdwg.mxu0
      %6064 = vmatpush.bf16.msra.mxu0 0
      %6065 = vmatpush.bf16.msra.mxu0 0
      %6066 = vmatpush.bf16.msra.mxu0 0
      %6067 = vmatpush.bf16.msra.mxu0 0
      %6068 = vmatpush.bf16.msra.mxu0 0
      %6069 = vmatpush.bf16.msra.mxu0 0
      %6070 = vmatpush.bf16.msra.mxu0 0
      %6071 = vmatpush.bf16.msra.mxu0 %v6031
      %6072 = vmatmul.bf16.gmra.mxu0 %v6025
      %v6073 = vpop.f32.mrf.mxu0
      %v6074 = vadd.f32 0.0, %v6073
      %v6075 = vpop.f32.mrf.mxu0
      %6076 = vdwg.mxu0
      %6077 = vmatpush.bf16.msra.mxu0 0
      %6078 = vmatpush.bf16.msra.mxu0 0
      %6079 = vmatpush.bf16.msra.mxu0 0
      %6080 = vmatpush.bf16.msra.mxu0 0
      %6081 = vmatpush.bf16.msra.mxu0 0
      %6082 = vmatpush.bf16.msra.mxu0 0
      %6083 = vmatpush.bf16.msra.mxu0 0
      %6084 = vmatpush.bf16.msra.mxu0 %v6034
      %6085 = vmatmul.bf16.gmra.mxu0 %v6025
      %v6086 = vpop.f32.mrf.mxu0
      %v6087 = vadd.f32 0.0, %v6086
      %v6088 = vpop.f32.mrf.mxu0
      %6089 = vdwg.mxu0
      %6090 = vmatpush.bf16.msra.mxu0 0
      %6091 = vmatpush.bf16.msra.mxu0 0
      %6092 = vmatpush.bf16.msra.mxu0 0
      %6093 = vmatpush.bf16.msra.mxu0 0
      %6094 = vmatpush.bf16.msra.mxu0 0
      %6095 = vmatpush.bf16.msra.mxu0 0
      %6096 = vmatpush.bf16.msra.mxu0 0
      %6097 = vmatpush.bf16.msra.mxu0 %v6037
      %6098 = vmatmul.bf16.gmra.mxu0 %v6025
      %v6099 = vpop.f32.mrf.mxu0
      %v6100 = vadd.f32 0.0, %v6099
      %v6101 = vpop.f32.mrf.mxu0
      %6102 = vdwg.mxu0
      %6103 = vmatpush.bf16.msra.mxu0 0
      %6104 = vmatpush.bf16.msra.mxu0 0
      %6105 = vmatpush.bf16.msra.mxu0 0
      %6106 = vmatpush.bf16.msra.mxu0 0
      %6107 = vmatpush.bf16.msra.mxu0 0
      %6108 = vmatpush.bf16.msra.mxu0 0
      %6109 = vmatpush.bf16.msra.mxu0 0
      %6110 = vmatpush.bf16.msra.mxu0 %v6040
      %6111 = vmatmul.bf16.gmra.mxu0 %v6025
      %v6112 = vpop.f32.mrf.mxu0
      %v6113 = vadd.f32 0.0, %v6112
      %v6114 = vpop.f32.mrf.mxu0
      %6115 = vdwg.mxu0
      %6116 = vmatpush.bf16.msra.mxu0 0
      %6117 = vmatpush.bf16.msra.mxu0 0
      %6118 = vmatpush.bf16.msra.mxu0 0
      %6119 = vmatpush.bf16.msra.mxu0 0
      %6120 = vmatpush.bf16.msra.mxu0 0
      %6121 = vmatpush.bf16.msra.mxu0 0
      %6122 = vmatpush.bf16.msra.mxu0 0
      %6123 = vmatpush.bf16.msra.mxu0 %v6043
      %6124 = vmatmul.bf16.gmra.mxu0 %v6025
      %v6125 = vpop.f32.mrf.mxu0
      %v6126 = vadd.f32 0.0, %v6125
      %v6127 = vpop.f32.mrf.mxu0
      %6128 = vdwg.mxu0
      %6129 = vmatpush.bf16.msra.mxu0 0
      %6130 = vmatpush.bf16.msra.mxu0 0
      %6131 = vmatpush.bf16.msra.mxu0 0
      %6132 = vmatpush.bf16.msra.mxu0 0
      %6133 = vmatpush.bf16.msra.mxu0 0
      %6134 = vmatpush.bf16.msra.mxu0 0
      %6135 = vmatpush.bf16.msra.mxu0 0
      %6136 = vmatpush.bf16.msra.mxu0 %v6046
      %6137 = vmatmul.bf16.gmra.mxu0 %v6025
      %v6138 = vpop.f32.mrf.mxu0
      %v6139 = vadd.f32 0.0, %v6138
      %v6140 = vpop.f32.mrf.mxu0
      %6141 = vdwg.mxu0
      %6142 = vmatpush.bf16.msra.mxu0 0
      %6143 = vmatpush.bf16.msra.mxu0 0
      %6144 = vmatpush.bf16.msra.mxu0 0
      %6145 = vmatpush.bf16.msra.mxu0 0
      %6146 = vmatpush.bf16.msra.mxu0 0
      %6147 = vmatpush.bf16.msra.mxu0 0
      %6148 = vmatpush.bf16.msra.mxu0 0
      %6149 = vmatpush.bf16.msra.mxu0 %v6049
      %6150 = vmatmul.bf16.gmra.mxu0 %v6025
      %v6151 = vpop.f32.mrf.mxu0
      %v6152 = vadd.f32 0.0, %v6151
      %v6153 = vpop.f32.mrf.mxu0
      %6154 = vdwg.mxu0
      %v6155 = vadd.f32 %v5976, %v6061
      %v6156 = vadd.f32 %v5977, %v6074
      %v6157 = vadd.f32 %v5978, %v6087
      %v6158 = vadd.f32 %v5979, %v6100
      %v6159 = vadd.f32 %v5980, %v6113
      %v6160 = vadd.f32 %v5981, %v6126
      %v6161 = vadd.f32 %v5982, %v6139
      %v6162 = vadd.f32 %v5983, %v6152
      %6163 = vrot.lane.b32.xlu0 %v5268, 99
      %v6164 = vpop.permute.xlu0 %6163
      %6165 = vrot.lane.b32.xlu0 %v5269, 99
      %v6166 = vpop.permute.xlu0 %6165
      %6167 = vrot.lane.b32.xlu0 %v5270, 99
      %v6168 = vpop.permute.xlu0 %6167
      %6169 = vrot.lane.b32.xlu0 %v5271, 99
      %v6170 = vpop.permute.xlu0 %6169
      %6171 = vrot.lane.b32.xlu0 %v5272, 99
      %v6172 = vpop.permute.xlu0 %6171
      %6173 = vrot.lane.b32.xlu0 %v5273, 99
      %v6174 = vpop.permute.xlu0 %6173
      %6175 = vrot.lane.b32.xlu0 %v5274, 99
      %v6176 = vpop.permute.xlu0 %6175
      %6177 = vrot.lane.b32.xlu0 %v5275, 99
      %v6178 = vpop.permute.xlu0 %6177
      %v6179 = vsel %vm1207, %v6164, %v6166
      %v6180 = vsel %vm1207, %v6166, %v6168
      %v6181 = vsel %vm1207, %v6168, %v6170
      %v6182 = vsel %vm1207, %v6170, %v6172
      %v6183 = vsel %vm1207, %v6172, %v6174
      %v6184 = vsel %vm1207, %v6174, %v6176
      %v6185 = vsel %vm1207, %v6176, %v6178
      %v6194 = vsel %vm1207, 0.0, %v6164
      %v6195 = vpack.c.bf16 %v6194, %v6194
      %v6196 = vpack.c.bf16 %v6179, %v6179
      %v6197 = vpack.c.bf16 %v6180, %v6180
      %v6198 = vpack.c.bf16 %v6181, %v6181
      %v6199 = vpack.c.bf16 %v6182, %v6182
      %v6200 = vpack.c.bf16 %v6183, %v6183
      %v6201 = vpack.c.bf16 %v6184, %v6184
      %v6202 = vpack.c.bf16 %v6185, %v6185
      %v6204 = vsel %vm387, %v263, 0
      %v6207 = vsel %vm391, %v6195, 0
      %v6210 = vsel %vm391, %v6196, 0
      %v6213 = vsel %vm391, %v6197, 0
      %v6216 = vsel %vm391, %v6198, 0
      %v6219 = vsel %vm391, %v6199, 0
      %v6222 = vsel %vm391, %v6200, 0
      %v6225 = vsel %vm391, %v6201, 0
      %v6228 = vsel %vm391, %v6202, 0
      %6230 = vmatpush.bf16.msra.mxu0 0
      %6231 = vmatpush.bf16.msra.mxu0 0
      %6232 = vmatpush.bf16.msra.mxu0 0
      %6233 = vmatpush.bf16.msra.mxu0 0
      %6234 = vmatpush.bf16.msra.mxu0 0
      %6235 = vmatpush.bf16.msra.mxu0 0
      %6236 = vmatpush.bf16.msra.mxu0 0
      %6237 = vmatpush.bf16.msra.mxu0 %v6207
      %6238 = vmatmul.bf16.gmra.mxu0 %v6204
      %v6239 = vpop.f32.mrf.mxu0
      %v6240 = vadd.f32 0.0, %v6239
      %v6241 = vpop.f32.mrf.mxu0
      %6242 = vdwg.mxu0
      %6243 = vmatpush.bf16.msra.mxu0 0
      %6244 = vmatpush.bf16.msra.mxu0 0
      %6245 = vmatpush.bf16.msra.mxu0 0
      %6246 = vmatpush.bf16.msra.mxu0 0
      %6247 = vmatpush.bf16.msra.mxu0 0
      %6248 = vmatpush.bf16.msra.mxu0 0
      %6249 = vmatpush.bf16.msra.mxu0 0
      %6250 = vmatpush.bf16.msra.mxu0 %v6210
      %6251 = vmatmul.bf16.gmra.mxu0 %v6204
      %v6252 = vpop.f32.mrf.mxu0
      %v6253 = vadd.f32 0.0, %v6252
      %v6254 = vpop.f32.mrf.mxu0
      %6255 = vdwg.mxu0
      %6256 = vmatpush.bf16.msra.mxu0 0
      %6257 = vmatpush.bf16.msra.mxu0 0
      %6258 = vmatpush.bf16.msra.mxu0 0
      %6259 = vmatpush.bf16.msra.mxu0 0
      %6260 = vmatpush.bf16.msra.mxu0 0
      %6261 = vmatpush.bf16.msra.mxu0 0
      %6262 = vmatpush.bf16.msra.mxu0 0
      %6263 = vmatpush.bf16.msra.mxu0 %v6213
      %6264 = vmatmul.bf16.gmra.mxu0 %v6204
      %v6265 = vpop.f32.mrf.mxu0
      %v6266 = vadd.f32 0.0, %v6265
      %v6267 = vpop.f32.mrf.mxu0
      %6268 = vdwg.mxu0
      %6269 = vmatpush.bf16.msra.mxu0 0
      %6270 = vmatpush.bf16.msra.mxu0 0
      %6271 = vmatpush.bf16.msra.mxu0 0
      %6272 = vmatpush.bf16.msra.mxu0 0
      %6273 = vmatpush.bf16.msra.mxu0 0
      %6274 = vmatpush.bf16.msra.mxu0 0
      %6275 = vmatpush.bf16.msra.mxu0 0
      %6276 = vmatpush.bf16.msra.mxu0 %v6216
      %6277 = vmatmul.bf16.gmra.mxu0 %v6204
      %v6278 = vpop.f32.mrf.mxu0
      %v6279 = vadd.f32 0.0, %v6278
      %v6280 = vpop.f32.mrf.mxu0
      %6281 = vdwg.mxu0
      %6282 = vmatpush.bf16.msra.mxu0 0
      %6283 = vmatpush.bf16.msra.mxu0 0
      %6284 = vmatpush.bf16.msra.mxu0 0
      %6285 = vmatpush.bf16.msra.mxu0 0
      %6286 = vmatpush.bf16.msra.mxu0 0
      %6287 = vmatpush.bf16.msra.mxu0 0
      %6288 = vmatpush.bf16.msra.mxu0 0
      %6289 = vmatpush.bf16.msra.mxu0 %v6219
      %6290 = vmatmul.bf16.gmra.mxu0 %v6204
      %v6291 = vpop.f32.mrf.mxu0
      %v6292 = vadd.f32 0.0, %v6291
      %v6293 = vpop.f32.mrf.mxu0
      %6294 = vdwg.mxu0
      %6295 = vmatpush.bf16.msra.mxu0 0
      %6296 = vmatpush.bf16.msra.mxu0 0
      %6297 = vmatpush.bf16.msra.mxu0 0
      %6298 = vmatpush.bf16.msra.mxu0 0
      %6299 = vmatpush.bf16.msra.mxu0 0
      %6300 = vmatpush.bf16.msra.mxu0 0
      %6301 = vmatpush.bf16.msra.mxu0 0
      %6302 = vmatpush.bf16.msra.mxu0 %v6222
      %6303 = vmatmul.bf16.gmra.mxu0 %v6204
      %v6304 = vpop.f32.mrf.mxu0
      %v6305 = vadd.f32 0.0, %v6304
      %v6306 = vpop.f32.mrf.mxu0
      %6307 = vdwg.mxu0
      %6308 = vmatpush.bf16.msra.mxu0 0
      %6309 = vmatpush.bf16.msra.mxu0 0
      %6310 = vmatpush.bf16.msra.mxu0 0
      %6311 = vmatpush.bf16.msra.mxu0 0
      %6312 = vmatpush.bf16.msra.mxu0 0
      %6313 = vmatpush.bf16.msra.mxu0 0
      %6314 = vmatpush.bf16.msra.mxu0 0
      %6315 = vmatpush.bf16.msra.mxu0 %v6225
      %6316 = vmatmul.bf16.gmra.mxu0 %v6204
      %v6317 = vpop.f32.mrf.mxu0
      %v6318 = vadd.f32 0.0, %v6317
      %v6319 = vpop.f32.mrf.mxu0
      %6320 = vdwg.mxu0
      %6321 = vmatpush.bf16.msra.mxu0 0
      %6322 = vmatpush.bf16.msra.mxu0 0
      %6323 = vmatpush.bf16.msra.mxu0 0
      %6324 = vmatpush.bf16.msra.mxu0 0
      %6325 = vmatpush.bf16.msra.mxu0 0
      %6326 = vmatpush.bf16.msra.mxu0 0
      %6327 = vmatpush.bf16.msra.mxu0 0
      %6328 = vmatpush.bf16.msra.mxu0 %v6228
      %6329 = vmatmul.bf16.gmra.mxu0 %v6204
      %v6330 = vpop.f32.mrf.mxu0
      %v6331 = vadd.f32 0.0, %v6330
      %v6332 = vpop.f32.mrf.mxu0
      %6333 = vdwg.mxu0
      %v6334 = vadd.f32 %v6155, %v6240
      %v6335 = vadd.f32 %v6156, %v6253
      %v6336 = vadd.f32 %v6157, %v6266
      %v6337 = vadd.f32 %v6158, %v6279
      %v6338 = vadd.f32 %v6159, %v6292
      %v6339 = vadd.f32 %v6160, %v6305
      %v6340 = vadd.f32 %v6161, %v6318
      %v6341 = vadd.f32 %v6162, %v6331
      %6342 = vrot.lane.b32.xlu0 %v5268, 91
      %v6343 = vpop.permute.xlu0 %6342
      %6344 = vrot.lane.b32.xlu0 %v5269, 91
      %v6345 = vpop.permute.xlu0 %6344
      %6346 = vrot.lane.b32.xlu0 %v5270, 91
      %v6347 = vpop.permute.xlu0 %6346
      %6348 = vrot.lane.b32.xlu0 %v5271, 91
      %v6349 = vpop.permute.xlu0 %6348
      %6350 = vrot.lane.b32.xlu0 %v5272, 91
      %v6351 = vpop.permute.xlu0 %6350
      %6352 = vrot.lane.b32.xlu0 %v5273, 91
      %v6353 = vpop.permute.xlu0 %6352
      %6354 = vrot.lane.b32.xlu0 %v5274, 91
      %v6355 = vpop.permute.xlu0 %6354
      %6356 = vrot.lane.b32.xlu0 %v5275, 91
      %v6357 = vpop.permute.xlu0 %6356
      %v6358 = vsel %vm1387, %v6343, %v6345
      %v6359 = vsel %vm1387, %v6345, %v6347
      %v6360 = vsel %vm1387, %v6347, %v6349
      %v6361 = vsel %vm1387, %v6349, %v6351
      %v6362 = vsel %vm1387, %v6351, %v6353
      %v6363 = vsel %vm1387, %v6353, %v6355
      %v6364 = vsel %vm1387, %v6355, %v6357
      %v6373 = vsel %vm1387, 0.0, %v6343
      %v6374 = vpack.c.bf16 %v6373, %v6373
      %v6375 = vpack.c.bf16 %v6358, %v6358
      %v6376 = vpack.c.bf16 %v6359, %v6359
      %v6377 = vpack.c.bf16 %v6360, %v6360
      %v6378 = vpack.c.bf16 %v6361, %v6361
      %v6379 = vpack.c.bf16 %v6362, %v6362
      %v6380 = vpack.c.bf16 %v6363, %v6363
      %v6381 = vpack.c.bf16 %v6364, %v6364
      %v6383 = vsel %vm387, %v264, 0
      %v6386 = vsel %vm391, %v6374, 0
      %v6389 = vsel %vm391, %v6375, 0
      %v6392 = vsel %vm391, %v6376, 0
      %v6395 = vsel %vm391, %v6377, 0
      %v6398 = vsel %vm391, %v6378, 0
      %v6401 = vsel %vm391, %v6379, 0
      %v6404 = vsel %vm391, %v6380, 0
      %v6407 = vsel %vm391, %v6381, 0
      %6409 = vmatpush.bf16.msra.mxu0 0
      %6410 = vmatpush.bf16.msra.mxu0 0
      %6411 = vmatpush.bf16.msra.mxu0 0
      %6412 = vmatpush.bf16.msra.mxu0 0
      %6413 = vmatpush.bf16.msra.mxu0 0
      %6414 = vmatpush.bf16.msra.mxu0 0
      %6415 = vmatpush.bf16.msra.mxu0 0
      %6416 = vmatpush.bf16.msra.mxu0 %v6386
      %6417 = vmatmul.bf16.gmra.mxu0 %v6383
      %v6418 = vpop.f32.mrf.mxu0
      %v6419 = vadd.f32 0.0, %v6418
      %v6420 = vpop.f32.mrf.mxu0
      %6421 = vdwg.mxu0
      %6422 = vmatpush.bf16.msra.mxu0 0
      %6423 = vmatpush.bf16.msra.mxu0 0
      %6424 = vmatpush.bf16.msra.mxu0 0
      %6425 = vmatpush.bf16.msra.mxu0 0
      %6426 = vmatpush.bf16.msra.mxu0 0
      %6427 = vmatpush.bf16.msra.mxu0 0
      %6428 = vmatpush.bf16.msra.mxu0 0
      %6429 = vmatpush.bf16.msra.mxu0 %v6389
      %6430 = vmatmul.bf16.gmra.mxu0 %v6383
      %v6431 = vpop.f32.mrf.mxu0
      %v6432 = vadd.f32 0.0, %v6431
      %v6433 = vpop.f32.mrf.mxu0
      %6434 = vdwg.mxu0
      %6435 = vmatpush.bf16.msra.mxu0 0
      %6436 = vmatpush.bf16.msra.mxu0 0
      %6437 = vmatpush.bf16.msra.mxu0 0
      %6438 = vmatpush.bf16.msra.mxu0 0
      %6439 = vmatpush.bf16.msra.mxu0 0
      %6440 = vmatpush.bf16.msra.mxu0 0
      %6441 = vmatpush.bf16.msra.mxu0 0
      %6442 = vmatpush.bf16.msra.mxu0 %v6392
      %6443 = vmatmul.bf16.gmra.mxu0 %v6383
      %v6444 = vpop.f32.mrf.mxu0
      %v6445 = vadd.f32 0.0, %v6444
      %v6446 = vpop.f32.mrf.mxu0
      %6447 = vdwg.mxu0
      %6448 = vmatpush.bf16.msra.mxu0 0
      %6449 = vmatpush.bf16.msra.mxu0 0
      %6450 = vmatpush.bf16.msra.mxu0 0
      %6451 = vmatpush.bf16.msra.mxu0 0
      %6452 = vmatpush.bf16.msra.mxu0 0
      %6453 = vmatpush.bf16.msra.mxu0 0
      %6454 = vmatpush.bf16.msra.mxu0 0
      %6455 = vmatpush.bf16.msra.mxu0 %v6395
      %6456 = vmatmul.bf16.gmra.mxu0 %v6383
      %v6457 = vpop.f32.mrf.mxu0
      %v6458 = vadd.f32 0.0, %v6457
      %v6459 = vpop.f32.mrf.mxu0
      %6460 = vdwg.mxu0
      %6461 = vmatpush.bf16.msra.mxu0 0
      %6462 = vmatpush.bf16.msra.mxu0 0
      %6463 = vmatpush.bf16.msra.mxu0 0
      %6464 = vmatpush.bf16.msra.mxu0 0
      %6465 = vmatpush.bf16.msra.mxu0 0
      %6466 = vmatpush.bf16.msra.mxu0 0
      %6467 = vmatpush.bf16.msra.mxu0 0
      %6468 = vmatpush.bf16.msra.mxu0 %v6398
      %6469 = vmatmul.bf16.gmra.mxu0 %v6383
      %v6470 = vpop.f32.mrf.mxu0
      %v6471 = vadd.f32 0.0, %v6470
      %v6472 = vpop.f32.mrf.mxu0
      %6473 = vdwg.mxu0
      %6474 = vmatpush.bf16.msra.mxu0 0
      %6475 = vmatpush.bf16.msra.mxu0 0
      %6476 = vmatpush.bf16.msra.mxu0 0
      %6477 = vmatpush.bf16.msra.mxu0 0
      %6478 = vmatpush.bf16.msra.mxu0 0
      %6479 = vmatpush.bf16.msra.mxu0 0
      %6480 = vmatpush.bf16.msra.mxu0 0
      %6481 = vmatpush.bf16.msra.mxu0 %v6401
      %6482 = vmatmul.bf16.gmra.mxu0 %v6383
      %v6483 = vpop.f32.mrf.mxu0
      %v6484 = vadd.f32 0.0, %v6483
      %v6485 = vpop.f32.mrf.mxu0
      %6486 = vdwg.mxu0
      %6487 = vmatpush.bf16.msra.mxu0 0
      %6488 = vmatpush.bf16.msra.mxu0 0
      %6489 = vmatpush.bf16.msra.mxu0 0
      %6490 = vmatpush.bf16.msra.mxu0 0
      %6491 = vmatpush.bf16.msra.mxu0 0
      %6492 = vmatpush.bf16.msra.mxu0 0
      %6493 = vmatpush.bf16.msra.mxu0 0
      %6494 = vmatpush.bf16.msra.mxu0 %v6404
      %6495 = vmatmul.bf16.gmra.mxu0 %v6383
      %v6496 = vpop.f32.mrf.mxu0
      %v6497 = vadd.f32 0.0, %v6496
      %v6498 = vpop.f32.mrf.mxu0
      %6499 = vdwg.mxu0
      %6500 = vmatpush.bf16.msra.mxu0 0
      %6501 = vmatpush.bf16.msra.mxu0 0
      %6502 = vmatpush.bf16.msra.mxu0 0
      %6503 = vmatpush.bf16.msra.mxu0 0
      %6504 = vmatpush.bf16.msra.mxu0 0
      %6505 = vmatpush.bf16.msra.mxu0 0
      %6506 = vmatpush.bf16.msra.mxu0 0
      %6507 = vmatpush.bf16.msra.mxu0 %v6407
      %6508 = vmatmul.bf16.gmra.mxu0 %v6383
      %v6509 = vpop.f32.mrf.mxu0
      %v6510 = vadd.f32 0.0, %v6509
      %v6511 = vpop.f32.mrf.mxu0
      %6512 = vdwg.mxu0
      %v6513 = vadd.f32 %v6334, %v6419
      %v6514 = vadd.f32 %v6335, %v6432
      %v6515 = vadd.f32 %v6336, %v6445
      %v6516 = vadd.f32 %v6337, %v6458
      %v6517 = vadd.f32 %v6338, %v6471
      %v6518 = vadd.f32 %v6339, %v6484
      %v6519 = vadd.f32 %v6340, %v6497
      %v6520 = vadd.f32 %v6341, %v6510
      %6521 = vrot.lane.b32.xlu0 %v5268, 90
      %v6522 = vpop.permute.xlu0 %6521
      %6523 = vrot.lane.b32.xlu0 %v5269, 90
      %v6524 = vpop.permute.xlu0 %6523
      %6525 = vrot.lane.b32.xlu0 %v5270, 90
      %v6526 = vpop.permute.xlu0 %6525
      %6527 = vrot.lane.b32.xlu0 %v5271, 90
      %v6528 = vpop.permute.xlu0 %6527
      %6529 = vrot.lane.b32.xlu0 %v5272, 90
      %v6530 = vpop.permute.xlu0 %6529
      %6531 = vrot.lane.b32.xlu0 %v5273, 90
      %v6532 = vpop.permute.xlu0 %6531
      %6533 = vrot.lane.b32.xlu0 %v5274, 90
      %v6534 = vpop.permute.xlu0 %6533
      %6535 = vrot.lane.b32.xlu0 %v5275, 90
      %v6536 = vpop.permute.xlu0 %6535
      %v6537 = vsel %vm1567, %v6522, %v6524
      %v6538 = vsel %vm1567, %v6524, %v6526
      %v6539 = vsel %vm1567, %v6526, %v6528
      %v6540 = vsel %vm1567, %v6528, %v6530
      %v6541 = vsel %vm1567, %v6530, %v6532
      %v6542 = vsel %vm1567, %v6532, %v6534
      %v6543 = vsel %vm1567, %v6534, %v6536
      %v6552 = vsel %vm1567, 0.0, %v6522
      %v6553 = vpack.c.bf16 %v6552, %v6552
      %v6554 = vpack.c.bf16 %v6537, %v6537
      %v6555 = vpack.c.bf16 %v6538, %v6538
      %v6556 = vpack.c.bf16 %v6539, %v6539
      %v6557 = vpack.c.bf16 %v6540, %v6540
      %v6558 = vpack.c.bf16 %v6541, %v6541
      %v6559 = vpack.c.bf16 %v6542, %v6542
      %v6560 = vpack.c.bf16 %v6543, %v6543
      %v6562 = vsel %vm387, %v265, 0
      %v6565 = vsel %vm391, %v6553, 0
      %v6568 = vsel %vm391, %v6554, 0
      %v6571 = vsel %vm391, %v6555, 0
      %v6574 = vsel %vm391, %v6556, 0
      %v6577 = vsel %vm391, %v6557, 0
      %v6580 = vsel %vm391, %v6558, 0
      %v6583 = vsel %vm391, %v6559, 0
      %v6586 = vsel %vm391, %v6560, 0
      %6588 = vmatpush.bf16.msra.mxu0 0
      %6589 = vmatpush.bf16.msra.mxu0 0
      %6590 = vmatpush.bf16.msra.mxu0 0
      %6591 = vmatpush.bf16.msra.mxu0 0
      %6592 = vmatpush.bf16.msra.mxu0 0
      %6593 = vmatpush.bf16.msra.mxu0 0
      %6594 = vmatpush.bf16.msra.mxu0 0
      %6595 = vmatpush.bf16.msra.mxu0 %v6565
      %6596 = vmatmul.bf16.gmra.mxu0 %v6562
      %v6597 = vpop.f32.mrf.mxu0
      %v6598 = vadd.f32 0.0, %v6597
      %v6599 = vpop.f32.mrf.mxu0
      %6600 = vdwg.mxu0
      %6601 = vmatpush.bf16.msra.mxu0 0
      %6602 = vmatpush.bf16.msra.mxu0 0
      %6603 = vmatpush.bf16.msra.mxu0 0
      %6604 = vmatpush.bf16.msra.mxu0 0
      %6605 = vmatpush.bf16.msra.mxu0 0
      %6606 = vmatpush.bf16.msra.mxu0 0
      %6607 = vmatpush.bf16.msra.mxu0 0
      %6608 = vmatpush.bf16.msra.mxu0 %v6568
      %6609 = vmatmul.bf16.gmra.mxu0 %v6562
      %v6610 = vpop.f32.mrf.mxu0
      %v6611 = vadd.f32 0.0, %v6610
      %v6612 = vpop.f32.mrf.mxu0
      %6613 = vdwg.mxu0
      %6614 = vmatpush.bf16.msra.mxu0 0
      %6615 = vmatpush.bf16.msra.mxu0 0
      %6616 = vmatpush.bf16.msra.mxu0 0
      %6617 = vmatpush.bf16.msra.mxu0 0
      %6618 = vmatpush.bf16.msra.mxu0 0
      %6619 = vmatpush.bf16.msra.mxu0 0
      %6620 = vmatpush.bf16.msra.mxu0 0
      %6621 = vmatpush.bf16.msra.mxu0 %v6571
      %6622 = vmatmul.bf16.gmra.mxu0 %v6562
      %v6623 = vpop.f32.mrf.mxu0
      %v6624 = vadd.f32 0.0, %v6623
      %v6625 = vpop.f32.mrf.mxu0
      %6626 = vdwg.mxu0
      %6627 = vmatpush.bf16.msra.mxu0 0
      %6628 = vmatpush.bf16.msra.mxu0 0
      %6629 = vmatpush.bf16.msra.mxu0 0
      %6630 = vmatpush.bf16.msra.mxu0 0
      %6631 = vmatpush.bf16.msra.mxu0 0
      %6632 = vmatpush.bf16.msra.mxu0 0
      %6633 = vmatpush.bf16.msra.mxu0 0
      %6634 = vmatpush.bf16.msra.mxu0 %v6574
      %6635 = vmatmul.bf16.gmra.mxu0 %v6562
      %v6636 = vpop.f32.mrf.mxu0
      %v6637 = vadd.f32 0.0, %v6636
      %v6638 = vpop.f32.mrf.mxu0
      %6639 = vdwg.mxu0
      %6640 = vmatpush.bf16.msra.mxu0 0
      %6641 = vmatpush.bf16.msra.mxu0 0
      %6642 = vmatpush.bf16.msra.mxu0 0
      %6643 = vmatpush.bf16.msra.mxu0 0
      %6644 = vmatpush.bf16.msra.mxu0 0
      %6645 = vmatpush.bf16.msra.mxu0 0
      %6646 = vmatpush.bf16.msra.mxu0 0
      %6647 = vmatpush.bf16.msra.mxu0 %v6577
      %6648 = vmatmul.bf16.gmra.mxu0 %v6562
      %v6649 = vpop.f32.mrf.mxu0
      %v6650 = vadd.f32 0.0, %v6649
      %v6651 = vpop.f32.mrf.mxu0
      %6652 = vdwg.mxu0
      %6653 = vmatpush.bf16.msra.mxu0 0
      %6654 = vmatpush.bf16.msra.mxu0 0
      %6655 = vmatpush.bf16.msra.mxu0 0
      %6656 = vmatpush.bf16.msra.mxu0 0
      %6657 = vmatpush.bf16.msra.mxu0 0
      %6658 = vmatpush.bf16.msra.mxu0 0
      %6659 = vmatpush.bf16.msra.mxu0 0
      %6660 = vmatpush.bf16.msra.mxu0 %v6580
      %6661 = vmatmul.bf16.gmra.mxu0 %v6562
      %v6662 = vpop.f32.mrf.mxu0
      %v6663 = vadd.f32 0.0, %v6662
      %v6664 = vpop.f32.mrf.mxu0
      %6665 = vdwg.mxu0
      %6666 = vmatpush.bf16.msra.mxu0 0
      %6667 = vmatpush.bf16.msra.mxu0 0
      %6668 = vmatpush.bf16.msra.mxu0 0
      %6669 = vmatpush.bf16.msra.mxu0 0
      %6670 = vmatpush.bf16.msra.mxu0 0
      %6671 = vmatpush.bf16.msra.mxu0 0
      %6672 = vmatpush.bf16.msra.mxu0 0
      %6673 = vmatpush.bf16.msra.mxu0 %v6583
      %6674 = vmatmul.bf16.gmra.mxu0 %v6562
      %v6675 = vpop.f32.mrf.mxu0
      %v6676 = vadd.f32 0.0, %v6675
      %v6677 = vpop.f32.mrf.mxu0
      %6678 = vdwg.mxu0
      %6679 = vmatpush.bf16.msra.mxu0 0
      %6680 = vmatpush.bf16.msra.mxu0 0
      %6681 = vmatpush.bf16.msra.mxu0 0
      %6682 = vmatpush.bf16.msra.mxu0 0
      %6683 = vmatpush.bf16.msra.mxu0 0
      %6684 = vmatpush.bf16.msra.mxu0 0
      %6685 = vmatpush.bf16.msra.mxu0 0
      %6686 = vmatpush.bf16.msra.mxu0 %v6586
      %6687 = vmatmul.bf16.gmra.mxu0 %v6562
      %v6688 = vpop.f32.mrf.mxu0
      %v6689 = vadd.f32 0.0, %v6688
      %v6690 = vpop.f32.mrf.mxu0
      %6691 = vdwg.mxu0
      %v6692 = vadd.f32 %v6513, %v6598
      %v6693 = vadd.f32 %v6514, %v6611
      %v6694 = vadd.f32 %v6515, %v6624
      %v6695 = vadd.f32 %v6516, %v6637
      %v6696 = vadd.f32 %v6517, %v6650
      %v6697 = vadd.f32 %v6518, %v6663
      %v6698 = vadd.f32 %v6519, %v6676
      %v6699 = vadd.f32 %v6520, %v6689
      %6700 = vrot.lane.b32.xlu0 %v5268, 89
      %v6701 = vpop.permute.xlu0 %6700
      %6702 = vrot.lane.b32.xlu0 %v5269, 89
      %v6703 = vpop.permute.xlu0 %6702
      %6704 = vrot.lane.b32.xlu0 %v5270, 89
      %v6705 = vpop.permute.xlu0 %6704
      %6706 = vrot.lane.b32.xlu0 %v5271, 89
      %v6707 = vpop.permute.xlu0 %6706
      %6708 = vrot.lane.b32.xlu0 %v5272, 89
      %v6709 = vpop.permute.xlu0 %6708
      %6710 = vrot.lane.b32.xlu0 %v5273, 89
      %v6711 = vpop.permute.xlu0 %6710
      %6712 = vrot.lane.b32.xlu0 %v5274, 89
      %v6713 = vpop.permute.xlu0 %6712
      %6714 = vrot.lane.b32.xlu0 %v5275, 89
      %v6715 = vpop.permute.xlu0 %6714
      %v6716 = vsel %vm1747, %v6701, %v6703
      %v6717 = vsel %vm1747, %v6703, %v6705
      %v6718 = vsel %vm1747, %v6705, %v6707
      %v6719 = vsel %vm1747, %v6707, %v6709
      %v6720 = vsel %vm1747, %v6709, %v6711
      %v6721 = vsel %vm1747, %v6711, %v6713
      %v6722 = vsel %vm1747, %v6713, %v6715
      %v6731 = vsel %vm1747, 0.0, %v6701
      %v6732 = vpack.c.bf16 %v6731, %v6731
      %v6733 = vpack.c.bf16 %v6716, %v6716
      %v6734 = vpack.c.bf16 %v6717, %v6717
      %v6735 = vpack.c.bf16 %v6718, %v6718
      %v6736 = vpack.c.bf16 %v6719, %v6719
      %v6737 = vpack.c.bf16 %v6720, %v6720
      %v6738 = vpack.c.bf16 %v6721, %v6721
      %v6739 = vpack.c.bf16 %v6722, %v6722
      %v6741 = vsel %vm387, %v266, 0
      %v6744 = vsel %vm391, %v6732, 0
      %v6747 = vsel %vm391, %v6733, 0
      %v6750 = vsel %vm391, %v6734, 0
      %v6753 = vsel %vm391, %v6735, 0
      %v6756 = vsel %vm391, %v6736, 0
      %v6759 = vsel %vm391, %v6737, 0
      %v6762 = vsel %vm391, %v6738, 0
      %v6765 = vsel %vm391, %v6739, 0
      %6767 = vmatpush.bf16.msra.mxu0 0
      %6768 = vmatpush.bf16.msra.mxu0 0
      %6769 = vmatpush.bf16.msra.mxu0 0
      %6770 = vmatpush.bf16.msra.mxu0 0
      %6771 = vmatpush.bf16.msra.mxu0 0
      %6772 = vmatpush.bf16.msra.mxu0 0
      %6773 = vmatpush.bf16.msra.mxu0 0
      %6774 = vmatpush.bf16.msra.mxu0 %v6744
      %6775 = vmatmul.bf16.gmra.mxu0 %v6741
      %v6776 = vpop.f32.mrf.mxu0
      %v6777 = vadd.f32 0.0, %v6776
      %v6778 = vpop.f32.mrf.mxu0
      %6779 = vdwg.mxu0
      %6780 = vmatpush.bf16.msra.mxu0 0
      %6781 = vmatpush.bf16.msra.mxu0 0
      %6782 = vmatpush.bf16.msra.mxu0 0
      %6783 = vmatpush.bf16.msra.mxu0 0
      %6784 = vmatpush.bf16.msra.mxu0 0
      %6785 = vmatpush.bf16.msra.mxu0 0
      %6786 = vmatpush.bf16.msra.mxu0 0
      %6787 = vmatpush.bf16.msra.mxu0 %v6747
      %6788 = vmatmul.bf16.gmra.mxu0 %v6741
      %v6789 = vpop.f32.mrf.mxu0
      %v6790 = vadd.f32 0.0, %v6789
      %v6791 = vpop.f32.mrf.mxu0
      %6792 = vdwg.mxu0
      %6793 = vmatpush.bf16.msra.mxu0 0
      %6794 = vmatpush.bf16.msra.mxu0 0
      %6795 = vmatpush.bf16.msra.mxu0 0
      %6796 = vmatpush.bf16.msra.mxu0 0
      %6797 = vmatpush.bf16.msra.mxu0 0
      %6798 = vmatpush.bf16.msra.mxu0 0
      %6799 = vmatpush.bf16.msra.mxu0 0
      %6800 = vmatpush.bf16.msra.mxu0 %v6750
      %6801 = vmatmul.bf16.gmra.mxu0 %v6741
      %v6802 = vpop.f32.mrf.mxu0
      %v6803 = vadd.f32 0.0, %v6802
      %v6804 = vpop.f32.mrf.mxu0
      %6805 = vdwg.mxu0
      %6806 = vmatpush.bf16.msra.mxu0 0
      %6807 = vmatpush.bf16.msra.mxu0 0
      %6808 = vmatpush.bf16.msra.mxu0 0
      %6809 = vmatpush.bf16.msra.mxu0 0
      %6810 = vmatpush.bf16.msra.mxu0 0
      %6811 = vmatpush.bf16.msra.mxu0 0
      %6812 = vmatpush.bf16.msra.mxu0 0
      %6813 = vmatpush.bf16.msra.mxu0 %v6753
      %6814 = vmatmul.bf16.gmra.mxu0 %v6741
      %v6815 = vpop.f32.mrf.mxu0
      %v6816 = vadd.f32 0.0, %v6815
      %v6817 = vpop.f32.mrf.mxu0
      %6818 = vdwg.mxu0
      %6819 = vmatpush.bf16.msra.mxu0 0
      %6820 = vmatpush.bf16.msra.mxu0 0
      %6821 = vmatpush.bf16.msra.mxu0 0
      %6822 = vmatpush.bf16.msra.mxu0 0
      %6823 = vmatpush.bf16.msra.mxu0 0
      %6824 = vmatpush.bf16.msra.mxu0 0
      %6825 = vmatpush.bf16.msra.mxu0 0
      %6826 = vmatpush.bf16.msra.mxu0 %v6756
      %6827 = vmatmul.bf16.gmra.mxu0 %v6741
      %v6828 = vpop.f32.mrf.mxu0
      %v6829 = vadd.f32 0.0, %v6828
      %v6830 = vpop.f32.mrf.mxu0
      %6831 = vdwg.mxu0
      %6832 = vmatpush.bf16.msra.mxu0 0
      %6833 = vmatpush.bf16.msra.mxu0 0
      %6834 = vmatpush.bf16.msra.mxu0 0
      %6835 = vmatpush.bf16.msra.mxu0 0
      %6836 = vmatpush.bf16.msra.mxu0 0
      %6837 = vmatpush.bf16.msra.mxu0 0
      %6838 = vmatpush.bf16.msra.mxu0 0
      %6839 = vmatpush.bf16.msra.mxu0 %v6759
      %6840 = vmatmul.bf16.gmra.mxu0 %v6741
      %v6841 = vpop.f32.mrf.mxu0
      %v6842 = vadd.f32 0.0, %v6841
      %v6843 = vpop.f32.mrf.mxu0
      %6844 = vdwg.mxu0
      %6845 = vmatpush.bf16.msra.mxu0 0
      %6846 = vmatpush.bf16.msra.mxu0 0
      %6847 = vmatpush.bf16.msra.mxu0 0
      %6848 = vmatpush.bf16.msra.mxu0 0
      %6849 = vmatpush.bf16.msra.mxu0 0
      %6850 = vmatpush.bf16.msra.mxu0 0
      %6851 = vmatpush.bf16.msra.mxu0 0
      %6852 = vmatpush.bf16.msra.mxu0 %v6762
      %6853 = vmatmul.bf16.gmra.mxu0 %v6741
      %v6854 = vpop.f32.mrf.mxu0
      %v6855 = vadd.f32 0.0, %v6854
      %v6856 = vpop.f32.mrf.mxu0
      %6857 = vdwg.mxu0
      %6858 = vmatpush.bf16.msra.mxu0 0
      %6859 = vmatpush.bf16.msra.mxu0 0
      %6860 = vmatpush.bf16.msra.mxu0 0
      %6861 = vmatpush.bf16.msra.mxu0 0
      %6862 = vmatpush.bf16.msra.mxu0 0
      %6863 = vmatpush.bf16.msra.mxu0 0
      %6864 = vmatpush.bf16.msra.mxu0 0
      %6865 = vmatpush.bf16.msra.mxu0 %v6765
      %6866 = vmatmul.bf16.gmra.mxu0 %v6741
      %v6867 = vpop.f32.mrf.mxu0
      %v6868 = vadd.f32 0.0, %v6867
      %v6869 = vpop.f32.mrf.mxu0
      %6870 = vdwg.mxu0
      %v6871 = vadd.f32 %v6692, %v6777
      %v6872 = vadd.f32 %v6693, %v6790
      %v6873 = vadd.f32 %v6694, %v6803
      %v6874 = vadd.f32 %v6695, %v6816
      %v6875 = vadd.f32 %v6696, %v6829
      %v6876 = vadd.f32 %v6697, %v6842
      %v6877 = vadd.f32 %v6698, %v6855
      %v6878 = vadd.f32 %v6699, %v6868
      %6879 = vrot.lane.b32.xlu0 %v5268, 11
      %v6880 = vpop.permute.xlu0 %6879
      %6881 = vrot.lane.b32.xlu0 %v5269, 11
      %v6882 = vpop.permute.xlu0 %6881
      %6883 = vrot.lane.b32.xlu0 %v5270, 11
      %v6884 = vpop.permute.xlu0 %6883
      %6885 = vrot.lane.b32.xlu0 %v5271, 11
      %v6886 = vpop.permute.xlu0 %6885
      %6887 = vrot.lane.b32.xlu0 %v5272, 11
      %v6888 = vpop.permute.xlu0 %6887
      %6889 = vrot.lane.b32.xlu0 %v5273, 11
      %v6890 = vpop.permute.xlu0 %6889
      %6891 = vrot.lane.b32.xlu0 %v5274, 11
      %v6892 = vpop.permute.xlu0 %6891
      %6893 = vrot.lane.b32.xlu0 %v5275, 11
      %v6894 = vpop.permute.xlu0 %6893
      %v6895 = vsel %vm1927, %v6880, %v6882
      %v6896 = vsel %vm1927, %v6882, %v6884
      %v6897 = vsel %vm1927, %v6884, %v6886
      %v6898 = vsel %vm1927, %v6886, %v6888
      %v6899 = vsel %vm1927, %v6888, %v6890
      %v6900 = vsel %vm1927, %v6890, %v6892
      %v6901 = vsel %vm1927, %v6892, %v6894
      %v6910 = vsel %vm1927, 0.0, %v6880
      %v6911 = vpack.c.bf16 %v6910, %v6910
      %v6912 = vpack.c.bf16 %v6895, %v6895
      %v6913 = vpack.c.bf16 %v6896, %v6896
      %v6914 = vpack.c.bf16 %v6897, %v6897
      %v6915 = vpack.c.bf16 %v6898, %v6898
      %v6916 = vpack.c.bf16 %v6899, %v6899
      %v6917 = vpack.c.bf16 %v6900, %v6900
      %v6918 = vpack.c.bf16 %v6901, %v6901
      %v6920 = vsel %vm387, %v267, 0
      %v6923 = vsel %vm391, %v6911, 0
      %v6926 = vsel %vm391, %v6912, 0
      %v6929 = vsel %vm391, %v6913, 0
      %v6932 = vsel %vm391, %v6914, 0
      %v6935 = vsel %vm391, %v6915, 0
      %v6938 = vsel %vm391, %v6916, 0
      %v6941 = vsel %vm391, %v6917, 0
      %v6944 = vsel %vm391, %v6918, 0
      %6946 = vmatpush.bf16.msra.mxu0 0
      %6947 = vmatpush.bf16.msra.mxu0 0
      %6948 = vmatpush.bf16.msra.mxu0 0
      %6949 = vmatpush.bf16.msra.mxu0 0
      %6950 = vmatpush.bf16.msra.mxu0 0
      %6951 = vmatpush.bf16.msra.mxu0 0
      %6952 = vmatpush.bf16.msra.mxu0 0
      %6953 = vmatpush.bf16.msra.mxu0 %v6923
      %6954 = vmatmul.bf16.gmra.mxu0 %v6920
      %v6955 = vpop.f32.mrf.mxu0
      %v6956 = vadd.f32 0.0, %v6955
      %v6957 = vpop.f32.mrf.mxu0
      %6958 = vdwg.mxu0
      %6959 = vmatpush.bf16.msra.mxu0 0
      %6960 = vmatpush.bf16.msra.mxu0 0
      %6961 = vmatpush.bf16.msra.mxu0 0
      %6962 = vmatpush.bf16.msra.mxu0 0
      %6963 = vmatpush.bf16.msra.mxu0 0
      %6964 = vmatpush.bf16.msra.mxu0 0
      %6965 = vmatpush.bf16.msra.mxu0 0
      %6966 = vmatpush.bf16.msra.mxu0 %v6926
      %6967 = vmatmul.bf16.gmra.mxu0 %v6920
      %v6968 = vpop.f32.mrf.mxu0
      %v6969 = vadd.f32 0.0, %v6968
      %v6970 = vpop.f32.mrf.mxu0
      %6971 = vdwg.mxu0
      %6972 = vmatpush.bf16.msra.mxu0 0
      %6973 = vmatpush.bf16.msra.mxu0 0
      %6974 = vmatpush.bf16.msra.mxu0 0
      %6975 = vmatpush.bf16.msra.mxu0 0
      %6976 = vmatpush.bf16.msra.mxu0 0
      %6977 = vmatpush.bf16.msra.mxu0 0
      %6978 = vmatpush.bf16.msra.mxu0 0
      %6979 = vmatpush.bf16.msra.mxu0 %v6929
      %6980 = vmatmul.bf16.gmra.mxu0 %v6920
      %v6981 = vpop.f32.mrf.mxu0
      %v6982 = vadd.f32 0.0, %v6981
      %v6983 = vpop.f32.mrf.mxu0
      %6984 = vdwg.mxu0
      %6985 = vmatpush.bf16.msra.mxu0 0
      %6986 = vmatpush.bf16.msra.mxu0 0
      %6987 = vmatpush.bf16.msra.mxu0 0
      %6988 = vmatpush.bf16.msra.mxu0 0
      %6989 = vmatpush.bf16.msra.mxu0 0
      %6990 = vmatpush.bf16.msra.mxu0 0
      %6991 = vmatpush.bf16.msra.mxu0 0
      %6992 = vmatpush.bf16.msra.mxu0 %v6932
      %6993 = vmatmul.bf16.gmra.mxu0 %v6920
      %v6994 = vpop.f32.mrf.mxu0
      %v6995 = vadd.f32 0.0, %v6994
      %v6996 = vpop.f32.mrf.mxu0
      %6997 = vdwg.mxu0
      %6998 = vmatpush.bf16.msra.mxu0 0
      %6999 = vmatpush.bf16.msra.mxu0 0
      %7000 = vmatpush.bf16.msra.mxu0 0
      %7001 = vmatpush.bf16.msra.mxu0 0
      %7002 = vmatpush.bf16.msra.mxu0 0
      %7003 = vmatpush.bf16.msra.mxu0 0
      %7004 = vmatpush.bf16.msra.mxu0 0
      %7005 = vmatpush.bf16.msra.mxu0 %v6935
      %7006 = vmatmul.bf16.gmra.mxu0 %v6920
      %v7007 = vpop.f32.mrf.mxu0
      %v7008 = vadd.f32 0.0, %v7007
      %v7009 = vpop.f32.mrf.mxu0
      %7010 = vdwg.mxu0
      %7011 = vmatpush.bf16.msra.mxu0 0
      %7012 = vmatpush.bf16.msra.mxu0 0
      %7013 = vmatpush.bf16.msra.mxu0 0
      %7014 = vmatpush.bf16.msra.mxu0 0
      %7015 = vmatpush.bf16.msra.mxu0 0
      %7016 = vmatpush.bf16.msra.mxu0 0
      %7017 = vmatpush.bf16.msra.mxu0 0
      %7018 = vmatpush.bf16.msra.mxu0 %v6938
      %7019 = vmatmul.bf16.gmra.mxu0 %v6920
      %v7020 = vpop.f32.mrf.mxu0
      %v7021 = vadd.f32 0.0, %v7020
      %v7022 = vpop.f32.mrf.mxu0
      %7023 = vdwg.mxu0
      %7024 = vmatpush.bf16.msra.mxu0 0
      %7025 = vmatpush.bf16.msra.mxu0 0
      %7026 = vmatpush.bf16.msra.mxu0 0
      %7027 = vmatpush.bf16.msra.mxu0 0
      %7028 = vmatpush.bf16.msra.mxu0 0
      %7029 = vmatpush.bf16.msra.mxu0 0
      %7030 = vmatpush.bf16.msra.mxu0 0
      %7031 = vmatpush.bf16.msra.mxu0 %v6941
      %7032 = vmatmul.bf16.gmra.mxu0 %v6920
      %v7033 = vpop.f32.mrf.mxu0
      %v7034 = vadd.f32 0.0, %v7033
      %v7035 = vpop.f32.mrf.mxu0
      %7036 = vdwg.mxu0
      %7037 = vmatpush.bf16.msra.mxu0 0
      %7038 = vmatpush.bf16.msra.mxu0 0
      %7039 = vmatpush.bf16.msra.mxu0 0
      %7040 = vmatpush.bf16.msra.mxu0 0
      %7041 = vmatpush.bf16.msra.mxu0 0
      %7042 = vmatpush.bf16.msra.mxu0 0
      %7043 = vmatpush.bf16.msra.mxu0 0
      %7044 = vmatpush.bf16.msra.mxu0 %v6944
      %7045 = vmatmul.bf16.gmra.mxu0 %v6920
      %v7046 = vpop.f32.mrf.mxu0
      %v7047 = vadd.f32 0.0, %v7046
      %v7048 = vpop.f32.mrf.mxu0
      %7049 = vdwg.mxu0
      %v7050 = vadd.f32 %v6871, %v6956
      %v7051 = vadd.f32 %v6872, %v6969
      %v7052 = vadd.f32 %v6873, %v6982
      %v7053 = vadd.f32 %v6874, %v6995
      %v7054 = vadd.f32 %v6875, %v7008
      %v7055 = vadd.f32 %v6876, %v7021
      %v7056 = vadd.f32 %v6877, %v7034
      %v7057 = vadd.f32 %v6878, %v7047
      %7058 = vrot.lane.b32.xlu0 %v5268, 10
      %v7059 = vpop.permute.xlu0 %7058
      %7060 = vrot.lane.b32.xlu0 %v5269, 10
      %v7061 = vpop.permute.xlu0 %7060
      %7062 = vrot.lane.b32.xlu0 %v5270, 10
      %v7063 = vpop.permute.xlu0 %7062
      %7064 = vrot.lane.b32.xlu0 %v5271, 10
      %v7065 = vpop.permute.xlu0 %7064
      %7066 = vrot.lane.b32.xlu0 %v5272, 10
      %v7067 = vpop.permute.xlu0 %7066
      %7068 = vrot.lane.b32.xlu0 %v5273, 10
      %v7069 = vpop.permute.xlu0 %7068
      %7070 = vrot.lane.b32.xlu0 %v5274, 10
      %v7071 = vpop.permute.xlu0 %7070
      %7072 = vrot.lane.b32.xlu0 %v5275, 10
      %v7073 = vpop.permute.xlu0 %7072
      %v7074 = vsel %vm2107, %v7059, %v7061
      %v7075 = vsel %vm2107, %v7061, %v7063
      %v7076 = vsel %vm2107, %v7063, %v7065
      %v7077 = vsel %vm2107, %v7065, %v7067
      %v7078 = vsel %vm2107, %v7067, %v7069
      %v7079 = vsel %vm2107, %v7069, %v7071
      %v7080 = vsel %vm2107, %v7071, %v7073
      %v7089 = vsel %vm2107, 0.0, %v7059
      %v7090 = vpack.c.bf16 %v7089, %v7089
      %v7091 = vpack.c.bf16 %v7074, %v7074
      %v7092 = vpack.c.bf16 %v7075, %v7075
      %v7093 = vpack.c.bf16 %v7076, %v7076
      %v7094 = vpack.c.bf16 %v7077, %v7077
      %v7095 = vpack.c.bf16 %v7078, %v7078
      %v7096 = vpack.c.bf16 %v7079, %v7079
      %v7097 = vpack.c.bf16 %v7080, %v7080
      %v7099 = vsel %vm387, %v268, 0
      %v7102 = vsel %vm391, %v7090, 0
      %v7105 = vsel %vm391, %v7091, 0
      %v7108 = vsel %vm391, %v7092, 0
      %v7111 = vsel %vm391, %v7093, 0
      %v7114 = vsel %vm391, %v7094, 0
      %v7117 = vsel %vm391, %v7095, 0
      %v7120 = vsel %vm391, %v7096, 0
      %v7123 = vsel %vm391, %v7097, 0
      %7125 = vmatpush.bf16.msra.mxu0 0
      %7126 = vmatpush.bf16.msra.mxu0 0
      %7127 = vmatpush.bf16.msra.mxu0 0
      %7128 = vmatpush.bf16.msra.mxu0 0
      %7129 = vmatpush.bf16.msra.mxu0 0
      %7130 = vmatpush.bf16.msra.mxu0 0
      %7131 = vmatpush.bf16.msra.mxu0 0
      %7132 = vmatpush.bf16.msra.mxu0 %v7102
      %7133 = vmatmul.bf16.gmra.mxu0 %v7099
      %v7134 = vpop.f32.mrf.mxu0
      %v7135 = vadd.f32 0.0, %v7134
      %v7136 = vpop.f32.mrf.mxu0
      %7137 = vdwg.mxu0
      %7138 = vmatpush.bf16.msra.mxu0 0
      %7139 = vmatpush.bf16.msra.mxu0 0
      %7140 = vmatpush.bf16.msra.mxu0 0
      %7141 = vmatpush.bf16.msra.mxu0 0
      %7142 = vmatpush.bf16.msra.mxu0 0
      %7143 = vmatpush.bf16.msra.mxu0 0
      %7144 = vmatpush.bf16.msra.mxu0 0
      %7145 = vmatpush.bf16.msra.mxu0 %v7105
      %7146 = vmatmul.bf16.gmra.mxu0 %v7099
      %v7147 = vpop.f32.mrf.mxu0
      %v7148 = vadd.f32 0.0, %v7147
      %v7149 = vpop.f32.mrf.mxu0
      %7150 = vdwg.mxu0
      %7151 = vmatpush.bf16.msra.mxu0 0
      %7152 = vmatpush.bf16.msra.mxu0 0
      %7153 = vmatpush.bf16.msra.mxu0 0
      %7154 = vmatpush.bf16.msra.mxu0 0
      %7155 = vmatpush.bf16.msra.mxu0 0
      %7156 = vmatpush.bf16.msra.mxu0 0
      %7157 = vmatpush.bf16.msra.mxu0 0
      %7158 = vmatpush.bf16.msra.mxu0 %v7108
      %7159 = vmatmul.bf16.gmra.mxu0 %v7099
      %v7160 = vpop.f32.mrf.mxu0
      %v7161 = vadd.f32 0.0, %v7160
      %v7162 = vpop.f32.mrf.mxu0
      %7163 = vdwg.mxu0
      %7164 = vmatpush.bf16.msra.mxu0 0
      %7165 = vmatpush.bf16.msra.mxu0 0
      %7166 = vmatpush.bf16.msra.mxu0 0
      %7167 = vmatpush.bf16.msra.mxu0 0
      %7168 = vmatpush.bf16.msra.mxu0 0
      %7169 = vmatpush.bf16.msra.mxu0 0
      %7170 = vmatpush.bf16.msra.mxu0 0
      %7171 = vmatpush.bf16.msra.mxu0 %v7111
      %7172 = vmatmul.bf16.gmra.mxu0 %v7099
      %v7173 = vpop.f32.mrf.mxu0
      %v7174 = vadd.f32 0.0, %v7173
      %v7175 = vpop.f32.mrf.mxu0
      %7176 = vdwg.mxu0
      %7177 = vmatpush.bf16.msra.mxu0 0
      %7178 = vmatpush.bf16.msra.mxu0 0
      %7179 = vmatpush.bf16.msra.mxu0 0
      %7180 = vmatpush.bf16.msra.mxu0 0
      %7181 = vmatpush.bf16.msra.mxu0 0
      %7182 = vmatpush.bf16.msra.mxu0 0
      %7183 = vmatpush.bf16.msra.mxu0 0
      %7184 = vmatpush.bf16.msra.mxu0 %v7114
      %7185 = vmatmul.bf16.gmra.mxu0 %v7099
      %v7186 = vpop.f32.mrf.mxu0
      %v7187 = vadd.f32 0.0, %v7186
      %v7188 = vpop.f32.mrf.mxu0
      %7189 = vdwg.mxu0
      %7190 = vmatpush.bf16.msra.mxu0 0
      %7191 = vmatpush.bf16.msra.mxu0 0
      %7192 = vmatpush.bf16.msra.mxu0 0
      %7193 = vmatpush.bf16.msra.mxu0 0
      %7194 = vmatpush.bf16.msra.mxu0 0
      %7195 = vmatpush.bf16.msra.mxu0 0
      %7196 = vmatpush.bf16.msra.mxu0 0
      %7197 = vmatpush.bf16.msra.mxu0 %v7117
      %7198 = vmatmul.bf16.gmra.mxu0 %v7099
      %v7199 = vpop.f32.mrf.mxu0
      %v7200 = vadd.f32 0.0, %v7199
      %v7201 = vpop.f32.mrf.mxu0
      %7202 = vdwg.mxu0
      %7203 = vmatpush.bf16.msra.mxu0 0
      %7204 = vmatpush.bf16.msra.mxu0 0
      %7205 = vmatpush.bf16.msra.mxu0 0
      %7206 = vmatpush.bf16.msra.mxu0 0
      %7207 = vmatpush.bf16.msra.mxu0 0
      %7208 = vmatpush.bf16.msra.mxu0 0
      %7209 = vmatpush.bf16.msra.mxu0 0
      %7210 = vmatpush.bf16.msra.mxu0 %v7120
      %7211 = vmatmul.bf16.gmra.mxu0 %v7099
      %v7212 = vpop.f32.mrf.mxu0
      %v7213 = vadd.f32 0.0, %v7212
      %v7214 = vpop.f32.mrf.mxu0
      %7215 = vdwg.mxu0
      %7216 = vmatpush.bf16.msra.mxu0 0
      %7217 = vmatpush.bf16.msra.mxu0 0
      %7218 = vmatpush.bf16.msra.mxu0 0
      %7219 = vmatpush.bf16.msra.mxu0 0
      %7220 = vmatpush.bf16.msra.mxu0 0
      %7221 = vmatpush.bf16.msra.mxu0 0
      %7222 = vmatpush.bf16.msra.mxu0 0
      %7223 = vmatpush.bf16.msra.mxu0 %v7123
      %7224 = vmatmul.bf16.gmra.mxu0 %v7099
      %v7225 = vpop.f32.mrf.mxu0
      %v7226 = vadd.f32 0.0, %v7225
      %v7227 = vpop.f32.mrf.mxu0
      %7228 = vdwg.mxu0
      %v7229 = vadd.f32 %v7050, %v7135
      %v7230 = vadd.f32 %v7051, %v7148
      %v7231 = vadd.f32 %v7052, %v7161
      %v7232 = vadd.f32 %v7053, %v7174
      %v7233 = vadd.f32 %v7054, %v7187
      %v7234 = vadd.f32 %v7055, %v7200
      %v7235 = vadd.f32 %v7056, %v7213
      %v7236 = vadd.f32 %v7057, %v7226
      %7237 = vrot.lane.b32.xlu0 %v5268, 9
      %v7238 = vpop.permute.xlu0 %7237
      %7239 = vrot.lane.b32.xlu0 %v5269, 9
      %v7240 = vpop.permute.xlu0 %7239
      %7241 = vrot.lane.b32.xlu0 %v5270, 9
      %v7242 = vpop.permute.xlu0 %7241
      %7243 = vrot.lane.b32.xlu0 %v5271, 9
      %v7244 = vpop.permute.xlu0 %7243
      %7245 = vrot.lane.b32.xlu0 %v5272, 9
      %v7246 = vpop.permute.xlu0 %7245
      %7247 = vrot.lane.b32.xlu0 %v5273, 9
      %v7248 = vpop.permute.xlu0 %7247
      %7249 = vrot.lane.b32.xlu0 %v5274, 9
      %v7250 = vpop.permute.xlu0 %7249
      %7251 = vrot.lane.b32.xlu0 %v5275, 9
      %v7252 = vpop.permute.xlu0 %7251
      %v7253 = vsel %vm2287, %v7238, %v7240
      %v7254 = vsel %vm2287, %v7240, %v7242
      %v7255 = vsel %vm2287, %v7242, %v7244
      %v7256 = vsel %vm2287, %v7244, %v7246
      %v7257 = vsel %vm2287, %v7246, %v7248
      %v7258 = vsel %vm2287, %v7248, %v7250
      %v7259 = vsel %vm2287, %v7250, %v7252
      %v7268 = vsel %vm2287, 0.0, %v7238
      %v7269 = vpack.c.bf16 %v7268, %v7268
      %v7270 = vpack.c.bf16 %v7253, %v7253
      %v7271 = vpack.c.bf16 %v7254, %v7254
      %v7272 = vpack.c.bf16 %v7255, %v7255
      %v7273 = vpack.c.bf16 %v7256, %v7256
      %v7274 = vpack.c.bf16 %v7257, %v7257
      %v7275 = vpack.c.bf16 %v7258, %v7258
      %v7276 = vpack.c.bf16 %v7259, %v7259
      %v7278 = vsel %vm387, %v269, 0
      %v7281 = vsel %vm391, %v7269, 0
      %v7284 = vsel %vm391, %v7270, 0
      %v7287 = vsel %vm391, %v7271, 0
      %v7290 = vsel %vm391, %v7272, 0
      %v7293 = vsel %vm391, %v7273, 0
      %v7296 = vsel %vm391, %v7274, 0
      %v7299 = vsel %vm391, %v7275, 0
      %v7302 = vsel %vm391, %v7276, 0
      %7304 = vmatpush.bf16.msra.mxu0 0
      %7305 = vmatpush.bf16.msra.mxu0 0
      %7306 = vmatpush.bf16.msra.mxu0 0
      %7307 = vmatpush.bf16.msra.mxu0 0
      %7308 = vmatpush.bf16.msra.mxu0 0
      %7309 = vmatpush.bf16.msra.mxu0 0
      %7310 = vmatpush.bf16.msra.mxu0 0
      %7311 = vmatpush.bf16.msra.mxu0 %v7281
      %7312 = vmatmul.bf16.gmra.mxu0 %v7278
      %v7313 = vpop.f32.mrf.mxu0
      %v7314 = vadd.f32 0.0, %v7313
      %v7315 = vpop.f32.mrf.mxu0
      %7316 = vdwg.mxu0
      %7317 = vmatpush.bf16.msra.mxu0 0
      %7318 = vmatpush.bf16.msra.mxu0 0
      %7319 = vmatpush.bf16.msra.mxu0 0
      %7320 = vmatpush.bf16.msra.mxu0 0
      %7321 = vmatpush.bf16.msra.mxu0 0
      %7322 = vmatpush.bf16.msra.mxu0 0
      %7323 = vmatpush.bf16.msra.mxu0 0
      %7324 = vmatpush.bf16.msra.mxu0 %v7284
      %7325 = vmatmul.bf16.gmra.mxu0 %v7278
      %v7326 = vpop.f32.mrf.mxu0
      %v7327 = vadd.f32 0.0, %v7326
      %v7328 = vpop.f32.mrf.mxu0
      %7329 = vdwg.mxu0
      %7330 = vmatpush.bf16.msra.mxu0 0
      %7331 = vmatpush.bf16.msra.mxu0 0
      %7332 = vmatpush.bf16.msra.mxu0 0
      %7333 = vmatpush.bf16.msra.mxu0 0
      %7334 = vmatpush.bf16.msra.mxu0 0
      %7335 = vmatpush.bf16.msra.mxu0 0
      %7336 = vmatpush.bf16.msra.mxu0 0
      %7337 = vmatpush.bf16.msra.mxu0 %v7287
      %7338 = vmatmul.bf16.gmra.mxu0 %v7278
      %v7339 = vpop.f32.mrf.mxu0
      %v7340 = vadd.f32 0.0, %v7339
      %v7341 = vpop.f32.mrf.mxu0
      %7342 = vdwg.mxu0
      %7343 = vmatpush.bf16.msra.mxu0 0
      %7344 = vmatpush.bf16.msra.mxu0 0
      %7345 = vmatpush.bf16.msra.mxu0 0
      %7346 = vmatpush.bf16.msra.mxu0 0
      %7347 = vmatpush.bf16.msra.mxu0 0
      %7348 = vmatpush.bf16.msra.mxu0 0
      %7349 = vmatpush.bf16.msra.mxu0 0
      %7350 = vmatpush.bf16.msra.mxu0 %v7290
      %7351 = vmatmul.bf16.gmra.mxu0 %v7278
      %v7352 = vpop.f32.mrf.mxu0
      %v7353 = vadd.f32 0.0, %v7352
      %v7354 = vpop.f32.mrf.mxu0
      %7355 = vdwg.mxu0
      %7356 = vmatpush.bf16.msra.mxu0 0
      %7357 = vmatpush.bf16.msra.mxu0 0
      %7358 = vmatpush.bf16.msra.mxu0 0
      %7359 = vmatpush.bf16.msra.mxu0 0
      %7360 = vmatpush.bf16.msra.mxu0 0
      %7361 = vmatpush.bf16.msra.mxu0 0
      %7362 = vmatpush.bf16.msra.mxu0 0
      %7363 = vmatpush.bf16.msra.mxu0 %v7293
      %7364 = vmatmul.bf16.gmra.mxu0 %v7278
      %v7365 = vpop.f32.mrf.mxu0
      %v7366 = vadd.f32 0.0, %v7365
      %v7367 = vpop.f32.mrf.mxu0
      %7368 = vdwg.mxu0
      %7369 = vmatpush.bf16.msra.mxu0 0
      %7370 = vmatpush.bf16.msra.mxu0 0
      %7371 = vmatpush.bf16.msra.mxu0 0
      %7372 = vmatpush.bf16.msra.mxu0 0
      %7373 = vmatpush.bf16.msra.mxu0 0
      %7374 = vmatpush.bf16.msra.mxu0 0
      %7375 = vmatpush.bf16.msra.mxu0 0
      %7376 = vmatpush.bf16.msra.mxu0 %v7296
      %7377 = vmatmul.bf16.gmra.mxu0 %v7278
      %v7378 = vpop.f32.mrf.mxu0
      %v7379 = vadd.f32 0.0, %v7378
      %v7380 = vpop.f32.mrf.mxu0
      %7381 = vdwg.mxu0
      %7382 = vmatpush.bf16.msra.mxu0 0
      %7383 = vmatpush.bf16.msra.mxu0 0
      %7384 = vmatpush.bf16.msra.mxu0 0
      %7385 = vmatpush.bf16.msra.mxu0 0
      %7386 = vmatpush.bf16.msra.mxu0 0
      %7387 = vmatpush.bf16.msra.mxu0 0
      %7388 = vmatpush.bf16.msra.mxu0 0
      %7389 = vmatpush.bf16.msra.mxu0 %v7299
      %7390 = vmatmul.bf16.gmra.mxu0 %v7278
      %v7391 = vpop.f32.mrf.mxu0
      %v7392 = vadd.f32 0.0, %v7391
      %v7393 = vpop.f32.mrf.mxu0
      %7394 = vdwg.mxu0
      %7395 = vmatpush.bf16.msra.mxu0 0
      %7396 = vmatpush.bf16.msra.mxu0 0
      %7397 = vmatpush.bf16.msra.mxu0 0
      %7398 = vmatpush.bf16.msra.mxu0 0
      %7399 = vmatpush.bf16.msra.mxu0 0
      %7400 = vmatpush.bf16.msra.mxu0 0
      %7401 = vmatpush.bf16.msra.mxu0 0
      %7402 = vmatpush.bf16.msra.mxu0 %v7302
      %7403 = vmatmul.bf16.gmra.mxu0 %v7278
      %v7404 = vpop.f32.mrf.mxu0
      %v7405 = vadd.f32 0.0, %v7404
      %v7406 = vpop.f32.mrf.mxu0
      %7407 = vdwg.mxu0
      %v7408 = vadd.f32 %v7229, %v7314
      %v7409 = vadd.f32 %v7230, %v7327
      %v7410 = vadd.f32 %v7231, %v7340
      %v7411 = vadd.f32 %v7232, %v7353
      %v7412 = vadd.f32 %v7233, %v7366
      %v7413 = vadd.f32 %v7234, %v7379
      %v7414 = vadd.f32 %v7235, %v7392
      %v7415 = vadd.f32 %v7236, %v7405
      %7416 = vrot.lane.b32.xlu0 %v5268, 1
      %v7417 = vpop.permute.xlu0 %7416
      %7418 = vrot.lane.b32.xlu0 %v5269, 1
      %v7419 = vpop.permute.xlu0 %7418
      %7420 = vrot.lane.b32.xlu0 %v5270, 1
      %v7421 = vpop.permute.xlu0 %7420
      %7422 = vrot.lane.b32.xlu0 %v5271, 1
      %v7423 = vpop.permute.xlu0 %7422
      %7424 = vrot.lane.b32.xlu0 %v5272, 1
      %v7425 = vpop.permute.xlu0 %7424
      %7426 = vrot.lane.b32.xlu0 %v5273, 1
      %v7427 = vpop.permute.xlu0 %7426
      %7428 = vrot.lane.b32.xlu0 %v5274, 1
      %v7429 = vpop.permute.xlu0 %7428
      %7430 = vrot.lane.b32.xlu0 %v5275, 1
      %v7431 = vpop.permute.xlu0 %7430
      %v7432 = vsel %vm2467, %v7417, %v7419
      %v7433 = vsel %vm2467, %v7419, %v7421
      %v7434 = vsel %vm2467, %v7421, %v7423
      %v7435 = vsel %vm2467, %v7423, %v7425
      %v7436 = vsel %vm2467, %v7425, %v7427
      %v7437 = vsel %vm2467, %v7427, %v7429
      %v7438 = vsel %vm2467, %v7429, %v7431
      %v7447 = vsel %vm2467, 0.0, %v7417
      %v7448 = vpack.c.bf16 %v7447, %v7447
      %v7449 = vpack.c.bf16 %v7432, %v7432
      %v7450 = vpack.c.bf16 %v7433, %v7433
      %v7451 = vpack.c.bf16 %v7434, %v7434
      %v7452 = vpack.c.bf16 %v7435, %v7435
      %v7453 = vpack.c.bf16 %v7436, %v7436
      %v7454 = vpack.c.bf16 %v7437, %v7437
      %v7455 = vpack.c.bf16 %v7438, %v7438
      %v7457 = vsel %vm387, %v270, 0
      %v7460 = vsel %vm391, %v7448, 0
      %v7463 = vsel %vm391, %v7449, 0
      %v7466 = vsel %vm391, %v7450, 0
      %v7469 = vsel %vm391, %v7451, 0
      %v7472 = vsel %vm391, %v7452, 0
      %v7475 = vsel %vm391, %v7453, 0
      %v7478 = vsel %vm391, %v7454, 0
      %v7481 = vsel %vm391, %v7455, 0
      %7483 = vmatpush.bf16.msra.mxu0 0
      %7484 = vmatpush.bf16.msra.mxu0 0
      %7485 = vmatpush.bf16.msra.mxu0 0
      %7486 = vmatpush.bf16.msra.mxu0 0
      %7487 = vmatpush.bf16.msra.mxu0 0
      %7488 = vmatpush.bf16.msra.mxu0 0
      %7489 = vmatpush.bf16.msra.mxu0 0
      %7490 = vmatpush.bf16.msra.mxu0 %v7460
      %7491 = vmatmul.bf16.gmra.mxu0 %v7457
      %v7492 = vpop.f32.mrf.mxu0
      %v7493 = vadd.f32 0.0, %v7492
      %v7494 = vpop.f32.mrf.mxu0
      %7495 = vdwg.mxu0
      %7496 = vmatpush.bf16.msra.mxu0 0
      %7497 = vmatpush.bf16.msra.mxu0 0
      %7498 = vmatpush.bf16.msra.mxu0 0
      %7499 = vmatpush.bf16.msra.mxu0 0
      %7500 = vmatpush.bf16.msra.mxu0 0
      %7501 = vmatpush.bf16.msra.mxu0 0
      %7502 = vmatpush.bf16.msra.mxu0 0
      %7503 = vmatpush.bf16.msra.mxu0 %v7463
      %7504 = vmatmul.bf16.gmra.mxu0 %v7457
      %v7505 = vpop.f32.mrf.mxu0
      %v7506 = vadd.f32 0.0, %v7505
      %v7507 = vpop.f32.mrf.mxu0
      %7508 = vdwg.mxu0
      %7509 = vmatpush.bf16.msra.mxu0 0
      %7510 = vmatpush.bf16.msra.mxu0 0
      %7511 = vmatpush.bf16.msra.mxu0 0
      %7512 = vmatpush.bf16.msra.mxu0 0
      %7513 = vmatpush.bf16.msra.mxu0 0
      %7514 = vmatpush.bf16.msra.mxu0 0
      %7515 = vmatpush.bf16.msra.mxu0 0
      %7516 = vmatpush.bf16.msra.mxu0 %v7466
      %7517 = vmatmul.bf16.gmra.mxu0 %v7457
      %v7518 = vpop.f32.mrf.mxu0
      %v7519 = vadd.f32 0.0, %v7518
      %v7520 = vpop.f32.mrf.mxu0
      %7521 = vdwg.mxu0
      %7522 = vmatpush.bf16.msra.mxu0 0
      %7523 = vmatpush.bf16.msra.mxu0 0
      %7524 = vmatpush.bf16.msra.mxu0 0
      %7525 = vmatpush.bf16.msra.mxu0 0
      %7526 = vmatpush.bf16.msra.mxu0 0
      %7527 = vmatpush.bf16.msra.mxu0 0
      %7528 = vmatpush.bf16.msra.mxu0 0
      %7529 = vmatpush.bf16.msra.mxu0 %v7469
      %7530 = vmatmul.bf16.gmra.mxu0 %v7457
      %v7531 = vpop.f32.mrf.mxu0
      %v7532 = vadd.f32 0.0, %v7531
      %v7533 = vpop.f32.mrf.mxu0
      %7534 = vdwg.mxu0
      %7535 = vmatpush.bf16.msra.mxu0 0
      %7536 = vmatpush.bf16.msra.mxu0 0
      %7537 = vmatpush.bf16.msra.mxu0 0
      %7538 = vmatpush.bf16.msra.mxu0 0
      %7539 = vmatpush.bf16.msra.mxu0 0
      %7540 = vmatpush.bf16.msra.mxu0 0
      %7541 = vmatpush.bf16.msra.mxu0 0
      %7542 = vmatpush.bf16.msra.mxu0 %v7472
      %7543 = vmatmul.bf16.gmra.mxu0 %v7457
      %v7544 = vpop.f32.mrf.mxu0
      %v7545 = vadd.f32 0.0, %v7544
      %v7546 = vpop.f32.mrf.mxu0
      %7547 = vdwg.mxu0
      %7548 = vmatpush.bf16.msra.mxu0 0
      %7549 = vmatpush.bf16.msra.mxu0 0
      %7550 = vmatpush.bf16.msra.mxu0 0
      %7551 = vmatpush.bf16.msra.mxu0 0
      %7552 = vmatpush.bf16.msra.mxu0 0
      %7553 = vmatpush.bf16.msra.mxu0 0
      %7554 = vmatpush.bf16.msra.mxu0 0
      %7555 = vmatpush.bf16.msra.mxu0 %v7475
      %7556 = vmatmul.bf16.gmra.mxu0 %v7457
      %v7557 = vpop.f32.mrf.mxu0
      %v7558 = vadd.f32 0.0, %v7557
      %v7559 = vpop.f32.mrf.mxu0
      %7560 = vdwg.mxu0
      %7561 = vmatpush.bf16.msra.mxu0 0
      %7562 = vmatpush.bf16.msra.mxu0 0
      %7563 = vmatpush.bf16.msra.mxu0 0
      %7564 = vmatpush.bf16.msra.mxu0 0
      %7565 = vmatpush.bf16.msra.mxu0 0
      %7566 = vmatpush.bf16.msra.mxu0 0
      %7567 = vmatpush.bf16.msra.mxu0 0
      %7568 = vmatpush.bf16.msra.mxu0 %v7478
      %7569 = vmatmul.bf16.gmra.mxu0 %v7457
      %v7570 = vpop.f32.mrf.mxu0
      %v7571 = vadd.f32 0.0, %v7570
      %v7572 = vpop.f32.mrf.mxu0
      %7573 = vdwg.mxu0
      %7574 = vmatpush.bf16.msra.mxu0 0
      %7575 = vmatpush.bf16.msra.mxu0 0
      %7576 = vmatpush.bf16.msra.mxu0 0
      %7577 = vmatpush.bf16.msra.mxu0 0
      %7578 = vmatpush.bf16.msra.mxu0 0
      %7579 = vmatpush.bf16.msra.mxu0 0
      %7580 = vmatpush.bf16.msra.mxu0 0
      %7581 = vmatpush.bf16.msra.mxu0 %v7481
      %7582 = vmatmul.bf16.gmra.mxu0 %v7457
      %v7583 = vpop.f32.mrf.mxu0
      %v7584 = vadd.f32 0.0, %v7583
      %v7585 = vpop.f32.mrf.mxu0
      %7586 = vdwg.mxu0
      %v7587 = vadd.f32 %v7408, %v7493
      %v7588 = vadd.f32 %v7409, %v7506
      %v7589 = vadd.f32 %v7410, %v7519
      %v7590 = vadd.f32 %v7411, %v7532
      %v7591 = vadd.f32 %v7412, %v7545
      %v7592 = vadd.f32 %v7413, %v7558
      %v7593 = vadd.f32 %v7414, %v7571
      %v7594 = vadd.f32 %v7415, %v7584
      %v7595 = vpack.c.bf16 %v5268, %v5268
      %v7596 = vpack.c.bf16 %v5269, %v5269
      %v7597 = vpack.c.bf16 %v5270, %v5270
      %v7598 = vpack.c.bf16 %v5271, %v5271
      %v7599 = vpack.c.bf16 %v5272, %v5272
      %v7600 = vpack.c.bf16 %v5273, %v5273
      %v7601 = vpack.c.bf16 %v5274, %v5274
      %v7602 = vpack.c.bf16 %v5275, %v5275
      %v7604 = vsel %vm387, %v271, 0
      %v7607 = vsel %vm391, %v7595, 0
      %v7610 = vsel %vm391, %v7596, 0
      %v7613 = vsel %vm391, %v7597, 0
      %v7616 = vsel %vm391, %v7598, 0
      %v7619 = vsel %vm391, %v7599, 0
      %v7622 = vsel %vm391, %v7600, 0
      %v7625 = vsel %vm391, %v7601, 0
      %v7628 = vsel %vm391, %v7602, 0
      %7630 = vmatpush.bf16.msra.mxu0 0
      %7631 = vmatpush.bf16.msra.mxu0 0
      %7632 = vmatpush.bf16.msra.mxu0 0
      %7633 = vmatpush.bf16.msra.mxu0 0
      %7634 = vmatpush.bf16.msra.mxu0 0
      %7635 = vmatpush.bf16.msra.mxu0 0
      %7636 = vmatpush.bf16.msra.mxu0 0
      %7637 = vmatpush.bf16.msra.mxu0 %v7607
      %7638 = vmatmul.bf16.gmra.mxu0 %v7604
      %v7639 = vpop.f32.mrf.mxu0
      %v7640 = vadd.f32 0.0, %v7639
      %v7641 = vpop.f32.mrf.mxu0
      %7642 = vdwg.mxu0
      %7643 = vmatpush.bf16.msra.mxu0 0
      %7644 = vmatpush.bf16.msra.mxu0 0
      %7645 = vmatpush.bf16.msra.mxu0 0
      %7646 = vmatpush.bf16.msra.mxu0 0
      %7647 = vmatpush.bf16.msra.mxu0 0
      %7648 = vmatpush.bf16.msra.mxu0 0
      %7649 = vmatpush.bf16.msra.mxu0 0
      %7650 = vmatpush.bf16.msra.mxu0 %v7610
      %7651 = vmatmul.bf16.gmra.mxu0 %v7604
      %v7652 = vpop.f32.mrf.mxu0
      %v7653 = vadd.f32 0.0, %v7652
      %v7654 = vpop.f32.mrf.mxu0
      %7655 = vdwg.mxu0
      %7656 = vmatpush.bf16.msra.mxu0 0
      %7657 = vmatpush.bf16.msra.mxu0 0
      %7658 = vmatpush.bf16.msra.mxu0 0
      %7659 = vmatpush.bf16.msra.mxu0 0
      %7660 = vmatpush.bf16.msra.mxu0 0
      %7661 = vmatpush.bf16.msra.mxu0 0
      %7662 = vmatpush.bf16.msra.mxu0 0
      %7663 = vmatpush.bf16.msra.mxu0 %v7613
      %7664 = vmatmul.bf16.gmra.mxu0 %v7604
      %v7665 = vpop.f32.mrf.mxu0
      %v7666 = vadd.f32 0.0, %v7665
      %v7667 = vpop.f32.mrf.mxu0
      %7668 = vdwg.mxu0
      %7669 = vmatpush.bf16.msra.mxu0 0
      %7670 = vmatpush.bf16.msra.mxu0 0
      %7671 = vmatpush.bf16.msra.mxu0 0
      %7672 = vmatpush.bf16.msra.mxu0 0
      %7673 = vmatpush.bf16.msra.mxu0 0
      %7674 = vmatpush.bf16.msra.mxu0 0
      %7675 = vmatpush.bf16.msra.mxu0 0
      %7676 = vmatpush.bf16.msra.mxu0 %v7616
      %7677 = vmatmul.bf16.gmra.mxu0 %v7604
      %v7678 = vpop.f32.mrf.mxu0
      %v7679 = vadd.f32 0.0, %v7678
      %v7680 = vpop.f32.mrf.mxu0
      %7681 = vdwg.mxu0
      %7682 = vmatpush.bf16.msra.mxu0 0
      %7683 = vmatpush.bf16.msra.mxu0 0
      %7684 = vmatpush.bf16.msra.mxu0 0
      %7685 = vmatpush.bf16.msra.mxu0 0
      %7686 = vmatpush.bf16.msra.mxu0 0
      %7687 = vmatpush.bf16.msra.mxu0 0
      %7688 = vmatpush.bf16.msra.mxu0 0
      %7689 = vmatpush.bf16.msra.mxu0 %v7619
      %7690 = vmatmul.bf16.gmra.mxu0 %v7604
      %v7691 = vpop.f32.mrf.mxu0
      %v7692 = vadd.f32 0.0, %v7691
      %v7693 = vpop.f32.mrf.mxu0
      %7694 = vdwg.mxu0
      %7695 = vmatpush.bf16.msra.mxu0 0
      %7696 = vmatpush.bf16.msra.mxu0 0
      %7697 = vmatpush.bf16.msra.mxu0 0
      %7698 = vmatpush.bf16.msra.mxu0 0
      %7699 = vmatpush.bf16.msra.mxu0 0
      %7700 = vmatpush.bf16.msra.mxu0 0
      %7701 = vmatpush.bf16.msra.mxu0 0
      %7702 = vmatpush.bf16.msra.mxu0 %v7622
      %7703 = vmatmul.bf16.gmra.mxu0 %v7604
      %v7704 = vpop.f32.mrf.mxu0
      %v7705 = vadd.f32 0.0, %v7704
      %v7706 = vpop.f32.mrf.mxu0
      %7707 = vdwg.mxu0
      %7708 = vmatpush.bf16.msra.mxu0 0
      %7709 = vmatpush.bf16.msra.mxu0 0
      %7710 = vmatpush.bf16.msra.mxu0 0
      %7711 = vmatpush.bf16.msra.mxu0 0
      %7712 = vmatpush.bf16.msra.mxu0 0
      %7713 = vmatpush.bf16.msra.mxu0 0
      %7714 = vmatpush.bf16.msra.mxu0 0
      %7715 = vmatpush.bf16.msra.mxu0 %v7625
      %7716 = vmatmul.bf16.gmra.mxu0 %v7604
      %v7717 = vpop.f32.mrf.mxu0
      %v7718 = vadd.f32 0.0, %v7717
      %v7719 = vpop.f32.mrf.mxu0
      %7720 = vdwg.mxu0
      %7721 = vmatpush.bf16.msra.mxu0 0
      %7722 = vmatpush.bf16.msra.mxu0 0
      %7723 = vmatpush.bf16.msra.mxu0 0
      %7724 = vmatpush.bf16.msra.mxu0 0
      %7725 = vmatpush.bf16.msra.mxu0 0
      %7726 = vmatpush.bf16.msra.mxu0 0
      %7727 = vmatpush.bf16.msra.mxu0 0
      %7728 = vmatpush.bf16.msra.mxu0 %v7628
      %7729 = vmatmul.bf16.gmra.mxu0 %v7604
      %v7730 = vpop.f32.mrf.mxu0
      %v7731 = vadd.f32 0.0, %v7730
      %v7732 = vpop.f32.mrf.mxu0
      %7733 = vdwg.mxu0
      %v7734 = vadd.f32 %v7587, %v7640
      %v7735 = vadd.f32 %v7588, %v7653
      %v7736 = vadd.f32 %v7589, %v7666
      %v7737 = vadd.f32 %v7590, %v7679
      %v7738 = vadd.f32 %v7591, %v7692
      %v7739 = vadd.f32 %v7592, %v7705
      %v7740 = vadd.f32 %v7593, %v7718
      %v7741 = vadd.f32 %v7594, %v7731
      %7742 = vrot.lane.b32.xlu0 %v5268, 127
      %v7743 = vpop.permute.xlu0 %7742
      %7744 = vrot.lane.b32.xlu0 %v5269, 127
      %v7745 = vpop.permute.xlu0 %7744
      %7746 = vrot.lane.b32.xlu0 %v5270, 127
      %v7747 = vpop.permute.xlu0 %7746
      %7748 = vrot.lane.b32.xlu0 %v5271, 127
      %v7749 = vpop.permute.xlu0 %7748
      %7750 = vrot.lane.b32.xlu0 %v5272, 127
      %v7751 = vpop.permute.xlu0 %7750
      %7752 = vrot.lane.b32.xlu0 %v5273, 127
      %v7753 = vpop.permute.xlu0 %7752
      %7754 = vrot.lane.b32.xlu0 %v5274, 127
      %v7755 = vpop.permute.xlu0 %7754
      %7756 = vrot.lane.b32.xlu0 %v5275, 127
      %v7757 = vpop.permute.xlu0 %7756
      %v7758 = vsel %vm2806, %v7743, %v7745
      %v7759 = vsel %vm2806, %v7745, %v7747
      %v7760 = vsel %vm2806, %v7747, %v7749
      %v7761 = vsel %vm2806, %v7749, %v7751
      %v7762 = vsel %vm2806, %v7751, %v7753
      %v7763 = vsel %vm2806, %v7753, %v7755
      %v7764 = vsel %vm2806, %v7755, %v7757
      %v7773 = vsel %vm2806, %v7757, 0.0
      %v7774 = vpack.c.bf16 %v7758, %v7758
      %v7775 = vpack.c.bf16 %v7759, %v7759
      %v7776 = vpack.c.bf16 %v7760, %v7760
      %v7777 = vpack.c.bf16 %v7761, %v7761
      %v7778 = vpack.c.bf16 %v7762, %v7762
      %v7779 = vpack.c.bf16 %v7763, %v7763
      %v7780 = vpack.c.bf16 %v7764, %v7764
      %v7781 = vpack.c.bf16 %v7773, %v7773
      %v7783 = vsel %vm387, %v272, 0
      %v7786 = vsel %vm391, %v7774, 0
      %v7789 = vsel %vm391, %v7775, 0
      %v7792 = vsel %vm391, %v7776, 0
      %v7795 = vsel %vm391, %v7777, 0
      %v7798 = vsel %vm391, %v7778, 0
      %v7801 = vsel %vm391, %v7779, 0
      %v7804 = vsel %vm391, %v7780, 0
      %v7807 = vsel %vm391, %v7781, 0
      %7809 = vmatpush.bf16.msra.mxu0 0
      %7810 = vmatpush.bf16.msra.mxu0 0
      %7811 = vmatpush.bf16.msra.mxu0 0
      %7812 = vmatpush.bf16.msra.mxu0 0
      %7813 = vmatpush.bf16.msra.mxu0 0
      %7814 = vmatpush.bf16.msra.mxu0 0
      %7815 = vmatpush.bf16.msra.mxu0 0
      %7816 = vmatpush.bf16.msra.mxu0 %v7786
      %7817 = vmatmul.bf16.gmra.mxu0 %v7783
      %v7818 = vpop.f32.mrf.mxu0
      %v7819 = vadd.f32 0.0, %v7818
      %v7820 = vpop.f32.mrf.mxu0
      %7821 = vdwg.mxu0
      %7822 = vmatpush.bf16.msra.mxu0 0
      %7823 = vmatpush.bf16.msra.mxu0 0
      %7824 = vmatpush.bf16.msra.mxu0 0
      %7825 = vmatpush.bf16.msra.mxu0 0
      %7826 = vmatpush.bf16.msra.mxu0 0
      %7827 = vmatpush.bf16.msra.mxu0 0
      %7828 = vmatpush.bf16.msra.mxu0 0
      %7829 = vmatpush.bf16.msra.mxu0 %v7789
      %7830 = vmatmul.bf16.gmra.mxu0 %v7783
      %v7831 = vpop.f32.mrf.mxu0
      %v7832 = vadd.f32 0.0, %v7831
      %v7833 = vpop.f32.mrf.mxu0
      %7834 = vdwg.mxu0
      %7835 = vmatpush.bf16.msra.mxu0 0
      %7836 = vmatpush.bf16.msra.mxu0 0
      %7837 = vmatpush.bf16.msra.mxu0 0
      %7838 = vmatpush.bf16.msra.mxu0 0
      %7839 = vmatpush.bf16.msra.mxu0 0
      %7840 = vmatpush.bf16.msra.mxu0 0
      %7841 = vmatpush.bf16.msra.mxu0 0
      %7842 = vmatpush.bf16.msra.mxu0 %v7792
      %7843 = vmatmul.bf16.gmra.mxu0 %v7783
      %v7844 = vpop.f32.mrf.mxu0
      %v7845 = vadd.f32 0.0, %v7844
      %v7846 = vpop.f32.mrf.mxu0
      %7847 = vdwg.mxu0
      %7848 = vmatpush.bf16.msra.mxu0 0
      %7849 = vmatpush.bf16.msra.mxu0 0
      %7850 = vmatpush.bf16.msra.mxu0 0
      %7851 = vmatpush.bf16.msra.mxu0 0
      %7852 = vmatpush.bf16.msra.mxu0 0
      %7853 = vmatpush.bf16.msra.mxu0 0
      %7854 = vmatpush.bf16.msra.mxu0 0
      %7855 = vmatpush.bf16.msra.mxu0 %v7795
      %7856 = vmatmul.bf16.gmra.mxu0 %v7783
      %v7857 = vpop.f32.mrf.mxu0
      %v7858 = vadd.f32 0.0, %v7857
      %v7859 = vpop.f32.mrf.mxu0
      %7860 = vdwg.mxu0
      %7861 = vmatpush.bf16.msra.mxu0 0
      %7862 = vmatpush.bf16.msra.mxu0 0
      %7863 = vmatpush.bf16.msra.mxu0 0
      %7864 = vmatpush.bf16.msra.mxu0 0
      %7865 = vmatpush.bf16.msra.mxu0 0
      %7866 = vmatpush.bf16.msra.mxu0 0
      %7867 = vmatpush.bf16.msra.mxu0 0
      %7868 = vmatpush.bf16.msra.mxu0 %v7798
      %7869 = vmatmul.bf16.gmra.mxu0 %v7783
      %v7870 = vpop.f32.mrf.mxu0
      %v7871 = vadd.f32 0.0, %v7870
      %v7872 = vpop.f32.mrf.mxu0
      %7873 = vdwg.mxu0
      %7874 = vmatpush.bf16.msra.mxu0 0
      %7875 = vmatpush.bf16.msra.mxu0 0
      %7876 = vmatpush.bf16.msra.mxu0 0
      %7877 = vmatpush.bf16.msra.mxu0 0
      %7878 = vmatpush.bf16.msra.mxu0 0
      %7879 = vmatpush.bf16.msra.mxu0 0
      %7880 = vmatpush.bf16.msra.mxu0 0
      %7881 = vmatpush.bf16.msra.mxu0 %v7801
      %7882 = vmatmul.bf16.gmra.mxu0 %v7783
      %v7883 = vpop.f32.mrf.mxu0
      %v7884 = vadd.f32 0.0, %v7883
      %v7885 = vpop.f32.mrf.mxu0
      %7886 = vdwg.mxu0
      %7887 = vmatpush.bf16.msra.mxu0 0
      %7888 = vmatpush.bf16.msra.mxu0 0
      %7889 = vmatpush.bf16.msra.mxu0 0
      %7890 = vmatpush.bf16.msra.mxu0 0
      %7891 = vmatpush.bf16.msra.mxu0 0
      %7892 = vmatpush.bf16.msra.mxu0 0
      %7893 = vmatpush.bf16.msra.mxu0 0
      %7894 = vmatpush.bf16.msra.mxu0 %v7804
      %7895 = vmatmul.bf16.gmra.mxu0 %v7783
      %v7896 = vpop.f32.mrf.mxu0
      %v7897 = vadd.f32 0.0, %v7896
      %v7898 = vpop.f32.mrf.mxu0
      %7899 = vdwg.mxu0
      %7900 = vmatpush.bf16.msra.mxu0 0
      %7901 = vmatpush.bf16.msra.mxu0 0
      %7902 = vmatpush.bf16.msra.mxu0 0
      %7903 = vmatpush.bf16.msra.mxu0 0
      %7904 = vmatpush.bf16.msra.mxu0 0
      %7905 = vmatpush.bf16.msra.mxu0 0
      %7906 = vmatpush.bf16.msra.mxu0 0
      %7907 = vmatpush.bf16.msra.mxu0 %v7807
      %7908 = vmatmul.bf16.gmra.mxu0 %v7783
      %v7909 = vpop.f32.mrf.mxu0
      %v7910 = vadd.f32 0.0, %v7909
      %v7911 = vpop.f32.mrf.mxu0
      %7912 = vdwg.mxu0
      %v7913 = vadd.f32 %v7734, %v7819
      %v7914 = vadd.f32 %v7735, %v7832
      %v7915 = vadd.f32 %v7736, %v7845
      %v7916 = vadd.f32 %v7737, %v7858
      %v7917 = vadd.f32 %v7738, %v7871
      %v7918 = vadd.f32 %v7739, %v7884
      %v7919 = vadd.f32 %v7740, %v7897
      %v7920 = vadd.f32 %v7741, %v7910
      %7921 = vrot.lane.b32.xlu0 %v5268, 119
      %v7922 = vpop.permute.xlu0 %7921
      %7923 = vrot.lane.b32.xlu0 %v5269, 119
      %v7924 = vpop.permute.xlu0 %7923
      %7925 = vrot.lane.b32.xlu0 %v5270, 119
      %v7926 = vpop.permute.xlu0 %7925
      %7927 = vrot.lane.b32.xlu0 %v5271, 119
      %v7928 = vpop.permute.xlu0 %7927
      %7929 = vrot.lane.b32.xlu0 %v5272, 119
      %v7930 = vpop.permute.xlu0 %7929
      %7931 = vrot.lane.b32.xlu0 %v5273, 119
      %v7932 = vpop.permute.xlu0 %7931
      %7933 = vrot.lane.b32.xlu0 %v5274, 119
      %v7934 = vpop.permute.xlu0 %7933
      %7935 = vrot.lane.b32.xlu0 %v5275, 119
      %v7936 = vpop.permute.xlu0 %7935
      %v7937 = vsel %vm2986, %v7922, %v7924
      %v7938 = vsel %vm2986, %v7924, %v7926
      %v7939 = vsel %vm2986, %v7926, %v7928
      %v7940 = vsel %vm2986, %v7928, %v7930
      %v7941 = vsel %vm2986, %v7930, %v7932
      %v7942 = vsel %vm2986, %v7932, %v7934
      %v7943 = vsel %vm2986, %v7934, %v7936
      %v7952 = vsel %vm2986, %v7936, 0.0
      %v7953 = vpack.c.bf16 %v7937, %v7937
      %v7954 = vpack.c.bf16 %v7938, %v7938
      %v7955 = vpack.c.bf16 %v7939, %v7939
      %v7956 = vpack.c.bf16 %v7940, %v7940
      %v7957 = vpack.c.bf16 %v7941, %v7941
      %v7958 = vpack.c.bf16 %v7942, %v7942
      %v7959 = vpack.c.bf16 %v7943, %v7943
      %v7960 = vpack.c.bf16 %v7952, %v7952
      %v7962 = vsel %vm387, %v273, 0
      %v7965 = vsel %vm391, %v7953, 0
      %v7968 = vsel %vm391, %v7954, 0
      %v7971 = vsel %vm391, %v7955, 0
      %v7974 = vsel %vm391, %v7956, 0
      %v7977 = vsel %vm391, %v7957, 0
      %v7980 = vsel %vm391, %v7958, 0
      %v7983 = vsel %vm391, %v7959, 0
      %v7986 = vsel %vm391, %v7960, 0
      %7988 = vmatpush.bf16.msra.mxu0 0
      %7989 = vmatpush.bf16.msra.mxu0 0
      %7990 = vmatpush.bf16.msra.mxu0 0
      %7991 = vmatpush.bf16.msra.mxu0 0
      %7992 = vmatpush.bf16.msra.mxu0 0
      %7993 = vmatpush.bf16.msra.mxu0 0
      %7994 = vmatpush.bf16.msra.mxu0 0
      %7995 = vmatpush.bf16.msra.mxu0 %v7965
      %7996 = vmatmul.bf16.gmra.mxu0 %v7962
      %v7997 = vpop.f32.mrf.mxu0
      %v7998 = vadd.f32 0.0, %v7997
      %v7999 = vpop.f32.mrf.mxu0
      %8000 = vdwg.mxu0
      %8001 = vmatpush.bf16.msra.mxu0 0
      %8002 = vmatpush.bf16.msra.mxu0 0
      %8003 = vmatpush.bf16.msra.mxu0 0
      %8004 = vmatpush.bf16.msra.mxu0 0
      %8005 = vmatpush.bf16.msra.mxu0 0
      %8006 = vmatpush.bf16.msra.mxu0 0
      %8007 = vmatpush.bf16.msra.mxu0 0
      %8008 = vmatpush.bf16.msra.mxu0 %v7968
      %8009 = vmatmul.bf16.gmra.mxu0 %v7962
      %v8010 = vpop.f32.mrf.mxu0
      %v8011 = vadd.f32 0.0, %v8010
      %v8012 = vpop.f32.mrf.mxu0
      %8013 = vdwg.mxu0
      %8014 = vmatpush.bf16.msra.mxu0 0
      %8015 = vmatpush.bf16.msra.mxu0 0
      %8016 = vmatpush.bf16.msra.mxu0 0
      %8017 = vmatpush.bf16.msra.mxu0 0
      %8018 = vmatpush.bf16.msra.mxu0 0
      %8019 = vmatpush.bf16.msra.mxu0 0
      %8020 = vmatpush.bf16.msra.mxu0 0
      %8021 = vmatpush.bf16.msra.mxu0 %v7971
      %8022 = vmatmul.bf16.gmra.mxu0 %v7962
      %v8023 = vpop.f32.mrf.mxu0
      %v8024 = vadd.f32 0.0, %v8023
      %v8025 = vpop.f32.mrf.mxu0
      %8026 = vdwg.mxu0
      %8027 = vmatpush.bf16.msra.mxu0 0
      %8028 = vmatpush.bf16.msra.mxu0 0
      %8029 = vmatpush.bf16.msra.mxu0 0
      %8030 = vmatpush.bf16.msra.mxu0 0
      %8031 = vmatpush.bf16.msra.mxu0 0
      %8032 = vmatpush.bf16.msra.mxu0 0
      %8033 = vmatpush.bf16.msra.mxu0 0
      %8034 = vmatpush.bf16.msra.mxu0 %v7974
      %8035 = vmatmul.bf16.gmra.mxu0 %v7962
      %v8036 = vpop.f32.mrf.mxu0
      %v8037 = vadd.f32 0.0, %v8036
      %v8038 = vpop.f32.mrf.mxu0
      %8039 = vdwg.mxu0
      %8040 = vmatpush.bf16.msra.mxu0 0
      %8041 = vmatpush.bf16.msra.mxu0 0
      %8042 = vmatpush.bf16.msra.mxu0 0
      %8043 = vmatpush.bf16.msra.mxu0 0
      %8044 = vmatpush.bf16.msra.mxu0 0
      %8045 = vmatpush.bf16.msra.mxu0 0
      %8046 = vmatpush.bf16.msra.mxu0 0
      %8047 = vmatpush.bf16.msra.mxu0 %v7977
      %8048 = vmatmul.bf16.gmra.mxu0 %v7962
      %v8049 = vpop.f32.mrf.mxu0
      %v8050 = vadd.f32 0.0, %v8049
      %v8051 = vpop.f32.mrf.mxu0
      %8052 = vdwg.mxu0
      %8053 = vmatpush.bf16.msra.mxu0 0
      %8054 = vmatpush.bf16.msra.mxu0 0
      %8055 = vmatpush.bf16.msra.mxu0 0
      %8056 = vmatpush.bf16.msra.mxu0 0
      %8057 = vmatpush.bf16.msra.mxu0 0
      %8058 = vmatpush.bf16.msra.mxu0 0
      %8059 = vmatpush.bf16.msra.mxu0 0
      %8060 = vmatpush.bf16.msra.mxu0 %v7980
      %8061 = vmatmul.bf16.gmra.mxu0 %v7962
      %v8062 = vpop.f32.mrf.mxu0
      %v8063 = vadd.f32 0.0, %v8062
      %v8064 = vpop.f32.mrf.mxu0
      %8065 = vdwg.mxu0
      %8066 = vmatpush.bf16.msra.mxu0 0
      %8067 = vmatpush.bf16.msra.mxu0 0
      %8068 = vmatpush.bf16.msra.mxu0 0
      %8069 = vmatpush.bf16.msra.mxu0 0
      %8070 = vmatpush.bf16.msra.mxu0 0
      %8071 = vmatpush.bf16.msra.mxu0 0
      %8072 = vmatpush.bf16.msra.mxu0 0
      %8073 = vmatpush.bf16.msra.mxu0 %v7983
      %8074 = vmatmul.bf16.gmra.mxu0 %v7962
      %v8075 = vpop.f32.mrf.mxu0
      %v8076 = vadd.f32 0.0, %v8075
      %v8077 = vpop.f32.mrf.mxu0
      %8078 = vdwg.mxu0
      %8079 = vmatpush.bf16.msra.mxu0 0
      %8080 = vmatpush.bf16.msra.mxu0 0
      %8081 = vmatpush.bf16.msra.mxu0 0
      %8082 = vmatpush.bf16.msra.mxu0 0
      %8083 = vmatpush.bf16.msra.mxu0 0
      %8084 = vmatpush.bf16.msra.mxu0 0
      %8085 = vmatpush.bf16.msra.mxu0 0
      %8086 = vmatpush.bf16.msra.mxu0 %v7986
      %8087 = vmatmul.bf16.gmra.mxu0 %v7962
      %v8088 = vpop.f32.mrf.mxu0
      %v8089 = vadd.f32 0.0, %v8088
      %v8090 = vpop.f32.mrf.mxu0
      %8091 = vdwg.mxu0
      %v8092 = vadd.f32 %v7913, %v7998
      %v8093 = vadd.f32 %v7914, %v8011
      %v8094 = vadd.f32 %v7915, %v8024
      %v8095 = vadd.f32 %v7916, %v8037
      %v8096 = vadd.f32 %v7917, %v8050
      %v8097 = vadd.f32 %v7918, %v8063
      %v8098 = vadd.f32 %v7919, %v8076
      %v8099 = vadd.f32 %v7920, %v8089
      %8100 = vrot.lane.b32.xlu0 %v5268, 118
      %v8101 = vpop.permute.xlu0 %8100
      %8102 = vrot.lane.b32.xlu0 %v5269, 118
      %v8103 = vpop.permute.xlu0 %8102
      %8104 = vrot.lane.b32.xlu0 %v5270, 118
      %v8105 = vpop.permute.xlu0 %8104
      %8106 = vrot.lane.b32.xlu0 %v5271, 118
      %v8107 = vpop.permute.xlu0 %8106
      %8108 = vrot.lane.b32.xlu0 %v5272, 118
      %v8109 = vpop.permute.xlu0 %8108
      %8110 = vrot.lane.b32.xlu0 %v5273, 118
      %v8111 = vpop.permute.xlu0 %8110
      %8112 = vrot.lane.b32.xlu0 %v5274, 118
      %v8113 = vpop.permute.xlu0 %8112
      %8114 = vrot.lane.b32.xlu0 %v5275, 118
      %v8115 = vpop.permute.xlu0 %8114
      %v8116 = vsel %vm3166, %v8101, %v8103
      %v8117 = vsel %vm3166, %v8103, %v8105
      %v8118 = vsel %vm3166, %v8105, %v8107
      %v8119 = vsel %vm3166, %v8107, %v8109
      %v8120 = vsel %vm3166, %v8109, %v8111
      %v8121 = vsel %vm3166, %v8111, %v8113
      %v8122 = vsel %vm3166, %v8113, %v8115
      %v8131 = vsel %vm3166, %v8115, 0.0
      %v8132 = vpack.c.bf16 %v8116, %v8116
      %v8133 = vpack.c.bf16 %v8117, %v8117
      %v8134 = vpack.c.bf16 %v8118, %v8118
      %v8135 = vpack.c.bf16 %v8119, %v8119
      %v8136 = vpack.c.bf16 %v8120, %v8120
      %v8137 = vpack.c.bf16 %v8121, %v8121
      %v8138 = vpack.c.bf16 %v8122, %v8122
      %v8139 = vpack.c.bf16 %v8131, %v8131
      %v8141 = vsel %vm387, %v274, 0
      %v8144 = vsel %vm391, %v8132, 0
      %v8147 = vsel %vm391, %v8133, 0
      %v8150 = vsel %vm391, %v8134, 0
      %v8153 = vsel %vm391, %v8135, 0
      %v8156 = vsel %vm391, %v8136, 0
      %v8159 = vsel %vm391, %v8137, 0
      %v8162 = vsel %vm391, %v8138, 0
      %v8165 = vsel %vm391, %v8139, 0
      %8167 = vmatpush.bf16.msra.mxu0 0
      %8168 = vmatpush.bf16.msra.mxu0 0
      %8169 = vmatpush.bf16.msra.mxu0 0
      %8170 = vmatpush.bf16.msra.mxu0 0
      %8171 = vmatpush.bf16.msra.mxu0 0
      %8172 = vmatpush.bf16.msra.mxu0 0
      %8173 = vmatpush.bf16.msra.mxu0 0
      %8174 = vmatpush.bf16.msra.mxu0 %v8144
      %8175 = vmatmul.bf16.gmra.mxu0 %v8141
      %v8176 = vpop.f32.mrf.mxu0
      %v8177 = vadd.f32 0.0, %v8176
      %v8178 = vpop.f32.mrf.mxu0
      %8179 = vdwg.mxu0
      %8180 = vmatpush.bf16.msra.mxu0 0
      %8181 = vmatpush.bf16.msra.mxu0 0
      %8182 = vmatpush.bf16.msra.mxu0 0
      %8183 = vmatpush.bf16.msra.mxu0 0
      %8184 = vmatpush.bf16.msra.mxu0 0
      %8185 = vmatpush.bf16.msra.mxu0 0
      %8186 = vmatpush.bf16.msra.mxu0 0
      %8187 = vmatpush.bf16.msra.mxu0 %v8147
      %8188 = vmatmul.bf16.gmra.mxu0 %v8141
      %v8189 = vpop.f32.mrf.mxu0
      %v8190 = vadd.f32 0.0, %v8189
      %v8191 = vpop.f32.mrf.mxu0
      %8192 = vdwg.mxu0
      %8193 = vmatpush.bf16.msra.mxu0 0
      %8194 = vmatpush.bf16.msra.mxu0 0
      %8195 = vmatpush.bf16.msra.mxu0 0
      %8196 = vmatpush.bf16.msra.mxu0 0
      %8197 = vmatpush.bf16.msra.mxu0 0
      %8198 = vmatpush.bf16.msra.mxu0 0
      %8199 = vmatpush.bf16.msra.mxu0 0
      %8200 = vmatpush.bf16.msra.mxu0 %v8150
      %8201 = vmatmul.bf16.gmra.mxu0 %v8141
      %v8202 = vpop.f32.mrf.mxu0
      %v8203 = vadd.f32 0.0, %v8202
      %v8204 = vpop.f32.mrf.mxu0
      %8205 = vdwg.mxu0
      %8206 = vmatpush.bf16.msra.mxu0 0
      %8207 = vmatpush.bf16.msra.mxu0 0
      %8208 = vmatpush.bf16.msra.mxu0 0
      %8209 = vmatpush.bf16.msra.mxu0 0
      %8210 = vmatpush.bf16.msra.mxu0 0
      %8211 = vmatpush.bf16.msra.mxu0 0
      %8212 = vmatpush.bf16.msra.mxu0 0
      %8213 = vmatpush.bf16.msra.mxu0 %v8153
      %8214 = vmatmul.bf16.gmra.mxu0 %v8141
      %v8215 = vpop.f32.mrf.mxu0
      %v8216 = vadd.f32 0.0, %v8215
      %v8217 = vpop.f32.mrf.mxu0
      %8218 = vdwg.mxu0
      %8219 = vmatpush.bf16.msra.mxu0 0
      %8220 = vmatpush.bf16.msra.mxu0 0
      %8221 = vmatpush.bf16.msra.mxu0 0
      %8222 = vmatpush.bf16.msra.mxu0 0
      %8223 = vmatpush.bf16.msra.mxu0 0
      %8224 = vmatpush.bf16.msra.mxu0 0
      %8225 = vmatpush.bf16.msra.mxu0 0
      %8226 = vmatpush.bf16.msra.mxu0 %v8156
      %8227 = vmatmul.bf16.gmra.mxu0 %v8141
      %v8228 = vpop.f32.mrf.mxu0
      %v8229 = vadd.f32 0.0, %v8228
      %v8230 = vpop.f32.mrf.mxu0
      %8231 = vdwg.mxu0
      %8232 = vmatpush.bf16.msra.mxu0 0
      %8233 = vmatpush.bf16.msra.mxu0 0
      %8234 = vmatpush.bf16.msra.mxu0 0
      %8235 = vmatpush.bf16.msra.mxu0 0
      %8236 = vmatpush.bf16.msra.mxu0 0
      %8237 = vmatpush.bf16.msra.mxu0 0
      %8238 = vmatpush.bf16.msra.mxu0 0
      %8239 = vmatpush.bf16.msra.mxu0 %v8159
      %8240 = vmatmul.bf16.gmra.mxu0 %v8141
      %v8241 = vpop.f32.mrf.mxu0
      %v8242 = vadd.f32 0.0, %v8241
      %v8243 = vpop.f32.mrf.mxu0
      %8244 = vdwg.mxu0
      %8245 = vmatpush.bf16.msra.mxu0 0
      %8246 = vmatpush.bf16.msra.mxu0 0
      %8247 = vmatpush.bf16.msra.mxu0 0
      %8248 = vmatpush.bf16.msra.mxu0 0
      %8249 = vmatpush.bf16.msra.mxu0 0
      %8250 = vmatpush.bf16.msra.mxu0 0
      %8251 = vmatpush.bf16.msra.mxu0 0
      %8252 = vmatpush.bf16.msra.mxu0 %v8162
      %8253 = vmatmul.bf16.gmra.mxu0 %v8141
      %v8254 = vpop.f32.mrf.mxu0
      %v8255 = vadd.f32 0.0, %v8254
      %v8256 = vpop.f32.mrf.mxu0
      %8257 = vdwg.mxu0
      %8258 = vmatpush.bf16.msra.mxu0 0
      %8259 = vmatpush.bf16.msra.mxu0 0
      %8260 = vmatpush.bf16.msra.mxu0 0
      %8261 = vmatpush.bf16.msra.mxu0 0
      %8262 = vmatpush.bf16.msra.mxu0 0
      %8263 = vmatpush.bf16.msra.mxu0 0
      %8264 = vmatpush.bf16.msra.mxu0 0
      %8265 = vmatpush.bf16.msra.mxu0 %v8165
      %8266 = vmatmul.bf16.gmra.mxu0 %v8141
      %v8267 = vpop.f32.mrf.mxu0
      %v8268 = vadd.f32 0.0, %v8267
      %v8269 = vpop.f32.mrf.mxu0
      %8270 = vdwg.mxu0
      %v8271 = vadd.f32 %v8092, %v8177
      %v8272 = vadd.f32 %v8093, %v8190
      %v8273 = vadd.f32 %v8094, %v8203
      %v8274 = vadd.f32 %v8095, %v8216
      %v8275 = vadd.f32 %v8096, %v8229
      %v8276 = vadd.f32 %v8097, %v8242
      %v8277 = vadd.f32 %v8098, %v8255
      %v8278 = vadd.f32 %v8099, %v8268
      %8279 = vrot.lane.b32.xlu0 %v5268, 117
      %v8280 = vpop.permute.xlu0 %8279
      %8281 = vrot.lane.b32.xlu0 %v5269, 117
      %v8282 = vpop.permute.xlu0 %8281
      %8283 = vrot.lane.b32.xlu0 %v5270, 117
      %v8284 = vpop.permute.xlu0 %8283
      %8285 = vrot.lane.b32.xlu0 %v5271, 117
      %v8286 = vpop.permute.xlu0 %8285
      %8287 = vrot.lane.b32.xlu0 %v5272, 117
      %v8288 = vpop.permute.xlu0 %8287
      %8289 = vrot.lane.b32.xlu0 %v5273, 117
      %v8290 = vpop.permute.xlu0 %8289
      %8291 = vrot.lane.b32.xlu0 %v5274, 117
      %v8292 = vpop.permute.xlu0 %8291
      %8293 = vrot.lane.b32.xlu0 %v5275, 117
      %v8294 = vpop.permute.xlu0 %8293
      %v8295 = vsel %vm3346, %v8280, %v8282
      %v8296 = vsel %vm3346, %v8282, %v8284
      %v8297 = vsel %vm3346, %v8284, %v8286
      %v8298 = vsel %vm3346, %v8286, %v8288
      %v8299 = vsel %vm3346, %v8288, %v8290
      %v8300 = vsel %vm3346, %v8290, %v8292
      %v8301 = vsel %vm3346, %v8292, %v8294
      %v8310 = vsel %vm3346, %v8294, 0.0
      %v8311 = vpack.c.bf16 %v8295, %v8295
      %v8312 = vpack.c.bf16 %v8296, %v8296
      %v8313 = vpack.c.bf16 %v8297, %v8297
      %v8314 = vpack.c.bf16 %v8298, %v8298
      %v8315 = vpack.c.bf16 %v8299, %v8299
      %v8316 = vpack.c.bf16 %v8300, %v8300
      %v8317 = vpack.c.bf16 %v8301, %v8301
      %v8318 = vpack.c.bf16 %v8310, %v8310
      %v8320 = vsel %vm387, %v275, 0
      %v8323 = vsel %vm391, %v8311, 0
      %v8326 = vsel %vm391, %v8312, 0
      %v8329 = vsel %vm391, %v8313, 0
      %v8332 = vsel %vm391, %v8314, 0
      %v8335 = vsel %vm391, %v8315, 0
      %v8338 = vsel %vm391, %v8316, 0
      %v8341 = vsel %vm391, %v8317, 0
      %v8344 = vsel %vm391, %v8318, 0
      %8346 = vmatpush.bf16.msra.mxu0 0
      %8347 = vmatpush.bf16.msra.mxu0 0
      %8348 = vmatpush.bf16.msra.mxu0 0
      %8349 = vmatpush.bf16.msra.mxu0 0
      %8350 = vmatpush.bf16.msra.mxu0 0
      %8351 = vmatpush.bf16.msra.mxu0 0
      %8352 = vmatpush.bf16.msra.mxu0 0
      %8353 = vmatpush.bf16.msra.mxu0 %v8323
      %8354 = vmatmul.bf16.gmra.mxu0 %v8320
      %v8355 = vpop.f32.mrf.mxu0
      %v8356 = vadd.f32 0.0, %v8355
      %v8357 = vpop.f32.mrf.mxu0
      %8358 = vdwg.mxu0
      %8359 = vmatpush.bf16.msra.mxu0 0
      %8360 = vmatpush.bf16.msra.mxu0 0
      %8361 = vmatpush.bf16.msra.mxu0 0
      %8362 = vmatpush.bf16.msra.mxu0 0
      %8363 = vmatpush.bf16.msra.mxu0 0
      %8364 = vmatpush.bf16.msra.mxu0 0
      %8365 = vmatpush.bf16.msra.mxu0 0
      %8366 = vmatpush.bf16.msra.mxu0 %v8326
      %8367 = vmatmul.bf16.gmra.mxu0 %v8320
      %v8368 = vpop.f32.mrf.mxu0
      %v8369 = vadd.f32 0.0, %v8368
      %v8370 = vpop.f32.mrf.mxu0
      %8371 = vdwg.mxu0
      %8372 = vmatpush.bf16.msra.mxu0 0
      %8373 = vmatpush.bf16.msra.mxu0 0
      %8374 = vmatpush.bf16.msra.mxu0 0
      %8375 = vmatpush.bf16.msra.mxu0 0
      %8376 = vmatpush.bf16.msra.mxu0 0
      %8377 = vmatpush.bf16.msra.mxu0 0
      %8378 = vmatpush.bf16.msra.mxu0 0
      %8379 = vmatpush.bf16.msra.mxu0 %v8329
      %8380 = vmatmul.bf16.gmra.mxu0 %v8320
      %v8381 = vpop.f32.mrf.mxu0
      %v8382 = vadd.f32 0.0, %v8381
      %v8383 = vpop.f32.mrf.mxu0
      %8384 = vdwg.mxu0
      %8385 = vmatpush.bf16.msra.mxu0 0
      %8386 = vmatpush.bf16.msra.mxu0 0
      %8387 = vmatpush.bf16.msra.mxu0 0
      %8388 = vmatpush.bf16.msra.mxu0 0
      %8389 = vmatpush.bf16.msra.mxu0 0
      %8390 = vmatpush.bf16.msra.mxu0 0
      %8391 = vmatpush.bf16.msra.mxu0 0
      %8392 = vmatpush.bf16.msra.mxu0 %v8332
      %8393 = vmatmul.bf16.gmra.mxu0 %v8320
      %v8394 = vpop.f32.mrf.mxu0
      %v8395 = vadd.f32 0.0, %v8394
      %v8396 = vpop.f32.mrf.mxu0
      %8397 = vdwg.mxu0
      %8398 = vmatpush.bf16.msra.mxu0 0
      %8399 = vmatpush.bf16.msra.mxu0 0
      %8400 = vmatpush.bf16.msra.mxu0 0
      %8401 = vmatpush.bf16.msra.mxu0 0
      %8402 = vmatpush.bf16.msra.mxu0 0
      %8403 = vmatpush.bf16.msra.mxu0 0
      %8404 = vmatpush.bf16.msra.mxu0 0
      %8405 = vmatpush.bf16.msra.mxu0 %v8335
      %8406 = vmatmul.bf16.gmra.mxu0 %v8320
      %v8407 = vpop.f32.mrf.mxu0
      %v8408 = vadd.f32 0.0, %v8407
      %v8409 = vpop.f32.mrf.mxu0
      %8410 = vdwg.mxu0
      %8411 = vmatpush.bf16.msra.mxu0 0
      %8412 = vmatpush.bf16.msra.mxu0 0
      %8413 = vmatpush.bf16.msra.mxu0 0
      %8414 = vmatpush.bf16.msra.mxu0 0
      %8415 = vmatpush.bf16.msra.mxu0 0
      %8416 = vmatpush.bf16.msra.mxu0 0
      %8417 = vmatpush.bf16.msra.mxu0 0
      %8418 = vmatpush.bf16.msra.mxu0 %v8338
      %8419 = vmatmul.bf16.gmra.mxu0 %v8320
      %v8420 = vpop.f32.mrf.mxu0
      %v8421 = vadd.f32 0.0, %v8420
      %v8422 = vpop.f32.mrf.mxu0
      %8423 = vdwg.mxu0
      %8424 = vmatpush.bf16.msra.mxu0 0
      %8425 = vmatpush.bf16.msra.mxu0 0
      %8426 = vmatpush.bf16.msra.mxu0 0
      %8427 = vmatpush.bf16.msra.mxu0 0
      %8428 = vmatpush.bf16.msra.mxu0 0
      %8429 = vmatpush.bf16.msra.mxu0 0
      %8430 = vmatpush.bf16.msra.mxu0 0
      %8431 = vmatpush.bf16.msra.mxu0 %v8341
      %8432 = vmatmul.bf16.gmra.mxu0 %v8320
      %v8433 = vpop.f32.mrf.mxu0
      %v8434 = vadd.f32 0.0, %v8433
      %v8435 = vpop.f32.mrf.mxu0
      %8436 = vdwg.mxu0
      %8437 = vmatpush.bf16.msra.mxu0 0
      %8438 = vmatpush.bf16.msra.mxu0 0
      %8439 = vmatpush.bf16.msra.mxu0 0
      %8440 = vmatpush.bf16.msra.mxu0 0
      %8441 = vmatpush.bf16.msra.mxu0 0
      %8442 = vmatpush.bf16.msra.mxu0 0
      %8443 = vmatpush.bf16.msra.mxu0 0
      %8444 = vmatpush.bf16.msra.mxu0 %v8344
      %8445 = vmatmul.bf16.gmra.mxu0 %v8320
      %v8446 = vpop.f32.mrf.mxu0
      %v8447 = vadd.f32 0.0, %v8446
      %v8448 = vpop.f32.mrf.mxu0
      %8449 = vdwg.mxu0
      %v8450 = vadd.f32 %v8271, %v8356
      %v8451 = vadd.f32 %v8272, %v8369
      %v8452 = vadd.f32 %v8273, %v8382
      %v8453 = vadd.f32 %v8274, %v8395
      %v8454 = vadd.f32 %v8275, %v8408
      %v8455 = vadd.f32 %v8276, %v8421
      %v8456 = vadd.f32 %v8277, %v8434
      %v8457 = vadd.f32 %v8278, %v8447
      %8458 = vrot.lane.b32.xlu0 %v5268, 39
      %v8459 = vpop.permute.xlu0 %8458
      %8460 = vrot.lane.b32.xlu0 %v5269, 39
      %v8461 = vpop.permute.xlu0 %8460
      %8462 = vrot.lane.b32.xlu0 %v5270, 39
      %v8463 = vpop.permute.xlu0 %8462
      %8464 = vrot.lane.b32.xlu0 %v5271, 39
      %v8465 = vpop.permute.xlu0 %8464
      %8466 = vrot.lane.b32.xlu0 %v5272, 39
      %v8467 = vpop.permute.xlu0 %8466
      %8468 = vrot.lane.b32.xlu0 %v5273, 39
      %v8469 = vpop.permute.xlu0 %8468
      %8470 = vrot.lane.b32.xlu0 %v5274, 39
      %v8471 = vpop.permute.xlu0 %8470
      %8472 = vrot.lane.b32.xlu0 %v5275, 39
      %v8473 = vpop.permute.xlu0 %8472
      %v8474 = vsel %vm3526, %v8459, %v8461
      %v8475 = vsel %vm3526, %v8461, %v8463
      %v8476 = vsel %vm3526, %v8463, %v8465
      %v8477 = vsel %vm3526, %v8465, %v8467
      %v8478 = vsel %vm3526, %v8467, %v8469
      %v8479 = vsel %vm3526, %v8469, %v8471
      %v8480 = vsel %vm3526, %v8471, %v8473
      %v8489 = vsel %vm3526, %v8473, 0.0
      %v8490 = vpack.c.bf16 %v8474, %v8474
      %v8491 = vpack.c.bf16 %v8475, %v8475
      %v8492 = vpack.c.bf16 %v8476, %v8476
      %v8493 = vpack.c.bf16 %v8477, %v8477
      %v8494 = vpack.c.bf16 %v8478, %v8478
      %v8495 = vpack.c.bf16 %v8479, %v8479
      %v8496 = vpack.c.bf16 %v8480, %v8480
      %v8497 = vpack.c.bf16 %v8489, %v8489
      %v8499 = vsel %vm387, %v276, 0
      %v8502 = vsel %vm391, %v8490, 0
      %v8505 = vsel %vm391, %v8491, 0
      %v8508 = vsel %vm391, %v8492, 0
      %v8511 = vsel %vm391, %v8493, 0
      %v8514 = vsel %vm391, %v8494, 0
      %v8517 = vsel %vm391, %v8495, 0
      %v8520 = vsel %vm391, %v8496, 0
      %v8523 = vsel %vm391, %v8497, 0
      %8525 = vmatpush.bf16.msra.mxu0 0
      %8526 = vmatpush.bf16.msra.mxu0 0
      %8527 = vmatpush.bf16.msra.mxu0 0
      %8528 = vmatpush.bf16.msra.mxu0 0
      %8529 = vmatpush.bf16.msra.mxu0 0
      %8530 = vmatpush.bf16.msra.mxu0 0
      %8531 = vmatpush.bf16.msra.mxu0 0
      %8532 = vmatpush.bf16.msra.mxu0 %v8502
      %8533 = vmatmul.bf16.gmra.mxu0 %v8499
      %v8534 = vpop.f32.mrf.mxu0
      %v8535 = vadd.f32 0.0, %v8534
      %v8536 = vpop.f32.mrf.mxu0
      %8537 = vdwg.mxu0
      %8538 = vmatpush.bf16.msra.mxu0 0
      %8539 = vmatpush.bf16.msra.mxu0 0
      %8540 = vmatpush.bf16.msra.mxu0 0
      %8541 = vmatpush.bf16.msra.mxu0 0
      %8542 = vmatpush.bf16.msra.mxu0 0
      %8543 = vmatpush.bf16.msra.mxu0 0
      %8544 = vmatpush.bf16.msra.mxu0 0
      %8545 = vmatpush.bf16.msra.mxu0 %v8505
      %8546 = vmatmul.bf16.gmra.mxu0 %v8499
      %v8547 = vpop.f32.mrf.mxu0
      %v8548 = vadd.f32 0.0, %v8547
      %v8549 = vpop.f32.mrf.mxu0
      %8550 = vdwg.mxu0
      %8551 = vmatpush.bf16.msra.mxu0 0
      %8552 = vmatpush.bf16.msra.mxu0 0
      %8553 = vmatpush.bf16.msra.mxu0 0
      %8554 = vmatpush.bf16.msra.mxu0 0
      %8555 = vmatpush.bf16.msra.mxu0 0
      %8556 = vmatpush.bf16.msra.mxu0 0
      %8557 = vmatpush.bf16.msra.mxu0 0
      %8558 = vmatpush.bf16.msra.mxu0 %v8508
      %8559 = vmatmul.bf16.gmra.mxu0 %v8499
      %v8560 = vpop.f32.mrf.mxu0
      %v8561 = vadd.f32 0.0, %v8560
      %v8562 = vpop.f32.mrf.mxu0
      %8563 = vdwg.mxu0
      %8564 = vmatpush.bf16.msra.mxu0 0
      %8565 = vmatpush.bf16.msra.mxu0 0
      %8566 = vmatpush.bf16.msra.mxu0 0
      %8567 = vmatpush.bf16.msra.mxu0 0
      %8568 = vmatpush.bf16.msra.mxu0 0
      %8569 = vmatpush.bf16.msra.mxu0 0
      %8570 = vmatpush.bf16.msra.mxu0 0
      %8571 = vmatpush.bf16.msra.mxu0 %v8511
      %8572 = vmatmul.bf16.gmra.mxu0 %v8499
      %v8573 = vpop.f32.mrf.mxu0
      %v8574 = vadd.f32 0.0, %v8573
      %v8575 = vpop.f32.mrf.mxu0
      %8576 = vdwg.mxu0
      %8577 = vmatpush.bf16.msra.mxu0 0
      %8578 = vmatpush.bf16.msra.mxu0 0
      %8579 = vmatpush.bf16.msra.mxu0 0
      %8580 = vmatpush.bf16.msra.mxu0 0
      %8581 = vmatpush.bf16.msra.mxu0 0
      %8582 = vmatpush.bf16.msra.mxu0 0
      %8583 = vmatpush.bf16.msra.mxu0 0
      %8584 = vmatpush.bf16.msra.mxu0 %v8514
      %8585 = vmatmul.bf16.gmra.mxu0 %v8499
      %v8586 = vpop.f32.mrf.mxu0
      %v8587 = vadd.f32 0.0, %v8586
      %v8588 = vpop.f32.mrf.mxu0
      %8589 = vdwg.mxu0
      %8590 = vmatpush.bf16.msra.mxu0 0
      %8591 = vmatpush.bf16.msra.mxu0 0
      %8592 = vmatpush.bf16.msra.mxu0 0
      %8593 = vmatpush.bf16.msra.mxu0 0
      %8594 = vmatpush.bf16.msra.mxu0 0
      %8595 = vmatpush.bf16.msra.mxu0 0
      %8596 = vmatpush.bf16.msra.mxu0 0
      %8597 = vmatpush.bf16.msra.mxu0 %v8517
      %8598 = vmatmul.bf16.gmra.mxu0 %v8499
      %v8599 = vpop.f32.mrf.mxu0
      %v8600 = vadd.f32 0.0, %v8599
      %v8601 = vpop.f32.mrf.mxu0
      %8602 = vdwg.mxu0
      %8603 = vmatpush.bf16.msra.mxu0 0
      %8604 = vmatpush.bf16.msra.mxu0 0
      %8605 = vmatpush.bf16.msra.mxu0 0
      %8606 = vmatpush.bf16.msra.mxu0 0
      %8607 = vmatpush.bf16.msra.mxu0 0
      %8608 = vmatpush.bf16.msra.mxu0 0
      %8609 = vmatpush.bf16.msra.mxu0 0
      %8610 = vmatpush.bf16.msra.mxu0 %v8520
      %8611 = vmatmul.bf16.gmra.mxu0 %v8499
      %v8612 = vpop.f32.mrf.mxu0
      %v8613 = vadd.f32 0.0, %v8612
      %v8614 = vpop.f32.mrf.mxu0
      %8615 = vdwg.mxu0
      %8616 = vmatpush.bf16.msra.mxu0 0
      %8617 = vmatpush.bf16.msra.mxu0 0
      %8618 = vmatpush.bf16.msra.mxu0 0
      %8619 = vmatpush.bf16.msra.mxu0 0
      %8620 = vmatpush.bf16.msra.mxu0 0
      %8621 = vmatpush.bf16.msra.mxu0 0
      %8622 = vmatpush.bf16.msra.mxu0 0
      %8623 = vmatpush.bf16.msra.mxu0 %v8523
      %8624 = vmatmul.bf16.gmra.mxu0 %v8499
      %v8625 = vpop.f32.mrf.mxu0
      %v8626 = vadd.f32 0.0, %v8625
      %v8627 = vpop.f32.mrf.mxu0
      %8628 = vdwg.mxu0
      %v8629 = vadd.f32 %v8450, %v8535
      %v8630 = vadd.f32 %v8451, %v8548
      %v8631 = vadd.f32 %v8452, %v8561
      %v8632 = vadd.f32 %v8453, %v8574
      %v8633 = vadd.f32 %v8454, %v8587
      %v8634 = vadd.f32 %v8455, %v8600
      %v8635 = vadd.f32 %v8456, %v8613
      %v8636 = vadd.f32 %v8457, %v8626
      %8637 = vrot.lane.b32.xlu0 %v5268, 38
      %v8638 = vpop.permute.xlu0 %8637
      %8639 = vrot.lane.b32.xlu0 %v5269, 38
      %v8640 = vpop.permute.xlu0 %8639
      %8641 = vrot.lane.b32.xlu0 %v5270, 38
      %v8642 = vpop.permute.xlu0 %8641
      %8643 = vrot.lane.b32.xlu0 %v5271, 38
      %v8644 = vpop.permute.xlu0 %8643
      %8645 = vrot.lane.b32.xlu0 %v5272, 38
      %v8646 = vpop.permute.xlu0 %8645
      %8647 = vrot.lane.b32.xlu0 %v5273, 38
      %v8648 = vpop.permute.xlu0 %8647
      %8649 = vrot.lane.b32.xlu0 %v5274, 38
      %v8650 = vpop.permute.xlu0 %8649
      %8651 = vrot.lane.b32.xlu0 %v5275, 38
      %v8652 = vpop.permute.xlu0 %8651
      %v8653 = vsel %vm3706, %v8638, %v8640
      %v8654 = vsel %vm3706, %v8640, %v8642
      %v8655 = vsel %vm3706, %v8642, %v8644
      %v8656 = vsel %vm3706, %v8644, %v8646
      %v8657 = vsel %vm3706, %v8646, %v8648
      %v8658 = vsel %vm3706, %v8648, %v8650
      %v8659 = vsel %vm3706, %v8650, %v8652
      %v8668 = vsel %vm3706, %v8652, 0.0
      %v8669 = vpack.c.bf16 %v8653, %v8653
      %v8670 = vpack.c.bf16 %v8654, %v8654
      %v8671 = vpack.c.bf16 %v8655, %v8655
      %v8672 = vpack.c.bf16 %v8656, %v8656
      %v8673 = vpack.c.bf16 %v8657, %v8657
      %v8674 = vpack.c.bf16 %v8658, %v8658
      %v8675 = vpack.c.bf16 %v8659, %v8659
      %v8676 = vpack.c.bf16 %v8668, %v8668
      %v8678 = vsel %vm387, %v277, 0
      %v8681 = vsel %vm391, %v8669, 0
      %v8684 = vsel %vm391, %v8670, 0
      %v8687 = vsel %vm391, %v8671, 0
      %v8690 = vsel %vm391, %v8672, 0
      %v8693 = vsel %vm391, %v8673, 0
      %v8696 = vsel %vm391, %v8674, 0
      %v8699 = vsel %vm391, %v8675, 0
      %v8702 = vsel %vm391, %v8676, 0
      %8704 = vmatpush.bf16.msra.mxu0 0
      %8705 = vmatpush.bf16.msra.mxu0 0
      %8706 = vmatpush.bf16.msra.mxu0 0
      %8707 = vmatpush.bf16.msra.mxu0 0
      %8708 = vmatpush.bf16.msra.mxu0 0
      %8709 = vmatpush.bf16.msra.mxu0 0
      %8710 = vmatpush.bf16.msra.mxu0 0
      %8711 = vmatpush.bf16.msra.mxu0 %v8681
      %8712 = vmatmul.bf16.gmra.mxu0 %v8678
      %v8713 = vpop.f32.mrf.mxu0
      %v8714 = vadd.f32 0.0, %v8713
      %v8715 = vpop.f32.mrf.mxu0
      %8716 = vdwg.mxu0
      %8717 = vmatpush.bf16.msra.mxu0 0
      %8718 = vmatpush.bf16.msra.mxu0 0
      %8719 = vmatpush.bf16.msra.mxu0 0
      %8720 = vmatpush.bf16.msra.mxu0 0
      %8721 = vmatpush.bf16.msra.mxu0 0
      %8722 = vmatpush.bf16.msra.mxu0 0
      %8723 = vmatpush.bf16.msra.mxu0 0
      %8724 = vmatpush.bf16.msra.mxu0 %v8684
      %8725 = vmatmul.bf16.gmra.mxu0 %v8678
      %v8726 = vpop.f32.mrf.mxu0
      %v8727 = vadd.f32 0.0, %v8726
      %v8728 = vpop.f32.mrf.mxu0
      %8729 = vdwg.mxu0
      %8730 = vmatpush.bf16.msra.mxu0 0
      %8731 = vmatpush.bf16.msra.mxu0 0
      %8732 = vmatpush.bf16.msra.mxu0 0
      %8733 = vmatpush.bf16.msra.mxu0 0
      %8734 = vmatpush.bf16.msra.mxu0 0
      %8735 = vmatpush.bf16.msra.mxu0 0
      %8736 = vmatpush.bf16.msra.mxu0 0
      %8737 = vmatpush.bf16.msra.mxu0 %v8687
      %8738 = vmatmul.bf16.gmra.mxu0 %v8678
      %v8739 = vpop.f32.mrf.mxu0
      %v8740 = vadd.f32 0.0, %v8739
      %v8741 = vpop.f32.mrf.mxu0
      %8742 = vdwg.mxu0
      %8743 = vmatpush.bf16.msra.mxu0 0
      %8744 = vmatpush.bf16.msra.mxu0 0
      %8745 = vmatpush.bf16.msra.mxu0 0
      %8746 = vmatpush.bf16.msra.mxu0 0
      %8747 = vmatpush.bf16.msra.mxu0 0
      %8748 = vmatpush.bf16.msra.mxu0 0
      %8749 = vmatpush.bf16.msra.mxu0 0
      %8750 = vmatpush.bf16.msra.mxu0 %v8690
      %8751 = vmatmul.bf16.gmra.mxu0 %v8678
      %v8752 = vpop.f32.mrf.mxu0
      %v8753 = vadd.f32 0.0, %v8752
      %v8754 = vpop.f32.mrf.mxu0
      %8755 = vdwg.mxu0
      %8756 = vmatpush.bf16.msra.mxu0 0
      %8757 = vmatpush.bf16.msra.mxu0 0
      %8758 = vmatpush.bf16.msra.mxu0 0
      %8759 = vmatpush.bf16.msra.mxu0 0
      %8760 = vmatpush.bf16.msra.mxu0 0
      %8761 = vmatpush.bf16.msra.mxu0 0
      %8762 = vmatpush.bf16.msra.mxu0 0
      %8763 = vmatpush.bf16.msra.mxu0 %v8693
      %8764 = vmatmul.bf16.gmra.mxu0 %v8678
      %v8765 = vpop.f32.mrf.mxu0
      %v8766 = vadd.f32 0.0, %v8765
      %v8767 = vpop.f32.mrf.mxu0
      %8768 = vdwg.mxu0
      %8769 = vmatpush.bf16.msra.mxu0 0
      %8770 = vmatpush.bf16.msra.mxu0 0
      %8771 = vmatpush.bf16.msra.mxu0 0
      %8772 = vmatpush.bf16.msra.mxu0 0
      %8773 = vmatpush.bf16.msra.mxu0 0
      %8774 = vmatpush.bf16.msra.mxu0 0
      %8775 = vmatpush.bf16.msra.mxu0 0
      %8776 = vmatpush.bf16.msra.mxu0 %v8696
      %8777 = vmatmul.bf16.gmra.mxu0 %v8678
      %v8778 = vpop.f32.mrf.mxu0
      %v8779 = vadd.f32 0.0, %v8778
      %v8780 = vpop.f32.mrf.mxu0
      %8781 = vdwg.mxu0
      %8782 = vmatpush.bf16.msra.mxu0 0
      %8783 = vmatpush.bf16.msra.mxu0 0
      %8784 = vmatpush.bf16.msra.mxu0 0
      %8785 = vmatpush.bf16.msra.mxu0 0
      %8786 = vmatpush.bf16.msra.mxu0 0
      %8787 = vmatpush.bf16.msra.mxu0 0
      %8788 = vmatpush.bf16.msra.mxu0 0
      %8789 = vmatpush.bf16.msra.mxu0 %v8699
      %8790 = vmatmul.bf16.gmra.mxu0 %v8678
      %v8791 = vpop.f32.mrf.mxu0
      %v8792 = vadd.f32 0.0, %v8791
      %v8793 = vpop.f32.mrf.mxu0
      %8794 = vdwg.mxu0
      %8795 = vmatpush.bf16.msra.mxu0 0
      %8796 = vmatpush.bf16.msra.mxu0 0
      %8797 = vmatpush.bf16.msra.mxu0 0
      %8798 = vmatpush.bf16.msra.mxu0 0
      %8799 = vmatpush.bf16.msra.mxu0 0
      %8800 = vmatpush.bf16.msra.mxu0 0
      %8801 = vmatpush.bf16.msra.mxu0 0
      %8802 = vmatpush.bf16.msra.mxu0 %v8702
      %8803 = vmatmul.bf16.gmra.mxu0 %v8678
      %v8804 = vpop.f32.mrf.mxu0
      %v8805 = vadd.f32 0.0, %v8804
      %v8806 = vpop.f32.mrf.mxu0
      %8807 = vdwg.mxu0
      %v8808 = vadd.f32 %v8629, %v8714
      %v8809 = vadd.f32 %v8630, %v8727
      %v8810 = vadd.f32 %v8631, %v8740
      %v8811 = vadd.f32 %v8632, %v8753
      %v8812 = vadd.f32 %v8633, %v8766
      %v8813 = vadd.f32 %v8634, %v8779
      %v8814 = vadd.f32 %v8635, %v8792
      %v8815 = vadd.f32 %v8636, %v8805
      %8816 = vrot.lane.b32.xlu0 %v5268, 37
      %v8817 = vpop.permute.xlu0 %8816
      %8818 = vrot.lane.b32.xlu0 %v5269, 37
      %v8819 = vpop.permute.xlu0 %8818
      %8820 = vrot.lane.b32.xlu0 %v5270, 37
      %v8821 = vpop.permute.xlu0 %8820
      %8822 = vrot.lane.b32.xlu0 %v5271, 37
      %v8823 = vpop.permute.xlu0 %8822
      %8824 = vrot.lane.b32.xlu0 %v5272, 37
      %v8825 = vpop.permute.xlu0 %8824
      %8826 = vrot.lane.b32.xlu0 %v5273, 37
      %v8827 = vpop.permute.xlu0 %8826
      %8828 = vrot.lane.b32.xlu0 %v5274, 37
      %v8829 = vpop.permute.xlu0 %8828
      %8830 = vrot.lane.b32.xlu0 %v5275, 37
      %v8831 = vpop.permute.xlu0 %8830
      %v8832 = vsel %vm3886, %v8817, %v8819
      %v8833 = vsel %vm3886, %v8819, %v8821
      %v8834 = vsel %vm3886, %v8821, %v8823
      %v8835 = vsel %vm3886, %v8823, %v8825
      %v8836 = vsel %vm3886, %v8825, %v8827
      %v8837 = vsel %vm3886, %v8827, %v8829
      %v8838 = vsel %vm3886, %v8829, %v8831
      %v8847 = vsel %vm3886, %v8831, 0.0
      %v8848 = vpack.c.bf16 %v8832, %v8832
      %v8849 = vpack.c.bf16 %v8833, %v8833
      %v8850 = vpack.c.bf16 %v8834, %v8834
      %v8851 = vpack.c.bf16 %v8835, %v8835
      %v8852 = vpack.c.bf16 %v8836, %v8836
      %v8853 = vpack.c.bf16 %v8837, %v8837
      %v8854 = vpack.c.bf16 %v8838, %v8838
      %v8855 = vpack.c.bf16 %v8847, %v8847
      %v8857 = vsel %vm387, %v278, 0
      %v8860 = vsel %vm391, %v8848, 0
      %v8863 = vsel %vm391, %v8849, 0
      %v8866 = vsel %vm391, %v8850, 0
      %v8869 = vsel %vm391, %v8851, 0
      %v8872 = vsel %vm391, %v8852, 0
      %v8875 = vsel %vm391, %v8853, 0
      %v8878 = vsel %vm391, %v8854, 0
      %v8881 = vsel %vm391, %v8855, 0
      %8883 = vmatpush.bf16.msra.mxu0 0
      %8884 = vmatpush.bf16.msra.mxu0 0
      %8885 = vmatpush.bf16.msra.mxu0 0
      %8886 = vmatpush.bf16.msra.mxu0 0
      %8887 = vmatpush.bf16.msra.mxu0 0
      %8888 = vmatpush.bf16.msra.mxu0 0
      %8889 = vmatpush.bf16.msra.mxu0 0
      %8890 = vmatpush.bf16.msra.mxu0 %v8860
      %8891 = vmatmul.bf16.gmra.mxu0 %v8857
      %v8892 = vpop.f32.mrf.mxu0
      %v8893 = vadd.f32 0.0, %v8892
      %v8894 = vpop.f32.mrf.mxu0
      %8895 = vdwg.mxu0
      %8896 = vmatpush.bf16.msra.mxu0 0
      %8897 = vmatpush.bf16.msra.mxu0 0
      %8898 = vmatpush.bf16.msra.mxu0 0
      %8899 = vmatpush.bf16.msra.mxu0 0
      %8900 = vmatpush.bf16.msra.mxu0 0
      %8901 = vmatpush.bf16.msra.mxu0 0
      %8902 = vmatpush.bf16.msra.mxu0 0
      %8903 = vmatpush.bf16.msra.mxu0 %v8863
      %8904 = vmatmul.bf16.gmra.mxu0 %v8857
      %v8905 = vpop.f32.mrf.mxu0
      %v8906 = vadd.f32 0.0, %v8905
      %v8907 = vpop.f32.mrf.mxu0
      %8908 = vdwg.mxu0
      %8909 = vmatpush.bf16.msra.mxu0 0
      %8910 = vmatpush.bf16.msra.mxu0 0
      %8911 = vmatpush.bf16.msra.mxu0 0
      %8912 = vmatpush.bf16.msra.mxu0 0
      %8913 = vmatpush.bf16.msra.mxu0 0
      %8914 = vmatpush.bf16.msra.mxu0 0
      %8915 = vmatpush.bf16.msra.mxu0 0
      %8916 = vmatpush.bf16.msra.mxu0 %v8866
      %8917 = vmatmul.bf16.gmra.mxu0 %v8857
      %v8918 = vpop.f32.mrf.mxu0
      %v8919 = vadd.f32 0.0, %v8918
      %v8920 = vpop.f32.mrf.mxu0
      %8921 = vdwg.mxu0
      %8922 = vmatpush.bf16.msra.mxu0 0
      %8923 = vmatpush.bf16.msra.mxu0 0
      %8924 = vmatpush.bf16.msra.mxu0 0
      %8925 = vmatpush.bf16.msra.mxu0 0
      %8926 = vmatpush.bf16.msra.mxu0 0
      %8927 = vmatpush.bf16.msra.mxu0 0
      %8928 = vmatpush.bf16.msra.mxu0 0
      %8929 = vmatpush.bf16.msra.mxu0 %v8869
      %8930 = vmatmul.bf16.gmra.mxu0 %v8857
      %v8931 = vpop.f32.mrf.mxu0
      %v8932 = vadd.f32 0.0, %v8931
      %v8933 = vpop.f32.mrf.mxu0
      %8934 = vdwg.mxu0
      %8935 = vmatpush.bf16.msra.mxu0 0
      %8936 = vmatpush.bf16.msra.mxu0 0
      %8937 = vmatpush.bf16.msra.mxu0 0
      %8938 = vmatpush.bf16.msra.mxu0 0
      %8939 = vmatpush.bf16.msra.mxu0 0
      %8940 = vmatpush.bf16.msra.mxu0 0
      %8941 = vmatpush.bf16.msra.mxu0 0
      %8942 = vmatpush.bf16.msra.mxu0 %v8872
      %8943 = vmatmul.bf16.gmra.mxu0 %v8857
      %v8944 = vpop.f32.mrf.mxu0
      %v8945 = vadd.f32 0.0, %v8944
      %v8946 = vpop.f32.mrf.mxu0
      %8947 = vdwg.mxu0
      %8948 = vmatpush.bf16.msra.mxu0 0
      %8949 = vmatpush.bf16.msra.mxu0 0
      %8950 = vmatpush.bf16.msra.mxu0 0
      %8951 = vmatpush.bf16.msra.mxu0 0
      %8952 = vmatpush.bf16.msra.mxu0 0
      %8953 = vmatpush.bf16.msra.mxu0 0
      %8954 = vmatpush.bf16.msra.mxu0 0
      %8955 = vmatpush.bf16.msra.mxu0 %v8875
      %8956 = vmatmul.bf16.gmra.mxu0 %v8857
      %v8957 = vpop.f32.mrf.mxu0
      %v8958 = vadd.f32 0.0, %v8957
      %v8959 = vpop.f32.mrf.mxu0
      %8960 = vdwg.mxu0
      %8961 = vmatpush.bf16.msra.mxu0 0
      %8962 = vmatpush.bf16.msra.mxu0 0
      %8963 = vmatpush.bf16.msra.mxu0 0
      %8964 = vmatpush.bf16.msra.mxu0 0
      %8965 = vmatpush.bf16.msra.mxu0 0
      %8966 = vmatpush.bf16.msra.mxu0 0
      %8967 = vmatpush.bf16.msra.mxu0 0
      %8968 = vmatpush.bf16.msra.mxu0 %v8878
      %8969 = vmatmul.bf16.gmra.mxu0 %v8857
      %v8970 = vpop.f32.mrf.mxu0
      %v8971 = vadd.f32 0.0, %v8970
      %v8972 = vpop.f32.mrf.mxu0
      %8973 = vdwg.mxu0
      %8974 = vmatpush.bf16.msra.mxu0 0
      %8975 = vmatpush.bf16.msra.mxu0 0
      %8976 = vmatpush.bf16.msra.mxu0 0
      %8977 = vmatpush.bf16.msra.mxu0 0
      %8978 = vmatpush.bf16.msra.mxu0 0
      %8979 = vmatpush.bf16.msra.mxu0 0
      %8980 = vmatpush.bf16.msra.mxu0 0
      %8981 = vmatpush.bf16.msra.mxu0 %v8881
      %8982 = vmatmul.bf16.gmra.mxu0 %v8857
      %v8983 = vpop.f32.mrf.mxu0
      %v8984 = vadd.f32 0.0, %v8983
      %v8985 = vpop.f32.mrf.mxu0
      %8986 = vdwg.mxu0
      %v8987 = vadd.f32 %v8808, %v8893
      %v8988 = vadd.f32 %v8809, %v8906
      %v8989 = vadd.f32 %v8810, %v8919
      %v8990 = vadd.f32 %v8811, %v8932
      %v8991 = vadd.f32 %v8812, %v8945
      %v8992 = vadd.f32 %v8813, %v8958
      %v8993 = vadd.f32 %v8814, %v8971
      %v8994 = vadd.f32 %v8815, %v8984
      %8995 = vrot.lane.b32.xlu0 %v5268, 29
      %v8996 = vpop.permute.xlu0 %8995
      %8997 = vrot.lane.b32.xlu0 %v5269, 29
      %v8998 = vpop.permute.xlu0 %8997
      %8999 = vrot.lane.b32.xlu0 %v5270, 29
      %v9000 = vpop.permute.xlu0 %8999
      %9001 = vrot.lane.b32.xlu0 %v5271, 29
      %v9002 = vpop.permute.xlu0 %9001
      %9003 = vrot.lane.b32.xlu0 %v5272, 29
      %v9004 = vpop.permute.xlu0 %9003
      %9005 = vrot.lane.b32.xlu0 %v5273, 29
      %v9006 = vpop.permute.xlu0 %9005
      %9007 = vrot.lane.b32.xlu0 %v5274, 29
      %v9008 = vpop.permute.xlu0 %9007
      %9009 = vrot.lane.b32.xlu0 %v5275, 29
      %v9010 = vpop.permute.xlu0 %9009
      %v9011 = vsel %vm4066, %v8996, %v8998
      %v9012 = vsel %vm4066, %v8998, %v9000
      %v9013 = vsel %vm4066, %v9000, %v9002
      %v9014 = vsel %vm4066, %v9002, %v9004
      %v9015 = vsel %vm4066, %v9004, %v9006
      %v9016 = vsel %vm4066, %v9006, %v9008
      %v9017 = vsel %vm4066, %v9008, %v9010
      %v9026 = vsel %vm4066, %v9010, 0.0
      %v9027 = vpack.c.bf16 %v9011, %v9011
      %v9028 = vpack.c.bf16 %v9012, %v9012
      %v9029 = vpack.c.bf16 %v9013, %v9013
      %v9030 = vpack.c.bf16 %v9014, %v9014
      %v9031 = vpack.c.bf16 %v9015, %v9015
      %v9032 = vpack.c.bf16 %v9016, %v9016
      %v9033 = vpack.c.bf16 %v9017, %v9017
      %v9034 = vpack.c.bf16 %v9026, %v9026
      %v9036 = vsel %vm387, %v279, 0
      %v9039 = vsel %vm391, %v9027, 0
      %v9042 = vsel %vm391, %v9028, 0
      %v9045 = vsel %vm391, %v9029, 0
      %v9048 = vsel %vm391, %v9030, 0
      %v9051 = vsel %vm391, %v9031, 0
      %v9054 = vsel %vm391, %v9032, 0
      %v9057 = vsel %vm391, %v9033, 0
      %v9060 = vsel %vm391, %v9034, 0
      %9062 = vmatpush.bf16.msra.mxu0 0
      %9063 = vmatpush.bf16.msra.mxu0 0
      %9064 = vmatpush.bf16.msra.mxu0 0
      %9065 = vmatpush.bf16.msra.mxu0 0
      %9066 = vmatpush.bf16.msra.mxu0 0
      %9067 = vmatpush.bf16.msra.mxu0 0
      %9068 = vmatpush.bf16.msra.mxu0 0
      %9069 = vmatpush.bf16.msra.mxu0 %v9039
      %9070 = vmatmul.bf16.gmra.mxu0 %v9036
      %v9071 = vpop.f32.mrf.mxu0
      %v9072 = vadd.f32 0.0, %v9071
      %v9073 = vpop.f32.mrf.mxu0
      %9074 = vdwg.mxu0
      %9075 = vmatpush.bf16.msra.mxu0 0
      %9076 = vmatpush.bf16.msra.mxu0 0
      %9077 = vmatpush.bf16.msra.mxu0 0
      %9078 = vmatpush.bf16.msra.mxu0 0
      %9079 = vmatpush.bf16.msra.mxu0 0
      %9080 = vmatpush.bf16.msra.mxu0 0
      %9081 = vmatpush.bf16.msra.mxu0 0
      %9082 = vmatpush.bf16.msra.mxu0 %v9042
      %9083 = vmatmul.bf16.gmra.mxu0 %v9036
      %v9084 = vpop.f32.mrf.mxu0
      %v9085 = vadd.f32 0.0, %v9084
      %v9086 = vpop.f32.mrf.mxu0
      %9087 = vdwg.mxu0
      %9088 = vmatpush.bf16.msra.mxu0 0
      %9089 = vmatpush.bf16.msra.mxu0 0
      %9090 = vmatpush.bf16.msra.mxu0 0
      %9091 = vmatpush.bf16.msra.mxu0 0
      %9092 = vmatpush.bf16.msra.mxu0 0
      %9093 = vmatpush.bf16.msra.mxu0 0
      %9094 = vmatpush.bf16.msra.mxu0 0
      %9095 = vmatpush.bf16.msra.mxu0 %v9045
      %9096 = vmatmul.bf16.gmra.mxu0 %v9036
      %v9097 = vpop.f32.mrf.mxu0
      %v9098 = vadd.f32 0.0, %v9097
      %v9099 = vpop.f32.mrf.mxu0
      %9100 = vdwg.mxu0
      %9101 = vmatpush.bf16.msra.mxu0 0
      %9102 = vmatpush.bf16.msra.mxu0 0
      %9103 = vmatpush.bf16.msra.mxu0 0
      %9104 = vmatpush.bf16.msra.mxu0 0
      %9105 = vmatpush.bf16.msra.mxu0 0
      %9106 = vmatpush.bf16.msra.mxu0 0
      %9107 = vmatpush.bf16.msra.mxu0 0
      %9108 = vmatpush.bf16.msra.mxu0 %v9048
      %9109 = vmatmul.bf16.gmra.mxu0 %v9036
      %v9110 = vpop.f32.mrf.mxu0
      %v9111 = vadd.f32 0.0, %v9110
      %v9112 = vpop.f32.mrf.mxu0
      %9113 = vdwg.mxu0
      %9114 = vmatpush.bf16.msra.mxu0 0
      %9115 = vmatpush.bf16.msra.mxu0 0
      %9116 = vmatpush.bf16.msra.mxu0 0
      %9117 = vmatpush.bf16.msra.mxu0 0
      %9118 = vmatpush.bf16.msra.mxu0 0
      %9119 = vmatpush.bf16.msra.mxu0 0
      %9120 = vmatpush.bf16.msra.mxu0 0
      %9121 = vmatpush.bf16.msra.mxu0 %v9051
      %9122 = vmatmul.bf16.gmra.mxu0 %v9036
      %v9123 = vpop.f32.mrf.mxu0
      %v9124 = vadd.f32 0.0, %v9123
      %v9125 = vpop.f32.mrf.mxu0
      %9126 = vdwg.mxu0
      %9127 = vmatpush.bf16.msra.mxu0 0
      %9128 = vmatpush.bf16.msra.mxu0 0
      %9129 = vmatpush.bf16.msra.mxu0 0
      %9130 = vmatpush.bf16.msra.mxu0 0
      %9131 = vmatpush.bf16.msra.mxu0 0
      %9132 = vmatpush.bf16.msra.mxu0 0
      %9133 = vmatpush.bf16.msra.mxu0 0
      %9134 = vmatpush.bf16.msra.mxu0 %v9054
      %9135 = vmatmul.bf16.gmra.mxu0 %v9036
      %v9136 = vpop.f32.mrf.mxu0
      %v9137 = vadd.f32 0.0, %v9136
      %v9138 = vpop.f32.mrf.mxu0
      %9139 = vdwg.mxu0
      %9140 = vmatpush.bf16.msra.mxu0 0
      %9141 = vmatpush.bf16.msra.mxu0 0
      %9142 = vmatpush.bf16.msra.mxu0 0
      %9143 = vmatpush.bf16.msra.mxu0 0
      %9144 = vmatpush.bf16.msra.mxu0 0
      %9145 = vmatpush.bf16.msra.mxu0 0
      %9146 = vmatpush.bf16.msra.mxu0 0
      %9147 = vmatpush.bf16.msra.mxu0 %v9057
      %9148 = vmatmul.bf16.gmra.mxu0 %v9036
      %v9149 = vpop.f32.mrf.mxu0
      %v9150 = vadd.f32 0.0, %v9149
      %v9151 = vpop.f32.mrf.mxu0
      %9152 = vdwg.mxu0
      %9153 = vmatpush.bf16.msra.mxu0 0
      %9154 = vmatpush.bf16.msra.mxu0 0
      %9155 = vmatpush.bf16.msra.mxu0 0
      %9156 = vmatpush.bf16.msra.mxu0 0
      %9157 = vmatpush.bf16.msra.mxu0 0
      %9158 = vmatpush.bf16.msra.mxu0 0
      %9159 = vmatpush.bf16.msra.mxu0 0
      %9160 = vmatpush.bf16.msra.mxu0 %v9060
      %9161 = vmatmul.bf16.gmra.mxu0 %v9036
      %v9162 = vpop.f32.mrf.mxu0
      %v9163 = vadd.f32 0.0, %v9162
      %v9164 = vpop.f32.mrf.mxu0
      %9165 = vdwg.mxu0
      %v9166 = vadd.f32 %v8987, %v9072
      %v9167 = vadd.f32 %v8988, %v9085
      %v9168 = vadd.f32 %v8989, %v9098
      %v9169 = vadd.f32 %v8990, %v9111
      %v9170 = vadd.f32 %v8991, %v9124
      %v9171 = vadd.f32 %v8992, %v9137
      %v9172 = vadd.f32 %v8993, %v9150
      %v9173 = vadd.f32 %v8994, %v9163
      %9174 = vrot.lane.b32.xlu0 %v5268, 28
      %v9175 = vpop.permute.xlu0 %9174
      %9176 = vrot.lane.b32.xlu0 %v5269, 28
      %v9177 = vpop.permute.xlu0 %9176
      %9178 = vrot.lane.b32.xlu0 %v5270, 28
      %v9179 = vpop.permute.xlu0 %9178
      %9180 = vrot.lane.b32.xlu0 %v5271, 28
      %v9181 = vpop.permute.xlu0 %9180
      %9182 = vrot.lane.b32.xlu0 %v5272, 28
      %v9183 = vpop.permute.xlu0 %9182
      %9184 = vrot.lane.b32.xlu0 %v5273, 28
      %v9185 = vpop.permute.xlu0 %9184
      %9186 = vrot.lane.b32.xlu0 %v5274, 28
      %v9187 = vpop.permute.xlu0 %9186
      %9188 = vrot.lane.b32.xlu0 %v5275, 28
      %v9189 = vpop.permute.xlu0 %9188
      %v9190 = vsel %vm4246, %v9175, %v9177
      %v9191 = vsel %vm4246, %v9177, %v9179
      %v9192 = vsel %vm4246, %v9179, %v9181
      %v9193 = vsel %vm4246, %v9181, %v9183
      %v9194 = vsel %vm4246, %v9183, %v9185
      %v9195 = vsel %vm4246, %v9185, %v9187
      %v9196 = vsel %vm4246, %v9187, %v9189
      %v9205 = vsel %vm4246, %v9189, 0.0
      %v9206 = vpack.c.bf16 %v9190, %v9190
      %v9207 = vpack.c.bf16 %v9191, %v9191
      %v9208 = vpack.c.bf16 %v9192, %v9192
      %v9209 = vpack.c.bf16 %v9193, %v9193
      %v9210 = vpack.c.bf16 %v9194, %v9194
      %v9211 = vpack.c.bf16 %v9195, %v9195
      %v9212 = vpack.c.bf16 %v9196, %v9196
      %v9213 = vpack.c.bf16 %v9205, %v9205
      %v9215 = vsel %vm387, %v280, 0
      %v9218 = vsel %vm391, %v9206, 0
      %v9221 = vsel %vm391, %v9207, 0
      %v9224 = vsel %vm391, %v9208, 0
      %v9227 = vsel %vm391, %v9209, 0
      %v9230 = vsel %vm391, %v9210, 0
      %v9233 = vsel %vm391, %v9211, 0
      %v9236 = vsel %vm391, %v9212, 0
      %v9239 = vsel %vm391, %v9213, 0
      %9241 = vmatpush.bf16.msra.mxu0 0
      %9242 = vmatpush.bf16.msra.mxu0 0
      %9243 = vmatpush.bf16.msra.mxu0 0
      %9244 = vmatpush.bf16.msra.mxu0 0
      %9245 = vmatpush.bf16.msra.mxu0 0
      %9246 = vmatpush.bf16.msra.mxu0 0
      %9247 = vmatpush.bf16.msra.mxu0 0
      %9248 = vmatpush.bf16.msra.mxu0 %v9218
      %9249 = vmatmul.bf16.gmra.mxu0 %v9215
      %v9250 = vpop.f32.mrf.mxu0
      %v9251 = vadd.f32 0.0, %v9250
      %v9252 = vpop.f32.mrf.mxu0
      %9253 = vdwg.mxu0
      %9254 = vmatpush.bf16.msra.mxu0 0
      %9255 = vmatpush.bf16.msra.mxu0 0
      %9256 = vmatpush.bf16.msra.mxu0 0
      %9257 = vmatpush.bf16.msra.mxu0 0
      %9258 = vmatpush.bf16.msra.mxu0 0
      %9259 = vmatpush.bf16.msra.mxu0 0
      %9260 = vmatpush.bf16.msra.mxu0 0
      %9261 = vmatpush.bf16.msra.mxu0 %v9221
      %9262 = vmatmul.bf16.gmra.mxu0 %v9215
      %v9263 = vpop.f32.mrf.mxu0
      %v9264 = vadd.f32 0.0, %v9263
      %v9265 = vpop.f32.mrf.mxu0
      %9266 = vdwg.mxu0
      %9267 = vmatpush.bf16.msra.mxu0 0
      %9268 = vmatpush.bf16.msra.mxu0 0
      %9269 = vmatpush.bf16.msra.mxu0 0
      %9270 = vmatpush.bf16.msra.mxu0 0
      %9271 = vmatpush.bf16.msra.mxu0 0
      %9272 = vmatpush.bf16.msra.mxu0 0
      %9273 = vmatpush.bf16.msra.mxu0 0
      %9274 = vmatpush.bf16.msra.mxu0 %v9224
      %9275 = vmatmul.bf16.gmra.mxu0 %v9215
      %v9276 = vpop.f32.mrf.mxu0
      %v9277 = vadd.f32 0.0, %v9276
      %v9278 = vpop.f32.mrf.mxu0
      %9279 = vdwg.mxu0
      %9280 = vmatpush.bf16.msra.mxu0 0
      %9281 = vmatpush.bf16.msra.mxu0 0
      %9282 = vmatpush.bf16.msra.mxu0 0
      %9283 = vmatpush.bf16.msra.mxu0 0
      %9284 = vmatpush.bf16.msra.mxu0 0
      %9285 = vmatpush.bf16.msra.mxu0 0
      %9286 = vmatpush.bf16.msra.mxu0 0
      %9287 = vmatpush.bf16.msra.mxu0 %v9227
      %9288 = vmatmul.bf16.gmra.mxu0 %v9215
      %v9289 = vpop.f32.mrf.mxu0
      %v9290 = vadd.f32 0.0, %v9289
      %v9291 = vpop.f32.mrf.mxu0
      %9292 = vdwg.mxu0
      %9293 = vmatpush.bf16.msra.mxu0 0
      %9294 = vmatpush.bf16.msra.mxu0 0
      %9295 = vmatpush.bf16.msra.mxu0 0
      %9296 = vmatpush.bf16.msra.mxu0 0
      %9297 = vmatpush.bf16.msra.mxu0 0
      %9298 = vmatpush.bf16.msra.mxu0 0
      %9299 = vmatpush.bf16.msra.mxu0 0
      %9300 = vmatpush.bf16.msra.mxu0 %v9230
      %9301 = vmatmul.bf16.gmra.mxu0 %v9215
      %v9302 = vpop.f32.mrf.mxu0
      %v9303 = vadd.f32 0.0, %v9302
      %v9304 = vpop.f32.mrf.mxu0
      %9305 = vdwg.mxu0
      %9306 = vmatpush.bf16.msra.mxu0 0
      %9307 = vmatpush.bf16.msra.mxu0 0
      %9308 = vmatpush.bf16.msra.mxu0 0
      %9309 = vmatpush.bf16.msra.mxu0 0
      %9310 = vmatpush.bf16.msra.mxu0 0
      %9311 = vmatpush.bf16.msra.mxu0 0
      %9312 = vmatpush.bf16.msra.mxu0 0
      %9313 = vmatpush.bf16.msra.mxu0 %v9233
      %9314 = vmatmul.bf16.gmra.mxu0 %v9215
      %v9315 = vpop.f32.mrf.mxu0
      %v9316 = vadd.f32 0.0, %v9315
      %v9317 = vpop.f32.mrf.mxu0
      %9318 = vdwg.mxu0
      %9319 = vmatpush.bf16.msra.mxu0 0
      %9320 = vmatpush.bf16.msra.mxu0 0
      %9321 = vmatpush.bf16.msra.mxu0 0
      %9322 = vmatpush.bf16.msra.mxu0 0
      %9323 = vmatpush.bf16.msra.mxu0 0
      %9324 = vmatpush.bf16.msra.mxu0 0
      %9325 = vmatpush.bf16.msra.mxu0 0
      %9326 = vmatpush.bf16.msra.mxu0 %v9236
      %9327 = vmatmul.bf16.gmra.mxu0 %v9215
      %v9328 = vpop.f32.mrf.mxu0
      %v9329 = vadd.f32 0.0, %v9328
      %v9330 = vpop.f32.mrf.mxu0
      %9331 = vdwg.mxu0
      %9332 = vmatpush.bf16.msra.mxu0 0
      %9333 = vmatpush.bf16.msra.mxu0 0
      %9334 = vmatpush.bf16.msra.mxu0 0
      %9335 = vmatpush.bf16.msra.mxu0 0
      %9336 = vmatpush.bf16.msra.mxu0 0
      %9337 = vmatpush.bf16.msra.mxu0 0
      %9338 = vmatpush.bf16.msra.mxu0 0
      %9339 = vmatpush.bf16.msra.mxu0 %v9239
      %9340 = vmatmul.bf16.gmra.mxu0 %v9215
      %v9341 = vpop.f32.mrf.mxu0
      %v9342 = vadd.f32 0.0, %v9341
      %v9343 = vpop.f32.mrf.mxu0
      %9344 = vdwg.mxu0
      %v9345 = vadd.f32 %v9166, %v9251
      %v9346 = vadd.f32 %v9167, %v9264
      %v9347 = vadd.f32 %v9168, %v9277
      %v9348 = vadd.f32 %v9169, %v9290
      %v9349 = vadd.f32 %v9170, %v9303
      %v9350 = vadd.f32 %v9171, %v9316
      %v9351 = vadd.f32 %v9172, %v9329
      %v9352 = vadd.f32 %v9173, %v9342
      %9353 = vrot.lane.b32.xlu0 %v5268, 27
      %v9354 = vpop.permute.xlu0 %9353
      %9355 = vrot.lane.b32.xlu0 %v5269, 27
      %v9356 = vpop.permute.xlu0 %9355
      %9357 = vrot.lane.b32.xlu0 %v5270, 27
      %v9358 = vpop.permute.xlu0 %9357
      %9359 = vrot.lane.b32.xlu0 %v5271, 27
      %v9360 = vpop.permute.xlu0 %9359
      %9361 = vrot.lane.b32.xlu0 %v5272, 27
      %v9362 = vpop.permute.xlu0 %9361
      %9363 = vrot.lane.b32.xlu0 %v5273, 27
      %v9364 = vpop.permute.xlu0 %9363
      %9365 = vrot.lane.b32.xlu0 %v5274, 27
      %v9366 = vpop.permute.xlu0 %9365
      %9367 = vrot.lane.b32.xlu0 %v5275, 27
      %v9368 = vpop.permute.xlu0 %9367
      %v9369 = vsel %vm4426, %v9354, %v9356
      %v9370 = vsel %vm4426, %v9356, %v9358
      %v9371 = vsel %vm4426, %v9358, %v9360
      %v9372 = vsel %vm4426, %v9360, %v9362
      %v9373 = vsel %vm4426, %v9362, %v9364
      %v9374 = vsel %vm4426, %v9364, %v9366
      %v9375 = vsel %vm4426, %v9366, %v9368
      %v9384 = vsel %vm4426, %v9368, 0.0
      %v9385 = vpack.c.bf16 %v9369, %v9369
      %v9386 = vpack.c.bf16 %v9370, %v9370
      %v9387 = vpack.c.bf16 %v9371, %v9371
      %v9388 = vpack.c.bf16 %v9372, %v9372
      %v9389 = vpack.c.bf16 %v9373, %v9373
      %v9390 = vpack.c.bf16 %v9374, %v9374
      %v9391 = vpack.c.bf16 %v9375, %v9375
      %v9392 = vpack.c.bf16 %v9384, %v9384
      %v9394 = vsel %vm387, %v281, 0
      %v9397 = vsel %vm391, %v9385, 0
      %v9400 = vsel %vm391, %v9386, 0
      %v9403 = vsel %vm391, %v9387, 0
      %v9406 = vsel %vm391, %v9388, 0
      %v9409 = vsel %vm391, %v9389, 0
      %v9412 = vsel %vm391, %v9390, 0
      %v9415 = vsel %vm391, %v9391, 0
      %v9418 = vsel %vm391, %v9392, 0
      %9420 = vmatpush.bf16.msra.mxu0 0
      %9421 = vmatpush.bf16.msra.mxu0 0
      %9422 = vmatpush.bf16.msra.mxu0 0
      %9423 = vmatpush.bf16.msra.mxu0 0
      %9424 = vmatpush.bf16.msra.mxu0 0
      %9425 = vmatpush.bf16.msra.mxu0 0
      %9426 = vmatpush.bf16.msra.mxu0 0
      %9427 = vmatpush.bf16.msra.mxu0 %v9397
      %9428 = vmatmul.bf16.gmra.mxu0 %v9394
      %v9429 = vpop.f32.mrf.mxu0
      %v9430 = vadd.f32 0.0, %v9429
      %v9431 = vpop.f32.mrf.mxu0
      %9432 = vdwg.mxu0
      %9433 = vmatpush.bf16.msra.mxu0 0
      %9434 = vmatpush.bf16.msra.mxu0 0
      %9435 = vmatpush.bf16.msra.mxu0 0
      %9436 = vmatpush.bf16.msra.mxu0 0
      %9437 = vmatpush.bf16.msra.mxu0 0
      %9438 = vmatpush.bf16.msra.mxu0 0
      %9439 = vmatpush.bf16.msra.mxu0 0
      %9440 = vmatpush.bf16.msra.mxu0 %v9400
      %9441 = vmatmul.bf16.gmra.mxu0 %v9394
      %v9442 = vpop.f32.mrf.mxu0
      %v9443 = vadd.f32 0.0, %v9442
      %v9444 = vpop.f32.mrf.mxu0
      %9445 = vdwg.mxu0
      %9446 = vmatpush.bf16.msra.mxu0 0
      %9447 = vmatpush.bf16.msra.mxu0 0
      %9448 = vmatpush.bf16.msra.mxu0 0
      %9449 = vmatpush.bf16.msra.mxu0 0
      %9450 = vmatpush.bf16.msra.mxu0 0
      %9451 = vmatpush.bf16.msra.mxu0 0
      %9452 = vmatpush.bf16.msra.mxu0 0
      %9453 = vmatpush.bf16.msra.mxu0 %v9403
      %9454 = vmatmul.bf16.gmra.mxu0 %v9394
      %v9455 = vpop.f32.mrf.mxu0
      %v9456 = vadd.f32 0.0, %v9455
      %v9457 = vpop.f32.mrf.mxu0
      %9458 = vdwg.mxu0
      %9459 = vmatpush.bf16.msra.mxu0 0
      %9460 = vmatpush.bf16.msra.mxu0 0
      %9461 = vmatpush.bf16.msra.mxu0 0
      %9462 = vmatpush.bf16.msra.mxu0 0
      %9463 = vmatpush.bf16.msra.mxu0 0
      %9464 = vmatpush.bf16.msra.mxu0 0
      %9465 = vmatpush.bf16.msra.mxu0 0
      %9466 = vmatpush.bf16.msra.mxu0 %v9406
      %9467 = vmatmul.bf16.gmra.mxu0 %v9394
      %v9468 = vpop.f32.mrf.mxu0
      %v9469 = vadd.f32 0.0, %v9468
      %v9470 = vpop.f32.mrf.mxu0
      %9471 = vdwg.mxu0
      %9472 = vmatpush.bf16.msra.mxu0 0
      %9473 = vmatpush.bf16.msra.mxu0 0
      %9474 = vmatpush.bf16.msra.mxu0 0
      %9475 = vmatpush.bf16.msra.mxu0 0
      %9476 = vmatpush.bf16.msra.mxu0 0
      %9477 = vmatpush.bf16.msra.mxu0 0
      %9478 = vmatpush.bf16.msra.mxu0 0
      %9479 = vmatpush.bf16.msra.mxu0 %v9409
      %9480 = vmatmul.bf16.gmra.mxu0 %v9394
      %v9481 = vpop.f32.mrf.mxu0
      %v9482 = vadd.f32 0.0, %v9481
      %v9483 = vpop.f32.mrf.mxu0
      %9484 = vdwg.mxu0
      %9485 = vmatpush.bf16.msra.mxu0 0
      %9486 = vmatpush.bf16.msra.mxu0 0
      %9487 = vmatpush.bf16.msra.mxu0 0
      %9488 = vmatpush.bf16.msra.mxu0 0
      %9489 = vmatpush.bf16.msra.mxu0 0
      %9490 = vmatpush.bf16.msra.mxu0 0
      %9491 = vmatpush.bf16.msra.mxu0 0
      %9492 = vmatpush.bf16.msra.mxu0 %v9412
      %9493 = vmatmul.bf16.gmra.mxu0 %v9394
      %v9494 = vpop.f32.mrf.mxu0
      %v9495 = vadd.f32 0.0, %v9494
      %v9496 = vpop.f32.mrf.mxu0
      %9497 = vdwg.mxu0
      %9498 = vmatpush.bf16.msra.mxu0 0
      %9499 = vmatpush.bf16.msra.mxu0 0
      %9500 = vmatpush.bf16.msra.mxu0 0
      %9501 = vmatpush.bf16.msra.mxu0 0
      %9502 = vmatpush.bf16.msra.mxu0 0
      %9503 = vmatpush.bf16.msra.mxu0 0
      %9504 = vmatpush.bf16.msra.mxu0 0
      %9505 = vmatpush.bf16.msra.mxu0 %v9415
      %9506 = vmatmul.bf16.gmra.mxu0 %v9394
      %v9507 = vpop.f32.mrf.mxu0
      %v9508 = vadd.f32 0.0, %v9507
      %v9509 = vpop.f32.mrf.mxu0
      %9510 = vdwg.mxu0
      %9511 = vmatpush.bf16.msra.mxu0 0
      %9512 = vmatpush.bf16.msra.mxu0 0
      %9513 = vmatpush.bf16.msra.mxu0 0
      %9514 = vmatpush.bf16.msra.mxu0 0
      %9515 = vmatpush.bf16.msra.mxu0 0
      %9516 = vmatpush.bf16.msra.mxu0 0
      %9517 = vmatpush.bf16.msra.mxu0 0
      %9518 = vmatpush.bf16.msra.mxu0 %v9418
      %9519 = vmatmul.bf16.gmra.mxu0 %v9394
      %v9520 = vpop.f32.mrf.mxu0
      %v9521 = vadd.f32 0.0, %v9520
      %v9522 = vpop.f32.mrf.mxu0
      %9523 = vdwg.mxu0
      %v9524 = vadd.f32 %v9345, %v9430
      %v9525 = vadd.f32 %v9346, %v9443
      %v9526 = vadd.f32 %v9347, %v9456
      %v9527 = vadd.f32 %v9348, %v9469
      %v9528 = vadd.f32 %v9349, %v9482
      %v9529 = vadd.f32 %v9350, %v9495
      %v9530 = vadd.f32 %v9351, %v9508
      %v9531 = vadd.f32 %v9352, %v9521
      %9532 = vrot.lane.b32.xlu0 %v5268, 19
      %v9533 = vpop.permute.xlu0 %9532
      %9534 = vrot.lane.b32.xlu0 %v5269, 19
      %v9535 = vpop.permute.xlu0 %9534
      %9536 = vrot.lane.b32.xlu0 %v5270, 19
      %v9537 = vpop.permute.xlu0 %9536
      %9538 = vrot.lane.b32.xlu0 %v5271, 19
      %v9539 = vpop.permute.xlu0 %9538
      %9540 = vrot.lane.b32.xlu0 %v5272, 19
      %v9541 = vpop.permute.xlu0 %9540
      %9542 = vrot.lane.b32.xlu0 %v5273, 19
      %v9543 = vpop.permute.xlu0 %9542
      %9544 = vrot.lane.b32.xlu0 %v5274, 19
      %v9545 = vpop.permute.xlu0 %9544
      %9546 = vrot.lane.b32.xlu0 %v5275, 19
      %v9547 = vpop.permute.xlu0 %9546
      %v9548 = vsel %vm4606, %v9533, %v9535
      %v9549 = vsel %vm4606, %v9535, %v9537
      %v9550 = vsel %vm4606, %v9537, %v9539
      %v9551 = vsel %vm4606, %v9539, %v9541
      %v9552 = vsel %vm4606, %v9541, %v9543
      %v9553 = vsel %vm4606, %v9543, %v9545
      %v9554 = vsel %vm4606, %v9545, %v9547
      %v9563 = vsel %vm4606, %v9547, 0.0
      %v9564 = vpack.c.bf16 %v9548, %v9548
      %v9565 = vpack.c.bf16 %v9549, %v9549
      %v9566 = vpack.c.bf16 %v9550, %v9550
      %v9567 = vpack.c.bf16 %v9551, %v9551
      %v9568 = vpack.c.bf16 %v9552, %v9552
      %v9569 = vpack.c.bf16 %v9553, %v9553
      %v9570 = vpack.c.bf16 %v9554, %v9554
      %v9571 = vpack.c.bf16 %v9563, %v9563
      %v9573 = vsel %vm387, %v282, 0
      %v9576 = vsel %vm391, %v9564, 0
      %v9579 = vsel %vm391, %v9565, 0
      %v9582 = vsel %vm391, %v9566, 0
      %v9585 = vsel %vm391, %v9567, 0
      %v9588 = vsel %vm391, %v9568, 0
      %v9591 = vsel %vm391, %v9569, 0
      %v9594 = vsel %vm391, %v9570, 0
      %v9597 = vsel %vm391, %v9571, 0
      %9599 = vmatpush.bf16.msra.mxu0 0
      %9600 = vmatpush.bf16.msra.mxu0 0
      %9601 = vmatpush.bf16.msra.mxu0 0
      %9602 = vmatpush.bf16.msra.mxu0 0
      %9603 = vmatpush.bf16.msra.mxu0 0
      %9604 = vmatpush.bf16.msra.mxu0 0
      %9605 = vmatpush.bf16.msra.mxu0 0
      %9606 = vmatpush.bf16.msra.mxu0 %v9576
      %9607 = vmatmul.bf16.gmra.mxu0 %v9573
      %v9608 = vpop.f32.mrf.mxu0
      %v9609 = vadd.f32 0.0, %v9608
      %v9610 = vpop.f32.mrf.mxu0
      %9611 = vdwg.mxu0
      %9612 = vmatpush.bf16.msra.mxu0 0
      %9613 = vmatpush.bf16.msra.mxu0 0
      %9614 = vmatpush.bf16.msra.mxu0 0
      %9615 = vmatpush.bf16.msra.mxu0 0
      %9616 = vmatpush.bf16.msra.mxu0 0
      %9617 = vmatpush.bf16.msra.mxu0 0
      %9618 = vmatpush.bf16.msra.mxu0 0
      %9619 = vmatpush.bf16.msra.mxu0 %v9579
      %9620 = vmatmul.bf16.gmra.mxu0 %v9573
      %v9621 = vpop.f32.mrf.mxu0
      %v9622 = vadd.f32 0.0, %v9621
      %v9623 = vpop.f32.mrf.mxu0
      %9624 = vdwg.mxu0
      %9625 = vmatpush.bf16.msra.mxu0 0
      %9626 = vmatpush.bf16.msra.mxu0 0
      %9627 = vmatpush.bf16.msra.mxu0 0
      %9628 = vmatpush.bf16.msra.mxu0 0
      %9629 = vmatpush.bf16.msra.mxu0 0
      %9630 = vmatpush.bf16.msra.mxu0 0
      %9631 = vmatpush.bf16.msra.mxu0 0
      %9632 = vmatpush.bf16.msra.mxu0 %v9582
      %9633 = vmatmul.bf16.gmra.mxu0 %v9573
      %v9634 = vpop.f32.mrf.mxu0
      %v9635 = vadd.f32 0.0, %v9634
      %v9636 = vpop.f32.mrf.mxu0
      %9637 = vdwg.mxu0
      %9638 = vmatpush.bf16.msra.mxu0 0
      %9639 = vmatpush.bf16.msra.mxu0 0
      %9640 = vmatpush.bf16.msra.mxu0 0
      %9641 = vmatpush.bf16.msra.mxu0 0
      %9642 = vmatpush.bf16.msra.mxu0 0
      %9643 = vmatpush.bf16.msra.mxu0 0
      %9644 = vmatpush.bf16.msra.mxu0 0
      %9645 = vmatpush.bf16.msra.mxu0 %v9585
      %9646 = vmatmul.bf16.gmra.mxu0 %v9573
      %v9647 = vpop.f32.mrf.mxu0
      %v9648 = vadd.f32 0.0, %v9647
      %v9649 = vpop.f32.mrf.mxu0
      %9650 = vdwg.mxu0
      %9651 = vmatpush.bf16.msra.mxu0 0
      %9652 = vmatpush.bf16.msra.mxu0 0
      %9653 = vmatpush.bf16.msra.mxu0 0
      %9654 = vmatpush.bf16.msra.mxu0 0
      %9655 = vmatpush.bf16.msra.mxu0 0
      %9656 = vmatpush.bf16.msra.mxu0 0
      %9657 = vmatpush.bf16.msra.mxu0 0
      %9658 = vmatpush.bf16.msra.mxu0 %v9588
      %9659 = vmatmul.bf16.gmra.mxu0 %v9573
      %v9660 = vpop.f32.mrf.mxu0
      %v9661 = vadd.f32 0.0, %v9660
      %v9662 = vpop.f32.mrf.mxu0
      %9663 = vdwg.mxu0
      %9664 = vmatpush.bf16.msra.mxu0 0
      %9665 = vmatpush.bf16.msra.mxu0 0
      %9666 = vmatpush.bf16.msra.mxu0 0
      %9667 = vmatpush.bf16.msra.mxu0 0
      %9668 = vmatpush.bf16.msra.mxu0 0
      %9669 = vmatpush.bf16.msra.mxu0 0
      %9670 = vmatpush.bf16.msra.mxu0 0
      %9671 = vmatpush.bf16.msra.mxu0 %v9591
      %9672 = vmatmul.bf16.gmra.mxu0 %v9573
      %v9673 = vpop.f32.mrf.mxu0
      %v9674 = vadd.f32 0.0, %v9673
      %v9675 = vpop.f32.mrf.mxu0
      %9676 = vdwg.mxu0
      %9677 = vmatpush.bf16.msra.mxu0 0
      %9678 = vmatpush.bf16.msra.mxu0 0
      %9679 = vmatpush.bf16.msra.mxu0 0
      %9680 = vmatpush.bf16.msra.mxu0 0
      %9681 = vmatpush.bf16.msra.mxu0 0
      %9682 = vmatpush.bf16.msra.mxu0 0
      %9683 = vmatpush.bf16.msra.mxu0 0
      %9684 = vmatpush.bf16.msra.mxu0 %v9594
      %9685 = vmatmul.bf16.gmra.mxu0 %v9573
      %v9686 = vpop.f32.mrf.mxu0
      %v9687 = vadd.f32 0.0, %v9686
      %v9688 = vpop.f32.mrf.mxu0
      %9689 = vdwg.mxu0
      %9690 = vmatpush.bf16.msra.mxu0 0
      %9691 = vmatpush.bf16.msra.mxu0 0
      %9692 = vmatpush.bf16.msra.mxu0 0
      %9693 = vmatpush.bf16.msra.mxu0 0
      %9694 = vmatpush.bf16.msra.mxu0 0
      %9695 = vmatpush.bf16.msra.mxu0 0
      %9696 = vmatpush.bf16.msra.mxu0 0
      %9697 = vmatpush.bf16.msra.mxu0 %v9597
      %9698 = vmatmul.bf16.gmra.mxu0 %v9573
      %v9699 = vpop.f32.mrf.mxu0
      %v9700 = vadd.f32 0.0, %v9699
      %v9701 = vpop.f32.mrf.mxu0
      %9702 = vdwg.mxu0
      %v9703 = vadd.f32 %v9524, %v9609
      %v9704 = vadd.f32 %v9525, %v9622
      %v9705 = vadd.f32 %v9526, %v9635
      %v9706 = vadd.f32 %v9527, %v9648
      %v9707 = vadd.f32 %v9528, %v9661
      %v9708 = vadd.f32 %v9529, %v9674
      %v9709 = vadd.f32 %v9530, %v9687
      %v9710 = vadd.f32 %v9531, %v9700
      %9711 = vrot.lane.b32.xlu0 %v5268, 18
      %v9712 = vpop.permute.xlu0 %9711
      %9713 = vrot.lane.b32.xlu0 %v5269, 18
      %v9714 = vpop.permute.xlu0 %9713
      %9715 = vrot.lane.b32.xlu0 %v5270, 18
      %v9716 = vpop.permute.xlu0 %9715
      %9717 = vrot.lane.b32.xlu0 %v5271, 18
      %v9718 = vpop.permute.xlu0 %9717
      %9719 = vrot.lane.b32.xlu0 %v5272, 18
      %v9720 = vpop.permute.xlu0 %9719
      %9721 = vrot.lane.b32.xlu0 %v5273, 18
      %v9722 = vpop.permute.xlu0 %9721
      %9723 = vrot.lane.b32.xlu0 %v5274, 18
      %v9724 = vpop.permute.xlu0 %9723
      %9725 = vrot.lane.b32.xlu0 %v5275, 18
      %v9726 = vpop.permute.xlu0 %9725
      %v9727 = vsel %vm4786, %v9712, %v9714
      %v9728 = vsel %vm4786, %v9714, %v9716
      %v9729 = vsel %vm4786, %v9716, %v9718
      %v9730 = vsel %vm4786, %v9718, %v9720
      %v9731 = vsel %vm4786, %v9720, %v9722
      %v9732 = vsel %vm4786, %v9722, %v9724
      %v9733 = vsel %vm4786, %v9724, %v9726
      %v9742 = vsel %vm4786, %v9726, 0.0
      %v9743 = vpack.c.bf16 %v9727, %v9727
      %v9744 = vpack.c.bf16 %v9728, %v9728
      %v9745 = vpack.c.bf16 %v9729, %v9729
      %v9746 = vpack.c.bf16 %v9730, %v9730
      %v9747 = vpack.c.bf16 %v9731, %v9731
      %v9748 = vpack.c.bf16 %v9732, %v9732
      %v9749 = vpack.c.bf16 %v9733, %v9733
      %v9750 = vpack.c.bf16 %v9742, %v9742
      %v9752 = vsel %vm387, %v283, 0
      %v9755 = vsel %vm391, %v9743, 0
      %v9758 = vsel %vm391, %v9744, 0
      %v9761 = vsel %vm391, %v9745, 0
      %v9764 = vsel %vm391, %v9746, 0
      %v9767 = vsel %vm391, %v9747, 0
      %v9770 = vsel %vm391, %v9748, 0
      %v9773 = vsel %vm391, %v9749, 0
      %v9776 = vsel %vm391, %v9750, 0
      %9778 = vmatpush.bf16.msra.mxu0 0
      %9779 = vmatpush.bf16.msra.mxu0 0
      %9780 = vmatpush.bf16.msra.mxu0 0
      %9781 = vmatpush.bf16.msra.mxu0 0
      %9782 = vmatpush.bf16.msra.mxu0 0
      %9783 = vmatpush.bf16.msra.mxu0 0
      %9784 = vmatpush.bf16.msra.mxu0 0
      %9785 = vmatpush.bf16.msra.mxu0 %v9755
      %9786 = vmatmul.bf16.gmra.mxu0 %v9752
      %v9787 = vpop.f32.mrf.mxu0
      %v9788 = vadd.f32 0.0, %v9787
      %v9789 = vpop.f32.mrf.mxu0
      %9790 = vdwg.mxu0
      %9791 = vmatpush.bf16.msra.mxu0 0
      %9792 = vmatpush.bf16.msra.mxu0 0
      %9793 = vmatpush.bf16.msra.mxu0 0
      %9794 = vmatpush.bf16.msra.mxu0 0
      %9795 = vmatpush.bf16.msra.mxu0 0
      %9796 = vmatpush.bf16.msra.mxu0 0
      %9797 = vmatpush.bf16.msra.mxu0 0
      %9798 = vmatpush.bf16.msra.mxu0 %v9758
      %9799 = vmatmul.bf16.gmra.mxu0 %v9752
      %v9800 = vpop.f32.mrf.mxu0
      %v9801 = vadd.f32 0.0, %v9800
      %v9802 = vpop.f32.mrf.mxu0
      %9803 = vdwg.mxu0
      %9804 = vmatpush.bf16.msra.mxu0 0
      %9805 = vmatpush.bf16.msra.mxu0 0
      %9806 = vmatpush.bf16.msra.mxu0 0
      %9807 = vmatpush.bf16.msra.mxu0 0
      %9808 = vmatpush.bf16.msra.mxu0 0
      %9809 = vmatpush.bf16.msra.mxu0 0
      %9810 = vmatpush.bf16.msra.mxu0 0
      %9811 = vmatpush.bf16.msra.mxu0 %v9761
      %9812 = vmatmul.bf16.gmra.mxu0 %v9752
      %v9813 = vpop.f32.mrf.mxu0
      %v9814 = vadd.f32 0.0, %v9813
      %v9815 = vpop.f32.mrf.mxu0
      %9816 = vdwg.mxu0
      %9817 = vmatpush.bf16.msra.mxu0 0
      %9818 = vmatpush.bf16.msra.mxu0 0
      %9819 = vmatpush.bf16.msra.mxu0 0
      %9820 = vmatpush.bf16.msra.mxu0 0
      %9821 = vmatpush.bf16.msra.mxu0 0
      %9822 = vmatpush.bf16.msra.mxu0 0
      %9823 = vmatpush.bf16.msra.mxu0 0
      %9824 = vmatpush.bf16.msra.mxu0 %v9764
      %9825 = vmatmul.bf16.gmra.mxu0 %v9752
      %v9826 = vpop.f32.mrf.mxu0
      %v9827 = vadd.f32 0.0, %v9826
      %v9828 = vpop.f32.mrf.mxu0
      %9829 = vdwg.mxu0
      %9830 = vmatpush.bf16.msra.mxu0 0
      %9831 = vmatpush.bf16.msra.mxu0 0
      %9832 = vmatpush.bf16.msra.mxu0 0
      %9833 = vmatpush.bf16.msra.mxu0 0
      %9834 = vmatpush.bf16.msra.mxu0 0
      %9835 = vmatpush.bf16.msra.mxu0 0
      %9836 = vmatpush.bf16.msra.mxu0 0
      %9837 = vmatpush.bf16.msra.mxu0 %v9767
      %9838 = vmatmul.bf16.gmra.mxu0 %v9752
      %v9839 = vpop.f32.mrf.mxu0
      %v9840 = vadd.f32 0.0, %v9839
      %v9841 = vpop.f32.mrf.mxu0
      %9842 = vdwg.mxu0
      %9843 = vmatpush.bf16.msra.mxu0 0
      %9844 = vmatpush.bf16.msra.mxu0 0
      %9845 = vmatpush.bf16.msra.mxu0 0
      %9846 = vmatpush.bf16.msra.mxu0 0
      %9847 = vmatpush.bf16.msra.mxu0 0
      %9848 = vmatpush.bf16.msra.mxu0 0
      %9849 = vmatpush.bf16.msra.mxu0 0
      %9850 = vmatpush.bf16.msra.mxu0 %v9770
      %9851 = vmatmul.bf16.gmra.mxu0 %v9752
      %v9852 = vpop.f32.mrf.mxu0
      %v9853 = vadd.f32 0.0, %v9852
      %v9854 = vpop.f32.mrf.mxu0
      %9855 = vdwg.mxu0
      %9856 = vmatpush.bf16.msra.mxu0 0
      %9857 = vmatpush.bf16.msra.mxu0 0
      %9858 = vmatpush.bf16.msra.mxu0 0
      %9859 = vmatpush.bf16.msra.mxu0 0
      %9860 = vmatpush.bf16.msra.mxu0 0
      %9861 = vmatpush.bf16.msra.mxu0 0
      %9862 = vmatpush.bf16.msra.mxu0 0
      %9863 = vmatpush.bf16.msra.mxu0 %v9773
      %9864 = vmatmul.bf16.gmra.mxu0 %v9752
      %v9865 = vpop.f32.mrf.mxu0
      %v9866 = vadd.f32 0.0, %v9865
      %v9867 = vpop.f32.mrf.mxu0
      %9868 = vdwg.mxu0
      %9869 = vmatpush.bf16.msra.mxu0 0
      %9870 = vmatpush.bf16.msra.mxu0 0
      %9871 = vmatpush.bf16.msra.mxu0 0
      %9872 = vmatpush.bf16.msra.mxu0 0
      %9873 = vmatpush.bf16.msra.mxu0 0
      %9874 = vmatpush.bf16.msra.mxu0 0
      %9875 = vmatpush.bf16.msra.mxu0 0
      %9876 = vmatpush.bf16.msra.mxu0 %v9776
      %9877 = vmatmul.bf16.gmra.mxu0 %v9752
      %v9878 = vpop.f32.mrf.mxu0
      %v9879 = vadd.f32 0.0, %v9878
      %v9880 = vpop.f32.mrf.mxu0
      %9881 = vdwg.mxu0
      %v9882 = vadd.f32 %v9703, %v9788
      %v9883 = vadd.f32 %v9704, %v9801
      %v9884 = vadd.f32 %v9705, %v9814
      %v9885 = vadd.f32 %v9706, %v9827
      %v9886 = vadd.f32 %v9707, %v9840
      %v9887 = vadd.f32 %v9708, %v9853
      %v9888 = vadd.f32 %v9709, %v9866
      %v9889 = vadd.f32 %v9710, %v9879
      %9890 = vrot.lane.b32.xlu0 %v5268, 17
      %v9891 = vpop.permute.xlu0 %9890
      %9892 = vrot.lane.b32.xlu0 %v5269, 17
      %v9893 = vpop.permute.xlu0 %9892
      %9894 = vrot.lane.b32.xlu0 %v5270, 17
      %v9895 = vpop.permute.xlu0 %9894
      %9896 = vrot.lane.b32.xlu0 %v5271, 17
      %v9897 = vpop.permute.xlu0 %9896
      %9898 = vrot.lane.b32.xlu0 %v5272, 17
      %v9899 = vpop.permute.xlu0 %9898
      %9900 = vrot.lane.b32.xlu0 %v5273, 17
      %v9901 = vpop.permute.xlu0 %9900
      %9902 = vrot.lane.b32.xlu0 %v5274, 17
      %v9903 = vpop.permute.xlu0 %9902
      %9904 = vrot.lane.b32.xlu0 %v5275, 17
      %v9905 = vpop.permute.xlu0 %9904
      %v9906 = vsel %vm4966, %v9891, %v9893
      %v9907 = vsel %vm4966, %v9893, %v9895
      %v9908 = vsel %vm4966, %v9895, %v9897
      %v9909 = vsel %vm4966, %v9897, %v9899
      %v9910 = vsel %vm4966, %v9899, %v9901
      %v9911 = vsel %vm4966, %v9901, %v9903
      %v9912 = vsel %vm4966, %v9903, %v9905
      %v9921 = vsel %vm4966, %v9905, 0.0
      %v9922 = vpack.c.bf16 %v9906, %v9906
      %v9923 = vpack.c.bf16 %v9907, %v9907
      %v9924 = vpack.c.bf16 %v9908, %v9908
      %v9925 = vpack.c.bf16 %v9909, %v9909
      %v9926 = vpack.c.bf16 %v9910, %v9910
      %v9927 = vpack.c.bf16 %v9911, %v9911
      %v9928 = vpack.c.bf16 %v9912, %v9912
      %v9929 = vpack.c.bf16 %v9921, %v9921
      %v9931 = vsel %vm387, %v284, 0
      %v9934 = vsel %vm391, %v9922, 0
      %v9937 = vsel %vm391, %v9923, 0
      %v9940 = vsel %vm391, %v9924, 0
      %v9943 = vsel %vm391, %v9925, 0
      %v9946 = vsel %vm391, %v9926, 0
      %v9949 = vsel %vm391, %v9927, 0
      %v9952 = vsel %vm391, %v9928, 0
      %v9955 = vsel %vm391, %v9929, 0
      %9957 = vmatpush.bf16.msra.mxu0 0
      %9958 = vmatpush.bf16.msra.mxu0 0
      %9959 = vmatpush.bf16.msra.mxu0 0
      %9960 = vmatpush.bf16.msra.mxu0 0
      %9961 = vmatpush.bf16.msra.mxu0 0
      %9962 = vmatpush.bf16.msra.mxu0 0
      %9963 = vmatpush.bf16.msra.mxu0 0
      %9964 = vmatpush.bf16.msra.mxu0 %v9934
      %9965 = vmatmul.bf16.gmra.mxu0 %v9931
      %v9966 = vpop.f32.mrf.mxu0
      %v9967 = vadd.f32 0.0, %v9966
      %v9968 = vpop.f32.mrf.mxu0
      %9969 = vdwg.mxu0
      %9970 = vmatpush.bf16.msra.mxu0 0
      %9971 = vmatpush.bf16.msra.mxu0 0
      %9972 = vmatpush.bf16.msra.mxu0 0
      %9973 = vmatpush.bf16.msra.mxu0 0
      %9974 = vmatpush.bf16.msra.mxu0 0
      %9975 = vmatpush.bf16.msra.mxu0 0
      %9976 = vmatpush.bf16.msra.mxu0 0
      %9977 = vmatpush.bf16.msra.mxu0 %v9937
      %9978 = vmatmul.bf16.gmra.mxu0 %v9931
      %v9979 = vpop.f32.mrf.mxu0
      %v9980 = vadd.f32 0.0, %v9979
      %v9981 = vpop.f32.mrf.mxu0
      %9982 = vdwg.mxu0
      %9983 = vmatpush.bf16.msra.mxu0 0
      %9984 = vmatpush.bf16.msra.mxu0 0
      %9985 = vmatpush.bf16.msra.mxu0 0
      %9986 = vmatpush.bf16.msra.mxu0 0
      %9987 = vmatpush.bf16.msra.mxu0 0
      %9988 = vmatpush.bf16.msra.mxu0 0
      %9989 = vmatpush.bf16.msra.mxu0 0
      %9990 = vmatpush.bf16.msra.mxu0 %v9940
      %9991 = vmatmul.bf16.gmra.mxu0 %v9931
      %v9992 = vpop.f32.mrf.mxu0
      %v9993 = vadd.f32 0.0, %v9992
      %v9994 = vpop.f32.mrf.mxu0
      %9995 = vdwg.mxu0
      %9996 = vmatpush.bf16.msra.mxu0 0
      %9997 = vmatpush.bf16.msra.mxu0 0
      %9998 = vmatpush.bf16.msra.mxu0 0
      %9999 = vmatpush.bf16.msra.mxu0 0
      %10000 = vmatpush.bf16.msra.mxu0 0
      %10001 = vmatpush.bf16.msra.mxu0 0
      %10002 = vmatpush.bf16.msra.mxu0 0
      %10003 = vmatpush.bf16.msra.mxu0 %v9943
      %10004 = vmatmul.bf16.gmra.mxu0 %v9931
      %v10005 = vpop.f32.mrf.mxu0
      %v10006 = vadd.f32 0.0, %v10005
      %v10007 = vpop.f32.mrf.mxu0
      %10008 = vdwg.mxu0
      %10009 = vmatpush.bf16.msra.mxu0 0
      %10010 = vmatpush.bf16.msra.mxu0 0
      %10011 = vmatpush.bf16.msra.mxu0 0
      %10012 = vmatpush.bf16.msra.mxu0 0
      %10013 = vmatpush.bf16.msra.mxu0 0
      %10014 = vmatpush.bf16.msra.mxu0 0
      %10015 = vmatpush.bf16.msra.mxu0 0
      %10016 = vmatpush.bf16.msra.mxu0 %v9946
      %10017 = vmatmul.bf16.gmra.mxu0 %v9931
      %v10018 = vpop.f32.mrf.mxu0
      %v10019 = vadd.f32 0.0, %v10018
      %v10020 = vpop.f32.mrf.mxu0
      %10021 = vdwg.mxu0
      %10022 = vmatpush.bf16.msra.mxu0 0
      %10023 = vmatpush.bf16.msra.mxu0 0
      %10024 = vmatpush.bf16.msra.mxu0 0
      %10025 = vmatpush.bf16.msra.mxu0 0
      %10026 = vmatpush.bf16.msra.mxu0 0
      %10027 = vmatpush.bf16.msra.mxu0 0
      %10028 = vmatpush.bf16.msra.mxu0 0
      %10029 = vmatpush.bf16.msra.mxu0 %v9949
      %10030 = vmatmul.bf16.gmra.mxu0 %v9931
      %v10031 = vpop.f32.mrf.mxu0
      %v10032 = vadd.f32 0.0, %v10031
      %v10033 = vpop.f32.mrf.mxu0
      %10034 = vdwg.mxu0
      %10035 = vmatpush.bf16.msra.mxu0 0
      %10036 = vmatpush.bf16.msra.mxu0 0
      %10037 = vmatpush.bf16.msra.mxu0 0
      %10038 = vmatpush.bf16.msra.mxu0 0
      %10039 = vmatpush.bf16.msra.mxu0 0
      %10040 = vmatpush.bf16.msra.mxu0 0
      %10041 = vmatpush.bf16.msra.mxu0 0
      %10042 = vmatpush.bf16.msra.mxu0 %v9952
      %10043 = vmatmul.bf16.gmra.mxu0 %v9931
      %v10044 = vpop.f32.mrf.mxu0
      %v10045 = vadd.f32 0.0, %v10044
      %v10046 = vpop.f32.mrf.mxu0
      %10047 = vdwg.mxu0
      %10048 = vmatpush.bf16.msra.mxu0 0
      %10049 = vmatpush.bf16.msra.mxu0 0
      %10050 = vmatpush.bf16.msra.mxu0 0
      %10051 = vmatpush.bf16.msra.mxu0 0
      %10052 = vmatpush.bf16.msra.mxu0 0
      %10053 = vmatpush.bf16.msra.mxu0 0
      %10054 = vmatpush.bf16.msra.mxu0 0
      %10055 = vmatpush.bf16.msra.mxu0 %v9955
      %10056 = vmatmul.bf16.gmra.mxu0 %v9931
      %v10057 = vpop.f32.mrf.mxu0
      %v10058 = vadd.f32 0.0, %v10057
      %v10059 = vpop.f32.mrf.mxu0
      %10060 = vdwg.mxu0
      %v10061 = vadd.f32 %v9882, %v9967
      %v10062 = vadd.f32 %v9883, %v9980
      %v10063 = vadd.f32 %v9884, %v9993
      %v10064 = vadd.f32 %v9885, %v10006
      %v10065 = vadd.f32 %v9886, %v10019
      %v10066 = vadd.f32 %v9887, %v10032
      %v10067 = vadd.f32 %v9888, %v10045
      %v10068 = vadd.f32 %v9889, %v10058
      %v10069 = vmul.f32 %v10061, %v5131
      %v10070 = vmul.f32 %v10062, %v5132
      %v10071 = vmul.f32 %v10063, %v5133
      %v10072 = vmul.f32 %v10064, %v5134
      %v10073 = vmul.f32 %v10065, %v5135
      %v10074 = vmul.f32 %v10066, %v5136
      %v10075 = vmul.f32 %v10067, %v5137
      %v10076 = vmul.f32 %v10068, %v5138
      %v10077 = vadd.f32 %v10069, %v10070
      %v10078 = vadd.f32 %v10077, %v10071
      %v10079 = vadd.f32 %v10078, %v10072
      %v10080 = vadd.f32 %v10079, %v10073
      %v10081 = vadd.f32 %v10080, %v10074
      %v10082 = vadd.f32 %v10081, %v10075
      %v10083 = vadd.f32 %v10082, %v10076
      %10084 = vadd.xlane.f32.xlu0 %v10083
      %v10085 = vpop.xlane.xlu0 %10084
      %v10086 = vmul.f32 %v10085, 0.001953125
      %v10087 = vsub.f32 %v10061, %v10086
      %v10088 = vsub.f32 %v10062, %v10086
      %v10089 = vsub.f32 %v10063, %v10086
      %v10090 = vsub.f32 %v10064, %v10086
      %v10091 = vsub.f32 %v10065, %v10086
      %v10092 = vsub.f32 %v10066, %v10086
      %v10093 = vsub.f32 %v10067, %v10086
      %v10094 = vsub.f32 %v10068, %v10086
      %v10095 = vmul.f32 %v10087, %v10087
      %v10096 = vmul.f32 %v10088, %v10088
      %v10097 = vmul.f32 %v10089, %v10089
      %v10098 = vmul.f32 %v10090, %v10090
      %v10099 = vmul.f32 %v10091, %v10091
      %v10100 = vmul.f32 %v10092, %v10092
      %v10101 = vmul.f32 %v10093, %v10093
      %v10102 = vmul.f32 %v10094, %v10094
      %v10103 = vmul.f32 %v10095, %v5131
      %v10104 = vmul.f32 %v10096, %v5132
      %v10105 = vmul.f32 %v10097, %v5133
      %v10106 = vmul.f32 %v10098, %v5134
      %v10107 = vmul.f32 %v10099, %v5135
      %v10108 = vmul.f32 %v10100, %v5136
      %v10109 = vmul.f32 %v10101, %v5137
      %v10110 = vmul.f32 %v10102, %v5138
      %v10111 = vadd.f32 %v10103, %v10104
      %v10112 = vadd.f32 %v10111, %v10105
      %v10113 = vadd.f32 %v10112, %v10106
      %v10114 = vadd.f32 %v10113, %v10107
      %v10115 = vadd.f32 %v10114, %v10108
      %v10116 = vadd.f32 %v10115, %v10109
      %v10117 = vadd.f32 %v10116, %v10110
      %10118 = vadd.xlane.f32.xlu0 %v10117
      %v10119 = vpop.xlane.xlu0 %10118
      %v10120 = vmul.f32 %v10119, 0.001953125
      %v10121 = vadd.f32 %v10120, 1e-05
      %v10122 = vrsqrt.pop %v10121
      %v10123 = vmul.f32 %v10122, %v10121
      %v10124 = vmul.f32 %v10123, %v10122
      %v10125 = vmul.f32 0.5, %v10124
      %v10126 = vsub.f32 1.5, %v10125
      %v10127 = vmul.f32 %v10122, %v10126
      %vm10128 = vweird.f32 %v10121
      %vm10129 = vweird.f32 %v10122
      %vm10130 = vmor %vm10128, %vm10129
      %v10131 = vsel %vm10130, %v10122, %v10127
      %v10132 = vmul.f32 %v10087, %v10131
      %v10133 = vmul.f32 %v10088, %v10131
      %v10134 = vmul.f32 %v10089, %v10131
      %v10135 = vmul.f32 %v10090, %v10131
      %v10136 = vmul.f32 %v10091, %v10131
      %v10137 = vmul.f32 %v10092, %v10131
      %v10138 = vmul.f32 %v10093, %v10131
      %v10139 = vmul.f32 %v10094, %v10131
      %10141 = vset.pattern.permute.xlu0 0
      %10142 = vperm.xlu0 %10141, %v229
      %v10143 = vpop.permute.xlu0 %10142
      %v10145 = vmul.f32 %v10132, %v10143
      %v10146 = vmul.f32 %v10133, %v10143
      %v10147 = vmul.f32 %v10134, %v10143
      %v10148 = vmul.f32 %v10135, %v10143
      %v10149 = vmul.f32 %v10136, %v10143
      %v10150 = vmul.f32 %v10137, %v10143
      %v10151 = vmul.f32 %v10138, %v10143
      %v10152 = vmul.f32 %v10139, %v10143
      %10154 = vset.pattern.permute.xlu0 0
      %10155 = vperm.xlu0 %10154, %v230
      %v10156 = vpop.permute.xlu0 %10155
      %v10158 = vadd.f32 %v10145, %v10156
      %v10159 = vadd.f32 %v10146, %v10156
      %v10160 = vadd.f32 %v10147, %v10156
      %v10161 = vadd.f32 %v10148, %v10156
      %v10162 = vadd.f32 %v10149, %v10156
      %v10163 = vadd.f32 %v10150, %v10156
      %v10164 = vadd.f32 %v10151, %v10156
      %v10165 = vadd.f32 %v10152, %v10156
      %vm10166 = vcmp.gt.f32.partialorder %v10158, 0.0
      %vm10167 = vcmp.gt.f32.partialorder %v10159, 0.0
      %vm10168 = vcmp.gt.f32.partialorder %v10160, 0.0
      %vm10169 = vcmp.gt.f32.partialorder %v10161, 0.0
      %vm10170 = vcmp.gt.f32.partialorder %v10162, 0.0
      %vm10171 = vcmp.gt.f32.partialorder %v10163, 0.0
      %vm10172 = vcmp.gt.f32.partialorder %v10164, 0.0
      %vm10173 = vcmp.gt.f32.partialorder %v10165, 0.0
      %v10174 = vmul.f32 %v10158, 0.01
      %v10175 = vmul.f32 %v10159, 0.01
      %v10176 = vmul.f32 %v10160, 0.01
      %v10177 = vmul.f32 %v10161, 0.01
      %v10178 = vmul.f32 %v10162, 0.01
      %v10179 = vmul.f32 %v10163, 0.01
      %v10180 = vmul.f32 %v10164, 0.01
      %v10181 = vmul.f32 %v10165, 0.01
      %v10182 = vsel %vm10166, %v10158, %v10174
      %v10183 = vsel %vm10167, %v10159, %v10175
      %v10184 = vsel %vm10168, %v10160, %v10176
      %v10185 = vsel %vm10169, %v10161, %v10177
      %v10186 = vsel %vm10170, %v10162, %v10178
      %v10187 = vsel %vm10171, %v10163, %v10179
      %v10188 = vsel %vm10172, %v10164, %v10180
      %v10189 = vsel %vm10173, %v10165, %v10181
      %v10190 = vmul.f32 %v10182, %v5131
      %v10191 = vmul.f32 %v10183, %v5132
      %v10192 = vmul.f32 %v10184, %v5133
      %v10193 = vmul.f32 %v10185, %v5134
      %v10194 = vmul.f32 %v10186, %v5135
      %v10195 = vmul.f32 %v10187, %v5136
      %v10196 = vmul.f32 %v10188, %v5137
      %v10197 = vmul.f32 %v10189, %v5138
      %10198 = vst [vmem:[%s224] sm:$0xff] %v10190
      %10199 = vst [vmem:[%s224 + $0x8] sm:$0xff] %v10191
      %10200 = vst [vmem:[%s224 + $0x10] sm:$0xff] %v10192
      %10201 = vst [vmem:[%s224 + $0x18] sm:$0xff] %v10193
      %10202 = vst [vmem:[%s224 + $0x20] sm:$0xff] %v10194
      %10203 = vst [vmem:[%s224 + $0x28] sm:$0xff] %v10195
      %10204 = vst [vmem:[%s224 + $0x30] sm:$0xff] %v10196
      %10205 = vst [vmem:[%s224 + $0x38] sm:$0xff] %v10197
      %p10206 = scmp.lt.s32.totalorder %s16, 1
      %s10207 = scalar_select %p10206, %s16, 1
      %s10208 = smul.addr %s10207, 8
      %s10209 = smul.addr %s10208, 8
      %s10210 = scalar_lea.vmem %s5, %s10209
      // Predicated region
      $region41: #{conv_blocks.1} parent=39 // pred_check
        %p10211 = pneg %p144
      $region42: #{conv_blocks.1} parent=39 // pred_check_branch
        %10213 = sbr.rel (%p10211) target = $region44
      $region43: #{conv_blocks.1} parent=39 // pred_region
        _
      $region44: #{conv_blocks.1} parent=39 // pred_fallthru
        _
    $region40: #{conv_blocks.1} parent=5 // pred_fallthru
      _
    %p10214 = scmp.le.s32.totalorder 2, %s11
    // Predicated region
    $region45: #{conv_blocks.1} parent=5 // pred_check
      %p10215 = pneg %p10214
    $region46: #{conv_blocks.1} parent=5 // pred_check_branch
      %10217 = sbr.rel (%p10215) target = $region48
    $region47: #{conv_blocks.1} parent=5 // pred_region
      %s10218 = ssub.s32 %s11, 2
      // Predicated region
      $region49: #{conv_blocks.1} parent=47 // pred_check
        %p10219 = pneg %p150
      $region50: #{conv_blocks.1} parent=47 // pred_check_branch
        %10221 = sbr.rel (%p10219) target = $region52
      $region51: #{conv_blocks.1} parent=47 // pred_region
        %p10222 = scmp.lt.s32.totalorder %s17, 1
        %s10223 = scalar_select %p10222, %s17, 1
        %s10224 = smul.addr %s10223, 8
        %s10225 = smul.addr %s10224, 8
        %s10226 = scalar_lea.vmem %s5, %s10225
      $region52: #{conv_blocks.1} parent=47 // pred_fallthru
        _
    $region48: #{conv_blocks.1} parent=5 // pred_fallthru
      _
  $region6: #{conv_blocks.1} parent=0 // loop_footer
    %s15 = sadd.s32 1, %s11
  $region7: #{conv_blocks.1} parent=0 // loop_footer_branch
    %10 = sbr.rel target = $region3
  $region8: #{conv_blocks.1} parent=0 // loop_exit
    _

</llo_original>
